<compile_context>
chip_gen: v7x
topology: tpu7x:2x2x1
jax: 0.10.0
libtpu: 0.0.40
codegen_flags: <defaults>
</compile_context>

<pallas_src>
import functools

import jax
import jax.numpy as jnp
from jax.experimental import pallas as pl
from jax.experimental.pallas import tpu as pltpu


def _fused_convnet_kernel(x_ref, w_ref, b_ref, o_ref, *, layer_dims):
    """conv1 -> conv2 -> conv3 -> conv4 fused, each layer one im2col matmul.

    x_ref: (N, H, W, Cin0)       input activation (NHWC), VMEM
    w_ref: (L, Kmax, Cmax)       packed per-layer (9*Cin, Cout) weights (0-pad)
    b_ref: (L, Cmax)             packed per-layer biases (0-pad)
    o_ref: (Cout_last, N*Ho*Wo)  lane-dense output slab
    """
    a = x_ref[...].astype(jnp.float32)
    n_layers = len(layer_dims)
    for li, (cin, cout) in enumerate(layer_dims):
        n, h, w, _ = a.shape
        ho, wo = h - 2, w - 2
        m = n * ho * wo
        k = 9 * cin
        # im2col: 9 shifted windows concatenated along the channel (minor)
        # axis, then a single leading-dim collapse (minor dim preserved).
        cols = [a[:, dy:dy + ho, dx:dx + wo, :]
                for dy in range(3) for dx in range(3)]
        patches = jnp.concatenate(cols, axis=-1).reshape(m, k)
        wt = w_ref[li, :k, :cout]          # static slice of the weight slab
        bias = b_ref[li:li + 1, :cout]     # (1, Cout) bias row
        # One MXU push per layer; bias folded into the epilogue.
        out = jnp.dot(patches, wt, preferred_element_type=jnp.float32) + bias
        if li + 1 < n_layers:
            a = out.reshape(n, ho, wo, cout)
        else:
            # Lane-dense store: put M = N*Ho*Wo (128-aligned for the test
            # shape) in the lane dimension instead of Cout (=10).
            o_ref[...] = jnp.transpose(out).astype(o_ref.dtype)


def fused_model_forward(x_nchw, params):
    """PyTorch-equivalent forward: 4 chained valid 3x3 convs. NCHW in/out.

    params: list of (w_hwio (3,3,Cin,Cout), b (Cout,)) per layer.
    """
    x = jnp.transpose(x_nchw, (0, 2, 3, 1))  # NHWC for the kernel
    n, h0, w0, cin0 = x.shape
    n_layers = len(params)

    layer_dims = tuple((int(p[0].shape[2]), int(p[0].shape[3])) for p in params)
    kmax = 9 * max(cin for cin, _ in layer_dims)
    cmax = max(cout for _, cout in layer_dims)

    # Pack im2col-reshaped weights / biases into single zero-padded slabs
    # (3 input DMAs instead of 9).  Row order of each (9*Cin, Cout) block is
    # (dy, dx, cin) — identical to the kernel's window-concat order.
    w_slab = jnp.zeros((n_layers, kmax, cmax), jnp.float32)
    b_slab = jnp.zeros((n_layers, cmax), jnp.float32)

    flops = 0
    bytes_accessed = int(x.size) * 4
    cur_h, cur_w, cur_cin = h0, w0, cin0
    for li, (w_hwio, b) in enumerate(params):
        cout = layer_dims[li][1]
        k = 9 * cur_cin
        w2d = w_hwio.reshape(k, cout).astype(jnp.float32)
        w_slab = w_slab.at[li, :k, :cout].set(w2d)
        b_slab = b_slab.at[li, :cout].set(b.astype(jnp.float32))
        ho, wo = cur_h - 2, cur_w - 2
        flops += 2 * n * ho * wo * k * cout
        cur_h, cur_w, cur_cin = ho, wo, cout

    cout_last = layer_dims[-1][1]
    m_last = n * cur_h * cur_w
    bytes_accessed += int(w_slab.size + b_slab.size + cout_last * m_last) * 4

    vmem = pl.BlockSpec(memory_space=pltpu.MemorySpace.VMEM)
    kernel = functools.partial(_fused_convnet_kernel, layer_dims=layer_dims)

    out2d = pl.pallas_call(
        kernel,
        out_shape=jax.ShapeDtypeStruct((cout_last, m_last), x.dtype),
        in_specs=[vmem, vmem, vmem],
        out_specs=vmem,
        cost_estimate=pl.CostEstimate(
            flops=flops, transcendentals=0, bytes_accessed=bytes_accessed),
    )(x, w_slab, b_slab)

    # (Cout, N*Ho*Wo) -> (N, Cout, Ho, Wo)
    return out2d.reshape(cout_last, n, cur_h, cur_w).transpose(1, 0, 2, 3)


def init_conv_params(key, cin, cout, k=3):
    """Deterministic init mimicking nn.Conv2d default (kaiming-uniform-ish)."""
    kw, kb = jax.random.split(key)
    fan_in = cin * k * k
    bound = 1.0 / jnp.sqrt(fan_in)
    # PyTorch weight layout (Cout, Cin, KH, KW) -> (KH, KW, Cin, Cout)
    w_oihw = jax.random.uniform(kw, (cout, cin, k, k), jnp.float32, -bound, bound)
    b = jax.random.uniform(kb, (cout,), jnp.float32, -bound, bound)
    w_hwio = jnp.transpose(w_oihw, (2, 3, 1, 0))
    return w_hwio, b


def reference_forward(x_nchw, params):
    """Pure-JAX reference using lax.conv_general_dilated for verification."""
    x = jnp.transpose(x_nchw, (0, 2, 3, 1))
    for (w, b) in params:
        x = jax.lax.conv_general_dilated(
            x, w, window_strides=(1, 1), padding="VALID",
            dimension_numbers=("NHWC", "HWIO", "NHWC"),
        ) + b
    return jnp.transpose(x, (0, 3, 1, 2))


if __name__ == "__main__":
    key = jax.random.PRNGKey(0)
    k_in, k1, k2, k3, k4 = jax.random.split(key, 5)

    # Small shapes consistent with the module: in_channels=3, four 3x3 valid
    # convs: spatial 16 -> 14 -> 12 -> 10 -> 8.
    N, C, H, W = 2, 3, 16, 16
    x = jax.random.normal(k_in, (N, C, H, W), jnp.float32)

    params = [
        init_conv_params(k1, 3, 6),
        init_conv_params(k2, 6, 8),
        init_conv_params(k3, 8, 9),
        init_conv_params(k4, 9, 10),
    ]

    out = jax.jit(fused_model_forward)(x, params)
    out = jax.block_until_ready(out)

    ref = jax.block_until_ready(reference_forward(x, params))
    assert out.shape == (N, 10, 8, 8), out.shape
    assert jnp.allclose(out, ref, atol=1e-4, rtol=1e-4), "mismatch vs reference"

    print("KERNEL_OK")
</pallas_src>

<mosaic_0001>
module attributes {stable_mosaic.version = 11 : i64} {
  func.func @_fused_convnet_kernel(%arg0: memref<2x16x16x3xf32, #tpu.memory_space<vmem>>, %arg1: memref<4x81x10xf32, #tpu.memory_space<vmem>>, %arg2: memref<4x10xf32, #tpu.memory_space<vmem>>, %arg3: memref<10x128xf32, #tpu.memory_space<vmem>>) attributes {dimension_semantics = [], scalar_prefetch = 0 : i64, scratch_operands = 0 : i64, tpu.core_type = #tpu.core_type<tc>} {
    %c0 = arith.constant 0 : index
    %c0_0 = arith.constant 0 : index
    %c0_1 = arith.constant 0 : index
    %c0_2 = arith.constant 0 : index
    %0 = vector.load %arg0[%c0, %c0_0, %c0_1, %c0_2] : memref<2x16x16x3xf32, #tpu.memory_space<vmem>>, vector<2x16x16x3xf32>
    %1 = vector.extract_strided_slice %0 {offsets = [0, 0, 0, 0], sizes = [2, 14, 14, 3], strides = [1, 1, 1, 1]} : vector<2x16x16x3xf32> to vector<2x14x14x3xf32>
    %2 = vector.extract_strided_slice %0 {offsets = [0, 0, 1, 0], sizes = [2, 14, 14, 3], strides = [1, 1, 1, 1]} : vector<2x16x16x3xf32> to vector<2x14x14x3xf32>
    %3 = vector.extract_strided_slice %0 {offsets = [0, 0, 2, 0], sizes = [2, 14, 14, 3], strides = [1, 1, 1, 1]} : vector<2x16x16x3xf32> to vector<2x14x14x3xf32>
    %4 = vector.extract_strided_slice %0 {offsets = [0, 1, 0, 0], sizes = [2, 14, 14, 3], strides = [1, 1, 1, 1]} : vector<2x16x16x3xf32> to vector<2x14x14x3xf32>
    %5 = vector.extract_strided_slice %0 {offsets = [0, 1, 1, 0], sizes = [2, 14, 14, 3], strides = [1, 1, 1, 1]} : vector<2x16x16x3xf32> to vector<2x14x14x3xf32>
    %6 = vector.extract_strided_slice %0 {offsets = [0, 1, 2, 0], sizes = [2, 14, 14, 3], strides = [1, 1, 1, 1]} : vector<2x16x16x3xf32> to vector<2x14x14x3xf32>
    %7 = vector.extract_strided_slice %0 {offsets = [0, 2, 0, 0], sizes = [2, 14, 14, 3], strides = [1, 1, 1, 1]} : vector<2x16x16x3xf32> to vector<2x14x14x3xf32>
    %8 = vector.extract_strided_slice %0 {offsets = [0, 2, 1, 0], sizes = [2, 14, 14, 3], strides = [1, 1, 1, 1]} : vector<2x16x16x3xf32> to vector<2x14x14x3xf32>
    %9 = vector.extract_strided_slice %0 {offsets = [0, 2, 2, 0], sizes = [2, 14, 14, 3], strides = [1, 1, 1, 1]} : vector<2x16x16x3xf32> to vector<2x14x14x3xf32>
    %10 = tpu.concatenate %1, %2, %3, %4, %5, %6, %7, %8, %9 in 3 : vector<2x14x14x3xf32>, vector<2x14x14x3xf32>, vector<2x14x14x3xf32>, vector<2x14x14x3xf32>, vector<2x14x14x3xf32>, vector<2x14x14x3xf32>, vector<2x14x14x3xf32>, vector<2x14x14x3xf32>, vector<2x14x14x3xf32> -> vector<2x14x14x27xf32>
    %11 = vector.shape_cast %10 : vector<2x14x14x27xf32> to vector<392x27xf32>
    %c0_3 = arith.constant 0 : index
    %c0_4 = arith.constant 0 : index
    %c0_5 = arith.constant 0 : index
    %12 = vector.load %arg1[%c0_3, %c0_4, %c0_5] : memref<4x81x10xf32, #tpu.memory_space<vmem>>, vector<1x27x6xf32>
    %13 = vector.shape_cast %12 : vector<1x27x6xf32> to vector<27x6xf32>
    %c0_6 = arith.constant 0 : index
    %c0_7 = arith.constant 0 : index
    %14 = vector.load %arg2[%c0_6, %c0_7] : memref<4x10xf32, #tpu.memory_space<vmem>>, vector<1x6xf32>
    %cst = arith.constant dense<0.000000e+00> : vector<392x6xf32>
    %15 = tpu.matmul %11, %13, %cst {dimension_numbers = #tpu.dot_dimension_numbers<[1], [0], [0], [1], [0, 0, 1, 1], [], []>} : vector<392x27xf32>, vector<27x6xf32>, vector<392x6xf32> -> vector<392x6xf32>
    %16 = vector.broadcast %14 : vector<1x6xf32> to vector<392x6xf32>
    %17 = arith.addf %15, %16 : vector<392x6xf32>
    %18 = vector.shape_cast %17 : vector<392x6xf32> to vector<2x14x14x6xf32>
    %19 = vector.extract_strided_slice %18 {offsets = [0, 0, 0, 0], sizes = [2, 12, 12, 6], strides = [1, 1, 1, 1]} : vector<2x14x14x6xf32> to vector<2x12x12x6xf32>
    %20 = vector.extract_strided_slice %18 {offsets = [0, 0, 1, 0], sizes = [2, 12, 12, 6], strides = [1, 1, 1, 1]} : vector<2x14x14x6xf32> to vector<2x12x12x6xf32>
    %21 = vector.extract_strided_slice %18 {offsets = [0, 0, 2, 0], sizes = [2, 12, 12, 6], strides = [1, 1, 1, 1]} : vector<2x14x14x6xf32> to vector<2x12x12x6xf32>
    %22 = vector.extract_strided_slice %18 {offsets = [0, 1, 0, 0], sizes = [2, 12, 12, 6], strides = [1, 1, 1, 1]} : vector<2x14x14x6xf32> to vector<2x12x12x6xf32>
    %23 = vector.extract_strided_slice %18 {offsets = [0, 1, 1, 0], sizes = [2, 12, 12, 6], strides = [1, 1, 1, 1]} : vector<2x14x14x6xf32> to vector<2x12x12x6xf32>
    %24 = vector.extract_strided_slice %18 {offsets = [0, 1, 2, 0], sizes = [2, 12, 12, 6], strides = [1, 1, 1, 1]} : vector<2x14x14x6xf32> to vector<2x12x12x6xf32>
    %25 = vector.extract_strided_slice %18 {offsets = [0, 2, 0, 0], sizes = [2, 12, 12, 6], strides = [1, 1, 1, 1]} : vector<2x14x14x6xf32> to vector<2x12x12x6xf32>
    %26 = vector.extract_strided_slice %18 {offsets = [0, 2, 1, 0], sizes = [2, 12, 12, 6], strides = [1, 1, 1, 1]} : vector<2x14x14x6xf32> to vector<2x12x12x6xf32>
    %27 = vector.extract_strided_slice %18 {offsets = [0, 2, 2, 0], sizes = [2, 12, 12, 6], strides = [1, 1, 1, 1]} : vector<2x14x14x6xf32> to vector<2x12x12x6xf32>
    %28 = tpu.concatenate %19, %20, %21, %22, %23, %24, %25, %26, %27 in 3 : vector<2x12x12x6xf32>, vector<2x12x12x6xf32>, vector<2x12x12x6xf32>, vector<2x12x12x6xf32>, vector<2x12x12x6xf32>, vector<2x12x12x6xf32>, vector<2x12x12x6xf32>, vector<2x12x12x6xf32>, vector<2x12x12x6xf32> -> vector<2x12x12x54xf32>
    %29 = vector.shape_cast %28 : vector<2x12x12x54xf32> to vector<288x54xf32>
    %c1 = arith.constant 1 : index
    %c0_8 = arith.constant 0 : index
    %c0_9 = arith.constant 0 : index
    %30 = vector.load %arg1[%c1, %c0_8, %c0_9] : memref<4x81x10xf32, #tpu.memory_space<vmem>>, vector<1x54x8xf32>
    %31 = vector.shape_cast %30 : vector<1x54x8xf32> to vector<54x8xf32>
    %c1_10 = arith.constant 1 : index
    %c0_11 = arith.constant 0 : index
    %32 = vector.load %arg2[%c1_10, %c0_11] : memref<4x10xf32, #tpu.memory_space<vmem>>, vector<1x8xf32>
    %cst_12 = arith.constant dense<0.000000e+00> : vector<288x8xf32>
    %33 = tpu.matmul %29, %31, %cst_12 {dimension_numbers = #tpu.dot_dimension_numbers<[1], [0], [0], [1], [0, 0, 1, 1], [], []>} : vector<288x54xf32>, vector<54x8xf32>, vector<288x8xf32> -> vector<288x8xf32>
    %34 = vector.broadcast %32 : vector<1x8xf32> to vector<288x8xf32>
    %35 = arith.addf %33, %34 : vector<288x8xf32>
    %36 = vector.shape_cast %35 : vector<288x8xf32> to vector<2x12x12x8xf32>
    %37 = vector.extract_strided_slice %36 {offsets = [0, 0, 0, 0], sizes = [2, 10, 10, 8], strides = [1, 1, 1, 1]} : vector<2x12x12x8xf32> to vector<2x10x10x8xf32>
    %38 = vector.extract_strided_slice %36 {offsets = [0, 0, 1, 0], sizes = [2, 10, 10, 8], strides = [1, 1, 1, 1]} : vector<2x12x12x8xf32> to vector<2x10x10x8xf32>
    %39 = vector.extract_strided_slice %36 {offsets = [0, 0, 2, 0], sizes = [2, 10, 10, 8], strides = [1, 1, 1, 1]} : vector<2x12x12x8xf32> to vector<2x10x10x8xf32>
    %40 = vector.extract_strided_slice %36 {offsets = [0, 1, 0, 0], sizes = [2, 10, 10, 8], strides = [1, 1, 1, 1]} : vector<2x12x12x8xf32> to vector<2x10x10x8xf32>
    %41 = vector.extract_strided_slice %36 {offsets = [0, 1, 1, 0], sizes = [2, 10, 10, 8], strides = [1, 1, 1, 1]} : vector<2x12x12x8xf32> to vector<2x10x10x8xf32>
    %42 = vector.extract_strided_slice %36 {offsets = [0, 1, 2, 0], sizes = [2, 10, 10, 8], strides = [1, 1, 1, 1]} : vector<2x12x12x8xf32> to vector<2x10x10x8xf32>
    %43 = vector.extract_strided_slice %36 {offsets = [0, 2, 0, 0], sizes = [2, 10, 10, 8], strides = [1, 1, 1, 1]} : vector<2x12x12x8xf32> to vector<2x10x10x8xf32>
    %44 = vector.extract_strided_slice %36 {offsets = [0, 2, 1, 0], sizes = [2, 10, 10, 8], strides = [1, 1, 1, 1]} : vector<2x12x12x8xf32> to vector<2x10x10x8xf32>
    %45 = vector.extract_strided_slice %36 {offsets = [0, 2, 2, 0], sizes = [2, 10, 10, 8], strides = [1, 1, 1, 1]} : vector<2x12x12x8xf32> to vector<2x10x10x8xf32>
    %46 = tpu.concatenate %37, %38, %39, %40, %41, %42, %43, %44, %45 in 3 : vector<2x10x10x8xf32>, vector<2x10x10x8xf32>, vector<2x10x10x8xf32>, vector<2x10x10x8xf32>, vector<2x10x10x8xf32>, vector<2x10x10x8xf32>, vector<2x10x10x8xf32>, vector<2x10x10x8xf32>, vector<2x10x10x8xf32> -> vector<2x10x10x72xf32>
    %47 = vector.shape_cast %46 : vector<2x10x10x72xf32> to vector<200x72xf32>
    %c2 = arith.constant 2 : index
    %c0_13 = arith.constant 0 : index
    %c0_14 = arith.constant 0 : index
    %48 = vector.load %arg1[%c2, %c0_13, %c0_14] : memref<4x81x10xf32, #tpu.memory_space<vmem>>, vector<1x72x9xf32>
    %49 = vector.shape_cast %48 : vector<1x72x9xf32> to vector<72x9xf32>
    %c2_15 = arith.constant 2 : index
    %c0_16 = arith.constant 0 : index
    %50 = vector.load %arg2[%c2_15, %c0_16] : memref<4x10xf32, #tpu.memory_space<vmem>>, vector<1x9xf32>
    %cst_17 = arith.constant dense<0.000000e+00> : vector<200x9xf32>
    %51 = tpu.matmul %47, %49, %cst_17 {dimension_numbers = #tpu.dot_dimension_numbers<[1], [0], [0], [1], [0, 0, 1, 1], [], []>} : vector<200x72xf32>, vector<72x9xf32>, vector<200x9xf32> -> vector<200x9xf32>
    %52 = vector.broadcast %50 : vector<1x9xf32> to vector<200x9xf32>
    %53 = arith.addf %51, %52 : vector<200x9xf32>
    %54 = vector.shape_cast %53 : vector<200x9xf32> to vector<2x10x10x9xf32>
    %55 = vector.extract_strided_slice %54 {offsets = [0, 0, 0, 0], sizes = [2, 8, 8, 9], strides = [1, 1, 1, 1]} : vector<2x10x10x9xf32> to vector<2x8x8x9xf32>
    %56 = vector.extract_strided_slice %54 {offsets = [0, 0, 1, 0], sizes = [2, 8, 8, 9], strides = [1, 1, 1, 1]} : vector<2x10x10x9xf32> to vector<2x8x8x9xf32>
    %57 = vector.extract_strided_slice %54 {offsets = [0, 0, 2, 0], sizes = [2, 8, 8, 9], strides = [1, 1, 1, 1]} : vector<2x10x10x9xf32> to vector<2x8x8x9xf32>
    %58 = vector.extract_strided_slice %54 {offsets = [0, 1, 0, 0], sizes = [2, 8, 8, 9], strides = [1, 1, 1, 1]} : vector<2x10x10x9xf32> to vector<2x8x8x9xf32>
    %59 = vector.extract_strided_slice %54 {offsets = [0, 1, 1, 0], sizes = [2, 8, 8, 9], strides = [1, 1, 1, 1]} : vector<2x10x10x9xf32> to vector<2x8x8x9xf32>
    %60 = vector.extract_strided_slice %54 {offsets = [0, 1, 2, 0], sizes = [2, 8, 8, 9], strides = [1, 1, 1, 1]} : vector<2x10x10x9xf32> to vector<2x8x8x9xf32>
    %61 = vector.extract_strided_slice %54 {offsets = [0, 2, 0, 0], sizes = [2, 8, 8, 9], strides = [1, 1, 1, 1]} : vector<2x10x10x9xf32> to vector<2x8x8x9xf32>
    %62 = vector.extract_strided_slice %54 {offsets = [0, 2, 1, 0], sizes = [2, 8, 8, 9], strides = [1, 1, 1, 1]} : vector<2x10x10x9xf32> to vector<2x8x8x9xf32>
    %63 = vector.extract_strided_slice %54 {offsets = [0, 2, 2, 0], sizes = [2, 8, 8, 9], strides = [1, 1, 1, 1]} : vector<2x10x10x9xf32> to vector<2x8x8x9xf32>
    %64 = tpu.concatenate %55, %56, %57, %58, %59, %60, %61, %62, %63 in 3 : vector<2x8x8x9xf32>, vector<2x8x8x9xf32>, vector<2x8x8x9xf32>, vector<2x8x8x9xf32>, vector<2x8x8x9xf32>, vector<2x8x8x9xf32>, vector<2x8x8x9xf32>, vector<2x8x8x9xf32>, vector<2x8x8x9xf32> -> vector<2x8x8x81xf32>
    %65 = vector.shape_cast %64 : vector<2x8x8x81xf32> to vector<128x81xf32>
    %c3 = arith.constant 3 : index
    %c0_18 = arith.constant 0 : index
    %c0_19 = arith.constant 0 : index
    %66 = vector.load %arg1[%c3, %c0_18, %c0_19] : memref<4x81x10xf32, #tpu.memory_space<vmem>>, vector<1x81x10xf32>
    %67 = vector.shape_cast %66 : vector<1x81x10xf32> to vector<81x10xf32>
    %c3_20 = arith.constant 3 : index
    %c0_21 = arith.constant 0 : index
    %68 = vector.load %arg2[%c3_20, %c0_21] : memref<4x10xf32, #tpu.memory_space<vmem>>, vector<1x10xf32>
    %cst_22 = arith.constant dense<0.000000e+00> : vector<128x10xf32>
    %69 = tpu.matmul %65, %67, %cst_22 {dimension_numbers = #tpu.dot_dimension_numbers<[1], [0], [0], [1], [0, 0, 1, 1], [], []>} : vector<128x81xf32>, vector<81x10xf32>, vector<128x10xf32> -> vector<128x10xf32>
    %70 = vector.broadcast %68 : vector<1x10xf32> to vector<128x10xf32>
    %71 = arith.addf %69, %70 : vector<128x10xf32>
    %72 = tpu.transpose %71, [1, 0] : vector<128x10xf32> -> vector<10x128xf32>
    %c0_23 = arith.constant 0 : index
    %c0_24 = arith.constant 0 : index
    %73 = vector.load %arg3[%c0_23, %c0_24] : memref<10x128xf32, #tpu.memory_space<vmem>>, vector<10x128xf32>
    tpu.vector_store %arg3[%c0_23, %c0_24], %72 {strides = array<i32>} : memref<10x128xf32, #tpu.memory_space<vmem>>, vector<10x128xf32>,
    return
  }
}

</mosaic_0001>

<llo_original>
// kernel: fused_model_forward.1
$region0: #{fused_model_forward.1}
  #allocation0 [shape = 'u32[]', space=smem, size = 0x4, offset = 0x4, fixed_abs, tag = 'smem constant byte address 0x4 - core index']
  #allocation1 [shape = 'u32[144,128]{1,0:T(1,128)}', space=vmem, size = 0x12000, scoped, tag = 'internal scratch']
  %s0 = inlined_call_operand.vmem [shape: f32[2,16,16,3], index: 0, kind: input, shape index: {}]
  %s1 = inlined_call_operand.vmem [shape: f32[4,81,10], index: 1, kind: input, shape index: {}]
  %s2 = inlined_call_operand.vmem [shape: f32[4,10], index: 2, kind: input, shape index: {}]
  %s3 = inlined_call_operand.vmem [shape: f32[10,128], index: 3, kind: output, shape index: {}]
  %s4 = sld [smem:[#allocation0]]
  $region22: #{fused_model_forward.1} parent=0
    _
  %s6 = ssub.s32 1, %s4
  %s7 = scalar_select 0, %s6, %s4
  // Predicated region
  $region2: #{fused_model_forward.1} parent=0 // pred_check
    _
  $region3: #{fused_model_forward.1} parent=0 // pred_check_branch
    %9 = sbr.rel (0) target = $region5
  $region4: #{fused_model_forward.1} parent=0 // pred_region
    _
  $region5: #{fused_model_forward.1} parent=0 // pred_fallthru
    _
  // Predicated region
  $region6: #{fused_model_forward.1} parent=0 // pred_check
    _
  $region7: #{fused_model_forward.1} parent=0 // pred_check_branch
    %11 = sbr.rel (0) target = $region9
  $region8: #{fused_model_forward.1} parent=0 // pred_region
    _
  $region9: #{fused_model_forward.1} parent=0 // pred_fallthru
    _
  // Predicated region
  $region10: #{fused_model_forward.1} parent=0 // pred_check
    _
  $region11: #{fused_model_forward.1} parent=0 // pred_check_branch
    %13 = sbr.rel (0) target = $region13
  $region12: #{fused_model_forward.1} parent=0 // pred_region
    _
  $region13: #{fused_model_forward.1} parent=0 // pred_fallthru
    _
  %v14 = vld [vmem:[%s0] sm:$0xff]
  %v15 = vld [vmem:[%s0 + $0x8] sm:$0xff]
  %v16 = vld [vmem:[%s0 + $0x10] sm:$0xff]
  %v17 = vld [vmem:[%s0 + $0x18] sm:$0xff]
  %v18 = vld [vmem:[%s0 + $0x20] sm:$0xff]
  %v19 = vld [vmem:[%s0 + $0x28] sm:$0xff]
  %v20 = vld [vmem:[%s0 + $0x30] sm:$0xff]
  %v21 = vld [vmem:[%s0 + $0x38] sm:$0xff]
  %v22 = vld [vmem:[%s0 + $0x40] sm:$0xff]
  %v23 = vld [vmem:[%s0 + $0x48] sm:$0xff]
  %v24 = vld [vmem:[%s0 + $0x50] sm:$0xff]
  %v25 = vld [vmem:[%s0 + $0x58] sm:$0xff]
  %v26 = vld [vmem:[%s0 + $0x60] sm:$0xff]
  %v27 = vld [vmem:[%s0 + $0x68] sm:$0xff]
  %v28 = vld [vmem:[%s0 + $0x70] sm:$0xff]
  %v29 = vld [vmem:[%s0 + $0x78] sm:$0xff]
  %v30 = vld [vmem:[%s0 + $0x80] sm:$0xff]
  %v31 = vld [vmem:[%s0 + $0x88] sm:$0xff]
  %v32 = vld [vmem:[%s0 + $0x90] sm:$0xff]
  %v33 = vld [vmem:[%s0 + $0x98] sm:$0xff]
  %v34 = vld [vmem:[%s0 + $0xa0] sm:$0xff]
  %v35 = vld [vmem:[%s0 + $0xa8] sm:$0xff]
  %v36 = vld [vmem:[%s0 + $0xb0] sm:$0xff]
  %v37 = vld [vmem:[%s0 + $0xb8] sm:$0xff]
  %v38 = vld [vmem:[%s0 + $0xc0] sm:$0xff]
  %v39 = vld [vmem:[%s0 + $0xc8] sm:$0xff]
  %v40 = vld [vmem:[%s0 + $0xd0] sm:$0xff]
  %v41 = vld [vmem:[%s0 + $0xd8] sm:$0xff]
  %v42 = vld [vmem:[%s0 + $0xe0] sm:$0xff]
  %v43 = vld [vmem:[%s0 + $0xe8] sm:$0xff]
  %v44 = vld [vmem:[%s0 + $0xf0] sm:$0xff]
  %v45 = vld [vmem:[%s0 + $0xf8] sm:$0xff]
  %v46 = vld [vmem:[%s0 + $0x100] sm:$0xff]
  %v47 = vld [vmem:[%s0 + $0x108] sm:$0xff]
  %v48 = vld [vmem:[%s0 + $0x110] sm:$0xff]
  %v49 = vld [vmem:[%s0 + $0x118] sm:$0xff]
  %v50 = vld [vmem:[%s0 + $0x120] sm:$0xff]
  %v51 = vld [vmem:[%s0 + $0x128] sm:$0xff]
  %v52 = vld [vmem:[%s0 + $0x130] sm:$0xff]
  %v53 = vld [vmem:[%s0 + $0x138] sm:$0xff]
  %v54 = vld [vmem:[%s0 + $0x140] sm:$0xff]
  %v55 = vld [vmem:[%s0 + $0x148] sm:$0xff]
  %v56 = vld [vmem:[%s0 + $0x150] sm:$0xff]
  %v57 = vld [vmem:[%s0 + $0x158] sm:$0xff]
  %v58 = vld [vmem:[%s0 + $0x160] sm:$0xff]
  %v59 = vld [vmem:[%s0 + $0x168] sm:$0xff]
  %v60 = vld [vmem:[%s0 + $0x170] sm:$0xff]
  %v61 = vld [vmem:[%s0 + $0x178] sm:$0xff]
  %v62 = vld [vmem:[%s0 + $0x180] sm:$0xff]
  %v63 = vld [vmem:[%s0 + $0x188] sm:$0xff]
  %v64 = vld [vmem:[%s0 + $0x190] sm:$0xff]
  %v65 = vld [vmem:[%s0 + $0x198] sm:$0xff]
  %v66 = vld [vmem:[%s0 + $0x1a0] sm:$0xff]
  %v67 = vld [vmem:[%s0 + $0x1a8] sm:$0xff]
  %v68 = vld [vmem:[%s0 + $0x1b0] sm:$0xff]
  %v69 = vld [vmem:[%s0 + $0x1b8] sm:$0xff]
  %v70 = vld [vmem:[%s0 + $0x1c0] sm:$0xff]
  %v71 = vld [vmem:[%s0 + $0x1c8] sm:$0xff]
  %v72 = vld [vmem:[%s0 + $0x1d0] sm:$0xff]
  %v73 = vld [vmem:[%s0 + $0x1d8] sm:$0xff]
  %v74 = vld [vmem:[%s0 + $0x1e0] sm:$0xff]
  %v75 = vld [vmem:[%s0 + $0x1e8] sm:$0xff]
  %v76 = vld [vmem:[%s0 + $0x1f0] sm:$0xff]
  %v77 = vld [vmem:[%s0 + $0x1f8] sm:$0xff]
  %vm134 = vcmask 1046528
  %v135 = vrot.slane %v14, 1
  %v136 = vrot.slane %v15, 1
  %v137 = vsel %vm134, %v135, %v136
  %v138 = vrot.slane %v16, 1
  %v139 = vrot.slane %v17, 1
  %v140 = vsel %vm134, %v138, %v139
  %v141 = vrot.slane %v18, 1
  %v142 = vrot.slane %v19, 1
  %v143 = vsel %vm134, %v141, %v142
  %v144 = vrot.slane %v20, 1
  %v145 = vrot.slane %v21, 1
  %v146 = vsel %vm134, %v144, %v145
  %v147 = vrot.slane %v22, 1
  %v148 = vrot.slane %v23, 1
  %v149 = vsel %vm134, %v147, %v148
  %v150 = vrot.slane %v24, 1
  %v151 = vrot.slane %v25, 1
  %v152 = vsel %vm134, %v150, %v151
  %v153 = vrot.slane %v26, 1
  %v154 = vrot.slane %v27, 1
  %v155 = vsel %vm134, %v153, %v154
  %v156 = vrot.slane %v28, 1
  %v157 = vrot.slane %v29, 1
  %v158 = vsel %vm134, %v156, %v157
  %v159 = vrot.slane %v30, 1
  %v160 = vrot.slane %v31, 1
  %v161 = vsel %vm134, %v159, %v160
  %v162 = vrot.slane %v32, 1
  %v163 = vrot.slane %v33, 1
  %v164 = vsel %vm134, %v162, %v163
  %v165 = vrot.slane %v34, 1
  %v166 = vrot.slane %v35, 1
  %v167 = vsel %vm134, %v165, %v166
  %v168 = vrot.slane %v36, 1
  %v169 = vrot.slane %v37, 1
  %v170 = vsel %vm134, %v168, %v169
  %v171 = vrot.slane %v38, 1
  %v172 = vrot.slane %v39, 1
  %v173 = vsel %vm134, %v171, %v172
  %v174 = vrot.slane %v40, 1
  %v175 = vrot.slane %v41, 1
  %v176 = vsel %vm134, %v174, %v175
  %v177 = vrot.slane %v46, 1
  %v178 = vrot.slane %v47, 1
  %v179 = vsel %vm134, %v177, %v178
  %v180 = vrot.slane %v48, 1
  %v181 = vrot.slane %v49, 1
  %v182 = vsel %vm134, %v180, %v181
  %v183 = vrot.slane %v50, 1
  %v184 = vrot.slane %v51, 1
  %v185 = vsel %vm134, %v183, %v184
  %v186 = vrot.slane %v52, 1
  %v187 = vrot.slane %v53, 1
  %v188 = vsel %vm134, %v186, %v187
  %v189 = vrot.slane %v54, 1
  %v190 = vrot.slane %v55, 1
  %v191 = vsel %vm134, %v189, %v190
  %v192 = vrot.slane %v56, 1
  %v193 = vrot.slane %v57, 1
  %v194 = vsel %vm134, %v192, %v193
  %v195 = vrot.slane %v58, 1
  %v196 = vrot.slane %v59, 1
  %v197 = vsel %vm134, %v195, %v196
  %v198 = vrot.slane %v60, 1
  %v199 = vrot.slane %v61, 1
  %v200 = vsel %vm134, %v198, %v199
  %v201 = vrot.slane %v62, 1
  %v202 = vrot.slane %v63, 1
  %v203 = vsel %vm134, %v201, %v202
  %v204 = vrot.slane %v64, 1
  %v205 = vrot.slane %v65, 1
  %v206 = vsel %vm134, %v204, %v205
  %v207 = vrot.slane %v66, 1
  %v208 = vrot.slane %v67, 1
  %v209 = vsel %vm134, %v207, %v208
  %v210 = vrot.slane %v68, 1
  %v211 = vrot.slane %v69, 1
  %v212 = vsel %vm134, %v210, %v211
  %v213 = vrot.slane %v70, 1
  %v214 = vrot.slane %v71, 1
  %v215 = vsel %vm134, %v213, %v214
  %v216 = vrot.slane %v72, 1
  %v217 = vrot.slane %v73, 1
  %v218 = vsel %vm134, %v216, %v217
  %219 = vrot.lane.b32.xlu0 %v137, 3
  %v220 = vpop.permute.xlu0 %219
  %221 = vrot.lane.b32.xlu0 %v136, 3
  %v222 = vpop.permute.xlu0 %221
  %223 = vrot.lane.b32.xlu0 %v140, 3
  %v224 = vpop.permute.xlu0 %223
  %225 = vrot.lane.b32.xlu0 %v139, 3
  %v226 = vpop.permute.xlu0 %225
  %227 = vrot.lane.b32.xlu0 %v143, 3
  %v228 = vpop.permute.xlu0 %227
  %229 = vrot.lane.b32.xlu0 %v142, 3
  %v230 = vpop.permute.xlu0 %229
  %231 = vrot.lane.b32.xlu0 %v146, 3
  %v232 = vpop.permute.xlu0 %231
  %233 = vrot.lane.b32.xlu0 %v145, 3
  %v234 = vpop.permute.xlu0 %233
  %235 = vrot.lane.b32.xlu0 %v149, 3
  %v236 = vpop.permute.xlu0 %235
  %237 = vrot.lane.b32.xlu0 %v148, 3
  %v238 = vpop.permute.xlu0 %237
  %239 = vrot.lane.b32.xlu0 %v152, 3
  %v240 = vpop.permute.xlu0 %239
  %241 = vrot.lane.b32.xlu0 %v151, 3
  %v242 = vpop.permute.xlu0 %241
  %243 = vrot.lane.b32.xlu0 %v155, 3
  %v244 = vpop.permute.xlu0 %243
  %245 = vrot.lane.b32.xlu0 %v154, 3
  %v246 = vpop.permute.xlu0 %245
  %247 = vrot.lane.b32.xlu0 %v158, 3
  %v248 = vpop.permute.xlu0 %247
  %249 = vrot.lane.b32.xlu0 %v157, 3
  %v250 = vpop.permute.xlu0 %249
  %251 = vrot.lane.b32.xlu0 %v161, 3
  %v252 = vpop.permute.xlu0 %251
  %253 = vrot.lane.b32.xlu0 %v160, 3
  %v254 = vpop.permute.xlu0 %253
  %255 = vrot.lane.b32.xlu0 %v164, 3
  %v256 = vpop.permute.xlu0 %255
  %257 = vrot.lane.b32.xlu0 %v163, 3
  %v258 = vpop.permute.xlu0 %257
  %259 = vrot.lane.b32.xlu0 %v167, 3
  %v260 = vpop.permute.xlu0 %259
  %261 = vrot.lane.b32.xlu0 %v166, 3
  %v262 = vpop.permute.xlu0 %261
  %263 = vrot.lane.b32.xlu0 %v170, 3
  %v264 = vpop.permute.xlu0 %263
  %265 = vrot.lane.b32.xlu0 %v169, 3
  %v266 = vpop.permute.xlu0 %265
  %267 = vrot.lane.b32.xlu0 %v173, 3
  %v268 = vpop.permute.xlu0 %267
  %269 = vrot.lane.b32.xlu0 %v172, 3
  %v270 = vpop.permute.xlu0 %269
  %271 = vrot.lane.b32.xlu0 %v176, 3
  %v272 = vpop.permute.xlu0 %271
  %273 = vrot.lane.b32.xlu0 %v175, 3
  %v274 = vpop.permute.xlu0 %273
  %275 = vrot.lane.b32.xlu0 %v179, 3
  %v276 = vpop.permute.xlu0 %275
  %277 = vrot.lane.b32.xlu0 %v178, 3
  %v278 = vpop.permute.xlu0 %277
  %279 = vrot.lane.b32.xlu0 %v182, 3
  %v280 = vpop.permute.xlu0 %279
  %281 = vrot.lane.b32.xlu0 %v181, 3
  %v282 = vpop.permute.xlu0 %281
  %283 = vrot.lane.b32.xlu0 %v185, 3
  %v284 = vpop.permute.xlu0 %283
  %285 = vrot.lane.b32.xlu0 %v184, 3
  %v286 = vpop.permute.xlu0 %285
  %287 = vrot.lane.b32.xlu0 %v188, 3
  %v288 = vpop.permute.xlu0 %287
  %289 = vrot.lane.b32.xlu0 %v187, 3
  %v290 = vpop.permute.xlu0 %289
  %291 = vrot.lane.b32.xlu0 %v191, 3
  %v292 = vpop.permute.xlu0 %291
  %293 = vrot.lane.b32.xlu0 %v190, 3
  %v294 = vpop.permute.xlu0 %293
  %295 = vrot.lane.b32.xlu0 %v194, 3
  %v296 = vpop.permute.xlu0 %295
  %297 = vrot.lane.b32.xlu0 %v193, 3
  %v298 = vpop.permute.xlu0 %297
  %299 = vrot.lane.b32.xlu0 %v197, 3
  %v300 = vpop.permute.xlu0 %299
  %301 = vrot.lane.b32.xlu0 %v196, 3
  %v302 = vpop.permute.xlu0 %301
  %303 = vrot.lane.b32.xlu0 %v200, 3
  %v304 = vpop.permute.xlu0 %303
  %305 = vrot.lane.b32.xlu0 %v199, 3
  %v306 = vpop.permute.xlu0 %305
  %307 = vrot.lane.b32.xlu0 %v203, 3
  %v308 = vpop.permute.xlu0 %307
  %309 = vrot.lane.b32.xlu0 %v202, 3
  %v310 = vpop.permute.xlu0 %309
  %311 = vrot.lane.b32.xlu0 %v206, 3
  %v312 = vpop.permute.xlu0 %311
  %313 = vrot.lane.b32.xlu0 %v205, 3
  %v314 = vpop.permute.xlu0 %313
  %315 = vrot.lane.b32.xlu0 %v209, 3
  %v316 = vpop.permute.xlu0 %315
  %317 = vrot.lane.b32.xlu0 %v208, 3
  %v318 = vpop.permute.xlu0 %317
  %319 = vrot.lane.b32.xlu0 %v212, 3
  %v320 = vpop.permute.xlu0 %319
  %321 = vrot.lane.b32.xlu0 %v211, 3
  %v322 = vpop.permute.xlu0 %321
  %323 = vrot.lane.b32.xlu0 %v215, 3
  %v324 = vpop.permute.xlu0 %323
  %325 = vrot.lane.b32.xlu0 %v214, 3
  %v326 = vpop.permute.xlu0 %325
  %327 = vrot.lane.b32.xlu0 %v218, 3
  %v328 = vpop.permute.xlu0 %327
  %329 = vrot.lane.b32.xlu0 %v217, 3
  %v330 = vpop.permute.xlu0 %329
  %vm387 = vcmask 1045504
  %v388 = vrot.slane %v14, 2
  %v389 = vrot.slane %v15, 2
  %v390 = vsel %vm387, %v388, %v389
  %v391 = vrot.slane %v16, 2
  %v392 = vrot.slane %v17, 2
  %v393 = vsel %vm387, %v391, %v392
  %v394 = vrot.slane %v18, 2
  %v395 = vrot.slane %v19, 2
  %v396 = vsel %vm387, %v394, %v395
  %v397 = vrot.slane %v20, 2
  %v398 = vrot.slane %v21, 2
  %v399 = vsel %vm387, %v397, %v398
  %v400 = vrot.slane %v22, 2
  %v401 = vrot.slane %v23, 2
  %v402 = vsel %vm387, %v400, %v401
  %v403 = vrot.slane %v24, 2
  %v404 = vrot.slane %v25, 2
  %v405 = vsel %vm387, %v403, %v404
  %v406 = vrot.slane %v26, 2
  %v407 = vrot.slane %v27, 2
  %v408 = vsel %vm387, %v406, %v407
  %v409 = vrot.slane %v28, 2
  %v410 = vrot.slane %v29, 2
  %v411 = vsel %vm387, %v409, %v410
  %v412 = vrot.slane %v30, 2
  %v413 = vrot.slane %v31, 2
  %v414 = vsel %vm387, %v412, %v413
  %v415 = vrot.slane %v32, 2
  %v416 = vrot.slane %v33, 2
  %v417 = vsel %vm387, %v415, %v416
  %v418 = vrot.slane %v34, 2
  %v419 = vrot.slane %v35, 2
  %v420 = vsel %vm387, %v418, %v419
  %v421 = vrot.slane %v36, 2
  %v422 = vrot.slane %v37, 2
  %v423 = vsel %vm387, %v421, %v422
  %v424 = vrot.slane %v38, 2
  %v425 = vrot.slane %v39, 2
  %v426 = vsel %vm387, %v424, %v425
  %v427 = vrot.slane %v40, 2
  %v428 = vrot.slane %v41, 2
  %v429 = vsel %vm387, %v427, %v428
  %v430 = vrot.slane %v46, 2
  %v431 = vrot.slane %v47, 2
  %v432 = vsel %vm387, %v430, %v431
  %v433 = vrot.slane %v48, 2
  %v434 = vrot.slane %v49, 2
  %v435 = vsel %vm387, %v433, %v434
  %v436 = vrot.slane %v50, 2
  %v437 = vrot.slane %v51, 2
  %v438 = vsel %vm387, %v436, %v437
  %v439 = vrot.slane %v52, 2
  %v440 = vrot.slane %v53, 2
  %v441 = vsel %vm387, %v439, %v440
  %v442 = vrot.slane %v54, 2
  %v443 = vrot.slane %v55, 2
  %v444 = vsel %vm387, %v442, %v443
  %v445 = vrot.slane %v56, 2
  %v446 = vrot.slane %v57, 2
  %v447 = vsel %vm387, %v445, %v446
  %v448 = vrot.slane %v58, 2
  %v449 = vrot.slane %v59, 2
  %v450 = vsel %vm387, %v448, %v449
  %v451 = vrot.slane %v60, 2
  %v452 = vrot.slane %v61, 2
  %v453 = vsel %vm387, %v451, %v452
  %v454 = vrot.slane %v62, 2
  %v455 = vrot.slane %v63, 2
  %v456 = vsel %vm387, %v454, %v455
  %v457 = vrot.slane %v64, 2
  %v458 = vrot.slane %v65, 2
  %v459 = vsel %vm387, %v457, %v458
  %v460 = vrot.slane %v66, 2
  %v461 = vrot.slane %v67, 2
  %v462 = vsel %vm387, %v460, %v461
  %v463 = vrot.slane %v68, 2
  %v464 = vrot.slane %v69, 2
  %v465 = vsel %vm387, %v463, %v464
  %v466 = vrot.slane %v70, 2
  %v467 = vrot.slane %v71, 2
  %v468 = vsel %vm387, %v466, %v467
  %v469 = vrot.slane %v72, 2
  %v470 = vrot.slane %v73, 2
  %v471 = vsel %vm387, %v469, %v470
  %472 = vrot.lane.b32.xlu0 %v390, 6
  %v473 = vpop.permute.xlu0 %472
  %474 = vrot.lane.b32.xlu0 %v389, 6
  %v475 = vpop.permute.xlu0 %474
  %476 = vrot.lane.b32.xlu0 %v393, 6
  %v477 = vpop.permute.xlu0 %476
  %478 = vrot.lane.b32.xlu0 %v392, 6
  %v479 = vpop.permute.xlu0 %478
  %480 = vrot.lane.b32.xlu0 %v396, 6
  %v481 = vpop.permute.xlu0 %480
  %482 = vrot.lane.b32.xlu0 %v395, 6
  %v483 = vpop.permute.xlu0 %482
  %484 = vrot.lane.b32.xlu0 %v399, 6
  %v485 = vpop.permute.xlu0 %484
  %486 = vrot.lane.b32.xlu0 %v398, 6
  %v487 = vpop.permute.xlu0 %486
  %488 = vrot.lane.b32.xlu0 %v402, 6
  %v489 = vpop.permute.xlu0 %488
  %490 = vrot.lane.b32.xlu0 %v401, 6
  %v491 = vpop.permute.xlu0 %490
  %492 = vrot.lane.b32.xlu0 %v405, 6
  %v493 = vpop.permute.xlu0 %492
  %494 = vrot.lane.b32.xlu0 %v404, 6
  %v495 = vpop.permute.xlu0 %494
  %496 = vrot.lane.b32.xlu0 %v408, 6
  %v497 = vpop.permute.xlu0 %496
  %498 = vrot.lane.b32.xlu0 %v407, 6
  %v499 = vpop.permute.xlu0 %498
  %500 = vrot.lane.b32.xlu0 %v411, 6
  %v501 = vpop.permute.xlu0 %500
  %502 = vrot.lane.b32.xlu0 %v410, 6
  %v503 = vpop.permute.xlu0 %502
  %504 = vrot.lane.b32.xlu0 %v414, 6
  %v505 = vpop.permute.xlu0 %504
  %506 = vrot.lane.b32.xlu0 %v413, 6
  %v507 = vpop.permute.xlu0 %506
  %508 = vrot.lane.b32.xlu0 %v417, 6
  %v509 = vpop.permute.xlu0 %508
  %510 = vrot.lane.b32.xlu0 %v416, 6
  %v511 = vpop.permute.xlu0 %510
  %512 = vrot.lane.b32.xlu0 %v420, 6
  %v513 = vpop.permute.xlu0 %512
  %514 = vrot.lane.b32.xlu0 %v419, 6
  %v515 = vpop.permute.xlu0 %514
  %516 = vrot.lane.b32.xlu0 %v423, 6
  %v517 = vpop.permute.xlu0 %516
  %518 = vrot.lane.b32.xlu0 %v422, 6
  %v519 = vpop.permute.xlu0 %518
  %520 = vrot.lane.b32.xlu0 %v426, 6
  %v521 = vpop.permute.xlu0 %520
  %522 = vrot.lane.b32.xlu0 %v425, 6
  %v523 = vpop.permute.xlu0 %522
  %524 = vrot.lane.b32.xlu0 %v429, 6
  %v525 = vpop.permute.xlu0 %524
  %526 = vrot.lane.b32.xlu0 %v428, 6
  %v527 = vpop.permute.xlu0 %526
  %528 = vrot.lane.b32.xlu0 %v432, 6
  %v529 = vpop.permute.xlu0 %528
  %530 = vrot.lane.b32.xlu0 %v431, 6
  %v531 = vpop.permute.xlu0 %530
  %532 = vrot.lane.b32.xlu0 %v435, 6
  %v533 = vpop.permute.xlu0 %532
  %534 = vrot.lane.b32.xlu0 %v434, 6
  %v535 = vpop.permute.xlu0 %534
  %536 = vrot.lane.b32.xlu0 %v438, 6
  %v537 = vpop.permute.xlu0 %536
  %538 = vrot.lane.b32.xlu0 %v437, 6
  %v539 = vpop.permute.xlu0 %538
  %540 = vrot.lane.b32.xlu0 %v441, 6
  %v541 = vpop.permute.xlu0 %540
  %542 = vrot.lane.b32.xlu0 %v440, 6
  %v543 = vpop.permute.xlu0 %542
  %544 = vrot.lane.b32.xlu0 %v444, 6
  %v545 = vpop.permute.xlu0 %544
  %546 = vrot.lane.b32.xlu0 %v443, 6
  %v547 = vpop.permute.xlu0 %546
  %548 = vrot.lane.b32.xlu0 %v447, 6
  %v549 = vpop.permute.xlu0 %548
  %550 = vrot.lane.b32.xlu0 %v446, 6
  %v551 = vpop.permute.xlu0 %550
  %552 = vrot.lane.b32.xlu0 %v450, 6
  %v553 = vpop.permute.xlu0 %552
  %554 = vrot.lane.b32.xlu0 %v449, 6
  %v555 = vpop.permute.xlu0 %554
  %556 = vrot.lane.b32.xlu0 %v453, 6
  %v557 = vpop.permute.xlu0 %556
  %558 = vrot.lane.b32.xlu0 %v452, 6
  %v559 = vpop.permute.xlu0 %558
  %560 = vrot.lane.b32.xlu0 %v456, 6
  %v561 = vpop.permute.xlu0 %560
  %562 = vrot.lane.b32.xlu0 %v455, 6
  %v563 = vpop.permute.xlu0 %562
  %564 = vrot.lane.b32.xlu0 %v459, 6
  %v565 = vpop.permute.xlu0 %564
  %566 = vrot.lane.b32.xlu0 %v458, 6
  %v567 = vpop.permute.xlu0 %566
  %568 = vrot.lane.b32.xlu0 %v462, 6
  %v569 = vpop.permute.xlu0 %568
  %570 = vrot.lane.b32.xlu0 %v461, 6
  %v571 = vpop.permute.xlu0 %570
  %572 = vrot.lane.b32.xlu0 %v465, 6
  %v573 = vpop.permute.xlu0 %572
  %574 = vrot.lane.b32.xlu0 %v464, 6
  %v575 = vpop.permute.xlu0 %574
  %576 = vrot.lane.b32.xlu0 %v468, 6
  %v577 = vpop.permute.xlu0 %576
  %578 = vrot.lane.b32.xlu0 %v467, 6
  %v579 = vpop.permute.xlu0 %578
  %580 = vrot.lane.b32.xlu0 %v471, 6
  %v581 = vpop.permute.xlu0 %580
  %582 = vrot.lane.b32.xlu0 %v470, 6
  %v583 = vpop.permute.xlu0 %582
  %644 = vrot.lane.b32.xlu0 %v16, 9
  %v645 = vpop.permute.xlu0 %644
  %646 = vrot.lane.b32.xlu0 %v17, 9
  %v647 = vpop.permute.xlu0 %646
  %648 = vrot.lane.b32.xlu0 %v18, 9
  %v649 = vpop.permute.xlu0 %648
  %650 = vrot.lane.b32.xlu0 %v19, 9
  %v651 = vpop.permute.xlu0 %650
  %652 = vrot.lane.b32.xlu0 %v20, 9
  %v653 = vpop.permute.xlu0 %652
  %654 = vrot.lane.b32.xlu0 %v21, 9
  %v655 = vpop.permute.xlu0 %654
  %656 = vrot.lane.b32.xlu0 %v22, 9
  %v657 = vpop.permute.xlu0 %656
  %658 = vrot.lane.b32.xlu0 %v23, 9
  %v659 = vpop.permute.xlu0 %658
  %660 = vrot.lane.b32.xlu0 %v24, 9
  %v661 = vpop.permute.xlu0 %660
  %662 = vrot.lane.b32.xlu0 %v25, 9
  %v663 = vpop.permute.xlu0 %662
  %664 = vrot.lane.b32.xlu0 %v26, 9
  %v665 = vpop.permute.xlu0 %664
  %666 = vrot.lane.b32.xlu0 %v27, 9
  %v667 = vpop.permute.xlu0 %666
  %668 = vrot.lane.b32.xlu0 %v28, 9
  %v669 = vpop.permute.xlu0 %668
  %670 = vrot.lane.b32.xlu0 %v29, 9
  %v671 = vpop.permute.xlu0 %670
  %672 = vrot.lane.b32.xlu0 %v30, 9
  %v673 = vpop.permute.xlu0 %672
  %674 = vrot.lane.b32.xlu0 %v31, 9
  %v675 = vpop.permute.xlu0 %674
  %676 = vrot.lane.b32.xlu0 %v32, 9
  %v677 = vpop.permute.xlu0 %676
  %678 = vrot.lane.b32.xlu0 %v33, 9
  %v679 = vpop.permute.xlu0 %678
  %680 = vrot.lane.b32.xlu0 %v34, 9
  %v681 = vpop.permute.xlu0 %680
  %682 = vrot.lane.b32.xlu0 %v35, 9
  %v683 = vpop.permute.xlu0 %682
  %684 = vrot.lane.b32.xlu0 %v36, 9
  %v685 = vpop.permute.xlu0 %684
  %686 = vrot.lane.b32.xlu0 %v37, 9
  %v687 = vpop.permute.xlu0 %686
  %688 = vrot.lane.b32.xlu0 %v38, 9
  %v689 = vpop.permute.xlu0 %688
  %690 = vrot.lane.b32.xlu0 %v39, 9
  %v691 = vpop.permute.xlu0 %690
  %692 = vrot.lane.b32.xlu0 %v40, 9
  %v693 = vpop.permute.xlu0 %692
  %694 = vrot.lane.b32.xlu0 %v41, 9
  %v695 = vpop.permute.xlu0 %694
  %696 = vrot.lane.b32.xlu0 %v42, 9
  %v697 = vpop.permute.xlu0 %696
  %698 = vrot.lane.b32.xlu0 %v43, 9
  %v699 = vpop.permute.xlu0 %698
  %700 = vrot.lane.b32.xlu0 %v48, 9
  %v701 = vpop.permute.xlu0 %700
  %702 = vrot.lane.b32.xlu0 %v49, 9
  %v703 = vpop.permute.xlu0 %702
  %704 = vrot.lane.b32.xlu0 %v50, 9
  %v705 = vpop.permute.xlu0 %704
  %706 = vrot.lane.b32.xlu0 %v51, 9
  %v707 = vpop.permute.xlu0 %706
  %708 = vrot.lane.b32.xlu0 %v52, 9
  %v709 = vpop.permute.xlu0 %708
  %710 = vrot.lane.b32.xlu0 %v53, 9
  %v711 = vpop.permute.xlu0 %710
  %712 = vrot.lane.b32.xlu0 %v54, 9
  %v713 = vpop.permute.xlu0 %712
  %714 = vrot.lane.b32.xlu0 %v55, 9
  %v715 = vpop.permute.xlu0 %714
  %716 = vrot.lane.b32.xlu0 %v56, 9
  %v717 = vpop.permute.xlu0 %716
  %718 = vrot.lane.b32.xlu0 %v57, 9
  %v719 = vpop.permute.xlu0 %718
  %720 = vrot.lane.b32.xlu0 %v58, 9
  %v721 = vpop.permute.xlu0 %720
  %722 = vrot.lane.b32.xlu0 %v59, 9
  %v723 = vpop.permute.xlu0 %722
  %724 = vrot.lane.b32.xlu0 %v60, 9
  %v725 = vpop.permute.xlu0 %724
  %726 = vrot.lane.b32.xlu0 %v61, 9
  %v727 = vpop.permute.xlu0 %726
  %728 = vrot.lane.b32.xlu0 %v62, 9
  %v729 = vpop.permute.xlu0 %728
  %730 = vrot.lane.b32.xlu0 %v63, 9
  %v731 = vpop.permute.xlu0 %730
  %732 = vrot.lane.b32.xlu0 %v64, 9
  %v733 = vpop.permute.xlu0 %732
  %734 = vrot.lane.b32.xlu0 %v65, 9
  %v735 = vpop.permute.xlu0 %734
  %736 = vrot.lane.b32.xlu0 %v66, 9
  %v737 = vpop.permute.xlu0 %736
  %738 = vrot.lane.b32.xlu0 %v67, 9
  %v739 = vpop.permute.xlu0 %738
  %740 = vrot.lane.b32.xlu0 %v68, 9
  %v741 = vpop.permute.xlu0 %740
  %742 = vrot.lane.b32.xlu0 %v69, 9
  %v743 = vpop.permute.xlu0 %742
  %744 = vrot.lane.b32.xlu0 %v70, 9
  %v745 = vpop.permute.xlu0 %744
  %746 = vrot.lane.b32.xlu0 %v71, 9
  %v747 = vpop.permute.xlu0 %746
  %748 = vrot.lane.b32.xlu0 %v72, 9
  %v749 = vpop.permute.xlu0 %748
  %750 = vrot.lane.b32.xlu0 %v73, 9
  %v751 = vpop.permute.xlu0 %750
  %752 = vrot.lane.b32.xlu0 %v74, 9
  %v753 = vpop.permute.xlu0 %752
  %754 = vrot.lane.b32.xlu0 %v75, 9
  %v755 = vpop.permute.xlu0 %754
  %v812 = vrot.slane %v42, 1
  %v813 = vrot.slane %v43, 1
  %v814 = vsel %vm134, %v812, %v813
  %v815 = vrot.slane %v74, 1
  %v816 = vrot.slane %v75, 1
  %v817 = vsel %vm134, %v815, %v816
  %818 = vrot.lane.b32.xlu0 %v140, 12
  %v819 = vpop.permute.xlu0 %818
  %820 = vrot.lane.b32.xlu0 %v139, 12
  %v821 = vpop.permute.xlu0 %820
  %822 = vrot.lane.b32.xlu0 %v143, 12
  %v823 = vpop.permute.xlu0 %822
  %824 = vrot.lane.b32.xlu0 %v142, 12
  %v825 = vpop.permute.xlu0 %824
  %826 = vrot.lane.b32.xlu0 %v146, 12
  %v827 = vpop.permute.xlu0 %826
  %828 = vrot.lane.b32.xlu0 %v145, 12
  %v829 = vpop.permute.xlu0 %828
  %830 = vrot.lane.b32.xlu0 %v149, 12
  %v831 = vpop.permute.xlu0 %830
  %832 = vrot.lane.b32.xlu0 %v148, 12
  %v833 = vpop.permute.xlu0 %832
  %834 = vrot.lane.b32.xlu0 %v152, 12
  %v835 = vpop.permute.xlu0 %834
  %836 = vrot.lane.b32.xlu0 %v151, 12
  %v837 = vpop.permute.xlu0 %836
  %838 = vrot.lane.b32.xlu0 %v155, 12
  %v839 = vpop.permute.xlu0 %838
  %840 = vrot.lane.b32.xlu0 %v154, 12
  %v841 = vpop.permute.xlu0 %840
  %842 = vrot.lane.b32.xlu0 %v158, 12
  %v843 = vpop.permute.xlu0 %842
  %844 = vrot.lane.b32.xlu0 %v157, 12
  %v845 = vpop.permute.xlu0 %844
  %846 = vrot.lane.b32.xlu0 %v161, 12
  %v847 = vpop.permute.xlu0 %846
  %848 = vrot.lane.b32.xlu0 %v160, 12
  %v849 = vpop.permute.xlu0 %848
  %850 = vrot.lane.b32.xlu0 %v164, 12
  %v851 = vpop.permute.xlu0 %850
  %852 = vrot.lane.b32.xlu0 %v163, 12
  %v853 = vpop.permute.xlu0 %852
  %854 = vrot.lane.b32.xlu0 %v167, 12
  %v855 = vpop.permute.xlu0 %854
  %856 = vrot.lane.b32.xlu0 %v166, 12
  %v857 = vpop.permute.xlu0 %856
  %858 = vrot.lane.b32.xlu0 %v170, 12
  %v859 = vpop.permute.xlu0 %858
  %860 = vrot.lane.b32.xlu0 %v169, 12
  %v861 = vpop.permute.xlu0 %860
  %862 = vrot.lane.b32.xlu0 %v173, 12
  %v863 = vpop.permute.xlu0 %862
  %864 = vrot.lane.b32.xlu0 %v172, 12
  %v865 = vpop.permute.xlu0 %864
  %866 = vrot.lane.b32.xlu0 %v176, 12
  %v867 = vpop.permute.xlu0 %866
  %868 = vrot.lane.b32.xlu0 %v175, 12
  %v869 = vpop.permute.xlu0 %868
  %870 = vrot.lane.b32.xlu0 %v814, 12
  %v871 = vpop.permute.xlu0 %870
  %872 = vrot.lane.b32.xlu0 %v813, 12
  %v873 = vpop.permute.xlu0 %872
  %874 = vrot.lane.b32.xlu0 %v182, 12
  %v875 = vpop.permute.xlu0 %874
  %876 = vrot.lane.b32.xlu0 %v181, 12
  %v877 = vpop.permute.xlu0 %876
  %878 = vrot.lane.b32.xlu0 %v185, 12
  %v879 = vpop.permute.xlu0 %878
  %880 = vrot.lane.b32.xlu0 %v184, 12
  %v881 = vpop.permute.xlu0 %880
  %882 = vrot.lane.b32.xlu0 %v188, 12
  %v883 = vpop.permute.xlu0 %882
  %884 = vrot.lane.b32.xlu0 %v187, 12
  %v885 = vpop.permute.xlu0 %884
  %886 = vrot.lane.b32.xlu0 %v191, 12
  %v887 = vpop.permute.xlu0 %886
  %888 = vrot.lane.b32.xlu0 %v190, 12
  %v889 = vpop.permute.xlu0 %888
  %890 = vrot.lane.b32.xlu0 %v194, 12
  %v891 = vpop.permute.xlu0 %890
  %892 = vrot.lane.b32.xlu0 %v193, 12
  %v893 = vpop.permute.xlu0 %892
  %894 = vrot.lane.b32.xlu0 %v197, 12
  %v895 = vpop.permute.xlu0 %894
  %896 = vrot.lane.b32.xlu0 %v196, 12
  %v897 = vpop.permute.xlu0 %896
  %898 = vrot.lane.b32.xlu0 %v200, 12
  %v899 = vpop.permute.xlu0 %898
  %900 = vrot.lane.b32.xlu0 %v199, 12
  %v901 = vpop.permute.xlu0 %900
  %902 = vrot.lane.b32.xlu0 %v203, 12
  %v903 = vpop.permute.xlu0 %902
  %904 = vrot.lane.b32.xlu0 %v202, 12
  %v905 = vpop.permute.xlu0 %904
  %906 = vrot.lane.b32.xlu0 %v206, 12
  %v907 = vpop.permute.xlu0 %906
  %908 = vrot.lane.b32.xlu0 %v205, 12
  %v909 = vpop.permute.xlu0 %908
  %910 = vrot.lane.b32.xlu0 %v209, 12
  %v911 = vpop.permute.xlu0 %910
  %912 = vrot.lane.b32.xlu0 %v208, 12
  %v913 = vpop.permute.xlu0 %912
  %914 = vrot.lane.b32.xlu0 %v212, 12
  %v915 = vpop.permute.xlu0 %914
  %916 = vrot.lane.b32.xlu0 %v211, 12
  %v917 = vpop.permute.xlu0 %916
  %918 = vrot.lane.b32.xlu0 %v215, 12
  %v919 = vpop.permute.xlu0 %918
  %920 = vrot.lane.b32.xlu0 %v214, 12
  %v921 = vpop.permute.xlu0 %920
  %922 = vrot.lane.b32.xlu0 %v218, 12
  %v923 = vpop.permute.xlu0 %922
  %924 = vrot.lane.b32.xlu0 %v217, 12
  %v925 = vpop.permute.xlu0 %924
  %926 = vrot.lane.b32.xlu0 %v817, 12
  %v927 = vpop.permute.xlu0 %926
  %928 = vrot.lane.b32.xlu0 %v816, 12
  %v929 = vpop.permute.xlu0 %928
  %v986 = vrot.slane %v42, 2
  %v987 = vrot.slane %v43, 2
  %v988 = vsel %vm387, %v986, %v987
  %v989 = vrot.slane %v74, 2
  %v990 = vrot.slane %v75, 2
  %v991 = vsel %vm387, %v989, %v990
  %992 = vrot.lane.b32.xlu0 %v393, 15
  %v993 = vpop.permute.xlu0 %992
  %994 = vrot.lane.b32.xlu0 %v392, 15
  %v995 = vpop.permute.xlu0 %994
  %996 = vrot.lane.b32.xlu0 %v396, 15
  %v997 = vpop.permute.xlu0 %996
  %998 = vrot.lane.b32.xlu0 %v395, 15
  %v999 = vpop.permute.xlu0 %998
  %1000 = vrot.lane.b32.xlu0 %v399, 15
  %v1001 = vpop.permute.xlu0 %1000
  %1002 = vrot.lane.b32.xlu0 %v398, 15
  %v1003 = vpop.permute.xlu0 %1002
  %1004 = vrot.lane.b32.xlu0 %v402, 15
  %v1005 = vpop.permute.xlu0 %1004
  %1006 = vrot.lane.b32.xlu0 %v401, 15
  %v1007 = vpop.permute.xlu0 %1006
  %1008 = vrot.lane.b32.xlu0 %v405, 15
  %v1009 = vpop.permute.xlu0 %1008
  %1010 = vrot.lane.b32.xlu0 %v404, 15
  %v1011 = vpop.permute.xlu0 %1010
  %1012 = vrot.lane.b32.xlu0 %v408, 15
  %v1013 = vpop.permute.xlu0 %1012
  %1014 = vrot.lane.b32.xlu0 %v407, 15
  %v1015 = vpop.permute.xlu0 %1014
  %1016 = vrot.lane.b32.xlu0 %v411, 15
  %v1017 = vpop.permute.xlu0 %1016
  %1018 = vrot.lane.b32.xlu0 %v410, 15
  %v1019 = vpop.permute.xlu0 %1018
  %1020 = vrot.lane.b32.xlu0 %v414, 15
  %v1021 = vpop.permute.xlu0 %1020
  %1022 = vrot.lane.b32.xlu0 %v413, 15
  %v1023 = vpop.permute.xlu0 %1022
  %1024 = vrot.lane.b32.xlu0 %v417, 15
  %v1025 = vpop.permute.xlu0 %1024
  %1026 = vrot.lane.b32.xlu0 %v416, 15
  %v1027 = vpop.permute.xlu0 %1026
  %1028 = vrot.lane.b32.xlu0 %v420, 15
  %v1029 = vpop.permute.xlu0 %1028
  %1030 = vrot.lane.b32.xlu0 %v419, 15
  %v1031 = vpop.permute.xlu0 %1030
  %1032 = vrot.lane.b32.xlu0 %v423, 15
  %v1033 = vpop.permute.xlu0 %1032
  %1034 = vrot.lane.b32.xlu0 %v422, 15
  %v1035 = vpop.permute.xlu0 %1034
  %1036 = vrot.lane.b32.xlu0 %v426, 15
  %v1037 = vpop.permute.xlu0 %1036
  %1038 = vrot.lane.b32.xlu0 %v425, 15
  %v1039 = vpop.permute.xlu0 %1038
  %1040 = vrot.lane.b32.xlu0 %v429, 15
  %v1041 = vpop.permute.xlu0 %1040
  %1042 = vrot.lane.b32.xlu0 %v428, 15
  %v1043 = vpop.permute.xlu0 %1042
  %1044 = vrot.lane.b32.xlu0 %v988, 15
  %v1045 = vpop.permute.xlu0 %1044
  %1046 = vrot.lane.b32.xlu0 %v987, 15
  %v1047 = vpop.permute.xlu0 %1046
  %1048 = vrot.lane.b32.xlu0 %v435, 15
  %v1049 = vpop.permute.xlu0 %1048
  %1050 = vrot.lane.b32.xlu0 %v434, 15
  %v1051 = vpop.permute.xlu0 %1050
  %1052 = vrot.lane.b32.xlu0 %v438, 15
  %v1053 = vpop.permute.xlu0 %1052
  %1054 = vrot.lane.b32.xlu0 %v437, 15
  %v1055 = vpop.permute.xlu0 %1054
  %1056 = vrot.lane.b32.xlu0 %v441, 15
  %v1057 = vpop.permute.xlu0 %1056
  %1058 = vrot.lane.b32.xlu0 %v440, 15
  %v1059 = vpop.permute.xlu0 %1058
  %1060 = vrot.lane.b32.xlu0 %v444, 15
  %v1061 = vpop.permute.xlu0 %1060
  %1062 = vrot.lane.b32.xlu0 %v443, 15
  %v1063 = vpop.permute.xlu0 %1062
  %1064 = vrot.lane.b32.xlu0 %v447, 15
  %v1065 = vpop.permute.xlu0 %1064
  %1066 = vrot.lane.b32.xlu0 %v446, 15
  %v1067 = vpop.permute.xlu0 %1066
  %1068 = vrot.lane.b32.xlu0 %v450, 15
  %v1069 = vpop.permute.xlu0 %1068
  %1070 = vrot.lane.b32.xlu0 %v449, 15
  %v1071 = vpop.permute.xlu0 %1070
  %1072 = vrot.lane.b32.xlu0 %v453, 15
  %v1073 = vpop.permute.xlu0 %1072
  %1074 = vrot.lane.b32.xlu0 %v452, 15
  %v1075 = vpop.permute.xlu0 %1074
  %1076 = vrot.lane.b32.xlu0 %v456, 15
  %v1077 = vpop.permute.xlu0 %1076
  %1078 = vrot.lane.b32.xlu0 %v455, 15
  %v1079 = vpop.permute.xlu0 %1078
  %1080 = vrot.lane.b32.xlu0 %v459, 15
  %v1081 = vpop.permute.xlu0 %1080
  %1082 = vrot.lane.b32.xlu0 %v458, 15
  %v1083 = vpop.permute.xlu0 %1082
  %1084 = vrot.lane.b32.xlu0 %v462, 15
  %v1085 = vpop.permute.xlu0 %1084
  %1086 = vrot.lane.b32.xlu0 %v461, 15
  %v1087 = vpop.permute.xlu0 %1086
  %1088 = vrot.lane.b32.xlu0 %v465, 15
  %v1089 = vpop.permute.xlu0 %1088
  %1090 = vrot.lane.b32.xlu0 %v464, 15
  %v1091 = vpop.permute.xlu0 %1090
  %1092 = vrot.lane.b32.xlu0 %v468, 15
  %v1093 = vpop.permute.xlu0 %1092
  %1094 = vrot.lane.b32.xlu0 %v467, 15
  %v1095 = vpop.permute.xlu0 %1094
  %1096 = vrot.lane.b32.xlu0 %v471, 15
  %v1097 = vpop.permute.xlu0 %1096
  %1098 = vrot.lane.b32.xlu0 %v470, 15
  %v1099 = vpop.permute.xlu0 %1098
  %1100 = vrot.lane.b32.xlu0 %v991, 15
  %v1101 = vpop.permute.xlu0 %1100
  %1102 = vrot.lane.b32.xlu0 %v990, 15
  %v1103 = vpop.permute.xlu0 %1102
  %1164 = vrot.lane.b32.xlu0 %v18, 18
  %v1165 = vpop.permute.xlu0 %1164
  %1166 = vrot.lane.b32.xlu0 %v19, 18
  %v1167 = vpop.permute.xlu0 %1166
  %1168 = vrot.lane.b32.xlu0 %v20, 18
  %v1169 = vpop.permute.xlu0 %1168
  %1170 = vrot.lane.b32.xlu0 %v21, 18
  %v1171 = vpop.permute.xlu0 %1170
  %1172 = vrot.lane.b32.xlu0 %v22, 18
  %v1173 = vpop.permute.xlu0 %1172
  %1174 = vrot.lane.b32.xlu0 %v23, 18
  %v1175 = vpop.permute.xlu0 %1174
  %1176 = vrot.lane.b32.xlu0 %v24, 18
  %v1177 = vpop.permute.xlu0 %1176
  %1178 = vrot.lane.b32.xlu0 %v25, 18
  %v1179 = vpop.permute.xlu0 %1178
  %1180 = vrot.lane.b32.xlu0 %v26, 18
  %v1181 = vpop.permute.xlu0 %1180
  %1182 = vrot.lane.b32.xlu0 %v27, 18
  %v1183 = vpop.permute.xlu0 %1182
  %1184 = vrot.lane.b32.xlu0 %v28, 18
  %v1185 = vpop.permute.xlu0 %1184
  %1186 = vrot.lane.b32.xlu0 %v29, 18
  %v1187 = vpop.permute.xlu0 %1186
  %1188 = vrot.lane.b32.xlu0 %v30, 18
  %v1189 = vpop.permute.xlu0 %1188
  %1190 = vrot.lane.b32.xlu0 %v31, 18
  %v1191 = vpop.permute.xlu0 %1190
  %1192 = vrot.lane.b32.xlu0 %v32, 18
  %v1193 = vpop.permute.xlu0 %1192
  %1194 = vrot.lane.b32.xlu0 %v33, 18
  %v1195 = vpop.permute.xlu0 %1194
  %1196 = vrot.lane.b32.xlu0 %v34, 18
  %v1197 = vpop.permute.xlu0 %1196
  %1198 = vrot.lane.b32.xlu0 %v35, 18
  %v1199 = vpop.permute.xlu0 %1198
  %1200 = vrot.lane.b32.xlu0 %v36, 18
  %v1201 = vpop.permute.xlu0 %1200
  %1202 = vrot.lane.b32.xlu0 %v37, 18
  %v1203 = vpop.permute.xlu0 %1202
  %1204 = vrot.lane.b32.xlu0 %v38, 18
  %v1205 = vpop.permute.xlu0 %1204
  %1206 = vrot.lane.b32.xlu0 %v39, 18
  %v1207 = vpop.permute.xlu0 %1206
  %1208 = vrot.lane.b32.xlu0 %v40, 18
  %v1209 = vpop.permute.xlu0 %1208
  %1210 = vrot.lane.b32.xlu0 %v41, 18
  %v1211 = vpop.permute.xlu0 %1210
  %1212 = vrot.lane.b32.xlu0 %v42, 18
  %v1213 = vpop.permute.xlu0 %1212
  %1214 = vrot.lane.b32.xlu0 %v43, 18
  %v1215 = vpop.permute.xlu0 %1214
  %1216 = vrot.lane.b32.xlu0 %v44, 18
  %v1217 = vpop.permute.xlu0 %1216
  %1218 = vrot.lane.b32.xlu0 %v45, 18
  %v1219 = vpop.permute.xlu0 %1218
  %1220 = vrot.lane.b32.xlu0 %v50, 18
  %v1221 = vpop.permute.xlu0 %1220
  %1222 = vrot.lane.b32.xlu0 %v51, 18
  %v1223 = vpop.permute.xlu0 %1222
  %1224 = vrot.lane.b32.xlu0 %v52, 18
  %v1225 = vpop.permute.xlu0 %1224
  %1226 = vrot.lane.b32.xlu0 %v53, 18
  %v1227 = vpop.permute.xlu0 %1226
  %1228 = vrot.lane.b32.xlu0 %v54, 18
  %v1229 = vpop.permute.xlu0 %1228
  %1230 = vrot.lane.b32.xlu0 %v55, 18
  %v1231 = vpop.permute.xlu0 %1230
  %1232 = vrot.lane.b32.xlu0 %v56, 18
  %v1233 = vpop.permute.xlu0 %1232
  %1234 = vrot.lane.b32.xlu0 %v57, 18
  %v1235 = vpop.permute.xlu0 %1234
  %1236 = vrot.lane.b32.xlu0 %v58, 18
  %v1237 = vpop.permute.xlu0 %1236
  %1238 = vrot.lane.b32.xlu0 %v59, 18
  %v1239 = vpop.permute.xlu0 %1238
  %1240 = vrot.lane.b32.xlu0 %v60, 18
  %v1241 = vpop.permute.xlu0 %1240
  %1242 = vrot.lane.b32.xlu0 %v61, 18
  %v1243 = vpop.permute.xlu0 %1242
  %1244 = vrot.lane.b32.xlu0 %v62, 18
  %v1245 = vpop.permute.xlu0 %1244
  %1246 = vrot.lane.b32.xlu0 %v63, 18
  %v1247 = vpop.permute.xlu0 %1246
  %1248 = vrot.lane.b32.xlu0 %v64, 18
  %v1249 = vpop.permute.xlu0 %1248
  %1250 = vrot.lane.b32.xlu0 %v65, 18
  %v1251 = vpop.permute.xlu0 %1250
  %1252 = vrot.lane.b32.xlu0 %v66, 18
  %v1253 = vpop.permute.xlu0 %1252
  %1254 = vrot.lane.b32.xlu0 %v67, 18
  %v1255 = vpop.permute.xlu0 %1254
  %1256 = vrot.lane.b32.xlu0 %v68, 18
  %v1257 = vpop.permute.xlu0 %1256
  %1258 = vrot.lane.b32.xlu0 %v69, 18
  %v1259 = vpop.permute.xlu0 %1258
  %1260 = vrot.lane.b32.xlu0 %v70, 18
  %v1261 = vpop.permute.xlu0 %1260
  %1262 = vrot.lane.b32.xlu0 %v71, 18
  %v1263 = vpop.permute.xlu0 %1262
  %1264 = vrot.lane.b32.xlu0 %v72, 18
  %v1265 = vpop.permute.xlu0 %1264
  %1266 = vrot.lane.b32.xlu0 %v73, 18
  %v1267 = vpop.permute.xlu0 %1266
  %1268 = vrot.lane.b32.xlu0 %v74, 18
  %v1269 = vpop.permute.xlu0 %1268
  %1270 = vrot.lane.b32.xlu0 %v75, 18
  %v1271 = vpop.permute.xlu0 %1270
  %1272 = vrot.lane.b32.xlu0 %v76, 18
  %v1273 = vpop.permute.xlu0 %1272
  %1274 = vrot.lane.b32.xlu0 %v77, 18
  %v1275 = vpop.permute.xlu0 %1274
  %v1332 = vrot.slane %v44, 1
  %v1333 = vrot.slane %v45, 1
  %v1334 = vsel %vm134, %v1332, %v1333
  %v1335 = vrot.slane %v76, 1
  %v1336 = vrot.slane %v77, 1
  %v1337 = vsel %vm134, %v1335, %v1336
  %1338 = vrot.lane.b32.xlu0 %v143, 21
  %v1339 = vpop.permute.xlu0 %1338
  %1340 = vrot.lane.b32.xlu0 %v142, 21
  %v1341 = vpop.permute.xlu0 %1340
  %1342 = vrot.lane.b32.xlu0 %v146, 21
  %v1343 = vpop.permute.xlu0 %1342
  %1344 = vrot.lane.b32.xlu0 %v145, 21
  %v1345 = vpop.permute.xlu0 %1344
  %1346 = vrot.lane.b32.xlu0 %v149, 21
  %v1347 = vpop.permute.xlu0 %1346
  %1348 = vrot.lane.b32.xlu0 %v148, 21
  %v1349 = vpop.permute.xlu0 %1348
  %1350 = vrot.lane.b32.xlu0 %v152, 21
  %v1351 = vpop.permute.xlu0 %1350
  %1352 = vrot.lane.b32.xlu0 %v151, 21
  %v1353 = vpop.permute.xlu0 %1352
  %1354 = vrot.lane.b32.xlu0 %v155, 21
  %v1355 = vpop.permute.xlu0 %1354
  %1356 = vrot.lane.b32.xlu0 %v154, 21
  %v1357 = vpop.permute.xlu0 %1356
  %1358 = vrot.lane.b32.xlu0 %v158, 21
  %v1359 = vpop.permute.xlu0 %1358
  %1360 = vrot.lane.b32.xlu0 %v157, 21
  %v1361 = vpop.permute.xlu0 %1360
  %1362 = vrot.lane.b32.xlu0 %v161, 21
  %v1363 = vpop.permute.xlu0 %1362
  %1364 = vrot.lane.b32.xlu0 %v160, 21
  %v1365 = vpop.permute.xlu0 %1364
  %1366 = vrot.lane.b32.xlu0 %v164, 21
  %v1367 = vpop.permute.xlu0 %1366
  %1368 = vrot.lane.b32.xlu0 %v163, 21
  %v1369 = vpop.permute.xlu0 %1368
  %1370 = vrot.lane.b32.xlu0 %v167, 21
  %v1371 = vpop.permute.xlu0 %1370
  %1372 = vrot.lane.b32.xlu0 %v166, 21
  %v1373 = vpop.permute.xlu0 %1372
  %1374 = vrot.lane.b32.xlu0 %v170, 21
  %v1375 = vpop.permute.xlu0 %1374
  %1376 = vrot.lane.b32.xlu0 %v169, 21
  %v1377 = vpop.permute.xlu0 %1376
  %1378 = vrot.lane.b32.xlu0 %v173, 21
  %v1379 = vpop.permute.xlu0 %1378
  %1380 = vrot.lane.b32.xlu0 %v172, 21
  %v1381 = vpop.permute.xlu0 %1380
  %1382 = vrot.lane.b32.xlu0 %v176, 21
  %v1383 = vpop.permute.xlu0 %1382
  %1384 = vrot.lane.b32.xlu0 %v175, 21
  %v1385 = vpop.permute.xlu0 %1384
  %1386 = vrot.lane.b32.xlu0 %v814, 21
  %v1387 = vpop.permute.xlu0 %1386
  %1388 = vrot.lane.b32.xlu0 %v813, 21
  %v1389 = vpop.permute.xlu0 %1388
  %1390 = vrot.lane.b32.xlu0 %v1334, 21
  %v1391 = vpop.permute.xlu0 %1390
  %1392 = vrot.lane.b32.xlu0 %v1333, 21
  %v1393 = vpop.permute.xlu0 %1392
  %1394 = vrot.lane.b32.xlu0 %v185, 21
  %v1395 = vpop.permute.xlu0 %1394
  %1396 = vrot.lane.b32.xlu0 %v184, 21
  %v1397 = vpop.permute.xlu0 %1396
  %1398 = vrot.lane.b32.xlu0 %v188, 21
  %v1399 = vpop.permute.xlu0 %1398
  %1400 = vrot.lane.b32.xlu0 %v187, 21
  %v1401 = vpop.permute.xlu0 %1400
  %1402 = vrot.lane.b32.xlu0 %v191, 21
  %v1403 = vpop.permute.xlu0 %1402
  %1404 = vrot.lane.b32.xlu0 %v190, 21
  %v1405 = vpop.permute.xlu0 %1404
  %1406 = vrot.lane.b32.xlu0 %v194, 21
  %v1407 = vpop.permute.xlu0 %1406
  %1408 = vrot.lane.b32.xlu0 %v193, 21
  %v1409 = vpop.permute.xlu0 %1408
  %1410 = vrot.lane.b32.xlu0 %v197, 21
  %v1411 = vpop.permute.xlu0 %1410
  %1412 = vrot.lane.b32.xlu0 %v196, 21
  %v1413 = vpop.permute.xlu0 %1412
  %1414 = vrot.lane.b32.xlu0 %v200, 21
  %v1415 = vpop.permute.xlu0 %1414
  %1416 = vrot.lane.b32.xlu0 %v199, 21
  %v1417 = vpop.permute.xlu0 %1416
  %1418 = vrot.lane.b32.xlu0 %v203, 21
  %v1419 = vpop.permute.xlu0 %1418
  %1420 = vrot.lane.b32.xlu0 %v202, 21
  %v1421 = vpop.permute.xlu0 %1420
  %1422 = vrot.lane.b32.xlu0 %v206, 21
  %v1423 = vpop.permute.xlu0 %1422
  %1424 = vrot.lane.b32.xlu0 %v205, 21
  %v1425 = vpop.permute.xlu0 %1424
  %1426 = vrot.lane.b32.xlu0 %v209, 21
  %v1427 = vpop.permute.xlu0 %1426
  %1428 = vrot.lane.b32.xlu0 %v208, 21
  %v1429 = vpop.permute.xlu0 %1428
  %1430 = vrot.lane.b32.xlu0 %v212, 21
  %v1431 = vpop.permute.xlu0 %1430
  %1432 = vrot.lane.b32.xlu0 %v211, 21
  %v1433 = vpop.permute.xlu0 %1432
  %1434 = vrot.lane.b32.xlu0 %v215, 21
  %v1435 = vpop.permute.xlu0 %1434
  %1436 = vrot.lane.b32.xlu0 %v214, 21
  %v1437 = vpop.permute.xlu0 %1436
  %1438 = vrot.lane.b32.xlu0 %v218, 21
  %v1439 = vpop.permute.xlu0 %1438
  %1440 = vrot.lane.b32.xlu0 %v217, 21
  %v1441 = vpop.permute.xlu0 %1440
  %1442 = vrot.lane.b32.xlu0 %v817, 21
  %v1443 = vpop.permute.xlu0 %1442
  %1444 = vrot.lane.b32.xlu0 %v816, 21
  %v1445 = vpop.permute.xlu0 %1444
  %1446 = vrot.lane.b32.xlu0 %v1337, 21
  %v1447 = vpop.permute.xlu0 %1446
  %1448 = vrot.lane.b32.xlu0 %v1336, 21
  %v1449 = vpop.permute.xlu0 %1448
  %v1506 = vrot.slane %v44, 2
  %v1507 = vrot.slane %v45, 2
  %v1508 = vsel %vm387, %v1506, %v1507
  %v1509 = vrot.slane %v76, 2
  %v1510 = vrot.slane %v77, 2
  %v1511 = vsel %vm387, %v1509, %v1510
  %1512 = vrot.lane.b32.xlu0 %v396, 24
  %v1513 = vpop.permute.xlu0 %1512
  %1514 = vrot.lane.b32.xlu0 %v395, 24
  %v1515 = vpop.permute.xlu0 %1514
  %1516 = vrot.lane.b32.xlu0 %v399, 24
  %v1517 = vpop.permute.xlu0 %1516
  %1518 = vrot.lane.b32.xlu0 %v398, 24
  %v1519 = vpop.permute.xlu0 %1518
  %1520 = vrot.lane.b32.xlu0 %v402, 24
  %v1521 = vpop.permute.xlu0 %1520
  %1522 = vrot.lane.b32.xlu0 %v401, 24
  %v1523 = vpop.permute.xlu0 %1522
  %1524 = vrot.lane.b32.xlu0 %v405, 24
  %v1525 = vpop.permute.xlu0 %1524
  %1526 = vrot.lane.b32.xlu0 %v404, 24
  %v1527 = vpop.permute.xlu0 %1526
  %1528 = vrot.lane.b32.xlu0 %v408, 24
  %v1529 = vpop.permute.xlu0 %1528
  %1530 = vrot.lane.b32.xlu0 %v407, 24
  %v1531 = vpop.permute.xlu0 %1530
  %1532 = vrot.lane.b32.xlu0 %v411, 24
  %v1533 = vpop.permute.xlu0 %1532
  %1534 = vrot.lane.b32.xlu0 %v410, 24
  %v1535 = vpop.permute.xlu0 %1534
  %1536 = vrot.lane.b32.xlu0 %v414, 24
  %v1537 = vpop.permute.xlu0 %1536
  %1538 = vrot.lane.b32.xlu0 %v413, 24
  %v1539 = vpop.permute.xlu0 %1538
  %1540 = vrot.lane.b32.xlu0 %v417, 24
  %v1541 = vpop.permute.xlu0 %1540
  %1542 = vrot.lane.b32.xlu0 %v416, 24
  %v1543 = vpop.permute.xlu0 %1542
  %1544 = vrot.lane.b32.xlu0 %v420, 24
  %v1545 = vpop.permute.xlu0 %1544
  %1546 = vrot.lane.b32.xlu0 %v419, 24
  %v1547 = vpop.permute.xlu0 %1546
  %1548 = vrot.lane.b32.xlu0 %v423, 24
  %v1549 = vpop.permute.xlu0 %1548
  %1550 = vrot.lane.b32.xlu0 %v422, 24
  %v1551 = vpop.permute.xlu0 %1550
  %1552 = vrot.lane.b32.xlu0 %v426, 24
  %v1553 = vpop.permute.xlu0 %1552
  %1554 = vrot.lane.b32.xlu0 %v425, 24
  %v1555 = vpop.permute.xlu0 %1554
  %1556 = vrot.lane.b32.xlu0 %v429, 24
  %v1557 = vpop.permute.xlu0 %1556
  %1558 = vrot.lane.b32.xlu0 %v428, 24
  %v1559 = vpop.permute.xlu0 %1558
  %1560 = vrot.lane.b32.xlu0 %v988, 24
  %v1561 = vpop.permute.xlu0 %1560
  %1562 = vrot.lane.b32.xlu0 %v987, 24
  %v1563 = vpop.permute.xlu0 %1562
  %1564 = vrot.lane.b32.xlu0 %v1508, 24
  %v1565 = vpop.permute.xlu0 %1564
  %1566 = vrot.lane.b32.xlu0 %v1507, 24
  %v1567 = vpop.permute.xlu0 %1566
  %1568 = vrot.lane.b32.xlu0 %v438, 24
  %v1569 = vpop.permute.xlu0 %1568
  %1570 = vrot.lane.b32.xlu0 %v437, 24
  %v1571 = vpop.permute.xlu0 %1570
  %1572 = vrot.lane.b32.xlu0 %v441, 24
  %v1573 = vpop.permute.xlu0 %1572
  %1574 = vrot.lane.b32.xlu0 %v440, 24
  %v1575 = vpop.permute.xlu0 %1574
  %1576 = vrot.lane.b32.xlu0 %v444, 24
  %v1577 = vpop.permute.xlu0 %1576
  %1578 = vrot.lane.b32.xlu0 %v443, 24
  %v1579 = vpop.permute.xlu0 %1578
  %1580 = vrot.lane.b32.xlu0 %v447, 24
  %v1581 = vpop.permute.xlu0 %1580
  %1582 = vrot.lane.b32.xlu0 %v446, 24
  %v1583 = vpop.permute.xlu0 %1582
  %1584 = vrot.lane.b32.xlu0 %v450, 24
  %v1585 = vpop.permute.xlu0 %1584
  %1586 = vrot.lane.b32.xlu0 %v449, 24
  %v1587 = vpop.permute.xlu0 %1586
  %1588 = vrot.lane.b32.xlu0 %v453, 24
  %v1589 = vpop.permute.xlu0 %1588
  %1590 = vrot.lane.b32.xlu0 %v452, 24
  %v1591 = vpop.permute.xlu0 %1590
  %1592 = vrot.lane.b32.xlu0 %v456, 24
  %v1593 = vpop.permute.xlu0 %1592
  %1594 = vrot.lane.b32.xlu0 %v455, 24
  %v1595 = vpop.permute.xlu0 %1594
  %1596 = vrot.lane.b32.xlu0 %v459, 24
  %v1597 = vpop.permute.xlu0 %1596
  %1598 = vrot.lane.b32.xlu0 %v458, 24
  %v1599 = vpop.permute.xlu0 %1598
  %1600 = vrot.lane.b32.xlu0 %v462, 24
  %v1601 = vpop.permute.xlu0 %1600
  %1602 = vrot.lane.b32.xlu0 %v461, 24
  %v1603 = vpop.permute.xlu0 %1602
  %1604 = vrot.lane.b32.xlu0 %v465, 24
  %v1605 = vpop.permute.xlu0 %1604
  %1606 = vrot.lane.b32.xlu0 %v464, 24
  %v1607 = vpop.permute.xlu0 %1606
  %1608 = vrot.lane.b32.xlu0 %v468, 24
  %v1609 = vpop.permute.xlu0 %1608
  %1610 = vrot.lane.b32.xlu0 %v467, 24
  %v1611 = vpop.permute.xlu0 %1610
  %1612 = vrot.lane.b32.xlu0 %v471, 24
  %v1613 = vpop.permute.xlu0 %1612
  %1614 = vrot.lane.b32.xlu0 %v470, 24
  %v1615 = vpop.permute.xlu0 %1614
  %1616 = vrot.lane.b32.xlu0 %v991, 24
  %v1617 = vpop.permute.xlu0 %1616
  %1618 = vrot.lane.b32.xlu0 %v990, 24
  %v1619 = vpop.permute.xlu0 %1618
  %1620 = vrot.lane.b32.xlu0 %v1511, 24
  %v1621 = vpop.permute.xlu0 %1620
  %1622 = vrot.lane.b32.xlu0 %v1510, 24
  %v1623 = vpop.permute.xlu0 %1622
  %vm1680 = vcmask 23552
  %v1681 = vsel %vm1680, %v14, %v220
  %v1682 = vsel %vm1680, %v15, %v222
  %v1683 = vsel %vm1680, %v16, %v224
  %v1684 = vsel %vm1680, %v17, %v226
  %v1685 = vsel %vm1680, %v18, %v228
  %v1686 = vsel %vm1680, %v19, %v230
  %v1687 = vsel %vm1680, %v20, %v232
  %v1688 = vsel %vm1680, %v21, %v234
  %v1689 = vsel %vm1680, %v22, %v236
  %v1690 = vsel %vm1680, %v23, %v238
  %v1691 = vsel %vm1680, %v24, %v240
  %v1692 = vsel %vm1680, %v25, %v242
  %v1693 = vsel %vm1680, %v26, %v244
  %v1694 = vsel %vm1680, %v27, %v246
  %v1695 = vsel %vm1680, %v28, %v248
  %v1696 = vsel %vm1680, %v29, %v250
  %v1697 = vsel %vm1680, %v30, %v252
  %v1698 = vsel %vm1680, %v31, %v254
  %v1699 = vsel %vm1680, %v32, %v256
  %v1700 = vsel %vm1680, %v33, %v258
  %v1701 = vsel %vm1680, %v34, %v260
  %v1702 = vsel %vm1680, %v35, %v262
  %v1703 = vsel %vm1680, %v36, %v264
  %v1704 = vsel %vm1680, %v37, %v266
  %v1705 = vsel %vm1680, %v38, %v268
  %v1706 = vsel %vm1680, %v39, %v270
  %v1707 = vsel %vm1680, %v40, %v272
  %v1708 = vsel %vm1680, %v41, %v274
  %v1709 = vsel %vm1680, %v46, %v276
  %v1710 = vsel %vm1680, %v47, %v278
  %v1711 = vsel %vm1680, %v48, %v280
  %v1712 = vsel %vm1680, %v49, %v282
  %v1713 = vsel %vm1680, %v50, %v284
  %v1714 = vsel %vm1680, %v51, %v286
  %v1715 = vsel %vm1680, %v52, %v288
  %v1716 = vsel %vm1680, %v53, %v290
  %v1717 = vsel %vm1680, %v54, %v292
  %v1718 = vsel %vm1680, %v55, %v294
  %v1719 = vsel %vm1680, %v56, %v296
  %v1720 = vsel %vm1680, %v57, %v298
  %v1721 = vsel %vm1680, %v58, %v300
  %v1722 = vsel %vm1680, %v59, %v302
  %v1723 = vsel %vm1680, %v60, %v304
  %v1724 = vsel %vm1680, %v61, %v306
  %v1725 = vsel %vm1680, %v62, %v308
  %v1726 = vsel %vm1680, %v63, %v310
  %v1727 = vsel %vm1680, %v64, %v312
  %v1728 = vsel %vm1680, %v65, %v314
  %v1729 = vsel %vm1680, %v66, %v316
  %v1730 = vsel %vm1680, %v67, %v318
  %v1731 = vsel %vm1680, %v68, %v320
  %v1732 = vsel %vm1680, %v69, %v322
  %v1733 = vsel %vm1680, %v70, %v324
  %v1734 = vsel %vm1680, %v71, %v326
  %v1735 = vsel %vm1680, %v72, %v328
  %v1736 = vsel %vm1680, %v73, %v330
  %vm1737 = vcmask 48128
  %v1738 = vsel %vm1737, %v1681, %v473
  %v1739 = vsel %vm1737, %v1682, %v475
  %v1740 = vsel %vm1737, %v1683, %v477
  %v1741 = vsel %vm1737, %v1684, %v479
  %v1742 = vsel %vm1737, %v1685, %v481
  %v1743 = vsel %vm1737, %v1686, %v483
  %v1744 = vsel %vm1737, %v1687, %v485
  %v1745 = vsel %vm1737, %v1688, %v487
  %v1746 = vsel %vm1737, %v1689, %v489
  %v1747 = vsel %vm1737, %v1690, %v491
  %v1748 = vsel %vm1737, %v1691, %v493
  %v1749 = vsel %vm1737, %v1692, %v495
  %v1750 = vsel %vm1737, %v1693, %v497
  %v1751 = vsel %vm1737, %v1694, %v499
  %v1752 = vsel %vm1737, %v1695, %v501
  %v1753 = vsel %vm1737, %v1696, %v503
  %v1754 = vsel %vm1737, %v1697, %v505
  %v1755 = vsel %vm1737, %v1698, %v507
  %v1756 = vsel %vm1737, %v1699, %v509
  %v1757 = vsel %vm1737, %v1700, %v511
  %v1758 = vsel %vm1737, %v1701, %v513
  %v1759 = vsel %vm1737, %v1702, %v515
  %v1760 = vsel %vm1737, %v1703, %v517
  %v1761 = vsel %vm1737, %v1704, %v519
  %v1762 = vsel %vm1737, %v1705, %v521
  %v1763 = vsel %vm1737, %v1706, %v523
  %v1764 = vsel %vm1737, %v1707, %v525
  %v1765 = vsel %vm1737, %v1708, %v527
  %v1766 = vsel %vm1737, %v1709, %v529
  %v1767 = vsel %vm1737, %v1710, %v531
  %v1768 = vsel %vm1737, %v1711, %v533
  %v1769 = vsel %vm1737, %v1712, %v535
  %v1770 = vsel %vm1737, %v1713, %v537
  %v1771 = vsel %vm1737, %v1714, %v539
  %v1772 = vsel %vm1737, %v1715, %v541
  %v1773 = vsel %vm1737, %v1716, %v543
  %v1774 = vsel %vm1737, %v1717, %v545
  %v1775 = vsel %vm1737, %v1718, %v547
  %v1776 = vsel %vm1737, %v1719, %v549
  %v1777 = vsel %vm1737, %v1720, %v551
  %v1778 = vsel %vm1737, %v1721, %v553
  %v1779 = vsel %vm1737, %v1722, %v555
  %v1780 = vsel %vm1737, %v1723, %v557
  %v1781 = vsel %vm1737, %v1724, %v559
  %v1782 = vsel %vm1737, %v1725, %v561
  %v1783 = vsel %vm1737, %v1726, %v563
  %v1784 = vsel %vm1737, %v1727, %v565
  %v1785 = vsel %vm1737, %v1728, %v567
  %v1786 = vsel %vm1737, %v1729, %v569
  %v1787 = vsel %vm1737, %v1730, %v571
  %v1788 = vsel %vm1737, %v1731, %v573
  %v1789 = vsel %vm1737, %v1732, %v575
  %v1790 = vsel %vm1737, %v1733, %v577
  %v1791 = vsel %vm1737, %v1734, %v579
  %v1792 = vsel %vm1737, %v1735, %v581
  %v1793 = vsel %vm1737, %v1736, %v583
  %vm1794 = vcmask 72704
  %v1795 = vsel %vm1794, %v1738, %v645
  %v1796 = vsel %vm1794, %v1739, %v647
  %v1797 = vsel %vm1794, %v1740, %v649
  %v1798 = vsel %vm1794, %v1741, %v651
  %v1799 = vsel %vm1794, %v1742, %v653
  %v1800 = vsel %vm1794, %v1743, %v655
  %v1801 = vsel %vm1794, %v1744, %v657
  %v1802 = vsel %vm1794, %v1745, %v659
  %v1803 = vsel %vm1794, %v1746, %v661
  %v1804 = vsel %vm1794, %v1747, %v663
  %v1805 = vsel %vm1794, %v1748, %v665
  %v1806 = vsel %vm1794, %v1749, %v667
  %v1807 = vsel %vm1794, %v1750, %v669
  %v1808 = vsel %vm1794, %v1751, %v671
  %v1809 = vsel %vm1794, %v1752, %v673
  %v1810 = vsel %vm1794, %v1753, %v675
  %v1811 = vsel %vm1794, %v1754, %v677
  %v1812 = vsel %vm1794, %v1755, %v679
  %v1813 = vsel %vm1794, %v1756, %v681
  %v1814 = vsel %vm1794, %v1757, %v683
  %v1815 = vsel %vm1794, %v1758, %v685
  %v1816 = vsel %vm1794, %v1759, %v687
  %v1817 = vsel %vm1794, %v1760, %v689
  %v1818 = vsel %vm1794, %v1761, %v691
  %v1819 = vsel %vm1794, %v1762, %v693
  %v1820 = vsel %vm1794, %v1763, %v695
  %v1821 = vsel %vm1794, %v1764, %v697
  %v1822 = vsel %vm1794, %v1765, %v699
  %v1823 = vsel %vm1794, %v1766, %v701
  %v1824 = vsel %vm1794, %v1767, %v703
  %v1825 = vsel %vm1794, %v1768, %v705
  %v1826 = vsel %vm1794, %v1769, %v707
  %v1827 = vsel %vm1794, %v1770, %v709
  %v1828 = vsel %vm1794, %v1771, %v711
  %v1829 = vsel %vm1794, %v1772, %v713
  %v1830 = vsel %vm1794, %v1773, %v715
  %v1831 = vsel %vm1794, %v1774, %v717
  %v1832 = vsel %vm1794, %v1775, %v719
  %v1833 = vsel %vm1794, %v1776, %v721
  %v1834 = vsel %vm1794, %v1777, %v723
  %v1835 = vsel %vm1794, %v1778, %v725
  %v1836 = vsel %vm1794, %v1779, %v727
  %v1837 = vsel %vm1794, %v1780, %v729
  %v1838 = vsel %vm1794, %v1781, %v731
  %v1839 = vsel %vm1794, %v1782, %v733
  %v1840 = vsel %vm1794, %v1783, %v735
  %v1841 = vsel %vm1794, %v1784, %v737
  %v1842 = vsel %vm1794, %v1785, %v739
  %v1843 = vsel %vm1794, %v1786, %v741
  %v1844 = vsel %vm1794, %v1787, %v743
  %v1845 = vsel %vm1794, %v1788, %v745
  %v1846 = vsel %vm1794, %v1789, %v747
  %v1847 = vsel %vm1794, %v1790, %v749
  %v1848 = vsel %vm1794, %v1791, %v751
  %v1849 = vsel %vm1794, %v1792, %v753
  %v1850 = vsel %vm1794, %v1793, %v755
  %vm1851 = vcmask 97280
  %v1852 = vsel %vm1851, %v1795, %v819
  %v1853 = vsel %vm1851, %v1796, %v821
  %v1854 = vsel %vm1851, %v1797, %v823
  %v1855 = vsel %vm1851, %v1798, %v825
  %v1856 = vsel %vm1851, %v1799, %v827
  %v1857 = vsel %vm1851, %v1800, %v829
  %v1858 = vsel %vm1851, %v1801, %v831
  %v1859 = vsel %vm1851, %v1802, %v833
  %v1860 = vsel %vm1851, %v1803, %v835
  %v1861 = vsel %vm1851, %v1804, %v837
  %v1862 = vsel %vm1851, %v1805, %v839
  %v1863 = vsel %vm1851, %v1806, %v841
  %v1864 = vsel %vm1851, %v1807, %v843
  %v1865 = vsel %vm1851, %v1808, %v845
  %v1866 = vsel %vm1851, %v1809, %v847
  %v1867 = vsel %vm1851, %v1810, %v849
  %v1868 = vsel %vm1851, %v1811, %v851
  %v1869 = vsel %vm1851, %v1812, %v853
  %v1870 = vsel %vm1851, %v1813, %v855
  %v1871 = vsel %vm1851, %v1814, %v857
  %v1872 = vsel %vm1851, %v1815, %v859
  %v1873 = vsel %vm1851, %v1816, %v861
  %v1874 = vsel %vm1851, %v1817, %v863
  %v1875 = vsel %vm1851, %v1818, %v865
  %v1876 = vsel %vm1851, %v1819, %v867
  %v1877 = vsel %vm1851, %v1820, %v869
  %v1878 = vsel %vm1851, %v1821, %v871
  %v1879 = vsel %vm1851, %v1822, %v873
  %v1880 = vsel %vm1851, %v1823, %v875
  %v1881 = vsel %vm1851, %v1824, %v877
  %v1882 = vsel %vm1851, %v1825, %v879
  %v1883 = vsel %vm1851, %v1826, %v881
  %v1884 = vsel %vm1851, %v1827, %v883
  %v1885 = vsel %vm1851, %v1828, %v885
  %v1886 = vsel %vm1851, %v1829, %v887
  %v1887 = vsel %vm1851, %v1830, %v889
  %v1888 = vsel %vm1851, %v1831, %v891
  %v1889 = vsel %vm1851, %v1832, %v893
  %v1890 = vsel %vm1851, %v1833, %v895
  %v1891 = vsel %vm1851, %v1834, %v897
  %v1892 = vsel %vm1851, %v1835, %v899
  %v1893 = vsel %vm1851, %v1836, %v901
  %v1894 = vsel %vm1851, %v1837, %v903
  %v1895 = vsel %vm1851, %v1838, %v905
  %v1896 = vsel %vm1851, %v1839, %v907
  %v1897 = vsel %vm1851, %v1840, %v909
  %v1898 = vsel %vm1851, %v1841, %v911
  %v1899 = vsel %vm1851, %v1842, %v913
  %v1900 = vsel %vm1851, %v1843, %v915
  %v1901 = vsel %vm1851, %v1844, %v917
  %v1902 = vsel %vm1851, %v1845, %v919
  %v1903 = vsel %vm1851, %v1846, %v921
  %v1904 = vsel %vm1851, %v1847, %v923
  %v1905 = vsel %vm1851, %v1848, %v925
  %v1906 = vsel %vm1851, %v1849, %v927
  %v1907 = vsel %vm1851, %v1850, %v929
  %vm1908 = vcmask 121856
  %v1909 = vsel %vm1908, %v1852, %v993
  %v1910 = vsel %vm1908, %v1853, %v995
  %v1911 = vsel %vm1908, %v1854, %v997
  %v1912 = vsel %vm1908, %v1855, %v999
  %v1913 = vsel %vm1908, %v1856, %v1001
  %v1914 = vsel %vm1908, %v1857, %v1003
  %v1915 = vsel %vm1908, %v1858, %v1005
  %v1916 = vsel %vm1908, %v1859, %v1007
  %v1917 = vsel %vm1908, %v1860, %v1009
  %v1918 = vsel %vm1908, %v1861, %v1011
  %v1919 = vsel %vm1908, %v1862, %v1013
  %v1920 = vsel %vm1908, %v1863, %v1015
  %v1921 = vsel %vm1908, %v1864, %v1017
  %v1922 = vsel %vm1908, %v1865, %v1019
  %v1923 = vsel %vm1908, %v1866, %v1021
  %v1924 = vsel %vm1908, %v1867, %v1023
  %v1925 = vsel %vm1908, %v1868, %v1025
  %v1926 = vsel %vm1908, %v1869, %v1027
  %v1927 = vsel %vm1908, %v1870, %v1029
  %v1928 = vsel %vm1908, %v1871, %v1031
  %v1929 = vsel %vm1908, %v1872, %v1033
  %v1930 = vsel %vm1908, %v1873, %v1035
  %v1931 = vsel %vm1908, %v1874, %v1037
  %v1932 = vsel %vm1908, %v1875, %v1039
  %v1933 = vsel %vm1908, %v1876, %v1041
  %v1934 = vsel %vm1908, %v1877, %v1043
  %v1935 = vsel %vm1908, %v1878, %v1045
  %v1936 = vsel %vm1908, %v1879, %v1047
  %v1937 = vsel %vm1908, %v1880, %v1049
  %v1938 = vsel %vm1908, %v1881, %v1051
  %v1939 = vsel %vm1908, %v1882, %v1053
  %v1940 = vsel %vm1908, %v1883, %v1055
  %v1941 = vsel %vm1908, %v1884, %v1057
  %v1942 = vsel %vm1908, %v1885, %v1059
  %v1943 = vsel %vm1908, %v1886, %v1061
  %v1944 = vsel %vm1908, %v1887, %v1063
  %v1945 = vsel %vm1908, %v1888, %v1065
  %v1946 = vsel %vm1908, %v1889, %v1067
  %v1947 = vsel %vm1908, %v1890, %v1069
  %v1948 = vsel %vm1908, %v1891, %v1071
  %v1949 = vsel %vm1908, %v1892, %v1073
  %v1950 = vsel %vm1908, %v1893, %v1075
  %v1951 = vsel %vm1908, %v1894, %v1077
  %v1952 = vsel %vm1908, %v1895, %v1079
  %v1953 = vsel %vm1908, %v1896, %v1081
  %v1954 = vsel %vm1908, %v1897, %v1083
  %v1955 = vsel %vm1908, %v1898, %v1085
  %v1956 = vsel %vm1908, %v1899, %v1087
  %v1957 = vsel %vm1908, %v1900, %v1089
  %v1958 = vsel %vm1908, %v1901, %v1091
  %v1959 = vsel %vm1908, %v1902, %v1093
  %v1960 = vsel %vm1908, %v1903, %v1095
  %v1961 = vsel %vm1908, %v1904, %v1097
  %v1962 = vsel %vm1908, %v1905, %v1099
  %v1963 = vsel %vm1908, %v1906, %v1101
  %v1964 = vsel %vm1908, %v1907, %v1103
  %vm1965 = vcmask 146432
  %v1966 = vsel %vm1965, %v1909, %v1165
  %v1967 = vsel %vm1965, %v1910, %v1167
  %v1968 = vsel %vm1965, %v1911, %v1169
  %v1969 = vsel %vm1965, %v1912, %v1171
  %v1970 = vsel %vm1965, %v1913, %v1173
  %v1971 = vsel %vm1965, %v1914, %v1175
  %v1972 = vsel %vm1965, %v1915, %v1177
  %v1973 = vsel %vm1965, %v1916, %v1179
  %v1974 = vsel %vm1965, %v1917, %v1181
  %v1975 = vsel %vm1965, %v1918, %v1183
  %v1976 = vsel %vm1965, %v1919, %v1185
  %v1977 = vsel %vm1965, %v1920, %v1187
  %v1978 = vsel %vm1965, %v1921, %v1189
  %v1979 = vsel %vm1965, %v1922, %v1191
  %v1980 = vsel %vm1965, %v1923, %v1193
  %v1981 = vsel %vm1965, %v1924, %v1195
  %v1982 = vsel %vm1965, %v1925, %v1197
  %v1983 = vsel %vm1965, %v1926, %v1199
  %v1984 = vsel %vm1965, %v1927, %v1201
  %v1985 = vsel %vm1965, %v1928, %v1203
  %v1986 = vsel %vm1965, %v1929, %v1205
  %v1987 = vsel %vm1965, %v1930, %v1207
  %v1988 = vsel %vm1965, %v1931, %v1209
  %v1989 = vsel %vm1965, %v1932, %v1211
  %v1990 = vsel %vm1965, %v1933, %v1213
  %v1991 = vsel %vm1965, %v1934, %v1215
  %v1992 = vsel %vm1965, %v1935, %v1217
  %v1993 = vsel %vm1965, %v1936, %v1219
  %v1994 = vsel %vm1965, %v1937, %v1221
  %v1995 = vsel %vm1965, %v1938, %v1223
  %v1996 = vsel %vm1965, %v1939, %v1225
  %v1997 = vsel %vm1965, %v1940, %v1227
  %v1998 = vsel %vm1965, %v1941, %v1229
  %v1999 = vsel %vm1965, %v1942, %v1231
  %v2000 = vsel %vm1965, %v1943, %v1233
  %v2001 = vsel %vm1965, %v1944, %v1235
  %v2002 = vsel %vm1965, %v1945, %v1237
  %v2003 = vsel %vm1965, %v1946, %v1239
  %v2004 = vsel %vm1965, %v1947, %v1241
  %v2005 = vsel %vm1965, %v1948, %v1243
  %v2006 = vsel %vm1965, %v1949, %v1245
  %v2007 = vsel %vm1965, %v1950, %v1247
  %v2008 = vsel %vm1965, %v1951, %v1249
  %v2009 = vsel %vm1965, %v1952, %v1251
  %v2010 = vsel %vm1965, %v1953, %v1253
  %v2011 = vsel %vm1965, %v1954, %v1255
  %v2012 = vsel %vm1965, %v1955, %v1257
  %v2013 = vsel %vm1965, %v1956, %v1259
  %v2014 = vsel %vm1965, %v1957, %v1261
  %v2015 = vsel %vm1965, %v1958, %v1263
  %v2016 = vsel %vm1965, %v1959, %v1265
  %v2017 = vsel %vm1965, %v1960, %v1267
  %v2018 = vsel %vm1965, %v1961, %v1269
  %v2019 = vsel %vm1965, %v1962, %v1271
  %v2020 = vsel %vm1965, %v1963, %v1273
  %v2021 = vsel %vm1965, %v1964, %v1275
  %vm2022 = vcmask 171008
  %v2023 = vsel %vm2022, %v1966, %v1339
  %v2024 = vsel %vm2022, %v1967, %v1341
  %v2025 = vsel %vm2022, %v1968, %v1343
  %v2026 = vsel %vm2022, %v1969, %v1345
  %v2027 = vsel %vm2022, %v1970, %v1347
  %v2028 = vsel %vm2022, %v1971, %v1349
  %v2029 = vsel %vm2022, %v1972, %v1351
  %v2030 = vsel %vm2022, %v1973, %v1353
  %v2031 = vsel %vm2022, %v1974, %v1355
  %v2032 = vsel %vm2022, %v1975, %v1357
  %v2033 = vsel %vm2022, %v1976, %v1359
  %v2034 = vsel %vm2022, %v1977, %v1361
  %v2035 = vsel %vm2022, %v1978, %v1363
  %v2036 = vsel %vm2022, %v1979, %v1365
  %v2037 = vsel %vm2022, %v1980, %v1367
  %v2038 = vsel %vm2022, %v1981, %v1369
  %v2039 = vsel %vm2022, %v1982, %v1371
  %v2040 = vsel %vm2022, %v1983, %v1373
  %v2041 = vsel %vm2022, %v1984, %v1375
  %v2042 = vsel %vm2022, %v1985, %v1377
  %v2043 = vsel %vm2022, %v1986, %v1379
  %v2044 = vsel %vm2022, %v1987, %v1381
  %v2045 = vsel %vm2022, %v1988, %v1383
  %v2046 = vsel %vm2022, %v1989, %v1385
  %v2047 = vsel %vm2022, %v1990, %v1387
  %v2048 = vsel %vm2022, %v1991, %v1389
  %v2049 = vsel %vm2022, %v1992, %v1391
  %v2050 = vsel %vm2022, %v1993, %v1393
  %v2051 = vsel %vm2022, %v1994, %v1395
  %v2052 = vsel %vm2022, %v1995, %v1397
  %v2053 = vsel %vm2022, %v1996, %v1399
  %v2054 = vsel %vm2022, %v1997, %v1401
  %v2055 = vsel %vm2022, %v1998, %v1403
  %v2056 = vsel %vm2022, %v1999, %v1405
  %v2057 = vsel %vm2022, %v2000, %v1407
  %v2058 = vsel %vm2022, %v2001, %v1409
  %v2059 = vsel %vm2022, %v2002, %v1411
  %v2060 = vsel %vm2022, %v2003, %v1413
  %v2061 = vsel %vm2022, %v2004, %v1415
  %v2062 = vsel %vm2022, %v2005, %v1417
  %v2063 = vsel %vm2022, %v2006, %v1419
  %v2064 = vsel %vm2022, %v2007, %v1421
  %v2065 = vsel %vm2022, %v2008, %v1423
  %v2066 = vsel %vm2022, %v2009, %v1425
  %v2067 = vsel %vm2022, %v2010, %v1427
  %v2068 = vsel %vm2022, %v2011, %v1429
  %v2069 = vsel %vm2022, %v2012, %v1431
  %v2070 = vsel %vm2022, %v2013, %v1433
  %v2071 = vsel %vm2022, %v2014, %v1435
  %v2072 = vsel %vm2022, %v2015, %v1437
  %v2073 = vsel %vm2022, %v2016, %v1439
  %v2074 = vsel %vm2022, %v2017, %v1441
  %v2075 = vsel %vm2022, %v2018, %v1443
  %v2076 = vsel %vm2022, %v2019, %v1445
  %v2077 = vsel %vm2022, %v2020, %v1447
  %v2078 = vsel %vm2022, %v2021, %v1449
  %vm2079 = vcmask 195584
  %v2080 = vsel %vm2079, %v2023, %v1513
  %v2081 = vsel %vm2079, %v2024, %v1515
  %v2082 = vsel %vm2079, %v2025, %v1517
  %v2083 = vsel %vm2079, %v2026, %v1519
  %v2084 = vsel %vm2079, %v2027, %v1521
  %v2085 = vsel %vm2079, %v2028, %v1523
  %v2086 = vsel %vm2079, %v2029, %v1525
  %v2087 = vsel %vm2079, %v2030, %v1527
  %v2088 = vsel %vm2079, %v2031, %v1529
  %v2089 = vsel %vm2079, %v2032, %v1531
  %v2090 = vsel %vm2079, %v2033, %v1533
  %v2091 = vsel %vm2079, %v2034, %v1535
  %v2092 = vsel %vm2079, %v2035, %v1537
  %v2093 = vsel %vm2079, %v2036, %v1539
  %v2094 = vsel %vm2079, %v2037, %v1541
  %v2095 = vsel %vm2079, %v2038, %v1543
  %v2096 = vsel %vm2079, %v2039, %v1545
  %v2097 = vsel %vm2079, %v2040, %v1547
  %v2098 = vsel %vm2079, %v2041, %v1549
  %v2099 = vsel %vm2079, %v2042, %v1551
  %v2100 = vsel %vm2079, %v2043, %v1553
  %v2101 = vsel %vm2079, %v2044, %v1555
  %v2102 = vsel %vm2079, %v2045, %v1557
  %v2103 = vsel %vm2079, %v2046, %v1559
  %v2104 = vsel %vm2079, %v2047, %v1561
  %v2105 = vsel %vm2079, %v2048, %v1563
  %v2106 = vsel %vm2079, %v2049, %v1565
  %v2107 = vsel %vm2079, %v2050, %v1567
  %v2108 = vsel %vm2079, %v2051, %v1569
  %v2109 = vsel %vm2079, %v2052, %v1571
  %v2110 = vsel %vm2079, %v2053, %v1573
  %v2111 = vsel %vm2079, %v2054, %v1575
  %v2112 = vsel %vm2079, %v2055, %v1577
  %v2113 = vsel %vm2079, %v2056, %v1579
  %v2114 = vsel %vm2079, %v2057, %v1581
  %v2115 = vsel %vm2079, %v2058, %v1583
  %v2116 = vsel %vm2079, %v2059, %v1585
  %v2117 = vsel %vm2079, %v2060, %v1587
  %v2118 = vsel %vm2079, %v2061, %v1589
  %v2119 = vsel %vm2079, %v2062, %v1591
  %v2120 = vsel %vm2079, %v2063, %v1593
  %v2121 = vsel %vm2079, %v2064, %v1595
  %v2122 = vsel %vm2079, %v2065, %v1597
  %v2123 = vsel %vm2079, %v2066, %v1599
  %v2124 = vsel %vm2079, %v2067, %v1601
  %v2125 = vsel %vm2079, %v2068, %v1603
  %v2126 = vsel %vm2079, %v2069, %v1605
  %v2127 = vsel %vm2079, %v2070, %v1607
  %v2128 = vsel %vm2079, %v2071, %v1609
  %v2129 = vsel %vm2079, %v2072, %v1611
  %v2130 = vsel %vm2079, %v2073, %v1613
  %v2131 = vsel %vm2079, %v2074, %v1615
  %v2132 = vsel %vm2079, %v2075, %v1617
  %v2133 = vsel %vm2079, %v2076, %v1619
  %v2134 = vsel %vm2079, %v2077, %v1621
  %v2135 = vsel %vm2079, %v2078, %v1623
  %v2192 = vcombine.high %v2080, %v2080
  %v2194 = vunpack.c.l.s4 1983009808
  %v2195 = vunpack.c.0.s8 %v2194
  %v2196 = vlaneseq
  %v2197 = vshrl.u32 %v2196, 7
  %v2198 = vsub.s32 %v2195, %v2197
  %v2199 = vrot.slane %v2080, %v2198
  %v2201 = vunpack.c.l.s4 1983009808
  %v2202 = vunpack.c.0.s8 %v2201
  %v2203 = vlaneseq
  %v2204 = vshrl.u32 %v2203, 7
  %v2205 = vsub.s32 %v2202, %v2204
  %v2206 = vrot.slane %v2192, %v2205
  %v2207 = vcombine.high %v2199, %v2199
  %v2208 = vcombine.high %v2206, %v2206
  %v2209 = vcombine.high %v2081, %v2081
  %v2211 = vunpack.c.l.s4 1983009808
  %v2212 = vunpack.c.0.s8 %v2211
  %v2213 = vlaneseq
  %v2214 = vshrl.u32 %v2213, 7
  %v2215 = vsub.s32 %v2212, %v2214
  %v2216 = vrot.slane %v2081, %v2215
  %v2218 = vunpack.c.l.s4 1983009808
  %v2219 = vunpack.c.0.s8 %v2218
  %v2220 = vlaneseq
  %v2221 = vshrl.u32 %v2220, 7
  %v2222 = vsub.s32 %v2219, %v2221
  %v2223 = vrot.slane %v2209, %v2222
  %v2224 = vcombine.high %v2216, %v2216
  %v2225 = vcombine.high %v2082, %v2082
  %v2227 = vunpack.c.l.s4 1983009808
  %v2228 = vunpack.c.0.s8 %v2227
  %v2229 = vlaneseq
  %v2230 = vshrl.u32 %v2229, 7
  %v2231 = vsub.s32 %v2228, %v2230
  %v2232 = vrot.slane %v2082, %v2231
  %v2234 = vunpack.c.l.s4 1983009808
  %v2235 = vunpack.c.0.s8 %v2234
  %v2236 = vlaneseq
  %v2237 = vshrl.u32 %v2236, 7
  %v2238 = vsub.s32 %v2235, %v2237
  %v2239 = vrot.slane %v2225, %v2238
  %v2240 = vcombine.high %v2232, %v2232
  %v2241 = vcombine.high %v2239, %v2239
  %v2242 = vcombine.high %v2083, %v2083
  %v2244 = vunpack.c.l.s4 1983009808
  %v2245 = vunpack.c.0.s8 %v2244
  %v2246 = vlaneseq
  %v2247 = vshrl.u32 %v2246, 7
  %v2248 = vsub.s32 %v2245, %v2247
  %v2249 = vrot.slane %v2083, %v2248
  %v2251 = vunpack.c.l.s4 1983009808
  %v2252 = vunpack.c.0.s8 %v2251
  %v2253 = vlaneseq
  %v2254 = vshrl.u32 %v2253, 7
  %v2255 = vsub.s32 %v2252, %v2254
  %v2256 = vrot.slane %v2242, %v2255
  %v2257 = vcombine.high %v2249, %v2249
  %v2258 = vcombine.high %v2084, %v2084
  %v2260 = vunpack.c.l.s4 1983009808
  %v2261 = vunpack.c.0.s8 %v2260
  %v2262 = vlaneseq
  %v2263 = vshrl.u32 %v2262, 7
  %v2264 = vsub.s32 %v2261, %v2263
  %v2265 = vrot.slane %v2084, %v2264
  %v2267 = vunpack.c.l.s4 1983009808
  %v2268 = vunpack.c.0.s8 %v2267
  %v2269 = vlaneseq
  %v2270 = vshrl.u32 %v2269, 7
  %v2271 = vsub.s32 %v2268, %v2270
  %v2272 = vrot.slane %v2258, %v2271
  %v2273 = vcombine.high %v2265, %v2265
  %v2274 = vcombine.high %v2272, %v2272
  %v2275 = vcombine.high %v2085, %v2085
  %v2277 = vunpack.c.l.s4 1983009808
  %v2278 = vunpack.c.0.s8 %v2277
  %v2279 = vlaneseq
  %v2280 = vshrl.u32 %v2279, 7
  %v2281 = vsub.s32 %v2278, %v2280
  %v2282 = vrot.slane %v2085, %v2281
  %v2284 = vunpack.c.l.s4 1983009808
  %v2285 = vunpack.c.0.s8 %v2284
  %v2286 = vlaneseq
  %v2287 = vshrl.u32 %v2286, 7
  %v2288 = vsub.s32 %v2285, %v2287
  %v2289 = vrot.slane %v2275, %v2288
  %v2290 = vcombine.high %v2282, %v2282
  %v2291 = vcombine.high %v2086, %v2086
  %v2293 = vunpack.c.l.s4 1983009808
  %v2294 = vunpack.c.0.s8 %v2293
  %v2295 = vlaneseq
  %v2296 = vshrl.u32 %v2295, 7
  %v2297 = vsub.s32 %v2294, %v2296
  %v2298 = vrot.slane %v2086, %v2297
  %v2300 = vunpack.c.l.s4 1983009808
  %v2301 = vunpack.c.0.s8 %v2300
  %v2302 = vlaneseq
  %v2303 = vshrl.u32 %v2302, 7
  %v2304 = vsub.s32 %v2301, %v2303
  %v2305 = vrot.slane %v2291, %v2304
  %v2306 = vcombine.high %v2298, %v2298
  %v2307 = vcombine.high %v2305, %v2305
  %v2308 = vcombine.high %v2087, %v2087
  %v2310 = vunpack.c.l.s4 1983009808
  %v2311 = vunpack.c.0.s8 %v2310
  %v2312 = vlaneseq
  %v2313 = vshrl.u32 %v2312, 7
  %v2314 = vsub.s32 %v2311, %v2313
  %v2315 = vrot.slane %v2087, %v2314
  %v2317 = vunpack.c.l.s4 1983009808
  %v2318 = vunpack.c.0.s8 %v2317
  %v2319 = vlaneseq
  %v2320 = vshrl.u32 %v2319, 7
  %v2321 = vsub.s32 %v2318, %v2320
  %v2322 = vrot.slane %v2308, %v2321
  %v2323 = vcombine.high %v2315, %v2315
  %v2324 = vcombine.high %v2088, %v2088
  %v2326 = vunpack.c.l.s4 1983009808
  %v2327 = vunpack.c.0.s8 %v2326
  %v2328 = vlaneseq
  %v2329 = vshrl.u32 %v2328, 7
  %v2330 = vsub.s32 %v2327, %v2329
  %v2331 = vrot.slane %v2088, %v2330
  %v2333 = vunpack.c.l.s4 1983009808
  %v2334 = vunpack.c.0.s8 %v2333
  %v2335 = vlaneseq
  %v2336 = vshrl.u32 %v2335, 7
  %v2337 = vsub.s32 %v2334, %v2336
  %v2338 = vrot.slane %v2324, %v2337
  %v2339 = vcombine.high %v2331, %v2331
  %v2340 = vcombine.high %v2338, %v2338
  %v2341 = vcombine.high %v2089, %v2089
  %v2343 = vunpack.c.l.s4 1983009808
  %v2344 = vunpack.c.0.s8 %v2343
  %v2345 = vlaneseq
  %v2346 = vshrl.u32 %v2345, 7
  %v2347 = vsub.s32 %v2344, %v2346
  %v2348 = vrot.slane %v2089, %v2347
  %v2350 = vunpack.c.l.s4 1983009808
  %v2351 = vunpack.c.0.s8 %v2350
  %v2352 = vlaneseq
  %v2353 = vshrl.u32 %v2352, 7
  %v2354 = vsub.s32 %v2351, %v2353
  %v2355 = vrot.slane %v2341, %v2354
  %v2356 = vcombine.high %v2348, %v2348
  %v2357 = vcombine.high %v2090, %v2090
  %v2359 = vunpack.c.l.s4 1983009808
  %v2360 = vunpack.c.0.s8 %v2359
  %v2361 = vlaneseq
  %v2362 = vshrl.u32 %v2361, 7
  %v2363 = vsub.s32 %v2360, %v2362
  %v2364 = vrot.slane %v2090, %v2363
  %v2366 = vunpack.c.l.s4 1983009808
  %v2367 = vunpack.c.0.s8 %v2366
  %v2368 = vlaneseq
  %v2369 = vshrl.u32 %v2368, 7
  %v2370 = vsub.s32 %v2367, %v2369
  %v2371 = vrot.slane %v2357, %v2370
  %v2372 = vcombine.high %v2364, %v2364
  %v2373 = vcombine.high %v2371, %v2371
  %v2374 = vcombine.high %v2091, %v2091
  %v2376 = vunpack.c.l.s4 1983009808
  %v2377 = vunpack.c.0.s8 %v2376
  %v2378 = vlaneseq
  %v2379 = vshrl.u32 %v2378, 7
  %v2380 = vsub.s32 %v2377, %v2379
  %v2381 = vrot.slane %v2091, %v2380
  %v2383 = vunpack.c.l.s4 1983009808
  %v2384 = vunpack.c.0.s8 %v2383
  %v2385 = vlaneseq
  %v2386 = vshrl.u32 %v2385, 7
  %v2387 = vsub.s32 %v2384, %v2386
  %v2388 = vrot.slane %v2374, %v2387
  %v2389 = vcombine.high %v2381, %v2381
  %v2390 = vcombine.high %v2092, %v2092
  %v2392 = vunpack.c.l.s4 1983009808
  %v2393 = vunpack.c.0.s8 %v2392
  %v2394 = vlaneseq
  %v2395 = vshrl.u32 %v2394, 7
  %v2396 = vsub.s32 %v2393, %v2395
  %v2397 = vrot.slane %v2092, %v2396
  %v2399 = vunpack.c.l.s4 1983009808
  %v2400 = vunpack.c.0.s8 %v2399
  %v2401 = vlaneseq
  %v2402 = vshrl.u32 %v2401, 7
  %v2403 = vsub.s32 %v2400, %v2402
  %v2404 = vrot.slane %v2390, %v2403
  %v2405 = vcombine.high %v2397, %v2397
  %v2406 = vcombine.high %v2404, %v2404
  %v2407 = vcombine.high %v2093, %v2093
  %v2409 = vunpack.c.l.s4 1983009808
  %v2410 = vunpack.c.0.s8 %v2409
  %v2411 = vlaneseq
  %v2412 = vshrl.u32 %v2411, 7
  %v2413 = vsub.s32 %v2410, %v2412
  %v2414 = vrot.slane %v2093, %v2413
  %v2416 = vunpack.c.l.s4 1983009808
  %v2417 = vunpack.c.0.s8 %v2416
  %v2418 = vlaneseq
  %v2419 = vshrl.u32 %v2418, 7
  %v2420 = vsub.s32 %v2417, %v2419
  %v2421 = vrot.slane %v2407, %v2420
  %v2422 = vcombine.high %v2414, %v2414
  %v2423 = vcombine.high %v2094, %v2094
  %v2425 = vunpack.c.l.s4 1983009808
  %v2426 = vunpack.c.0.s8 %v2425
  %v2427 = vlaneseq
  %v2428 = vshrl.u32 %v2427, 7
  %v2429 = vsub.s32 %v2426, %v2428
  %v2430 = vrot.slane %v2094, %v2429
  %v2432 = vunpack.c.l.s4 1983009808
  %v2433 = vunpack.c.0.s8 %v2432
  %v2434 = vlaneseq
  %v2435 = vshrl.u32 %v2434, 7
  %v2436 = vsub.s32 %v2433, %v2435
  %v2437 = vrot.slane %v2423, %v2436
  %v2438 = vcombine.high %v2430, %v2430
  %v2439 = vcombine.high %v2437, %v2437
  %v2440 = vcombine.high %v2095, %v2095
  %v2442 = vunpack.c.l.s4 1983009808
  %v2443 = vunpack.c.0.s8 %v2442
  %v2444 = vlaneseq
  %v2445 = vshrl.u32 %v2444, 7
  %v2446 = vsub.s32 %v2443, %v2445
  %v2447 = vrot.slane %v2095, %v2446
  %v2449 = vunpack.c.l.s4 1983009808
  %v2450 = vunpack.c.0.s8 %v2449
  %v2451 = vlaneseq
  %v2452 = vshrl.u32 %v2451, 7
  %v2453 = vsub.s32 %v2450, %v2452
  %v2454 = vrot.slane %v2440, %v2453
  %v2455 = vcombine.high %v2447, %v2447
  %v2456 = vcombine.high %v2096, %v2096
  %v2458 = vunpack.c.l.s4 1983009808
  %v2459 = vunpack.c.0.s8 %v2458
  %v2460 = vlaneseq
  %v2461 = vshrl.u32 %v2460, 7
  %v2462 = vsub.s32 %v2459, %v2461
  %v2463 = vrot.slane %v2096, %v2462
  %v2465 = vunpack.c.l.s4 1983009808
  %v2466 = vunpack.c.0.s8 %v2465
  %v2467 = vlaneseq
  %v2468 = vshrl.u32 %v2467, 7
  %v2469 = vsub.s32 %v2466, %v2468
  %v2470 = vrot.slane %v2456, %v2469
  %v2471 = vcombine.high %v2463, %v2463
  %v2472 = vcombine.high %v2470, %v2470
  %v2473 = vcombine.high %v2097, %v2097
  %v2475 = vunpack.c.l.s4 1983009808
  %v2476 = vunpack.c.0.s8 %v2475
  %v2477 = vlaneseq
  %v2478 = vshrl.u32 %v2477, 7
  %v2479 = vsub.s32 %v2476, %v2478
  %v2480 = vrot.slane %v2097, %v2479
  %v2482 = vunpack.c.l.s4 1983009808
  %v2483 = vunpack.c.0.s8 %v2482
  %v2484 = vlaneseq
  %v2485 = vshrl.u32 %v2484, 7
  %v2486 = vsub.s32 %v2483, %v2485
  %v2487 = vrot.slane %v2473, %v2486
  %v2488 = vcombine.high %v2480, %v2480
  %v2489 = vcombine.high %v2098, %v2098
  %v2491 = vunpack.c.l.s4 1983009808
  %v2492 = vunpack.c.0.s8 %v2491
  %v2493 = vlaneseq
  %v2494 = vshrl.u32 %v2493, 7
  %v2495 = vsub.s32 %v2492, %v2494
  %v2496 = vrot.slane %v2098, %v2495
  %v2498 = vunpack.c.l.s4 1983009808
  %v2499 = vunpack.c.0.s8 %v2498
  %v2500 = vlaneseq
  %v2501 = vshrl.u32 %v2500, 7
  %v2502 = vsub.s32 %v2499, %v2501
  %v2503 = vrot.slane %v2489, %v2502
  %v2504 = vcombine.high %v2496, %v2496
  %v2505 = vcombine.high %v2503, %v2503
  %v2506 = vcombine.high %v2099, %v2099
  %v2508 = vunpack.c.l.s4 1983009808
  %v2509 = vunpack.c.0.s8 %v2508
  %v2510 = vlaneseq
  %v2511 = vshrl.u32 %v2510, 7
  %v2512 = vsub.s32 %v2509, %v2511
  %v2513 = vrot.slane %v2099, %v2512
  %v2515 = vunpack.c.l.s4 1983009808
  %v2516 = vunpack.c.0.s8 %v2515
  %v2517 = vlaneseq
  %v2518 = vshrl.u32 %v2517, 7
  %v2519 = vsub.s32 %v2516, %v2518
  %v2520 = vrot.slane %v2506, %v2519
  %v2521 = vcombine.high %v2513, %v2513
  %v2522 = vcombine.high %v2100, %v2100
  %v2524 = vunpack.c.l.s4 1983009808
  %v2525 = vunpack.c.0.s8 %v2524
  %v2526 = vlaneseq
  %v2527 = vshrl.u32 %v2526, 7
  %v2528 = vsub.s32 %v2525, %v2527
  %v2529 = vrot.slane %v2100, %v2528
  %v2531 = vunpack.c.l.s4 1983009808
  %v2532 = vunpack.c.0.s8 %v2531
  %v2533 = vlaneseq
  %v2534 = vshrl.u32 %v2533, 7
  %v2535 = vsub.s32 %v2532, %v2534
  %v2536 = vrot.slane %v2522, %v2535
  %v2537 = vcombine.high %v2529, %v2529
  %v2538 = vcombine.high %v2536, %v2536
  %v2539 = vcombine.high %v2101, %v2101
  %v2541 = vunpack.c.l.s4 1983009808
  %v2542 = vunpack.c.0.s8 %v2541
  %v2543 = vlaneseq
  %v2544 = vshrl.u32 %v2543, 7
  %v2545 = vsub.s32 %v2542, %v2544
  %v2546 = vrot.slane %v2101, %v2545
  %v2548 = vunpack.c.l.s4 1983009808
  %v2549 = vunpack.c.0.s8 %v2548
  %v2550 = vlaneseq
  %v2551 = vshrl.u32 %v2550, 7
  %v2552 = vsub.s32 %v2549, %v2551
  %v2553 = vrot.slane %v2539, %v2552
  %v2554 = vcombine.high %v2546, %v2546
  %v2555 = vcombine.high %v2102, %v2102
  %v2557 = vunpack.c.l.s4 1983009808
  %v2558 = vunpack.c.0.s8 %v2557
  %v2559 = vlaneseq
  %v2560 = vshrl.u32 %v2559, 7
  %v2561 = vsub.s32 %v2558, %v2560
  %v2562 = vrot.slane %v2102, %v2561
  %v2564 = vunpack.c.l.s4 1983009808
  %v2565 = vunpack.c.0.s8 %v2564
  %v2566 = vlaneseq
  %v2567 = vshrl.u32 %v2566, 7
  %v2568 = vsub.s32 %v2565, %v2567
  %v2569 = vrot.slane %v2555, %v2568
  %v2570 = vcombine.high %v2562, %v2562
  %v2571 = vcombine.high %v2569, %v2569
  %v2572 = vcombine.high %v2103, %v2103
  %v2574 = vunpack.c.l.s4 1983009808
  %v2575 = vunpack.c.0.s8 %v2574
  %v2576 = vlaneseq
  %v2577 = vshrl.u32 %v2576, 7
  %v2578 = vsub.s32 %v2575, %v2577
  %v2579 = vrot.slane %v2103, %v2578
  %v2581 = vunpack.c.l.s4 1983009808
  %v2582 = vunpack.c.0.s8 %v2581
  %v2583 = vlaneseq
  %v2584 = vshrl.u32 %v2583, 7
  %v2585 = vsub.s32 %v2582, %v2584
  %v2586 = vrot.slane %v2572, %v2585
  %v2587 = vcombine.high %v2579, %v2579
  %v2588 = vcombine.high %v2104, %v2104
  %v2590 = vunpack.c.l.s4 1983009808
  %v2591 = vunpack.c.0.s8 %v2590
  %v2592 = vlaneseq
  %v2593 = vshrl.u32 %v2592, 7
  %v2594 = vsub.s32 %v2591, %v2593
  %v2595 = vrot.slane %v2104, %v2594
  %v2597 = vunpack.c.l.s4 1983009808
  %v2598 = vunpack.c.0.s8 %v2597
  %v2599 = vlaneseq
  %v2600 = vshrl.u32 %v2599, 7
  %v2601 = vsub.s32 %v2598, %v2600
  %v2602 = vrot.slane %v2588, %v2601
  %v2603 = vcombine.high %v2595, %v2595
  %v2604 = vcombine.high %v2602, %v2602
  %v2605 = vcombine.high %v2105, %v2105
  %v2607 = vunpack.c.l.s4 1983009808
  %v2608 = vunpack.c.0.s8 %v2607
  %v2609 = vlaneseq
  %v2610 = vshrl.u32 %v2609, 7
  %v2611 = vsub.s32 %v2608, %v2610
  %v2612 = vrot.slane %v2105, %v2611
  %v2614 = vunpack.c.l.s4 1983009808
  %v2615 = vunpack.c.0.s8 %v2614
  %v2616 = vlaneseq
  %v2617 = vshrl.u32 %v2616, 7
  %v2618 = vsub.s32 %v2615, %v2617
  %v2619 = vrot.slane %v2605, %v2618
  %v2620 = vcombine.high %v2612, %v2612
  %v2621 = vcombine.high %v2106, %v2106
  %v2623 = vunpack.c.l.s4 1983009808
  %v2624 = vunpack.c.0.s8 %v2623
  %v2625 = vlaneseq
  %v2626 = vshrl.u32 %v2625, 7
  %v2627 = vsub.s32 %v2624, %v2626
  %v2628 = vrot.slane %v2106, %v2627
  %v2630 = vunpack.c.l.s4 1983009808
  %v2631 = vunpack.c.0.s8 %v2630
  %v2632 = vlaneseq
  %v2633 = vshrl.u32 %v2632, 7
  %v2634 = vsub.s32 %v2631, %v2633
  %v2635 = vrot.slane %v2621, %v2634
  %v2636 = vcombine.high %v2628, %v2628
  %v2637 = vcombine.high %v2635, %v2635
  %v2638 = vcombine.high %v2107, %v2107
  %v2640 = vunpack.c.l.s4 1983009808
  %v2641 = vunpack.c.0.s8 %v2640
  %v2642 = vlaneseq
  %v2643 = vshrl.u32 %v2642, 7
  %v2644 = vsub.s32 %v2641, %v2643
  %v2645 = vrot.slane %v2107, %v2644
  %v2647 = vunpack.c.l.s4 1983009808
  %v2648 = vunpack.c.0.s8 %v2647
  %v2649 = vlaneseq
  %v2650 = vshrl.u32 %v2649, 7
  %v2651 = vsub.s32 %v2648, %v2650
  %v2652 = vrot.slane %v2638, %v2651
  %v2653 = vcombine.high %v2645, %v2645
  %v2654 = vcombine.high %v2108, %v2108
  %v2656 = vunpack.c.l.s4 1983009808
  %v2657 = vunpack.c.0.s8 %v2656
  %v2658 = vlaneseq
  %v2659 = vshrl.u32 %v2658, 7
  %v2660 = vsub.s32 %v2657, %v2659
  %v2661 = vrot.slane %v2108, %v2660
  %v2663 = vunpack.c.l.s4 1983009808
  %v2664 = vunpack.c.0.s8 %v2663
  %v2665 = vlaneseq
  %v2666 = vshrl.u32 %v2665, 7
  %v2667 = vsub.s32 %v2664, %v2666
  %v2668 = vrot.slane %v2654, %v2667
  %v2669 = vcombine.high %v2661, %v2661
  %v2670 = vcombine.high %v2668, %v2668
  %v2671 = vcombine.high %v2109, %v2109
  %v2673 = vunpack.c.l.s4 1983009808
  %v2674 = vunpack.c.0.s8 %v2673
  %v2675 = vlaneseq
  %v2676 = vshrl.u32 %v2675, 7
  %v2677 = vsub.s32 %v2674, %v2676
  %v2678 = vrot.slane %v2109, %v2677
  %v2680 = vunpack.c.l.s4 1983009808
  %v2681 = vunpack.c.0.s8 %v2680
  %v2682 = vlaneseq
  %v2683 = vshrl.u32 %v2682, 7
  %v2684 = vsub.s32 %v2681, %v2683
  %v2685 = vrot.slane %v2671, %v2684
  %v2686 = vcombine.high %v2678, %v2678
  %v2687 = vcombine.high %v2110, %v2110
  %v2689 = vunpack.c.l.s4 1983009808
  %v2690 = vunpack.c.0.s8 %v2689
  %v2691 = vlaneseq
  %v2692 = vshrl.u32 %v2691, 7
  %v2693 = vsub.s32 %v2690, %v2692
  %v2694 = vrot.slane %v2110, %v2693
  %v2696 = vunpack.c.l.s4 1983009808
  %v2697 = vunpack.c.0.s8 %v2696
  %v2698 = vlaneseq
  %v2699 = vshrl.u32 %v2698, 7
  %v2700 = vsub.s32 %v2697, %v2699
  %v2701 = vrot.slane %v2687, %v2700
  %v2702 = vcombine.high %v2694, %v2694
  %v2703 = vcombine.high %v2701, %v2701
  %v2704 = vcombine.high %v2111, %v2111
  %v2706 = vunpack.c.l.s4 1983009808
  %v2707 = vunpack.c.0.s8 %v2706
  %v2708 = vlaneseq
  %v2709 = vshrl.u32 %v2708, 7
  %v2710 = vsub.s32 %v2707, %v2709
  %v2711 = vrot.slane %v2111, %v2710
  %v2713 = vunpack.c.l.s4 1983009808
  %v2714 = vunpack.c.0.s8 %v2713
  %v2715 = vlaneseq
  %v2716 = vshrl.u32 %v2715, 7
  %v2717 = vsub.s32 %v2714, %v2716
  %v2718 = vrot.slane %v2704, %v2717
  %v2719 = vcombine.high %v2711, %v2711
  %v2720 = vcombine.high %v2112, %v2112
  %v2722 = vunpack.c.l.s4 1983009808
  %v2723 = vunpack.c.0.s8 %v2722
  %v2724 = vlaneseq
  %v2725 = vshrl.u32 %v2724, 7
  %v2726 = vsub.s32 %v2723, %v2725
  %v2727 = vrot.slane %v2112, %v2726
  %v2729 = vunpack.c.l.s4 1983009808
  %v2730 = vunpack.c.0.s8 %v2729
  %v2731 = vlaneseq
  %v2732 = vshrl.u32 %v2731, 7
  %v2733 = vsub.s32 %v2730, %v2732
  %v2734 = vrot.slane %v2720, %v2733
  %v2735 = vcombine.high %v2727, %v2727
  %v2736 = vcombine.high %v2734, %v2734
  %v2737 = vcombine.high %v2113, %v2113
  %v2739 = vunpack.c.l.s4 1983009808
  %v2740 = vunpack.c.0.s8 %v2739
  %v2741 = vlaneseq
  %v2742 = vshrl.u32 %v2741, 7
  %v2743 = vsub.s32 %v2740, %v2742
  %v2744 = vrot.slane %v2113, %v2743
  %v2746 = vunpack.c.l.s4 1983009808
  %v2747 = vunpack.c.0.s8 %v2746
  %v2748 = vlaneseq
  %v2749 = vshrl.u32 %v2748, 7
  %v2750 = vsub.s32 %v2747, %v2749
  %v2751 = vrot.slane %v2737, %v2750
  %v2752 = vcombine.high %v2744, %v2744
  %v2753 = vcombine.high %v2114, %v2114
  %v2755 = vunpack.c.l.s4 1983009808
  %v2756 = vunpack.c.0.s8 %v2755
  %v2757 = vlaneseq
  %v2758 = vshrl.u32 %v2757, 7
  %v2759 = vsub.s32 %v2756, %v2758
  %v2760 = vrot.slane %v2114, %v2759
  %v2762 = vunpack.c.l.s4 1983009808
  %v2763 = vunpack.c.0.s8 %v2762
  %v2764 = vlaneseq
  %v2765 = vshrl.u32 %v2764, 7
  %v2766 = vsub.s32 %v2763, %v2765
  %v2767 = vrot.slane %v2753, %v2766
  %v2768 = vcombine.high %v2760, %v2760
  %v2769 = vcombine.high %v2767, %v2767
  %v2770 = vcombine.high %v2115, %v2115
  %v2772 = vunpack.c.l.s4 1983009808
  %v2773 = vunpack.c.0.s8 %v2772
  %v2774 = vlaneseq
  %v2775 = vshrl.u32 %v2774, 7
  %v2776 = vsub.s32 %v2773, %v2775
  %v2777 = vrot.slane %v2115, %v2776
  %v2779 = vunpack.c.l.s4 1983009808
  %v2780 = vunpack.c.0.s8 %v2779
  %v2781 = vlaneseq
  %v2782 = vshrl.u32 %v2781, 7
  %v2783 = vsub.s32 %v2780, %v2782
  %v2784 = vrot.slane %v2770, %v2783
  %v2785 = vcombine.high %v2777, %v2777
  %v2786 = vcombine.high %v2116, %v2116
  %v2788 = vunpack.c.l.s4 1983009808
  %v2789 = vunpack.c.0.s8 %v2788
  %v2790 = vlaneseq
  %v2791 = vshrl.u32 %v2790, 7
  %v2792 = vsub.s32 %v2789, %v2791
  %v2793 = vrot.slane %v2116, %v2792
  %v2795 = vunpack.c.l.s4 1983009808
  %v2796 = vunpack.c.0.s8 %v2795
  %v2797 = vlaneseq
  %v2798 = vshrl.u32 %v2797, 7
  %v2799 = vsub.s32 %v2796, %v2798
  %v2800 = vrot.slane %v2786, %v2799
  %v2801 = vcombine.high %v2793, %v2793
  %v2802 = vcombine.high %v2800, %v2800
  %v2803 = vcombine.high %v2117, %v2117
  %v2805 = vunpack.c.l.s4 1983009808
  %v2806 = vunpack.c.0.s8 %v2805
  %v2807 = vlaneseq
  %v2808 = vshrl.u32 %v2807, 7
  %v2809 = vsub.s32 %v2806, %v2808
  %v2810 = vrot.slane %v2117, %v2809
  %v2812 = vunpack.c.l.s4 1983009808
  %v2813 = vunpack.c.0.s8 %v2812
  %v2814 = vlaneseq
  %v2815 = vshrl.u32 %v2814, 7
  %v2816 = vsub.s32 %v2813, %v2815
  %v2817 = vrot.slane %v2803, %v2816
  %v2818 = vcombine.high %v2810, %v2810
  %v2819 = vcombine.high %v2118, %v2118
  %v2821 = vunpack.c.l.s4 1983009808
  %v2822 = vunpack.c.0.s8 %v2821
  %v2823 = vlaneseq
  %v2824 = vshrl.u32 %v2823, 7
  %v2825 = vsub.s32 %v2822, %v2824
  %v2826 = vrot.slane %v2118, %v2825
  %v2828 = vunpack.c.l.s4 1983009808
  %v2829 = vunpack.c.0.s8 %v2828
  %v2830 = vlaneseq
  %v2831 = vshrl.u32 %v2830, 7
  %v2832 = vsub.s32 %v2829, %v2831
  %v2833 = vrot.slane %v2819, %v2832
  %v2834 = vcombine.high %v2826, %v2826
  %v2835 = vcombine.high %v2833, %v2833
  %v2836 = vcombine.high %v2119, %v2119
  %v2838 = vunpack.c.l.s4 1983009808
  %v2839 = vunpack.c.0.s8 %v2838
  %v2840 = vlaneseq
  %v2841 = vshrl.u32 %v2840, 7
  %v2842 = vsub.s32 %v2839, %v2841
  %v2843 = vrot.slane %v2119, %v2842
  %v2845 = vunpack.c.l.s4 1983009808
  %v2846 = vunpack.c.0.s8 %v2845
  %v2847 = vlaneseq
  %v2848 = vshrl.u32 %v2847, 7
  %v2849 = vsub.s32 %v2846, %v2848
  %v2850 = vrot.slane %v2836, %v2849
  %v2851 = vcombine.high %v2843, %v2843
  %v2852 = vcombine.high %v2120, %v2120
  %v2854 = vunpack.c.l.s4 1983009808
  %v2855 = vunpack.c.0.s8 %v2854
  %v2856 = vlaneseq
  %v2857 = vshrl.u32 %v2856, 7
  %v2858 = vsub.s32 %v2855, %v2857
  %v2859 = vrot.slane %v2120, %v2858
  %v2861 = vunpack.c.l.s4 1983009808
  %v2862 = vunpack.c.0.s8 %v2861
  %v2863 = vlaneseq
  %v2864 = vshrl.u32 %v2863, 7
  %v2865 = vsub.s32 %v2862, %v2864
  %v2866 = vrot.slane %v2852, %v2865
  %v2867 = vcombine.high %v2859, %v2859
  %v2868 = vcombine.high %v2866, %v2866
  %v2869 = vcombine.high %v2121, %v2121
  %v2871 = vunpack.c.l.s4 1983009808
  %v2872 = vunpack.c.0.s8 %v2871
  %v2873 = vlaneseq
  %v2874 = vshrl.u32 %v2873, 7
  %v2875 = vsub.s32 %v2872, %v2874
  %v2876 = vrot.slane %v2121, %v2875
  %v2878 = vunpack.c.l.s4 1983009808
  %v2879 = vunpack.c.0.s8 %v2878
  %v2880 = vlaneseq
  %v2881 = vshrl.u32 %v2880, 7
  %v2882 = vsub.s32 %v2879, %v2881
  %v2883 = vrot.slane %v2869, %v2882
  %v2884 = vcombine.high %v2876, %v2876
  %v2885 = vcombine.high %v2122, %v2122
  %v2887 = vunpack.c.l.s4 1983009808
  %v2888 = vunpack.c.0.s8 %v2887
  %v2889 = vlaneseq
  %v2890 = vshrl.u32 %v2889, 7
  %v2891 = vsub.s32 %v2888, %v2890
  %v2892 = vrot.slane %v2122, %v2891
  %v2894 = vunpack.c.l.s4 1983009808
  %v2895 = vunpack.c.0.s8 %v2894
  %v2896 = vlaneseq
  %v2897 = vshrl.u32 %v2896, 7
  %v2898 = vsub.s32 %v2895, %v2897
  %v2899 = vrot.slane %v2885, %v2898
  %v2900 = vcombine.high %v2892, %v2892
  %v2901 = vcombine.high %v2899, %v2899
  %v2902 = vcombine.high %v2123, %v2123
  %v2904 = vunpack.c.l.s4 1983009808
  %v2905 = vunpack.c.0.s8 %v2904
  %v2906 = vlaneseq
  %v2907 = vshrl.u32 %v2906, 7
  %v2908 = vsub.s32 %v2905, %v2907
  %v2909 = vrot.slane %v2123, %v2908
  %v2911 = vunpack.c.l.s4 1983009808
  %v2912 = vunpack.c.0.s8 %v2911
  %v2913 = vlaneseq
  %v2914 = vshrl.u32 %v2913, 7
  %v2915 = vsub.s32 %v2912, %v2914
  %v2916 = vrot.slane %v2902, %v2915
  %v2917 = vcombine.high %v2909, %v2909
  %v2918 = vcombine.high %v2124, %v2124
  %v2920 = vunpack.c.l.s4 1983009808
  %v2921 = vunpack.c.0.s8 %v2920
  %v2922 = vlaneseq
  %v2923 = vshrl.u32 %v2922, 7
  %v2924 = vsub.s32 %v2921, %v2923
  %v2925 = vrot.slane %v2124, %v2924
  %v2927 = vunpack.c.l.s4 1983009808
  %v2928 = vunpack.c.0.s8 %v2927
  %v2929 = vlaneseq
  %v2930 = vshrl.u32 %v2929, 7
  %v2931 = vsub.s32 %v2928, %v2930
  %v2932 = vrot.slane %v2918, %v2931
  %v2933 = vcombine.high %v2925, %v2925
  %v2934 = vcombine.high %v2932, %v2932
  %v2935 = vcombine.high %v2125, %v2125
  %v2937 = vunpack.c.l.s4 1983009808
  %v2938 = vunpack.c.0.s8 %v2937
  %v2939 = vlaneseq
  %v2940 = vshrl.u32 %v2939, 7
  %v2941 = vsub.s32 %v2938, %v2940
  %v2942 = vrot.slane %v2125, %v2941
  %v2944 = vunpack.c.l.s4 1983009808
  %v2945 = vunpack.c.0.s8 %v2944
  %v2946 = vlaneseq
  %v2947 = vshrl.u32 %v2946, 7
  %v2948 = vsub.s32 %v2945, %v2947
  %v2949 = vrot.slane %v2935, %v2948
  %v2950 = vcombine.high %v2942, %v2942
  %v2951 = vcombine.high %v2126, %v2126
  %v2953 = vunpack.c.l.s4 1983009808
  %v2954 = vunpack.c.0.s8 %v2953
  %v2955 = vlaneseq
  %v2956 = vshrl.u32 %v2955, 7
  %v2957 = vsub.s32 %v2954, %v2956
  %v2958 = vrot.slane %v2126, %v2957
  %v2960 = vunpack.c.l.s4 1983009808
  %v2961 = vunpack.c.0.s8 %v2960
  %v2962 = vlaneseq
  %v2963 = vshrl.u32 %v2962, 7
  %v2964 = vsub.s32 %v2961, %v2963
  %v2965 = vrot.slane %v2951, %v2964
  %v2966 = vcombine.high %v2958, %v2958
  %v2967 = vcombine.high %v2965, %v2965
  %v2968 = vcombine.high %v2127, %v2127
  %v2970 = vunpack.c.l.s4 1983009808
  %v2971 = vunpack.c.0.s8 %v2970
  %v2972 = vlaneseq
  %v2973 = vshrl.u32 %v2972, 7
  %v2974 = vsub.s32 %v2971, %v2973
  %v2975 = vrot.slane %v2127, %v2974
  %v2977 = vunpack.c.l.s4 1983009808
  %v2978 = vunpack.c.0.s8 %v2977
  %v2979 = vlaneseq
  %v2980 = vshrl.u32 %v2979, 7
  %v2981 = vsub.s32 %v2978, %v2980
  %v2982 = vrot.slane %v2968, %v2981
  %v2983 = vcombine.high %v2975, %v2975
  %v2984 = vcombine.high %v2128, %v2128
  %v2986 = vunpack.c.l.s4 1983009808
  %v2987 = vunpack.c.0.s8 %v2986
  %v2988 = vlaneseq
  %v2989 = vshrl.u32 %v2988, 7
  %v2990 = vsub.s32 %v2987, %v2989
  %v2991 = vrot.slane %v2128, %v2990
  %v2993 = vunpack.c.l.s4 1983009808
  %v2994 = vunpack.c.0.s8 %v2993
  %v2995 = vlaneseq
  %v2996 = vshrl.u32 %v2995, 7
  %v2997 = vsub.s32 %v2994, %v2996
  %v2998 = vrot.slane %v2984, %v2997
  %v2999 = vcombine.high %v2991, %v2991
  %v3000 = vcombine.high %v2998, %v2998
  %v3001 = vcombine.high %v2129, %v2129
  %v3003 = vunpack.c.l.s4 1983009808
  %v3004 = vunpack.c.0.s8 %v3003
  %v3005 = vlaneseq
  %v3006 = vshrl.u32 %v3005, 7
  %v3007 = vsub.s32 %v3004, %v3006
  %v3008 = vrot.slane %v2129, %v3007
  %v3010 = vunpack.c.l.s4 1983009808
  %v3011 = vunpack.c.0.s8 %v3010
  %v3012 = vlaneseq
  %v3013 = vshrl.u32 %v3012, 7
  %v3014 = vsub.s32 %v3011, %v3013
  %v3015 = vrot.slane %v3001, %v3014
  %v3016 = vcombine.high %v3008, %v3008
  %v3017 = vcombine.high %v2130, %v2130
  %v3019 = vunpack.c.l.s4 1983009808
  %v3020 = vunpack.c.0.s8 %v3019
  %v3021 = vlaneseq
  %v3022 = vshrl.u32 %v3021, 7
  %v3023 = vsub.s32 %v3020, %v3022
  %v3024 = vrot.slane %v2130, %v3023
  %v3026 = vunpack.c.l.s4 1983009808
  %v3027 = vunpack.c.0.s8 %v3026
  %v3028 = vlaneseq
  %v3029 = vshrl.u32 %v3028, 7
  %v3030 = vsub.s32 %v3027, %v3029
  %v3031 = vrot.slane %v3017, %v3030
  %v3032 = vcombine.high %v3024, %v3024
  %v3033 = vcombine.high %v3031, %v3031
  %v3034 = vcombine.high %v2131, %v2131
  %v3036 = vunpack.c.l.s4 1983009808
  %v3037 = vunpack.c.0.s8 %v3036
  %v3038 = vlaneseq
  %v3039 = vshrl.u32 %v3038, 7
  %v3040 = vsub.s32 %v3037, %v3039
  %v3041 = vrot.slane %v2131, %v3040
  %v3043 = vunpack.c.l.s4 1983009808
  %v3044 = vunpack.c.0.s8 %v3043
  %v3045 = vlaneseq
  %v3046 = vshrl.u32 %v3045, 7
  %v3047 = vsub.s32 %v3044, %v3046
  %v3048 = vrot.slane %v3034, %v3047
  %v3049 = vcombine.high %v3041, %v3041
  %v3050 = vcombine.high %v2132, %v2132
  %v3052 = vunpack.c.l.s4 1983009808
  %v3053 = vunpack.c.0.s8 %v3052
  %v3054 = vlaneseq
  %v3055 = vshrl.u32 %v3054, 7
  %v3056 = vsub.s32 %v3053, %v3055
  %v3057 = vrot.slane %v2132, %v3056
  %v3059 = vunpack.c.l.s4 1983009808
  %v3060 = vunpack.c.0.s8 %v3059
  %v3061 = vlaneseq
  %v3062 = vshrl.u32 %v3061, 7
  %v3063 = vsub.s32 %v3060, %v3062
  %v3064 = vrot.slane %v3050, %v3063
  %v3065 = vcombine.high %v3057, %v3057
  %v3066 = vcombine.high %v3064, %v3064
  %v3067 = vcombine.high %v2133, %v2133
  %v3069 = vunpack.c.l.s4 1983009808
  %v3070 = vunpack.c.0.s8 %v3069
  %v3071 = vlaneseq
  %v3072 = vshrl.u32 %v3071, 7
  %v3073 = vsub.s32 %v3070, %v3072
  %v3074 = vrot.slane %v2133, %v3073
  %v3076 = vunpack.c.l.s4 1983009808
  %v3077 = vunpack.c.0.s8 %v3076
  %v3078 = vlaneseq
  %v3079 = vshrl.u32 %v3078, 7
  %v3080 = vsub.s32 %v3077, %v3079
  %v3081 = vrot.slane %v3067, %v3080
  %v3082 = vcombine.high %v3074, %v3074
  %v3083 = vcombine.high %v2134, %v2134
  %v3085 = vunpack.c.l.s4 1983009808
  %v3086 = vunpack.c.0.s8 %v3085
  %v3087 = vlaneseq
  %v3088 = vshrl.u32 %v3087, 7
  %v3089 = vsub.s32 %v3086, %v3088
  %v3090 = vrot.slane %v2134, %v3089
  %v3092 = vunpack.c.l.s4 1983009808
  %v3093 = vunpack.c.0.s8 %v3092
  %v3094 = vlaneseq
  %v3095 = vshrl.u32 %v3094, 7
  %v3096 = vsub.s32 %v3093, %v3095
  %v3097 = vrot.slane %v3083, %v3096
  %v3098 = vcombine.high %v3090, %v3090
  %v3099 = vcombine.high %v3097, %v3097
  %v3100 = vcombine.high %v2135, %v2135
  %v3102 = vunpack.c.l.s4 1983009808
  %v3103 = vunpack.c.0.s8 %v3102
  %v3104 = vlaneseq
  %v3105 = vshrl.u32 %v3104, 7
  %v3106 = vsub.s32 %v3103, %v3105
  %v3107 = vrot.slane %v2135, %v3106
  %v3109 = vunpack.c.l.s4 1983009808
  %v3110 = vunpack.c.0.s8 %v3109
  %v3111 = vlaneseq
  %v3112 = vshrl.u32 %v3111, 7
  %v3113 = vsub.s32 %v3110, %v3112
  %v3114 = vrot.slane %v3100, %v3113
  %v3115 = vcombine.high %v3107, %v3107
  %v3116 = vld [vmem:[%s1] sm:$0xff]
  %v3117 = vld [vmem:[%s1 + $0x8] sm:$0xff]
  %v3118 = vld [vmem:[%s1 + $0x10] sm:$0xff]
  %v3119 = vld [vmem:[%s1 + $0x18] sm:$0x7]
  %v3120 = vld [vmem:[%s2] sm:$0x1]
  %v3121 = vlaneseq
  %v3122 = vshrl.u32 %v3121, 7
  %v3123 = vsub.s32 0, %v3122
  %v3124 = vrot.slane %v3120, %v3123
  %v3125 = vcombine.low %v2199, %v2207
  %v3126 = vcombine.low %v2206, %v2208
  %v3128 = vunpack.c.l.s4 1983009808
  %v3129 = vunpack.c.0.s8 %v3128
  %v3130 = vlaneseq
  %v3131 = vshrl.u32 %v3130, 7
  %v3132 = vsub.s32 %v3129, %v3131
  %v3133 = vrot.slane %v3125, %v3132
  %v3135 = vunpack.c.l.s4 1983009808
  %v3136 = vunpack.c.0.s8 %v3135
  %v3137 = vlaneseq
  %v3138 = vshrl.u32 %v3137, 7
  %v3139 = vsub.s32 %v3136, %v3138
  %v3140 = vrot.slane %v3126, %v3139
  %v3141 = vcombine.low %v3133, %v3140
  %v3142 = vcombine.low %v2216, %v2224
  %v3143 = vcombine.low %v2223, %v2232
  %v3145 = vunpack.c.l.s4 1983009808
  %v3146 = vunpack.c.0.s8 %v3145
  %v3147 = vlaneseq
  %v3148 = vshrl.u32 %v3147, 7
  %v3149 = vsub.s32 %v3146, %v3148
  %v3150 = vrot.slane %v3142, %v3149
  %v3152 = vunpack.c.l.s4 1983009808
  %v3153 = vunpack.c.0.s8 %v3152
  %v3154 = vlaneseq
  %v3155 = vshrl.u32 %v3154, 7
  %v3156 = vsub.s32 %v3153, %v3155
  %v3157 = vrot.slane %v3143, %v3156
  %v3158 = vcombine.low %v3150, %v3157
  %v3159 = vcombine.low %v2240, %v2239
  %v3160 = vcombine.low %v2241, %v2249
  %v3162 = vunpack.c.l.s4 1983009808
  %v3163 = vunpack.c.0.s8 %v3162
  %v3164 = vlaneseq
  %v3165 = vshrl.u32 %v3164, 7
  %v3166 = vsub.s32 %v3163, %v3165
  %v3167 = vrot.slane %v3159, %v3166
  %v3169 = vunpack.c.l.s4 1983009808
  %v3170 = vunpack.c.0.s8 %v3169
  %v3171 = vlaneseq
  %v3172 = vshrl.u32 %v3171, 7
  %v3173 = vsub.s32 %v3170, %v3172
  %v3174 = vrot.slane %v3160, %v3173
  %v3175 = vcombine.low %v3167, %v3174
  %v3176 = vcombine.low %v2257, %v2256
  %v3177 = vcombine.low %v2265, %v2273
  %v3179 = vunpack.c.l.s4 1983009808
  %v3180 = vunpack.c.0.s8 %v3179
  %v3181 = vlaneseq
  %v3182 = vshrl.u32 %v3181, 7
  %v3183 = vsub.s32 %v3180, %v3182
  %v3184 = vrot.slane %v3176, %v3183
  %v3186 = vunpack.c.l.s4 1983009808
  %v3187 = vunpack.c.0.s8 %v3186
  %v3188 = vlaneseq
  %v3189 = vshrl.u32 %v3188, 7
  %v3190 = vsub.s32 %v3187, %v3189
  %v3191 = vrot.slane %v3177, %v3190
  %v3192 = vcombine.low %v3184, %v3191
  %v3193 = vcombine.low %v2272, %v2274
  %v3194 = vcombine.low %v2282, %v2290
  %v3196 = vunpack.c.l.s4 1983009808
  %v3197 = vunpack.c.0.s8 %v3196
  %v3198 = vlaneseq
  %v3199 = vshrl.u32 %v3198, 7
  %v3200 = vsub.s32 %v3197, %v3199
  %v3201 = vrot.slane %v3193, %v3200
  %v3203 = vunpack.c.l.s4 1983009808
  %v3204 = vunpack.c.0.s8 %v3203
  %v3205 = vlaneseq
  %v3206 = vshrl.u32 %v3205, 7
  %v3207 = vsub.s32 %v3204, %v3206
  %v3208 = vrot.slane %v3194, %v3207
  %v3209 = vcombine.low %v3201, %v3208
  %v3210 = vcombine.low %v2289, %v2298
  %v3211 = vcombine.low %v2306, %v2305
  %v3213 = vunpack.c.l.s4 1983009808
  %v3214 = vunpack.c.0.s8 %v3213
  %v3215 = vlaneseq
  %v3216 = vshrl.u32 %v3215, 7
  %v3217 = vsub.s32 %v3214, %v3216
  %v3218 = vrot.slane %v3210, %v3217
  %v3220 = vunpack.c.l.s4 1983009808
  %v3221 = vunpack.c.0.s8 %v3220
  %v3222 = vlaneseq
  %v3223 = vshrl.u32 %v3222, 7
  %v3224 = vsub.s32 %v3221, %v3223
  %v3225 = vrot.slane %v3211, %v3224
  %v3226 = vcombine.low %v3218, %v3225
  %v3227 = vcombine.low %v2307, %v2315
  %v3228 = vcombine.low %v2323, %v2322
  %v3230 = vunpack.c.l.s4 1983009808
  %v3231 = vunpack.c.0.s8 %v3230
  %v3232 = vlaneseq
  %v3233 = vshrl.u32 %v3232, 7
  %v3234 = vsub.s32 %v3231, %v3233
  %v3235 = vrot.slane %v3227, %v3234
  %v3237 = vunpack.c.l.s4 1983009808
  %v3238 = vunpack.c.0.s8 %v3237
  %v3239 = vlaneseq
  %v3240 = vshrl.u32 %v3239, 7
  %v3241 = vsub.s32 %v3238, %v3240
  %v3242 = vrot.slane %v3228, %v3241
  %v3243 = vcombine.low %v3235, %v3242
  %v3244 = vcombine.low %v2331, %v2339
  %v3245 = vcombine.low %v2338, %v2340
  %v3247 = vunpack.c.l.s4 1983009808
  %v3248 = vunpack.c.0.s8 %v3247
  %v3249 = vlaneseq
  %v3250 = vshrl.u32 %v3249, 7
  %v3251 = vsub.s32 %v3248, %v3250
  %v3252 = vrot.slane %v3244, %v3251
  %v3254 = vunpack.c.l.s4 1983009808
  %v3255 = vunpack.c.0.s8 %v3254
  %v3256 = vlaneseq
  %v3257 = vshrl.u32 %v3256, 7
  %v3258 = vsub.s32 %v3255, %v3257
  %v3259 = vrot.slane %v3245, %v3258
  %v3260 = vcombine.low %v3252, %v3259
  %v3261 = vcombine.low %v2348, %v2356
  %v3262 = vcombine.low %v2355, %v2364
  %v3264 = vunpack.c.l.s4 1983009808
  %v3265 = vunpack.c.0.s8 %v3264
  %v3266 = vlaneseq
  %v3267 = vshrl.u32 %v3266, 7
  %v3268 = vsub.s32 %v3265, %v3267
  %v3269 = vrot.slane %v3261, %v3268
  %v3271 = vunpack.c.l.s4 1983009808
  %v3272 = vunpack.c.0.s8 %v3271
  %v3273 = vlaneseq
  %v3274 = vshrl.u32 %v3273, 7
  %v3275 = vsub.s32 %v3272, %v3274
  %v3276 = vrot.slane %v3262, %v3275
  %v3277 = vcombine.low %v3269, %v3276
  %v3278 = vcombine.low %v2372, %v2371
  %v3279 = vcombine.low %v2373, %v2381
  %v3281 = vunpack.c.l.s4 1983009808
  %v3282 = vunpack.c.0.s8 %v3281
  %v3283 = vlaneseq
  %v3284 = vshrl.u32 %v3283, 7
  %v3285 = vsub.s32 %v3282, %v3284
  %v3286 = vrot.slane %v3278, %v3285
  %v3288 = vunpack.c.l.s4 1983009808
  %v3289 = vunpack.c.0.s8 %v3288
  %v3290 = vlaneseq
  %v3291 = vshrl.u32 %v3290, 7
  %v3292 = vsub.s32 %v3289, %v3291
  %v3293 = vrot.slane %v3279, %v3292
  %v3294 = vcombine.low %v3286, %v3293
  %v3295 = vcombine.low %v2389, %v2388
  %v3296 = vcombine.low %v2397, %v2405
  %v3298 = vunpack.c.l.s4 1983009808
  %v3299 = vunpack.c.0.s8 %v3298
  %v3300 = vlaneseq
  %v3301 = vshrl.u32 %v3300, 7
  %v3302 = vsub.s32 %v3299, %v3301
  %v3303 = vrot.slane %v3295, %v3302
  %v3305 = vunpack.c.l.s4 1983009808
  %v3306 = vunpack.c.0.s8 %v3305
  %v3307 = vlaneseq
  %v3308 = vshrl.u32 %v3307, 7
  %v3309 = vsub.s32 %v3306, %v3308
  %v3310 = vrot.slane %v3296, %v3309
  %v3311 = vcombine.low %v3303, %v3310
  %v3312 = vcombine.low %v2404, %v2406
  %v3313 = vcombine.low %v2414, %v2422
  %v3315 = vunpack.c.l.s4 1983009808
  %v3316 = vunpack.c.0.s8 %v3315
  %v3317 = vlaneseq
  %v3318 = vshrl.u32 %v3317, 7
  %v3319 = vsub.s32 %v3316, %v3318
  %v3320 = vrot.slane %v3312, %v3319
  %v3322 = vunpack.c.l.s4 1983009808
  %v3323 = vunpack.c.0.s8 %v3322
  %v3324 = vlaneseq
  %v3325 = vshrl.u32 %v3324, 7
  %v3326 = vsub.s32 %v3323, %v3325
  %v3327 = vrot.slane %v3313, %v3326
  %v3328 = vcombine.low %v3320, %v3327
  %v3329 = vcombine.low %v2421, %v2430
  %v3330 = vcombine.low %v2438, %v2437
  %v3332 = vunpack.c.l.s4 1983009808
  %v3333 = vunpack.c.0.s8 %v3332
  %v3334 = vlaneseq
  %v3335 = vshrl.u32 %v3334, 7
  %v3336 = vsub.s32 %v3333, %v3335
  %v3337 = vrot.slane %v3329, %v3336
  %v3339 = vunpack.c.l.s4 1983009808
  %v3340 = vunpack.c.0.s8 %v3339
  %v3341 = vlaneseq
  %v3342 = vshrl.u32 %v3341, 7
  %v3343 = vsub.s32 %v3340, %v3342
  %v3344 = vrot.slane %v3330, %v3343
  %v3345 = vcombine.low %v3337, %v3344
  %v3346 = vcombine.low %v2439, %v2447
  %v3347 = vcombine.low %v2455, %v2454
  %v3349 = vunpack.c.l.s4 1983009808
  %v3350 = vunpack.c.0.s8 %v3349
  %v3351 = vlaneseq
  %v3352 = vshrl.u32 %v3351, 7
  %v3353 = vsub.s32 %v3350, %v3352
  %v3354 = vrot.slane %v3346, %v3353
  %v3356 = vunpack.c.l.s4 1983009808
  %v3357 = vunpack.c.0.s8 %v3356
  %v3358 = vlaneseq
  %v3359 = vshrl.u32 %v3358, 7
  %v3360 = vsub.s32 %v3357, %v3359
  %v3361 = vrot.slane %v3347, %v3360
  %v3362 = vcombine.low %v3354, %v3361
  %v3363 = vcombine.low %v2463, %v2471
  %v3364 = vcombine.low %v2470, %v2472
  %v3366 = vunpack.c.l.s4 1983009808
  %v3367 = vunpack.c.0.s8 %v3366
  %v3368 = vlaneseq
  %v3369 = vshrl.u32 %v3368, 7
  %v3370 = vsub.s32 %v3367, %v3369
  %v3371 = vrot.slane %v3363, %v3370
  %v3373 = vunpack.c.l.s4 1983009808
  %v3374 = vunpack.c.0.s8 %v3373
  %v3375 = vlaneseq
  %v3376 = vshrl.u32 %v3375, 7
  %v3377 = vsub.s32 %v3374, %v3376
  %v3378 = vrot.slane %v3364, %v3377
  %v3379 = vcombine.low %v3371, %v3378
  %v3380 = vcombine.low %v2480, %v2488
  %v3381 = vcombine.low %v2487, %v2496
  %v3383 = vunpack.c.l.s4 1983009808
  %v3384 = vunpack.c.0.s8 %v3383
  %v3385 = vlaneseq
  %v3386 = vshrl.u32 %v3385, 7
  %v3387 = vsub.s32 %v3384, %v3386
  %v3388 = vrot.slane %v3380, %v3387
  %v3390 = vunpack.c.l.s4 1983009808
  %v3391 = vunpack.c.0.s8 %v3390
  %v3392 = vlaneseq
  %v3393 = vshrl.u32 %v3392, 7
  %v3394 = vsub.s32 %v3391, %v3393
  %v3395 = vrot.slane %v3381, %v3394
  %v3396 = vcombine.low %v3388, %v3395
  %v3397 = vcombine.low %v2504, %v2503
  %v3398 = vcombine.low %v2505, %v2513
  %v3400 = vunpack.c.l.s4 1983009808
  %v3401 = vunpack.c.0.s8 %v3400
  %v3402 = vlaneseq
  %v3403 = vshrl.u32 %v3402, 7
  %v3404 = vsub.s32 %v3401, %v3403
  %v3405 = vrot.slane %v3397, %v3404
  %v3407 = vunpack.c.l.s4 1983009808
  %v3408 = vunpack.c.0.s8 %v3407
  %v3409 = vlaneseq
  %v3410 = vshrl.u32 %v3409, 7
  %v3411 = vsub.s32 %v3408, %v3410
  %v3412 = vrot.slane %v3398, %v3411
  %v3413 = vcombine.low %v3405, %v3412
  %v3414 = vcombine.low %v2521, %v2520
  %v3415 = vcombine.low %v2529, %v2537
  %v3417 = vunpack.c.l.s4 1983009808
  %v3418 = vunpack.c.0.s8 %v3417
  %v3419 = vlaneseq
  %v3420 = vshrl.u32 %v3419, 7
  %v3421 = vsub.s32 %v3418, %v3420
  %v3422 = vrot.slane %v3414, %v3421
  %v3424 = vunpack.c.l.s4 1983009808
  %v3425 = vunpack.c.0.s8 %v3424
  %v3426 = vlaneseq
  %v3427 = vshrl.u32 %v3426, 7
  %v3428 = vsub.s32 %v3425, %v3427
  %v3429 = vrot.slane %v3415, %v3428
  %v3430 = vcombine.low %v3422, %v3429
  %v3431 = vcombine.low %v2536, %v2538
  %v3432 = vcombine.low %v2546, %v2554
  %v3434 = vunpack.c.l.s4 1983009808
  %v3435 = vunpack.c.0.s8 %v3434
  %v3436 = vlaneseq
  %v3437 = vshrl.u32 %v3436, 7
  %v3438 = vsub.s32 %v3435, %v3437
  %v3439 = vrot.slane %v3431, %v3438
  %v3441 = vunpack.c.l.s4 1983009808
  %v3442 = vunpack.c.0.s8 %v3441
  %v3443 = vlaneseq
  %v3444 = vshrl.u32 %v3443, 7
  %v3445 = vsub.s32 %v3442, %v3444
  %v3446 = vrot.slane %v3432, %v3445
  %v3447 = vcombine.low %v3439, %v3446
  %v3448 = vcombine.low %v2553, %v2562
  %v3449 = vcombine.low %v2570, %v2569
  %v3451 = vunpack.c.l.s4 1983009808
  %v3452 = vunpack.c.0.s8 %v3451
  %v3453 = vlaneseq
  %v3454 = vshrl.u32 %v3453, 7
  %v3455 = vsub.s32 %v3452, %v3454
  %v3456 = vrot.slane %v3448, %v3455
  %v3458 = vunpack.c.l.s4 1983009808
  %v3459 = vunpack.c.0.s8 %v3458
  %v3460 = vlaneseq
  %v3461 = vshrl.u32 %v3460, 7
  %v3462 = vsub.s32 %v3459, %v3461
  %v3463 = vrot.slane %v3449, %v3462
  %v3464 = vcombine.low %v3456, %v3463
  %v3465 = vcombine.low %v2571, %v2579
  %v3466 = vcombine.low %v2587, %v2586
  %v3468 = vunpack.c.l.s4 1983009808
  %v3469 = vunpack.c.0.s8 %v3468
  %v3470 = vlaneseq
  %v3471 = vshrl.u32 %v3470, 7
  %v3472 = vsub.s32 %v3469, %v3471
  %v3473 = vrot.slane %v3465, %v3472
  %v3475 = vunpack.c.l.s4 1983009808
  %v3476 = vunpack.c.0.s8 %v3475
  %v3477 = vlaneseq
  %v3478 = vshrl.u32 %v3477, 7
  %v3479 = vsub.s32 %v3476, %v3478
  %v3480 = vrot.slane %v3466, %v3479
  %v3481 = vcombine.low %v3473, %v3480
  %v3482 = vcombine.low %v2595, %v2603
  %v3483 = vcombine.low %v2602, %v2604
  %v3485 = vunpack.c.l.s4 1983009808
  %v3486 = vunpack.c.0.s8 %v3485
  %v3487 = vlaneseq
  %v3488 = vshrl.u32 %v3487, 7
  %v3489 = vsub.s32 %v3486, %v3488
  %v3490 = vrot.slane %v3482, %v3489
  %v3492 = vunpack.c.l.s4 1983009808
  %v3493 = vunpack.c.0.s8 %v3492
  %v3494 = vlaneseq
  %v3495 = vshrl.u32 %v3494, 7
  %v3496 = vsub.s32 %v3493, %v3495
  %v3497 = vrot.slane %v3483, %v3496
  %v3498 = vcombine.low %v3490, %v3497
  %v3499 = vcombine.low %v2612, %v2620
  %v3500 = vcombine.low %v2619, %v2628
  %v3502 = vunpack.c.l.s4 1983009808
  %v3503 = vunpack.c.0.s8 %v3502
  %v3504 = vlaneseq
  %v3505 = vshrl.u32 %v3504, 7
  %v3506 = vsub.s32 %v3503, %v3505
  %v3507 = vrot.slane %v3499, %v3506
  %v3509 = vunpack.c.l.s4 1983009808
  %v3510 = vunpack.c.0.s8 %v3509
  %v3511 = vlaneseq
  %v3512 = vshrl.u32 %v3511, 7
  %v3513 = vsub.s32 %v3510, %v3512
  %v3514 = vrot.slane %v3500, %v3513
  %v3515 = vcombine.low %v3507, %v3514
  %v3516 = vcombine.low %v2636, %v2635
  %v3517 = vcombine.low %v2637, %v2645
  %v3519 = vunpack.c.l.s4 1983009808
  %v3520 = vunpack.c.0.s8 %v3519
  %v3521 = vlaneseq
  %v3522 = vshrl.u32 %v3521, 7
  %v3523 = vsub.s32 %v3520, %v3522
  %v3524 = vrot.slane %v3516, %v3523
  %v3526 = vunpack.c.l.s4 1983009808
  %v3527 = vunpack.c.0.s8 %v3526
  %v3528 = vlaneseq
  %v3529 = vshrl.u32 %v3528, 7
  %v3530 = vsub.s32 %v3527, %v3529
  %v3531 = vrot.slane %v3517, %v3530
  %v3532 = vcombine.low %v3524, %v3531
  %v3533 = vcombine.low %v2653, %v2652
  %v3534 = vcombine.low %v2661, %v2669
  %v3536 = vunpack.c.l.s4 1983009808
  %v3537 = vunpack.c.0.s8 %v3536
  %v3538 = vlaneseq
  %v3539 = vshrl.u32 %v3538, 7
  %v3540 = vsub.s32 %v3537, %v3539
  %v3541 = vrot.slane %v3533, %v3540
  %v3543 = vunpack.c.l.s4 1983009808
  %v3544 = vunpack.c.0.s8 %v3543
  %v3545 = vlaneseq
  %v3546 = vshrl.u32 %v3545, 7
  %v3547 = vsub.s32 %v3544, %v3546
  %v3548 = vrot.slane %v3534, %v3547
  %v3549 = vcombine.low %v3541, %v3548
  %v3550 = vcombine.low %v2668, %v2670
  %v3551 = vcombine.low %v2678, %v2686
  %v3553 = vunpack.c.l.s4 1983009808
  %v3554 = vunpack.c.0.s8 %v3553
  %v3555 = vlaneseq
  %v3556 = vshrl.u32 %v3555, 7
  %v3557 = vsub.s32 %v3554, %v3556
  %v3558 = vrot.slane %v3550, %v3557
  %v3560 = vunpack.c.l.s4 1983009808
  %v3561 = vunpack.c.0.s8 %v3560
  %v3562 = vlaneseq
  %v3563 = vshrl.u32 %v3562, 7
  %v3564 = vsub.s32 %v3561, %v3563
  %v3565 = vrot.slane %v3551, %v3564
  %v3566 = vcombine.low %v3558, %v3565
  %v3567 = vcombine.low %v2685, %v2694
  %v3568 = vcombine.low %v2702, %v2701
  %v3570 = vunpack.c.l.s4 1983009808
  %v3571 = vunpack.c.0.s8 %v3570
  %v3572 = vlaneseq
  %v3573 = vshrl.u32 %v3572, 7
  %v3574 = vsub.s32 %v3571, %v3573
  %v3575 = vrot.slane %v3567, %v3574
  %v3577 = vunpack.c.l.s4 1983009808
  %v3578 = vunpack.c.0.s8 %v3577
  %v3579 = vlaneseq
  %v3580 = vshrl.u32 %v3579, 7
  %v3581 = vsub.s32 %v3578, %v3580
  %v3582 = vrot.slane %v3568, %v3581
  %v3583 = vcombine.low %v3575, %v3582
  %v3584 = vcombine.low %v2703, %v2711
  %v3585 = vcombine.low %v2719, %v2718
  %v3587 = vunpack.c.l.s4 1983009808
  %v3588 = vunpack.c.0.s8 %v3587
  %v3589 = vlaneseq
  %v3590 = vshrl.u32 %v3589, 7
  %v3591 = vsub.s32 %v3588, %v3590
  %v3592 = vrot.slane %v3584, %v3591
  %v3594 = vunpack.c.l.s4 1983009808
  %v3595 = vunpack.c.0.s8 %v3594
  %v3596 = vlaneseq
  %v3597 = vshrl.u32 %v3596, 7
  %v3598 = vsub.s32 %v3595, %v3597
  %v3599 = vrot.slane %v3585, %v3598
  %v3600 = vcombine.low %v3592, %v3599
  %v3601 = vcombine.low %v2727, %v2735
  %v3602 = vcombine.low %v2734, %v2736
  %v3604 = vunpack.c.l.s4 1983009808
  %v3605 = vunpack.c.0.s8 %v3604
  %v3606 = vlaneseq
  %v3607 = vshrl.u32 %v3606, 7
  %v3608 = vsub.s32 %v3605, %v3607
  %v3609 = vrot.slane %v3601, %v3608
  %v3611 = vunpack.c.l.s4 1983009808
  %v3612 = vunpack.c.0.s8 %v3611
  %v3613 = vlaneseq
  %v3614 = vshrl.u32 %v3613, 7
  %v3615 = vsub.s32 %v3612, %v3614
  %v3616 = vrot.slane %v3602, %v3615
  %v3617 = vcombine.low %v3609, %v3616
  %v3618 = vcombine.low %v2744, %v2752
  %v3619 = vcombine.low %v2751, %v2760
  %v3621 = vunpack.c.l.s4 1983009808
  %v3622 = vunpack.c.0.s8 %v3621
  %v3623 = vlaneseq
  %v3624 = vshrl.u32 %v3623, 7
  %v3625 = vsub.s32 %v3622, %v3624
  %v3626 = vrot.slane %v3618, %v3625
  %v3628 = vunpack.c.l.s4 1983009808
  %v3629 = vunpack.c.0.s8 %v3628
  %v3630 = vlaneseq
  %v3631 = vshrl.u32 %v3630, 7
  %v3632 = vsub.s32 %v3629, %v3631
  %v3633 = vrot.slane %v3619, %v3632
  %v3634 = vcombine.low %v3626, %v3633
  %v3635 = vcombine.low %v2768, %v2767
  %v3636 = vcombine.low %v2769, %v2777
  %v3638 = vunpack.c.l.s4 1983009808
  %v3639 = vunpack.c.0.s8 %v3638
  %v3640 = vlaneseq
  %v3641 = vshrl.u32 %v3640, 7
  %v3642 = vsub.s32 %v3639, %v3641
  %v3643 = vrot.slane %v3635, %v3642
  %v3645 = vunpack.c.l.s4 1983009808
  %v3646 = vunpack.c.0.s8 %v3645
  %v3647 = vlaneseq
  %v3648 = vshrl.u32 %v3647, 7
  %v3649 = vsub.s32 %v3646, %v3648
  %v3650 = vrot.slane %v3636, %v3649
  %v3651 = vcombine.low %v3643, %v3650
  %v3652 = vcombine.low %v2785, %v2784
  %v3653 = vcombine.low %v2793, %v2801
  %v3655 = vunpack.c.l.s4 1983009808
  %v3656 = vunpack.c.0.s8 %v3655
  %v3657 = vlaneseq
  %v3658 = vshrl.u32 %v3657, 7
  %v3659 = vsub.s32 %v3656, %v3658
  %v3660 = vrot.slane %v3652, %v3659
  %v3662 = vunpack.c.l.s4 1983009808
  %v3663 = vunpack.c.0.s8 %v3662
  %v3664 = vlaneseq
  %v3665 = vshrl.u32 %v3664, 7
  %v3666 = vsub.s32 %v3663, %v3665
  %v3667 = vrot.slane %v3653, %v3666
  %v3668 = vcombine.low %v3660, %v3667
  %v3669 = vcombine.low %v2800, %v2802
  %v3670 = vcombine.low %v2810, %v2818
  %v3672 = vunpack.c.l.s4 1983009808
  %v3673 = vunpack.c.0.s8 %v3672
  %v3674 = vlaneseq
  %v3675 = vshrl.u32 %v3674, 7
  %v3676 = vsub.s32 %v3673, %v3675
  %v3677 = vrot.slane %v3669, %v3676
  %v3679 = vunpack.c.l.s4 1983009808
  %v3680 = vunpack.c.0.s8 %v3679
  %v3681 = vlaneseq
  %v3682 = vshrl.u32 %v3681, 7
  %v3683 = vsub.s32 %v3680, %v3682
  %v3684 = vrot.slane %v3670, %v3683
  %v3685 = vcombine.low %v3677, %v3684
  %v3686 = vcombine.low %v2817, %v2826
  %v3687 = vcombine.low %v2834, %v2833
  %v3689 = vunpack.c.l.s4 1983009808
  %v3690 = vunpack.c.0.s8 %v3689
  %v3691 = vlaneseq
  %v3692 = vshrl.u32 %v3691, 7
  %v3693 = vsub.s32 %v3690, %v3692
  %v3694 = vrot.slane %v3686, %v3693
  %v3696 = vunpack.c.l.s4 1983009808
  %v3697 = vunpack.c.0.s8 %v3696
  %v3698 = vlaneseq
  %v3699 = vshrl.u32 %v3698, 7
  %v3700 = vsub.s32 %v3697, %v3699
  %v3701 = vrot.slane %v3687, %v3700
  %v3702 = vcombine.low %v3694, %v3701
  %v3703 = vcombine.low %v2835, %v2843
  %v3704 = vcombine.low %v2851, %v2850
  %v3706 = vunpack.c.l.s4 1983009808
  %v3707 = vunpack.c.0.s8 %v3706
  %v3708 = vlaneseq
  %v3709 = vshrl.u32 %v3708, 7
  %v3710 = vsub.s32 %v3707, %v3709
  %v3711 = vrot.slane %v3703, %v3710
  %v3713 = vunpack.c.l.s4 1983009808
  %v3714 = vunpack.c.0.s8 %v3713
  %v3715 = vlaneseq
  %v3716 = vshrl.u32 %v3715, 7
  %v3717 = vsub.s32 %v3714, %v3716
  %v3718 = vrot.slane %v3704, %v3717
  %v3719 = vcombine.low %v3711, %v3718
  %v3720 = vcombine.low %v2859, %v2867
  %v3721 = vcombine.low %v2866, %v2868
  %v3723 = vunpack.c.l.s4 1983009808
  %v3724 = vunpack.c.0.s8 %v3723
  %v3725 = vlaneseq
  %v3726 = vshrl.u32 %v3725, 7
  %v3727 = vsub.s32 %v3724, %v3726
  %v3728 = vrot.slane %v3720, %v3727
  %v3730 = vunpack.c.l.s4 1983009808
  %v3731 = vunpack.c.0.s8 %v3730
  %v3732 = vlaneseq
  %v3733 = vshrl.u32 %v3732, 7
  %v3734 = vsub.s32 %v3731, %v3733
  %v3735 = vrot.slane %v3721, %v3734
  %v3736 = vcombine.low %v3728, %v3735
  %v3737 = vcombine.low %v2876, %v2884
  %v3738 = vcombine.low %v2883, %v2892
  %v3740 = vunpack.c.l.s4 1983009808
  %v3741 = vunpack.c.0.s8 %v3740
  %v3742 = vlaneseq
  %v3743 = vshrl.u32 %v3742, 7
  %v3744 = vsub.s32 %v3741, %v3743
  %v3745 = vrot.slane %v3737, %v3744
  %v3747 = vunpack.c.l.s4 1983009808
  %v3748 = vunpack.c.0.s8 %v3747
  %v3749 = vlaneseq
  %v3750 = vshrl.u32 %v3749, 7
  %v3751 = vsub.s32 %v3748, %v3750
  %v3752 = vrot.slane %v3738, %v3751
  %v3753 = vcombine.low %v3745, %v3752
  %v3754 = vcombine.low %v2900, %v2899
  %v3755 = vcombine.low %v2901, %v2909
  %v3757 = vunpack.c.l.s4 1983009808
  %v3758 = vunpack.c.0.s8 %v3757
  %v3759 = vlaneseq
  %v3760 = vshrl.u32 %v3759, 7
  %v3761 = vsub.s32 %v3758, %v3760
  %v3762 = vrot.slane %v3754, %v3761
  %v3764 = vunpack.c.l.s4 1983009808
  %v3765 = vunpack.c.0.s8 %v3764
  %v3766 = vlaneseq
  %v3767 = vshrl.u32 %v3766, 7
  %v3768 = vsub.s32 %v3765, %v3767
  %v3769 = vrot.slane %v3755, %v3768
  %v3770 = vcombine.low %v3762, %v3769
  %v3771 = vcombine.low %v2917, %v2916
  %v3772 = vcombine.low %v2925, %v2933
  %v3774 = vunpack.c.l.s4 1983009808
  %v3775 = vunpack.c.0.s8 %v3774
  %v3776 = vlaneseq
  %v3777 = vshrl.u32 %v3776, 7
  %v3778 = vsub.s32 %v3775, %v3777
  %v3779 = vrot.slane %v3771, %v3778
  %v3781 = vunpack.c.l.s4 1983009808
  %v3782 = vunpack.c.0.s8 %v3781
  %v3783 = vlaneseq
  %v3784 = vshrl.u32 %v3783, 7
  %v3785 = vsub.s32 %v3782, %v3784
  %v3786 = vrot.slane %v3772, %v3785
  %v3787 = vcombine.low %v3779, %v3786
  %v3788 = vcombine.low %v2932, %v2934
  %v3789 = vcombine.low %v2942, %v2950
  %v3791 = vunpack.c.l.s4 1983009808
  %v3792 = vunpack.c.0.s8 %v3791
  %v3793 = vlaneseq
  %v3794 = vshrl.u32 %v3793, 7
  %v3795 = vsub.s32 %v3792, %v3794
  %v3796 = vrot.slane %v3788, %v3795
  %v3798 = vunpack.c.l.s4 1983009808
  %v3799 = vunpack.c.0.s8 %v3798
  %v3800 = vlaneseq
  %v3801 = vshrl.u32 %v3800, 7
  %v3802 = vsub.s32 %v3799, %v3801
  %v3803 = vrot.slane %v3789, %v3802
  %v3804 = vcombine.low %v3796, %v3803
  %v3805 = vcombine.low %v2949, %v2958
  %v3806 = vcombine.low %v2966, %v2965
  %v3808 = vunpack.c.l.s4 1983009808
  %v3809 = vunpack.c.0.s8 %v3808
  %v3810 = vlaneseq
  %v3811 = vshrl.u32 %v3810, 7
  %v3812 = vsub.s32 %v3809, %v3811
  %v3813 = vrot.slane %v3805, %v3812
  %v3815 = vunpack.c.l.s4 1983009808
  %v3816 = vunpack.c.0.s8 %v3815
  %v3817 = vlaneseq
  %v3818 = vshrl.u32 %v3817, 7
  %v3819 = vsub.s32 %v3816, %v3818
  %v3820 = vrot.slane %v3806, %v3819
  %v3821 = vcombine.low %v3813, %v3820
  %v3822 = vcombine.low %v2967, %v2975
  %v3823 = vcombine.low %v2983, %v2982
  %v3825 = vunpack.c.l.s4 1983009808
  %v3826 = vunpack.c.0.s8 %v3825
  %v3827 = vlaneseq
  %v3828 = vshrl.u32 %v3827, 7
  %v3829 = vsub.s32 %v3826, %v3828
  %v3830 = vrot.slane %v3822, %v3829
  %v3832 = vunpack.c.l.s4 1983009808
  %v3833 = vunpack.c.0.s8 %v3832
  %v3834 = vlaneseq
  %v3835 = vshrl.u32 %v3834, 7
  %v3836 = vsub.s32 %v3833, %v3835
  %v3837 = vrot.slane %v3823, %v3836
  %v3838 = vcombine.low %v3830, %v3837
  %v3839 = vcombine.low %v2991, %v2999
  %v3840 = vcombine.low %v2998, %v3000
  %v3842 = vunpack.c.l.s4 1983009808
  %v3843 = vunpack.c.0.s8 %v3842
  %v3844 = vlaneseq
  %v3845 = vshrl.u32 %v3844, 7
  %v3846 = vsub.s32 %v3843, %v3845
  %v3847 = vrot.slane %v3839, %v3846
  %v3849 = vunpack.c.l.s4 1983009808
  %v3850 = vunpack.c.0.s8 %v3849
  %v3851 = vlaneseq
  %v3852 = vshrl.u32 %v3851, 7
  %v3853 = vsub.s32 %v3850, %v3852
  %v3854 = vrot.slane %v3840, %v3853
  %v3855 = vcombine.low %v3847, %v3854
  %v3856 = vcombine.low %v3008, %v3016
  %v3857 = vcombine.low %v3015, %v3024
  %v3859 = vunpack.c.l.s4 1983009808
  %v3860 = vunpack.c.0.s8 %v3859
  %v3861 = vlaneseq
  %v3862 = vshrl.u32 %v3861, 7
  %v3863 = vsub.s32 %v3860, %v3862
  %v3864 = vrot.slane %v3856, %v3863
  %v3866 = vunpack.c.l.s4 1983009808
  %v3867 = vunpack.c.0.s8 %v3866
  %v3868 = vlaneseq
  %v3869 = vshrl.u32 %v3868, 7
  %v3870 = vsub.s32 %v3867, %v3869
  %v3871 = vrot.slane %v3857, %v3870
  %v3872 = vcombine.low %v3864, %v3871
  %v3873 = vcombine.low %v3032, %v3031
  %v3874 = vcombine.low %v3033, %v3041
  %v3876 = vunpack.c.l.s4 1983009808
  %v3877 = vunpack.c.0.s8 %v3876
  %v3878 = vlaneseq
  %v3879 = vshrl.u32 %v3878, 7
  %v3880 = vsub.s32 %v3877, %v3879
  %v3881 = vrot.slane %v3873, %v3880
  %v3883 = vunpack.c.l.s4 1983009808
  %v3884 = vunpack.c.0.s8 %v3883
  %v3885 = vlaneseq
  %v3886 = vshrl.u32 %v3885, 7
  %v3887 = vsub.s32 %v3884, %v3886
  %v3888 = vrot.slane %v3874, %v3887
  %v3889 = vcombine.low %v3881, %v3888
  %v3890 = vcombine.low %v3049, %v3048
  %v3891 = vcombine.low %v3057, %v3065
  %v3893 = vunpack.c.l.s4 1983009808
  %v3894 = vunpack.c.0.s8 %v3893
  %v3895 = vlaneseq
  %v3896 = vshrl.u32 %v3895, 7
  %v3897 = vsub.s32 %v3894, %v3896
  %v3898 = vrot.slane %v3890, %v3897
  %v3900 = vunpack.c.l.s4 1983009808
  %v3901 = vunpack.c.0.s8 %v3900
  %v3902 = vlaneseq
  %v3903 = vshrl.u32 %v3902, 7
  %v3904 = vsub.s32 %v3901, %v3903
  %v3905 = vrot.slane %v3891, %v3904
  %v3906 = vcombine.low %v3898, %v3905
  %v3907 = vcombine.low %v3064, %v3066
  %v3908 = vcombine.low %v3074, %v3082
  %v3910 = vunpack.c.l.s4 1983009808
  %v3911 = vunpack.c.0.s8 %v3910
  %v3912 = vlaneseq
  %v3913 = vshrl.u32 %v3912, 7
  %v3914 = vsub.s32 %v3911, %v3913
  %v3915 = vrot.slane %v3907, %v3914
  %v3917 = vunpack.c.l.s4 1983009808
  %v3918 = vunpack.c.0.s8 %v3917
  %v3919 = vlaneseq
  %v3920 = vshrl.u32 %v3919, 7
  %v3921 = vsub.s32 %v3918, %v3920
  %v3922 = vrot.slane %v3908, %v3921
  %v3923 = vcombine.low %v3915, %v3922
  %v3924 = vcombine.low %v3081, %v3090
  %v3925 = vcombine.low %v3098, %v3097
  %v3927 = vunpack.c.l.s4 1983009808
  %v3928 = vunpack.c.0.s8 %v3927
  %v3929 = vlaneseq
  %v3930 = vshrl.u32 %v3929, 7
  %v3931 = vsub.s32 %v3928, %v3930
  %v3932 = vrot.slane %v3924, %v3931
  %v3934 = vunpack.c.l.s4 1983009808
  %v3935 = vunpack.c.0.s8 %v3934
  %v3936 = vlaneseq
  %v3937 = vshrl.u32 %v3936, 7
  %v3938 = vsub.s32 %v3935, %v3937
  %v3939 = vrot.slane %v3925, %v3938
  %v3940 = vcombine.low %v3932, %v3939
  %v3941 = vcombine.low %v3099, %v3107
  %v3942 = vcombine.low %v3115, %v3114
  %v3944 = vunpack.c.l.s4 1983009808
  %v3945 = vunpack.c.0.s8 %v3944
  %v3946 = vlaneseq
  %v3947 = vshrl.u32 %v3946, 7
  %v3948 = vsub.s32 %v3945, %v3947
  %v3949 = vrot.slane %v3941, %v3948
  %v3951 = vunpack.c.l.s4 1983009808
  %v3952 = vunpack.c.0.s8 %v3951
  %v3953 = vlaneseq
  %v3954 = vshrl.u32 %v3953, 7
  %v3955 = vsub.s32 %v3952, %v3954
  %v3956 = vrot.slane %v3942, %v3955
  %v3957 = vcombine.low %v3949, %v3956
  %vm3958 = vcmask 220160
  %v3959 = vsel %vm3958, %v3141, 0
  %v3961 = vsel %vm3958, %v3158, 0
  %v3963 = vsel %vm3958, %v3175, 0
  %v3965 = vsel %vm3958, %v3192, 0
  %v3967 = vsel %vm3958, %v3209, 0
  %v3969 = vsel %vm3958, %v3226, 0
  %v3971 = vsel %vm3958, %v3243, 0
  %v3973 = vsel %vm3958, %v3260, 0
  %v3975 = vsel %vm3958, %v3277, 0
  %v3977 = vsel %vm3958, %v3294, 0
  %v3979 = vsel %vm3958, %v3311, 0
  %v3981 = vsel %vm3958, %v3328, 0
  %v3983 = vsel %vm3958, %v3345, 0
  %v3985 = vsel %vm3958, %v3362, 0
  %v3987 = vsel %vm3958, %v3379, 0
  %v3989 = vsel %vm3958, %v3396, 0
  %v3991 = vsel %vm3958, %v3413, 0
  %v3993 = vsel %vm3958, %v3430, 0
  %v3995 = vsel %vm3958, %v3447, 0
  %v3997 = vsel %vm3958, %v3464, 0
  %v3999 = vsel %vm3958, %v3481, 0
  %v4001 = vsel %vm3958, %v3498, 0
  %v4003 = vsel %vm3958, %v3515, 0
  %v4005 = vsel %vm3958, %v3532, 0
  %v4007 = vsel %vm3958, %v3549, 0
  %v4009 = vsel %vm3958, %v3566, 0
  %v4011 = vsel %vm3958, %v3583, 0
  %v4013 = vsel %vm3958, %v3600, 0
  %v4015 = vsel %vm3958, %v3617, 0
  %v4017 = vsel %vm3958, %v3634, 0
  %v4019 = vsel %vm3958, %v3651, 0
  %v4021 = vsel %vm3958, %v3668, 0
  %v4023 = vsel %vm3958, %v3685, 0
  %v4025 = vsel %vm3958, %v3702, 0
  %v4027 = vsel %vm3958, %v3719, 0
  %v4029 = vsel %vm3958, %v3736, 0
  %v4031 = vsel %vm3958, %v3753, 0
  %v4033 = vsel %vm3958, %v3770, 0
  %v4035 = vsel %vm3958, %v3787, 0
  %v4037 = vsel %vm3958, %v3804, 0
  %v4039 = vsel %vm3958, %v3821, 0
  %v4041 = vsel %vm3958, %v3838, 0
  %v4043 = vsel %vm3958, %v3855, 0
  %v4045 = vsel %vm3958, %v3872, 0
  %v4047 = vsel %vm3958, %v3889, 0
  %v4049 = vsel %vm3958, %v3906, 0
  %v4051 = vsel %vm3958, %v3923, 0
  %v4053 = vsel %vm3958, %v3940, 0
  %v4055 = vsel %vm3958, %v3957, 0
  %vm4057 = vcmask 1042432
  %v4059 = vsel %vm4057, %v3119, 0
  %4061 = vmatprep.subr.mxu0 0.0
  %4062 = vmatpush1.msra.mxu0 %v3116
  %4063 = vmatprep.subr.mxu0 0.0
  %4064 = vmatpush1.msra.mxu0 %v3117
  %4065 = vmatprep.subr.mxu0 0.0
  %4066 = vmatpush1.msra.mxu0 %v3118
  %4067 = vmatprep.subr.mxu0 0.0
  %4068 = vmatpush1.msra.mxu0 %v4059
  %4069 = vmatprep.subr.mxu0 0.0
  %4070 = vmatpush1.msra.mxu0 0.0
  %4071 = vmatprep.subr.mxu0 0.0
  %4072 = vmatpush1.msra.mxu0 0.0
  %4073 = vmatprep.subr.mxu0 0.0
  %4074 = vmatpush1.msra.mxu0 0.0
  %4075 = vmatprep.subr.mxu0 0.0
  %4076 = vmatpush1.msra.mxu0 0.0
  %4077 = vmatprep.subr.mxu0 0.0
  %4078 = vmatpush1.msra.mxu0 0.0
  %4079 = vmatprep.subr.mxu0 0.0
  %4080 = vmatpush1.msra.mxu0 0.0
  %4081 = vmatprep.subr.mxu0 0.0
  %4082 = vmatpush1.msra.mxu0 0.0
  %4083 = vmatprep.subr.mxu0 0.0
  %4084 = vmatpush1.msra.mxu0 0.0
  %4085 = vmatprep.subr.mxu0 0.0
  %4086 = vmatpush1.msra.mxu0 0.0
  %4087 = vmatprep.subr.mxu0 0.0
  %4088 = vmatpush1.msra.mxu0 0.0
  %4089 = vmatprep.subr.mxu0 0.0
  %4090 = vmatpush1.msra.mxu0 0.0
  %4091 = vmatprep.subr.mxu0 0.0
  %4092 = vmatpush1.msra.mxu0 0.0
  %4093 = vmatprep.subr.mxu0 0.0
  %4094 = vmatpush1.msra.mxu0 0.0
  %4095 = vmatprep.subr.mxu0 0.0
  %4096 = vmatpush1.msra.mxu0 0.0
  %4097 = vmatprep.subr.mxu0 0.0
  %4098 = vmatpush1.msra.mxu0 0.0
  %4099 = vmatprep.subr.mxu0 0.0
  %4100 = vmatpush1.msra.mxu0 0.0
  %4101 = vmatprep.subr.mxu0 0.0
  %4102 = vmatpush1.msra.mxu0 0.0
  %4103 = vmatprep.subr.mxu0 0.0
  %4104 = vmatpush1.msra.mxu0 0.0
  %4105 = vmatprep.subr.mxu0 0.0
  %4106 = vmatpush1.msra.mxu0 0.0
  %4107 = vmatprep.subr.mxu0 0.0
  %4108 = vmatpush1.msra.mxu0 0.0
  %4109 = vmatprep.subr.mxu0 0.0
  %4110 = vmatpush1.msra.mxu0 0.0
  %4111 = vmatprep.subr.mxu0 0.0
  %4112 = vmatpush1.msra.mxu0 0.0
  %4113 = vmatprep.subr.mxu0 0.0
  %4114 = vmatpush1.msra.mxu0 0.0
  %4115 = vmatprep.subr.mxu0 0.0
  %4116 = vmatpush1.msra.mxu0 0.0
  %4117 = vmatprep.subr.mxu0 0.0
  %4118 = vmatpush1.msra.mxu0 0.0
  %4119 = vmatprep.subr.mxu0 0.0
  %4120 = vmatpush1.msra.mxu0 0.0
  %4121 = vmatprep.subr.mxu0 0.0
  %4122 = vmatpush1.msra.mxu0 0.0
  %4123 = vmatprep.subr.mxu0 0.0
  %4124 = vmatpush1.msra.mxu0 0.0
  %4125 = vmatprep.mubr.f32.mxu0 0.0
  %4126 = vmatmul.mubr.f32.gmra.mrb[0].mxu0 %v3959
  %v4127 = vpop.f32.mrb[0].mxu0
  %v4128 = vadd.f32 %v3124, %v4127
  %v4129 = vpop.f32.mrb[0].mxu0
  %4130 = vmatprep.mubr.f32.mxu0 0.0
  %4131 = vmatmul.mubr.f32.gmra.mrb[0].mxu0 %v3961
  %v4132 = vpop.f32.mrb[0].mxu0
  %v4133 = vadd.f32 %v3124, %v4132
  %v4134 = vpop.f32.mrb[0].mxu0
  %4135 = vmatprep.mubr.f32.mxu0 0.0
  %4136 = vmatmul.mubr.f32.gmra.mrb[0].mxu0 %v3963
  %v4137 = vpop.f32.mrb[0].mxu0
  %v4138 = vadd.f32 %v3124, %v4137
  %v4139 = vpop.f32.mrb[0].mxu0
  %4140 = vmatprep.mubr.f32.mxu0 0.0
  %4141 = vmatmul.mubr.f32.gmra.mrb[0].mxu0 %v3965
  %v4142 = vpop.f32.mrb[0].mxu0
  %v4143 = vadd.f32 %v3124, %v4142
  %v4144 = vpop.f32.mrb[0].mxu0
  %4145 = vmatprep.mubr.f32.mxu0 0.0
  %4146 = vmatmul.mubr.f32.gmra.mrb[0].mxu0 %v3967
  %v4147 = vpop.f32.mrb[0].mxu0
  %v4148 = vadd.f32 %v3124, %v4147
  %v4149 = vpop.f32.mrb[0].mxu0
  %4150 = vmatprep.mubr.f32.mxu0 0.0
  %4151 = vmatmul.mubr.f32.gmra.mrb[0].mxu0 %v3969
  %v4152 = vpop.f32.mrb[0].mxu0
  %v4153 = vadd.f32 %v3124, %v4152
  %v4154 = vpop.f32.mrb[0].mxu0
  %4155 = vmatprep.mubr.f32.mxu0 0.0
  %4156 = vmatmul.mubr.f32.gmra.mrb[0].mxu0 %v3971
  %v4157 = vpop.f32.mrb[0].mxu0
  %v4158 = vadd.f32 %v3124, %v4157
  %v4159 = vpop.f32.mrb[0].mxu0
  %4160 = vmatprep.mubr.f32.mxu0 0.0
  %4161 = vmatmul.mubr.f32.gmra.mrb[0].mxu0 %v3973
  %v4162 = vpop.f32.mrb[0].mxu0
  %v4163 = vadd.f32 %v3124, %v4162
  %v4164 = vpop.f32.mrb[0].mxu0
  %4165 = vmatprep.mubr.f32.mxu0 0.0
  %4166 = vmatmul.mubr.f32.gmra.mrb[0].mxu0 %v3975
  %v4167 = vpop.f32.mrb[0].mxu0
  %v4168 = vadd.f32 %v3124, %v4167
  %v4169 = vpop.f32.mrb[0].mxu0
  %4170 = vmatprep.mubr.f32.mxu0 0.0
  %4171 = vmatmul.mubr.f32.gmra.mrb[0].mxu0 %v3977
  %v4172 = vpop.f32.mrb[0].mxu0
  %v4173 = vadd.f32 %v3124, %v4172
  %v4174 = vpop.f32.mrb[0].mxu0
  %4175 = vmatprep.mubr.f32.mxu0 0.0
  %4176 = vmatmul.mubr.f32.gmra.mrb[0].mxu0 %v3979
  %v4177 = vpop.f32.mrb[0].mxu0
  %v4178 = vadd.f32 %v3124, %v4177
  %v4179 = vpop.f32.mrb[0].mxu0
  %4180 = vmatprep.mubr.f32.mxu0 0.0
  %4181 = vmatmul.mubr.f32.gmra.mrb[0].mxu0 %v3981
  %v4182 = vpop.f32.mrb[0].mxu0
  %v4183 = vadd.f32 %v3124, %v4182
  %v4184 = vpop.f32.mrb[0].mxu0
  %4185 = vmatprep.mubr.f32.mxu0 0.0
  %4186 = vmatmul.mubr.f32.gmra.mrb[0].mxu0 %v3983
  %v4187 = vpop.f32.mrb[0].mxu0
  %v4188 = vadd.f32 %v3124, %v4187
  %v4189 = vpop.f32.mrb[0].mxu0
  %4190 = vmatprep.mubr.f32.mxu0 0.0
  %4191 = vmatmul.mubr.f32.gmra.mrb[0].mxu0 %v3985
  %v4192 = vpop.f32.mrb[0].mxu0
  %v4193 = vadd.f32 %v3124, %v4192
  %v4194 = vpop.f32.mrb[0].mxu0
  %4195 = vmatprep.mubr.f32.mxu0 0.0
  %4196 = vmatmul.mubr.f32.gmra.mrb[0].mxu0 %v3987
  %v4197 = vpop.f32.mrb[0].mxu0
  %v4198 = vadd.f32 %v3124, %v4197
  %v4199 = vpop.f32.mrb[0].mxu0
  %4200 = vmatprep.mubr.f32.mxu0 0.0
  %4201 = vmatmul.mubr.f32.gmra.mrb[0].mxu0 %v3989
  %v4202 = vpop.f32.mrb[0].mxu0
  %v4203 = vadd.f32 %v3124, %v4202
  %v4204 = vpop.f32.mrb[0].mxu0
  %4205 = vmatprep.mubr.f32.mxu0 0.0
  %4206 = vmatmul.mubr.f32.gmra.mrb[0].mxu0 %v3991
  %v4207 = vpop.f32.mrb[0].mxu0
  %v4208 = vadd.f32 %v3124, %v4207
  %v4209 = vpop.f32.mrb[0].mxu0
  %4210 = vmatprep.mubr.f32.mxu0 0.0
  %4211 = vmatmul.mubr.f32.gmra.mrb[0].mxu0 %v3993
  %v4212 = vpop.f32.mrb[0].mxu0
  %v4213 = vadd.f32 %v3124, %v4212
  %v4214 = vpop.f32.mrb[0].mxu0
  %4215 = vmatprep.mubr.f32.mxu0 0.0
  %4216 = vmatmul.mubr.f32.gmra.mrb[0].mxu0 %v3995
  %v4217 = vpop.f32.mrb[0].mxu0
  %v4218 = vadd.f32 %v3124, %v4217
  %v4219 = vpop.f32.mrb[0].mxu0
  %4220 = vmatprep.mubr.f32.mxu0 0.0
  %4221 = vmatmul.mubr.f32.gmra.mrb[0].mxu0 %v3997
  %v4222 = vpop.f32.mrb[0].mxu0
  %v4223 = vadd.f32 %v3124, %v4222
  %v4224 = vpop.f32.mrb[0].mxu0
  %4225 = vmatprep.mubr.f32.mxu0 0.0
  %4226 = vmatmul.mubr.f32.gmra.mrb[0].mxu0 %v3999
  %v4227 = vpop.f32.mrb[0].mxu0
  %v4228 = vadd.f32 %v3124, %v4227
  %v4229 = vpop.f32.mrb[0].mxu0
  %4230 = vmatprep.mubr.f32.mxu0 0.0
  %4231 = vmatmul.mubr.f32.gmra.mrb[0].mxu0 %v4001
  %v4232 = vpop.f32.mrb[0].mxu0
  %v4233 = vadd.f32 %v3124, %v4232
  %v4234 = vpop.f32.mrb[0].mxu0
  %4235 = vmatprep.mubr.f32.mxu0 0.0
  %4236 = vmatmul.mubr.f32.gmra.mrb[0].mxu0 %v4003
  %v4237 = vpop.f32.mrb[0].mxu0
  %v4238 = vadd.f32 %v3124, %v4237
  %v4239 = vpop.f32.mrb[0].mxu0
  %4240 = vmatprep.mubr.f32.mxu0 0.0
  %4241 = vmatmul.mubr.f32.gmra.mrb[0].mxu0 %v4005
  %v4242 = vpop.f32.mrb[0].mxu0
  %v4243 = vadd.f32 %v3124, %v4242
  %v4244 = vpop.f32.mrb[0].mxu0
  %4245 = vmatprep.mubr.f32.mxu0 0.0
  %4246 = vmatmul.mubr.f32.gmra.mrb[0].mxu0 %v4007
  %v4247 = vpop.f32.mrb[0].mxu0
  %v4248 = vadd.f32 %v3124, %v4247
  %v4249 = vpop.f32.mrb[0].mxu0
  %4250 = vmatprep.mubr.f32.mxu0 0.0
  %4251 = vmatmul.mubr.f32.gmra.mrb[0].mxu0 %v4009
  %v4252 = vpop.f32.mrb[0].mxu0
  %v4253 = vadd.f32 %v3124, %v4252
  %v4254 = vpop.f32.mrb[0].mxu0
  %4255 = vmatprep.mubr.f32.mxu0 0.0
  %4256 = vmatmul.mubr.f32.gmra.mrb[0].mxu0 %v4011
  %v4257 = vpop.f32.mrb[0].mxu0
  %v4258 = vadd.f32 %v3124, %v4257
  %v4259 = vpop.f32.mrb[0].mxu0
  %4260 = vmatprep.mubr.f32.mxu0 0.0
  %4261 = vmatmul.mubr.f32.gmra.mrb[0].mxu0 %v4013
  %v4262 = vpop.f32.mrb[0].mxu0
  %v4263 = vadd.f32 %v3124, %v4262
  %v4264 = vpop.f32.mrb[0].mxu0
  %4265 = vmatprep.mubr.f32.mxu0 0.0
  %4266 = vmatmul.mubr.f32.gmra.mrb[0].mxu0 %v4015
  %v4267 = vpop.f32.mrb[0].mxu0
  %v4268 = vadd.f32 %v3124, %v4267
  %v4269 = vpop.f32.mrb[0].mxu0
  %4270 = vmatprep.mubr.f32.mxu0 0.0
  %4271 = vmatmul.mubr.f32.gmra.mrb[0].mxu0 %v4017
  %v4272 = vpop.f32.mrb[0].mxu0
  %v4273 = vadd.f32 %v3124, %v4272
  %v4274 = vpop.f32.mrb[0].mxu0
  %4275 = vmatprep.mubr.f32.mxu0 0.0
  %4276 = vmatmul.mubr.f32.gmra.mrb[0].mxu0 %v4019
  %v4277 = vpop.f32.mrb[0].mxu0
  %v4278 = vadd.f32 %v3124, %v4277
  %v4279 = vpop.f32.mrb[0].mxu0
  %4280 = vmatprep.mubr.f32.mxu0 0.0
  %4281 = vmatmul.mubr.f32.gmra.mrb[0].mxu0 %v4021
  %v4282 = vpop.f32.mrb[0].mxu0
  %v4283 = vadd.f32 %v3124, %v4282
  %v4284 = vpop.f32.mrb[0].mxu0
  %4285 = vmatprep.mubr.f32.mxu0 0.0
  %4286 = vmatmul.mubr.f32.gmra.mrb[0].mxu0 %v4023
  %v4287 = vpop.f32.mrb[0].mxu0
  %v4288 = vadd.f32 %v3124, %v4287
  %v4289 = vpop.f32.mrb[0].mxu0
  %4290 = vmatprep.mubr.f32.mxu0 0.0
  %4291 = vmatmul.mubr.f32.gmra.mrb[0].mxu0 %v4025
  %v4292 = vpop.f32.mrb[0].mxu0
  %v4293 = vadd.f32 %v3124, %v4292
  %v4294 = vpop.f32.mrb[0].mxu0
  %4295 = vmatprep.mubr.f32.mxu0 0.0
  %4296 = vmatmul.mubr.f32.gmra.mrb[0].mxu0 %v4027
  %v4297 = vpop.f32.mrb[0].mxu0
  %v4298 = vadd.f32 %v3124, %v4297
  %v4299 = vpop.f32.mrb[0].mxu0
  %4300 = vmatprep.mubr.f32.mxu0 0.0
  %4301 = vmatmul.mubr.f32.gmra.mrb[0].mxu0 %v4029
  %v4302 = vpop.f32.mrb[0].mxu0
  %v4303 = vadd.f32 %v3124, %v4302
  %v4304 = vpop.f32.mrb[0].mxu0
  %4305 = vmatprep.mubr.f32.mxu0 0.0
  %4306 = vmatmul.mubr.f32.gmra.mrb[0].mxu0 %v4031
  %v4307 = vpop.f32.mrb[0].mxu0
  %v4308 = vadd.f32 %v3124, %v4307
  %v4309 = vpop.f32.mrb[0].mxu0
  %4310 = vmatprep.mubr.f32.mxu0 0.0
  %4311 = vmatmul.mubr.f32.gmra.mrb[0].mxu0 %v4033
  %v4312 = vpop.f32.mrb[0].mxu0
  %v4313 = vadd.f32 %v3124, %v4312
  %v4314 = vpop.f32.mrb[0].mxu0
  %4315 = vmatprep.mubr.f32.mxu0 0.0
  %4316 = vmatmul.mubr.f32.gmra.mrb[0].mxu0 %v4035
  %v4317 = vpop.f32.mrb[0].mxu0
  %v4318 = vadd.f32 %v3124, %v4317
  %v4319 = vpop.f32.mrb[0].mxu0
  %4320 = vmatprep.mubr.f32.mxu0 0.0
  %4321 = vmatmul.mubr.f32.gmra.mrb[0].mxu0 %v4037
  %v4322 = vpop.f32.mrb[0].mxu0
  %v4323 = vadd.f32 %v3124, %v4322
  %v4324 = vpop.f32.mrb[0].mxu0
  %4325 = vmatprep.mubr.f32.mxu0 0.0
  %4326 = vmatmul.mubr.f32.gmra.mrb[0].mxu0 %v4039
  %v4327 = vpop.f32.mrb[0].mxu0
  %v4328 = vadd.f32 %v3124, %v4327
  %v4329 = vpop.f32.mrb[0].mxu0
  %4330 = vmatprep.mubr.f32.mxu0 0.0
  %4331 = vmatmul.mubr.f32.gmra.mrb[0].mxu0 %v4041
  %v4332 = vpop.f32.mrb[0].mxu0
  %v4333 = vadd.f32 %v3124, %v4332
  %v4334 = vpop.f32.mrb[0].mxu0
  %4335 = vmatprep.mubr.f32.mxu0 0.0
  %4336 = vmatmul.mubr.f32.gmra.mrb[0].mxu0 %v4043
  %v4337 = vpop.f32.mrb[0].mxu0
  %v4338 = vadd.f32 %v3124, %v4337
  %v4339 = vpop.f32.mrb[0].mxu0
  %4340 = vmatprep.mubr.f32.mxu0 0.0
  %4341 = vmatmul.mubr.f32.gmra.mrb[0].mxu0 %v4045
  %v4342 = vpop.f32.mrb[0].mxu0
  %v4343 = vadd.f32 %v3124, %v4342
  %v4344 = vpop.f32.mrb[0].mxu0
  %4345 = vmatprep.mubr.f32.mxu0 0.0
  %4346 = vmatmul.mubr.f32.gmra.mrb[0].mxu0 %v4047
  %v4347 = vpop.f32.mrb[0].mxu0
  %v4348 = vadd.f32 %v3124, %v4347
  %v4349 = vpop.f32.mrb[0].mxu0
  %4350 = vmatprep.mubr.f32.mxu0 0.0
  %4351 = vmatmul.mubr.f32.gmra.mrb[0].mxu0 %v4049
  %v4352 = vpop.f32.mrb[0].mxu0
  %v4353 = vadd.f32 %v3124, %v4352
  %v4354 = vpop.f32.mrb[0].mxu0
  %4355 = vmatprep.mubr.f32.mxu0 0.0
  %4356 = vmatmul.mubr.f32.gmra.mrb[0].mxu0 %v4051
  %v4357 = vpop.f32.mrb[0].mxu0
  %v4358 = vadd.f32 %v3124, %v4357
  %v4359 = vpop.f32.mrb[0].mxu0
  %4360 = vmatprep.mubr.f32.mxu0 0.0
  %4361 = vmatmul.mubr.f32.gmra.mrb[0].mxu0 %v4053
  %v4362 = vpop.f32.mrb[0].mxu0
  %v4363 = vadd.f32 %v3124, %v4362
  %v4364 = vpop.f32.mrb[0].mxu0
  %4365 = vmatprep.mubr.f32.mxu0 0.0
  %4366 = vmatmul.mubr.f32.gmra.mrb[0].mxu0 %v4055
  %v4367 = vpop.f32.mrb[0].mxu0
  %v4368 = vadd.f32 %v3124, %v4367
  %v4369 = vpop.f32.mrb[0].mxu0
  %4370 = vdwg.mxu0
  %v4420 = vcombine.high %v4128, %v4128
  %v4422 = vunpack.c.l.s4 1983009808
  %v4423 = vunpack.c.0.s8 %v4422
  %v4424 = vlaneseq
  %v4425 = vshrl.u32 %v4424, 7
  %v4426 = vsub.s32 %v4423, %v4425
  %v4427 = vrot.slane %v4128, %v4426
  %v4429 = vunpack.c.l.s4 1983009808
  %v4430 = vunpack.c.0.s8 %v4429
  %v4431 = vlaneseq
  %v4432 = vshrl.u32 %v4431, 7
  %v4433 = vsub.s32 %v4430, %v4432
  %v4434 = vrot.slane %v4420, %v4433
  %v4435 = vcombine.high %v4427, %v4427
  %v4436 = vcombine.high %v4434, %v4434
  %v4437 = vcombine.high %v4133, %v4133
  %v4439 = vunpack.c.l.s4 1983009808
  %v4440 = vunpack.c.0.s8 %v4439
  %v4441 = vlaneseq
  %v4442 = vshrl.u32 %v4441, 7
  %v4443 = vsub.s32 %v4440, %v4442
  %v4444 = vrot.slane %v4133, %v4443
  %v4446 = vunpack.c.l.s4 1983009808
  %v4447 = vunpack.c.0.s8 %v4446
  %v4448 = vlaneseq
  %v4449 = vshrl.u32 %v4448, 7
  %v4450 = vsub.s32 %v4447, %v4449
  %v4451 = vrot.slane %v4437, %v4450
  %v4452 = vcombine.high %v4444, %v4444
  %v4453 = vcombine.high %v4451, %v4451
  %v4454 = vcombine.high %v4138, %v4138
  %v4456 = vunpack.c.l.s4 1983009808
  %v4457 = vunpack.c.0.s8 %v4456
  %v4458 = vlaneseq
  %v4459 = vshrl.u32 %v4458, 7
  %v4460 = vsub.s32 %v4457, %v4459
  %v4461 = vrot.slane %v4138, %v4460
  %v4463 = vunpack.c.l.s4 1983009808
  %v4464 = vunpack.c.0.s8 %v4463
  %v4465 = vlaneseq
  %v4466 = vshrl.u32 %v4465, 7
  %v4467 = vsub.s32 %v4464, %v4466
  %v4468 = vrot.slane %v4454, %v4467
  %v4469 = vcombine.high %v4461, %v4461
  %v4470 = vcombine.high %v4468, %v4468
  %v4471 = vcombine.high %v4143, %v4143
  %v4473 = vunpack.c.l.s4 1983009808
  %v4474 = vunpack.c.0.s8 %v4473
  %v4475 = vlaneseq
  %v4476 = vshrl.u32 %v4475, 7
  %v4477 = vsub.s32 %v4474, %v4476
  %v4478 = vrot.slane %v4143, %v4477
  %v4480 = vunpack.c.l.s4 1983009808
  %v4481 = vunpack.c.0.s8 %v4480
  %v4482 = vlaneseq
  %v4483 = vshrl.u32 %v4482, 7
  %v4484 = vsub.s32 %v4481, %v4483
  %v4485 = vrot.slane %v4471, %v4484
  %v4486 = vcombine.high %v4478, %v4478
  %v4487 = vcombine.high %v4485, %v4485
  %v4488 = vcombine.high %v4148, %v4148
  %v4490 = vunpack.c.l.s4 1983009808
  %v4491 = vunpack.c.0.s8 %v4490
  %v4492 = vlaneseq
  %v4493 = vshrl.u32 %v4492, 7
  %v4494 = vsub.s32 %v4491, %v4493
  %v4495 = vrot.slane %v4148, %v4494
  %v4497 = vunpack.c.l.s4 1983009808
  %v4498 = vunpack.c.0.s8 %v4497
  %v4499 = vlaneseq
  %v4500 = vshrl.u32 %v4499, 7
  %v4501 = vsub.s32 %v4498, %v4500
  %v4502 = vrot.slane %v4488, %v4501
  %v4503 = vcombine.high %v4495, %v4495
  %v4504 = vcombine.high %v4502, %v4502
  %v4505 = vcombine.high %v4153, %v4153
  %v4507 = vunpack.c.l.s4 1983009808
  %v4508 = vunpack.c.0.s8 %v4507
  %v4509 = vlaneseq
  %v4510 = vshrl.u32 %v4509, 7
  %v4511 = vsub.s32 %v4508, %v4510
  %v4512 = vrot.slane %v4153, %v4511
  %v4514 = vunpack.c.l.s4 1983009808
  %v4515 = vunpack.c.0.s8 %v4514
  %v4516 = vlaneseq
  %v4517 = vshrl.u32 %v4516, 7
  %v4518 = vsub.s32 %v4515, %v4517
  %v4519 = vrot.slane %v4505, %v4518
  %v4520 = vcombine.high %v4512, %v4512
  %v4521 = vcombine.high %v4519, %v4519
  %v4522 = vcombine.high %v4158, %v4158
  %v4524 = vunpack.c.l.s4 1983009808
  %v4525 = vunpack.c.0.s8 %v4524
  %v4526 = vlaneseq
  %v4527 = vshrl.u32 %v4526, 7
  %v4528 = vsub.s32 %v4525, %v4527
  %v4529 = vrot.slane %v4158, %v4528
  %v4531 = vunpack.c.l.s4 1983009808
  %v4532 = vunpack.c.0.s8 %v4531
  %v4533 = vlaneseq
  %v4534 = vshrl.u32 %v4533, 7
  %v4535 = vsub.s32 %v4532, %v4534
  %v4536 = vrot.slane %v4522, %v4535
  %v4537 = vcombine.high %v4529, %v4529
  %v4538 = vcombine.high %v4536, %v4536
  %v4539 = vcombine.high %v4163, %v4163
  %v4541 = vunpack.c.l.s4 1983009808
  %v4542 = vunpack.c.0.s8 %v4541
  %v4543 = vlaneseq
  %v4544 = vshrl.u32 %v4543, 7
  %v4545 = vsub.s32 %v4542, %v4544
  %v4546 = vrot.slane %v4163, %v4545
  %v4548 = vunpack.c.l.s4 1983009808
  %v4549 = vunpack.c.0.s8 %v4548
  %v4550 = vlaneseq
  %v4551 = vshrl.u32 %v4550, 7
  %v4552 = vsub.s32 %v4549, %v4551
  %v4553 = vrot.slane %v4539, %v4552
  %v4554 = vcombine.high %v4546, %v4546
  %v4555 = vcombine.high %v4553, %v4553
  %v4556 = vcombine.high %v4168, %v4168
  %v4558 = vunpack.c.l.s4 1983009808
  %v4559 = vunpack.c.0.s8 %v4558
  %v4560 = vlaneseq
  %v4561 = vshrl.u32 %v4560, 7
  %v4562 = vsub.s32 %v4559, %v4561
  %v4563 = vrot.slane %v4168, %v4562
  %v4565 = vunpack.c.l.s4 1983009808
  %v4566 = vunpack.c.0.s8 %v4565
  %v4567 = vlaneseq
  %v4568 = vshrl.u32 %v4567, 7
  %v4569 = vsub.s32 %v4566, %v4568
  %v4570 = vrot.slane %v4556, %v4569
  %v4571 = vcombine.high %v4563, %v4563
  %v4572 = vcombine.high %v4570, %v4570
  %v4573 = vcombine.high %v4173, %v4173
  %v4575 = vunpack.c.l.s4 1983009808
  %v4576 = vunpack.c.0.s8 %v4575
  %v4577 = vlaneseq
  %v4578 = vshrl.u32 %v4577, 7
  %v4579 = vsub.s32 %v4576, %v4578
  %v4580 = vrot.slane %v4173, %v4579
  %v4582 = vunpack.c.l.s4 1983009808
  %v4583 = vunpack.c.0.s8 %v4582
  %v4584 = vlaneseq
  %v4585 = vshrl.u32 %v4584, 7
  %v4586 = vsub.s32 %v4583, %v4585
  %v4587 = vrot.slane %v4573, %v4586
  %v4588 = vcombine.high %v4580, %v4580
  %v4589 = vcombine.high %v4587, %v4587
  %v4590 = vcombine.high %v4178, %v4178
  %v4592 = vunpack.c.l.s4 1983009808
  %v4593 = vunpack.c.0.s8 %v4592
  %v4594 = vlaneseq
  %v4595 = vshrl.u32 %v4594, 7
  %v4596 = vsub.s32 %v4593, %v4595
  %v4597 = vrot.slane %v4178, %v4596
  %v4599 = vunpack.c.l.s4 1983009808
  %v4600 = vunpack.c.0.s8 %v4599
  %v4601 = vlaneseq
  %v4602 = vshrl.u32 %v4601, 7
  %v4603 = vsub.s32 %v4600, %v4602
  %v4604 = vrot.slane %v4590, %v4603
  %v4605 = vcombine.high %v4597, %v4597
  %v4606 = vcombine.high %v4604, %v4604
  %v4607 = vcombine.high %v4183, %v4183
  %v4609 = vunpack.c.l.s4 1983009808
  %v4610 = vunpack.c.0.s8 %v4609
  %v4611 = vlaneseq
  %v4612 = vshrl.u32 %v4611, 7
  %v4613 = vsub.s32 %v4610, %v4612
  %v4614 = vrot.slane %v4183, %v4613
  %v4616 = vunpack.c.l.s4 1983009808
  %v4617 = vunpack.c.0.s8 %v4616
  %v4618 = vlaneseq
  %v4619 = vshrl.u32 %v4618, 7
  %v4620 = vsub.s32 %v4617, %v4619
  %v4621 = vrot.slane %v4607, %v4620
  %v4622 = vcombine.high %v4614, %v4614
  %v4623 = vcombine.high %v4621, %v4621
  %v4624 = vcombine.high %v4188, %v4188
  %v4626 = vunpack.c.l.s4 1983009808
  %v4627 = vunpack.c.0.s8 %v4626
  %v4628 = vlaneseq
  %v4629 = vshrl.u32 %v4628, 7
  %v4630 = vsub.s32 %v4627, %v4629
  %v4631 = vrot.slane %v4188, %v4630
  %v4633 = vunpack.c.l.s4 1983009808
  %v4634 = vunpack.c.0.s8 %v4633
  %v4635 = vlaneseq
  %v4636 = vshrl.u32 %v4635, 7
  %v4637 = vsub.s32 %v4634, %v4636
  %v4638 = vrot.slane %v4624, %v4637
  %v4639 = vcombine.high %v4631, %v4631
  %v4640 = vcombine.high %v4638, %v4638
  %v4641 = vcombine.high %v4193, %v4193
  %v4643 = vunpack.c.l.s4 1983009808
  %v4644 = vunpack.c.0.s8 %v4643
  %v4645 = vlaneseq
  %v4646 = vshrl.u32 %v4645, 7
  %v4647 = vsub.s32 %v4644, %v4646
  %v4648 = vrot.slane %v4193, %v4647
  %v4650 = vunpack.c.l.s4 1983009808
  %v4651 = vunpack.c.0.s8 %v4650
  %v4652 = vlaneseq
  %v4653 = vshrl.u32 %v4652, 7
  %v4654 = vsub.s32 %v4651, %v4653
  %v4655 = vrot.slane %v4641, %v4654
  %v4656 = vcombine.high %v4648, %v4648
  %v4657 = vcombine.high %v4655, %v4655
  %v4658 = vcombine.high %v4198, %v4198
  %v4660 = vunpack.c.l.s4 1983009808
  %v4661 = vunpack.c.0.s8 %v4660
  %v4662 = vlaneseq
  %v4663 = vshrl.u32 %v4662, 7
  %v4664 = vsub.s32 %v4661, %v4663
  %v4665 = vrot.slane %v4198, %v4664
  %v4667 = vunpack.c.l.s4 1983009808
  %v4668 = vunpack.c.0.s8 %v4667
  %v4669 = vlaneseq
  %v4670 = vshrl.u32 %v4669, 7
  %v4671 = vsub.s32 %v4668, %v4670
  %v4672 = vrot.slane %v4658, %v4671
  %v4673 = vcombine.high %v4665, %v4665
  %v4674 = vcombine.high %v4672, %v4672
  %v4675 = vcombine.high %v4203, %v4203
  %v4677 = vunpack.c.l.s4 1983009808
  %v4678 = vunpack.c.0.s8 %v4677
  %v4679 = vlaneseq
  %v4680 = vshrl.u32 %v4679, 7
  %v4681 = vsub.s32 %v4678, %v4680
  %v4682 = vrot.slane %v4203, %v4681
  %v4684 = vunpack.c.l.s4 1983009808
  %v4685 = vunpack.c.0.s8 %v4684
  %v4686 = vlaneseq
  %v4687 = vshrl.u32 %v4686, 7
  %v4688 = vsub.s32 %v4685, %v4687
  %v4689 = vrot.slane %v4675, %v4688
  %v4690 = vcombine.high %v4682, %v4682
  %v4691 = vcombine.high %v4689, %v4689
  %v4692 = vcombine.high %v4208, %v4208
  %v4694 = vunpack.c.l.s4 1983009808
  %v4695 = vunpack.c.0.s8 %v4694
  %v4696 = vlaneseq
  %v4697 = vshrl.u32 %v4696, 7
  %v4698 = vsub.s32 %v4695, %v4697
  %v4699 = vrot.slane %v4208, %v4698
  %v4701 = vunpack.c.l.s4 1983009808
  %v4702 = vunpack.c.0.s8 %v4701
  %v4703 = vlaneseq
  %v4704 = vshrl.u32 %v4703, 7
  %v4705 = vsub.s32 %v4702, %v4704
  %v4706 = vrot.slane %v4692, %v4705
  %v4707 = vcombine.high %v4699, %v4699
  %v4708 = vcombine.high %v4706, %v4706
  %v4709 = vcombine.high %v4213, %v4213
  %v4711 = vunpack.c.l.s4 1983009808
  %v4712 = vunpack.c.0.s8 %v4711
  %v4713 = vlaneseq
  %v4714 = vshrl.u32 %v4713, 7
  %v4715 = vsub.s32 %v4712, %v4714
  %v4716 = vrot.slane %v4213, %v4715
  %v4718 = vunpack.c.l.s4 1983009808
  %v4719 = vunpack.c.0.s8 %v4718
  %v4720 = vlaneseq
  %v4721 = vshrl.u32 %v4720, 7
  %v4722 = vsub.s32 %v4719, %v4721
  %v4723 = vrot.slane %v4709, %v4722
  %v4724 = vcombine.high %v4716, %v4716
  %v4725 = vcombine.high %v4723, %v4723
  %v4726 = vcombine.high %v4218, %v4218
  %v4728 = vunpack.c.l.s4 1983009808
  %v4729 = vunpack.c.0.s8 %v4728
  %v4730 = vlaneseq
  %v4731 = vshrl.u32 %v4730, 7
  %v4732 = vsub.s32 %v4729, %v4731
  %v4733 = vrot.slane %v4218, %v4732
  %v4735 = vunpack.c.l.s4 1983009808
  %v4736 = vunpack.c.0.s8 %v4735
  %v4737 = vlaneseq
  %v4738 = vshrl.u32 %v4737, 7
  %v4739 = vsub.s32 %v4736, %v4738
  %v4740 = vrot.slane %v4726, %v4739
  %v4741 = vcombine.high %v4733, %v4733
  %v4742 = vcombine.high %v4740, %v4740
  %v4743 = vcombine.high %v4223, %v4223
  %v4745 = vunpack.c.l.s4 1983009808
  %v4746 = vunpack.c.0.s8 %v4745
  %v4747 = vlaneseq
  %v4748 = vshrl.u32 %v4747, 7
  %v4749 = vsub.s32 %v4746, %v4748
  %v4750 = vrot.slane %v4223, %v4749
  %v4752 = vunpack.c.l.s4 1983009808
  %v4753 = vunpack.c.0.s8 %v4752
  %v4754 = vlaneseq
  %v4755 = vshrl.u32 %v4754, 7
  %v4756 = vsub.s32 %v4753, %v4755
  %v4757 = vrot.slane %v4743, %v4756
  %v4758 = vcombine.high %v4750, %v4750
  %v4759 = vcombine.high %v4757, %v4757
  %v4760 = vcombine.high %v4228, %v4228
  %v4762 = vunpack.c.l.s4 1983009808
  %v4763 = vunpack.c.0.s8 %v4762
  %v4764 = vlaneseq
  %v4765 = vshrl.u32 %v4764, 7
  %v4766 = vsub.s32 %v4763, %v4765
  %v4767 = vrot.slane %v4228, %v4766
  %v4769 = vunpack.c.l.s4 1983009808
  %v4770 = vunpack.c.0.s8 %v4769
  %v4771 = vlaneseq
  %v4772 = vshrl.u32 %v4771, 7
  %v4773 = vsub.s32 %v4770, %v4772
  %v4774 = vrot.slane %v4760, %v4773
  %v4775 = vcombine.high %v4767, %v4767
  %v4776 = vcombine.high %v4774, %v4774
  %v4777 = vcombine.high %v4233, %v4233
  %v4779 = vunpack.c.l.s4 1983009808
  %v4780 = vunpack.c.0.s8 %v4779
  %v4781 = vlaneseq
  %v4782 = vshrl.u32 %v4781, 7
  %v4783 = vsub.s32 %v4780, %v4782
  %v4784 = vrot.slane %v4233, %v4783
  %v4786 = vunpack.c.l.s4 1983009808
  %v4787 = vunpack.c.0.s8 %v4786
  %v4788 = vlaneseq
  %v4789 = vshrl.u32 %v4788, 7
  %v4790 = vsub.s32 %v4787, %v4789
  %v4791 = vrot.slane %v4777, %v4790
  %v4792 = vcombine.high %v4784, %v4784
  %v4793 = vcombine.high %v4791, %v4791
  %v4794 = vcombine.high %v4238, %v4238
  %v4796 = vunpack.c.l.s4 1983009808
  %v4797 = vunpack.c.0.s8 %v4796
  %v4798 = vlaneseq
  %v4799 = vshrl.u32 %v4798, 7
  %v4800 = vsub.s32 %v4797, %v4799
  %v4801 = vrot.slane %v4238, %v4800
  %v4803 = vunpack.c.l.s4 1983009808
  %v4804 = vunpack.c.0.s8 %v4803
  %v4805 = vlaneseq
  %v4806 = vshrl.u32 %v4805, 7
  %v4807 = vsub.s32 %v4804, %v4806
  %v4808 = vrot.slane %v4794, %v4807
  %v4809 = vcombine.high %v4801, %v4801
  %v4810 = vcombine.high %v4808, %v4808
  %v4811 = vcombine.high %v4243, %v4243
  %v4813 = vunpack.c.l.s4 1983009808
  %v4814 = vunpack.c.0.s8 %v4813
  %v4815 = vlaneseq
  %v4816 = vshrl.u32 %v4815, 7
  %v4817 = vsub.s32 %v4814, %v4816
  %v4818 = vrot.slane %v4243, %v4817
  %v4820 = vunpack.c.l.s4 1983009808
  %v4821 = vunpack.c.0.s8 %v4820
  %v4822 = vlaneseq
  %v4823 = vshrl.u32 %v4822, 7
  %v4824 = vsub.s32 %v4821, %v4823
  %v4825 = vrot.slane %v4811, %v4824
  %v4826 = vcombine.high %v4818, %v4818
  %v4827 = vcombine.high %v4825, %v4825
  %v4828 = vcombine.high %v4248, %v4248
  %v4830 = vunpack.c.l.s4 1983009808
  %v4831 = vunpack.c.0.s8 %v4830
  %v4832 = vlaneseq
  %v4833 = vshrl.u32 %v4832, 7
  %v4834 = vsub.s32 %v4831, %v4833
  %v4835 = vrot.slane %v4248, %v4834
  %v4837 = vunpack.c.l.s4 1983009808
  %v4838 = vunpack.c.0.s8 %v4837
  %v4839 = vlaneseq
  %v4840 = vshrl.u32 %v4839, 7
  %v4841 = vsub.s32 %v4838, %v4840
  %v4842 = vrot.slane %v4828, %v4841
  %v4843 = vcombine.high %v4835, %v4835
  %v4844 = vcombine.high %v4842, %v4842
  %v4845 = vcombine.high %v4253, %v4253
  %v4847 = vunpack.c.l.s4 1983009808
  %v4848 = vunpack.c.0.s8 %v4847
  %v4849 = vlaneseq
  %v4850 = vshrl.u32 %v4849, 7
  %v4851 = vsub.s32 %v4848, %v4850
  %v4852 = vrot.slane %v4253, %v4851
  %v4854 = vunpack.c.l.s4 1983009808
  %v4855 = vunpack.c.0.s8 %v4854
  %v4856 = vlaneseq
  %v4857 = vshrl.u32 %v4856, 7
  %v4858 = vsub.s32 %v4855, %v4857
  %v4859 = vrot.slane %v4845, %v4858
  %v4860 = vcombine.high %v4852, %v4852
  %v4861 = vcombine.high %v4859, %v4859
  %v4862 = vcombine.high %v4258, %v4258
  %v4864 = vunpack.c.l.s4 1983009808
  %v4865 = vunpack.c.0.s8 %v4864
  %v4866 = vlaneseq
  %v4867 = vshrl.u32 %v4866, 7
  %v4868 = vsub.s32 %v4865, %v4867
  %v4869 = vrot.slane %v4258, %v4868
  %v4871 = vunpack.c.l.s4 1983009808
  %v4872 = vunpack.c.0.s8 %v4871
  %v4873 = vlaneseq
  %v4874 = vshrl.u32 %v4873, 7
  %v4875 = vsub.s32 %v4872, %v4874
  %v4876 = vrot.slane %v4862, %v4875
  %v4877 = vcombine.high %v4869, %v4869
  %v4878 = vcombine.high %v4876, %v4876
  %v4879 = vcombine.high %v4263, %v4263
  %v4881 = vunpack.c.l.s4 1983009808
  %v4882 = vunpack.c.0.s8 %v4881
  %v4883 = vlaneseq
  %v4884 = vshrl.u32 %v4883, 7
  %v4885 = vsub.s32 %v4882, %v4884
  %v4886 = vrot.slane %v4263, %v4885
  %v4888 = vunpack.c.l.s4 1983009808
  %v4889 = vunpack.c.0.s8 %v4888
  %v4890 = vlaneseq
  %v4891 = vshrl.u32 %v4890, 7
  %v4892 = vsub.s32 %v4889, %v4891
  %v4893 = vrot.slane %v4879, %v4892
  %v4894 = vcombine.high %v4886, %v4886
  %v4895 = vcombine.high %v4893, %v4893
  %v4896 = vcombine.high %v4268, %v4268
  %v4898 = vunpack.c.l.s4 1983009808
  %v4899 = vunpack.c.0.s8 %v4898
  %v4900 = vlaneseq
  %v4901 = vshrl.u32 %v4900, 7
  %v4902 = vsub.s32 %v4899, %v4901
  %v4903 = vrot.slane %v4268, %v4902
  %v4905 = vunpack.c.l.s4 1983009808
  %v4906 = vunpack.c.0.s8 %v4905
  %v4907 = vlaneseq
  %v4908 = vshrl.u32 %v4907, 7
  %v4909 = vsub.s32 %v4906, %v4908
  %v4910 = vrot.slane %v4896, %v4909
  %v4911 = vcombine.high %v4903, %v4903
  %v4912 = vcombine.high %v4910, %v4910
  %v4913 = vcombine.high %v4273, %v4273
  %v4915 = vunpack.c.l.s4 1983009808
  %v4916 = vunpack.c.0.s8 %v4915
  %v4917 = vlaneseq
  %v4918 = vshrl.u32 %v4917, 7
  %v4919 = vsub.s32 %v4916, %v4918
  %v4920 = vrot.slane %v4273, %v4919
  %v4922 = vunpack.c.l.s4 1983009808
  %v4923 = vunpack.c.0.s8 %v4922
  %v4924 = vlaneseq
  %v4925 = vshrl.u32 %v4924, 7
  %v4926 = vsub.s32 %v4923, %v4925
  %v4927 = vrot.slane %v4913, %v4926
  %v4928 = vcombine.high %v4920, %v4920
  %v4929 = vcombine.high %v4927, %v4927
  %v4930 = vcombine.high %v4278, %v4278
  %v4932 = vunpack.c.l.s4 1983009808
  %v4933 = vunpack.c.0.s8 %v4932
  %v4934 = vlaneseq
  %v4935 = vshrl.u32 %v4934, 7
  %v4936 = vsub.s32 %v4933, %v4935
  %v4937 = vrot.slane %v4278, %v4936
  %v4939 = vunpack.c.l.s4 1983009808
  %v4940 = vunpack.c.0.s8 %v4939
  %v4941 = vlaneseq
  %v4942 = vshrl.u32 %v4941, 7
  %v4943 = vsub.s32 %v4940, %v4942
  %v4944 = vrot.slane %v4930, %v4943
  %v4945 = vcombine.high %v4937, %v4937
  %v4946 = vcombine.high %v4944, %v4944
  %v4947 = vcombine.high %v4283, %v4283
  %v4949 = vunpack.c.l.s4 1983009808
  %v4950 = vunpack.c.0.s8 %v4949
  %v4951 = vlaneseq
  %v4952 = vshrl.u32 %v4951, 7
  %v4953 = vsub.s32 %v4950, %v4952
  %v4954 = vrot.slane %v4283, %v4953
  %v4956 = vunpack.c.l.s4 1983009808
  %v4957 = vunpack.c.0.s8 %v4956
  %v4958 = vlaneseq
  %v4959 = vshrl.u32 %v4958, 7
  %v4960 = vsub.s32 %v4957, %v4959
  %v4961 = vrot.slane %v4947, %v4960
  %v4962 = vcombine.high %v4954, %v4954
  %v4963 = vcombine.high %v4961, %v4961
  %v4964 = vcombine.high %v4288, %v4288
  %v4966 = vunpack.c.l.s4 1983009808
  %v4967 = vunpack.c.0.s8 %v4966
  %v4968 = vlaneseq
  %v4969 = vshrl.u32 %v4968, 7
  %v4970 = vsub.s32 %v4967, %v4969
  %v4971 = vrot.slane %v4288, %v4970
  %v4973 = vunpack.c.l.s4 1983009808
  %v4974 = vunpack.c.0.s8 %v4973
  %v4975 = vlaneseq
  %v4976 = vshrl.u32 %v4975, 7
  %v4977 = vsub.s32 %v4974, %v4976
  %v4978 = vrot.slane %v4964, %v4977
  %v4979 = vcombine.high %v4971, %v4971
  %v4980 = vcombine.high %v4978, %v4978
  %v4981 = vcombine.high %v4293, %v4293
  %v4983 = vunpack.c.l.s4 1983009808
  %v4984 = vunpack.c.0.s8 %v4983
  %v4985 = vlaneseq
  %v4986 = vshrl.u32 %v4985, 7
  %v4987 = vsub.s32 %v4984, %v4986
  %v4988 = vrot.slane %v4293, %v4987
  %v4990 = vunpack.c.l.s4 1983009808
  %v4991 = vunpack.c.0.s8 %v4990
  %v4992 = vlaneseq
  %v4993 = vshrl.u32 %v4992, 7
  %v4994 = vsub.s32 %v4991, %v4993
  %v4995 = vrot.slane %v4981, %v4994
  %v4996 = vcombine.high %v4988, %v4988
  %v4997 = vcombine.high %v4995, %v4995
  %v4998 = vcombine.high %v4298, %v4298
  %v5000 = vunpack.c.l.s4 1983009808
  %v5001 = vunpack.c.0.s8 %v5000
  %v5002 = vlaneseq
  %v5003 = vshrl.u32 %v5002, 7
  %v5004 = vsub.s32 %v5001, %v5003
  %v5005 = vrot.slane %v4298, %v5004
  %v5007 = vunpack.c.l.s4 1983009808
  %v5008 = vunpack.c.0.s8 %v5007
  %v5009 = vlaneseq
  %v5010 = vshrl.u32 %v5009, 7
  %v5011 = vsub.s32 %v5008, %v5010
  %v5012 = vrot.slane %v4998, %v5011
  %v5013 = vcombine.high %v5005, %v5005
  %v5014 = vcombine.high %v5012, %v5012
  %v5015 = vcombine.high %v4303, %v4303
  %v5017 = vunpack.c.l.s4 1983009808
  %v5018 = vunpack.c.0.s8 %v5017
  %v5019 = vlaneseq
  %v5020 = vshrl.u32 %v5019, 7
  %v5021 = vsub.s32 %v5018, %v5020
  %v5022 = vrot.slane %v4303, %v5021
  %v5024 = vunpack.c.l.s4 1983009808
  %v5025 = vunpack.c.0.s8 %v5024
  %v5026 = vlaneseq
  %v5027 = vshrl.u32 %v5026, 7
  %v5028 = vsub.s32 %v5025, %v5027
  %v5029 = vrot.slane %v5015, %v5028
  %v5030 = vcombine.high %v5022, %v5022
  %v5031 = vcombine.high %v5029, %v5029
  %v5032 = vcombine.high %v4308, %v4308
  %v5034 = vunpack.c.l.s4 1983009808
  %v5035 = vunpack.c.0.s8 %v5034
  %v5036 = vlaneseq
  %v5037 = vshrl.u32 %v5036, 7
  %v5038 = vsub.s32 %v5035, %v5037
  %v5039 = vrot.slane %v4308, %v5038
  %v5041 = vunpack.c.l.s4 1983009808
  %v5042 = vunpack.c.0.s8 %v5041
  %v5043 = vlaneseq
  %v5044 = vshrl.u32 %v5043, 7
  %v5045 = vsub.s32 %v5042, %v5044
  %v5046 = vrot.slane %v5032, %v5045
  %v5047 = vcombine.high %v5039, %v5039
  %v5048 = vcombine.high %v5046, %v5046
  %v5049 = vcombine.high %v4313, %v4313
  %v5051 = vunpack.c.l.s4 1983009808
  %v5052 = vunpack.c.0.s8 %v5051
  %v5053 = vlaneseq
  %v5054 = vshrl.u32 %v5053, 7
  %v5055 = vsub.s32 %v5052, %v5054
  %v5056 = vrot.slane %v4313, %v5055
  %v5058 = vunpack.c.l.s4 1983009808
  %v5059 = vunpack.c.0.s8 %v5058
  %v5060 = vlaneseq
  %v5061 = vshrl.u32 %v5060, 7
  %v5062 = vsub.s32 %v5059, %v5061
  %v5063 = vrot.slane %v5049, %v5062
  %v5064 = vcombine.high %v5056, %v5056
  %v5065 = vcombine.high %v5063, %v5063
  %v5066 = vcombine.high %v4318, %v4318
  %v5068 = vunpack.c.l.s4 1983009808
  %v5069 = vunpack.c.0.s8 %v5068
  %v5070 = vlaneseq
  %v5071 = vshrl.u32 %v5070, 7
  %v5072 = vsub.s32 %v5069, %v5071
  %v5073 = vrot.slane %v4318, %v5072
  %v5075 = vunpack.c.l.s4 1983009808
  %v5076 = vunpack.c.0.s8 %v5075
  %v5077 = vlaneseq
  %v5078 = vshrl.u32 %v5077, 7
  %v5079 = vsub.s32 %v5076, %v5078
  %v5080 = vrot.slane %v5066, %v5079
  %v5081 = vcombine.high %v5073, %v5073
  %v5082 = vcombine.high %v5080, %v5080
  %v5083 = vcombine.high %v4323, %v4323
  %v5085 = vunpack.c.l.s4 1983009808
  %v5086 = vunpack.c.0.s8 %v5085
  %v5087 = vlaneseq
  %v5088 = vshrl.u32 %v5087, 7
  %v5089 = vsub.s32 %v5086, %v5088
  %v5090 = vrot.slane %v4323, %v5089
  %v5092 = vunpack.c.l.s4 1983009808
  %v5093 = vunpack.c.0.s8 %v5092
  %v5094 = vlaneseq
  %v5095 = vshrl.u32 %v5094, 7
  %v5096 = vsub.s32 %v5093, %v5095
  %v5097 = vrot.slane %v5083, %v5096
  %v5098 = vcombine.high %v5090, %v5090
  %v5099 = vcombine.high %v5097, %v5097
  %v5100 = vcombine.high %v4328, %v4328
  %v5102 = vunpack.c.l.s4 1983009808
  %v5103 = vunpack.c.0.s8 %v5102
  %v5104 = vlaneseq
  %v5105 = vshrl.u32 %v5104, 7
  %v5106 = vsub.s32 %v5103, %v5105
  %v5107 = vrot.slane %v4328, %v5106
  %v5109 = vunpack.c.l.s4 1983009808
  %v5110 = vunpack.c.0.s8 %v5109
  %v5111 = vlaneseq
  %v5112 = vshrl.u32 %v5111, 7
  %v5113 = vsub.s32 %v5110, %v5112
  %v5114 = vrot.slane %v5100, %v5113
  %v5115 = vcombine.high %v5107, %v5107
  %v5116 = vcombine.high %v5114, %v5114
  %v5117 = vcombine.high %v4333, %v4333
  %v5119 = vunpack.c.l.s4 1983009808
  %v5120 = vunpack.c.0.s8 %v5119
  %v5121 = vlaneseq
  %v5122 = vshrl.u32 %v5121, 7
  %v5123 = vsub.s32 %v5120, %v5122
  %v5124 = vrot.slane %v4333, %v5123
  %v5126 = vunpack.c.l.s4 1983009808
  %v5127 = vunpack.c.0.s8 %v5126
  %v5128 = vlaneseq
  %v5129 = vshrl.u32 %v5128, 7
  %v5130 = vsub.s32 %v5127, %v5129
  %v5131 = vrot.slane %v5117, %v5130
  %v5132 = vcombine.high %v5124, %v5124
  %v5133 = vcombine.high %v5131, %v5131
  %v5134 = vcombine.high %v4338, %v4338
  %v5136 = vunpack.c.l.s4 1983009808
  %v5137 = vunpack.c.0.s8 %v5136
  %v5138 = vlaneseq
  %v5139 = vshrl.u32 %v5138, 7
  %v5140 = vsub.s32 %v5137, %v5139
  %v5141 = vrot.slane %v4338, %v5140
  %v5143 = vunpack.c.l.s4 1983009808
  %v5144 = vunpack.c.0.s8 %v5143
  %v5145 = vlaneseq
  %v5146 = vshrl.u32 %v5145, 7
  %v5147 = vsub.s32 %v5144, %v5146
  %v5148 = vrot.slane %v5134, %v5147
  %v5149 = vcombine.high %v5141, %v5141
  %v5150 = vcombine.high %v5148, %v5148
  %v5151 = vcombine.high %v4343, %v4343
  %v5153 = vunpack.c.l.s4 1983009808
  %v5154 = vunpack.c.0.s8 %v5153
  %v5155 = vlaneseq
  %v5156 = vshrl.u32 %v5155, 7
  %v5157 = vsub.s32 %v5154, %v5156
  %v5158 = vrot.slane %v4343, %v5157
  %v5160 = vunpack.c.l.s4 1983009808
  %v5161 = vunpack.c.0.s8 %v5160
  %v5162 = vlaneseq
  %v5163 = vshrl.u32 %v5162, 7
  %v5164 = vsub.s32 %v5161, %v5163
  %v5165 = vrot.slane %v5151, %v5164
  %v5166 = vcombine.high %v5158, %v5158
  %v5167 = vcombine.high %v5165, %v5165
  %v5168 = vcombine.high %v4348, %v4348
  %v5170 = vunpack.c.l.s4 1983009808
  %v5171 = vunpack.c.0.s8 %v5170
  %v5172 = vlaneseq
  %v5173 = vshrl.u32 %v5172, 7
  %v5174 = vsub.s32 %v5171, %v5173
  %v5175 = vrot.slane %v4348, %v5174
  %v5177 = vunpack.c.l.s4 1983009808
  %v5178 = vunpack.c.0.s8 %v5177
  %v5179 = vlaneseq
  %v5180 = vshrl.u32 %v5179, 7
  %v5181 = vsub.s32 %v5178, %v5180
  %v5182 = vrot.slane %v5168, %v5181
  %v5183 = vcombine.high %v5175, %v5175
  %v5184 = vcombine.high %v5182, %v5182
  %v5185 = vcombine.high %v4353, %v4353
  %v5187 = vunpack.c.l.s4 1983009808
  %v5188 = vunpack.c.0.s8 %v5187
  %v5189 = vlaneseq
  %v5190 = vshrl.u32 %v5189, 7
  %v5191 = vsub.s32 %v5188, %v5190
  %v5192 = vrot.slane %v4353, %v5191
  %v5194 = vunpack.c.l.s4 1983009808
  %v5195 = vunpack.c.0.s8 %v5194
  %v5196 = vlaneseq
  %v5197 = vshrl.u32 %v5196, 7
  %v5198 = vsub.s32 %v5195, %v5197
  %v5199 = vrot.slane %v5185, %v5198
  %v5200 = vcombine.high %v5192, %v5192
  %v5201 = vcombine.high %v5199, %v5199
  %v5202 = vcombine.high %v4358, %v4358
  %v5204 = vunpack.c.l.s4 1983009808
  %v5205 = vunpack.c.0.s8 %v5204
  %v5206 = vlaneseq
  %v5207 = vshrl.u32 %v5206, 7
  %v5208 = vsub.s32 %v5205, %v5207
  %v5209 = vrot.slane %v4358, %v5208
  %v5211 = vunpack.c.l.s4 1983009808
  %v5212 = vunpack.c.0.s8 %v5211
  %v5213 = vlaneseq
  %v5214 = vshrl.u32 %v5213, 7
  %v5215 = vsub.s32 %v5212, %v5214
  %v5216 = vrot.slane %v5202, %v5215
  %v5217 = vcombine.high %v5209, %v5209
  %v5218 = vcombine.high %v5216, %v5216
  %v5219 = vcombine.high %v4363, %v4363
  %v5221 = vunpack.c.l.s4 1983009808
  %v5222 = vunpack.c.0.s8 %v5221
  %v5223 = vlaneseq
  %v5224 = vshrl.u32 %v5223, 7
  %v5225 = vsub.s32 %v5222, %v5224
  %v5226 = vrot.slane %v4363, %v5225
  %v5228 = vunpack.c.l.s4 1983009808
  %v5229 = vunpack.c.0.s8 %v5228
  %v5230 = vlaneseq
  %v5231 = vshrl.u32 %v5230, 7
  %v5232 = vsub.s32 %v5229, %v5231
  %v5233 = vrot.slane %v5219, %v5232
  %v5234 = vcombine.high %v5226, %v5226
  %v5235 = vcombine.high %v5233, %v5233
  %v5236 = vcombine.high %v4368, %v4368
  %v5238 = vunpack.c.l.s4 1983009808
  %v5239 = vunpack.c.0.s8 %v5238
  %v5240 = vlaneseq
  %v5241 = vshrl.u32 %v5240, 7
  %v5242 = vsub.s32 %v5239, %v5241
  %v5243 = vrot.slane %v4368, %v5242
  %v5245 = vunpack.c.l.s4 1983009808
  %v5246 = vunpack.c.0.s8 %v5245
  %v5247 = vlaneseq
  %v5248 = vshrl.u32 %v5247, 7
  %v5249 = vsub.s32 %v5246, %v5248
  %v5250 = vrot.slane %v5236, %v5249
  %v5251 = vcombine.high %v5243, %v5243
  %v5252 = vcombine.high %v5250, %v5250
  %v5253 = vcombine.low %v4427, %v4435
  %v5254 = vcombine.low %v4434, %v4436
  %v5256 = vunpack.c.l.s4 1983009808
  %v5257 = vunpack.c.0.s8 %v5256
  %v5258 = vlaneseq
  %v5259 = vshrl.u32 %v5258, 7
  %v5260 = vsub.s32 %v5257, %v5259
  %v5261 = vrot.slane %v5253, %v5260
  %v5263 = vunpack.c.l.s4 1983009808
  %v5264 = vunpack.c.0.s8 %v5263
  %v5265 = vlaneseq
  %v5266 = vshrl.u32 %v5265, 7
  %v5267 = vsub.s32 %v5264, %v5266
  %v5268 = vrot.slane %v5254, %v5267
  %v5269 = vcombine.low %v5261, %v5268
  %v5270 = vcombine.low %v4444, %v4452
  %v5272 = vunpack.c.l.s4 1983009808
  %v5273 = vunpack.c.0.s8 %v5272
  %v5274 = vlaneseq
  %v5275 = vshrl.u32 %v5274, 7
  %v5276 = vsub.s32 %v5273, %v5275
  %v5277 = vrot.slane %v5270, %v5276
  %v5278 = vcombine.low %v4453, %v4461
  %v5279 = vcombine.low %v4469, %v4468
  %v5281 = vunpack.c.l.s4 1983009808
  %v5282 = vunpack.c.0.s8 %v5281
  %v5283 = vlaneseq
  %v5284 = vshrl.u32 %v5283, 7
  %v5285 = vsub.s32 %v5282, %v5284
  %v5286 = vrot.slane %v5278, %v5285
  %v5288 = vunpack.c.l.s4 1983009808
  %v5289 = vunpack.c.0.s8 %v5288
  %v5290 = vlaneseq
  %v5291 = vshrl.u32 %v5290, 7
  %v5292 = vsub.s32 %v5289, %v5291
  %v5293 = vrot.slane %v5279, %v5292
  %v5294 = vcombine.low %v5286, %v5293
  %v5295 = vcombine.low %v4470, %v4478
  %v5297 = vunpack.c.l.s4 1983009808
  %v5298 = vunpack.c.0.s8 %v5297
  %v5299 = vlaneseq
  %v5300 = vshrl.u32 %v5299, 7
  %v5301 = vsub.s32 %v5298, %v5300
  %v5302 = vrot.slane %v5295, %v5301
  %v5303 = vcombine.low %v4485, %v4487
  %v5304 = vcombine.low %v4495, %v4503
  %v5306 = vunpack.c.l.s4 1983009808
  %v5307 = vunpack.c.0.s8 %v5306
  %v5308 = vlaneseq
  %v5309 = vshrl.u32 %v5308, 7
  %v5310 = vsub.s32 %v5307, %v5309
  %v5311 = vrot.slane %v5303, %v5310
  %v5313 = vunpack.c.l.s4 1983009808
  %v5314 = vunpack.c.0.s8 %v5313
  %v5315 = vlaneseq
  %v5316 = vshrl.u32 %v5315, 7
  %v5317 = vsub.s32 %v5314, %v5316
  %v5318 = vrot.slane %v5304, %v5317
  %v5319 = vcombine.low %v5311, %v5318
  %v5320 = vcombine.low %v4502, %v4504
  %v5322 = vunpack.c.l.s4 1983009808
  %v5323 = vunpack.c.0.s8 %v5322
  %v5324 = vlaneseq
  %v5325 = vshrl.u32 %v5324, 7
  %v5326 = vsub.s32 %v5323, %v5325
  %v5327 = vrot.slane %v5320, %v5326
  %v5328 = vcombine.low %v4520, %v4519
  %v5329 = vcombine.low %v4521, %v4529
  %v5331 = vunpack.c.l.s4 1983009808
  %v5332 = vunpack.c.0.s8 %v5331
  %v5333 = vlaneseq
  %v5334 = vshrl.u32 %v5333, 7
  %v5335 = vsub.s32 %v5332, %v5334
  %v5336 = vrot.slane %v5328, %v5335
  %v5338 = vunpack.c.l.s4 1983009808
  %v5339 = vunpack.c.0.s8 %v5338
  %v5340 = vlaneseq
  %v5341 = vshrl.u32 %v5340, 7
  %v5342 = vsub.s32 %v5339, %v5341
  %v5343 = vrot.slane %v5329, %v5342
  %v5344 = vcombine.low %v5336, %v5343
  %v5345 = vcombine.low %v4537, %v4536
  %v5347 = vunpack.c.l.s4 1983009808
  %v5348 = vunpack.c.0.s8 %v5347
  %v5349 = vlaneseq
  %v5350 = vshrl.u32 %v5349, 7
  %v5351 = vsub.s32 %v5348, %v5350
  %v5352 = vrot.slane %v5345, %v5351
  %v5353 = vcombine.low %v4546, %v4554
  %v5354 = vcombine.low %v4553, %v4555
  %v5356 = vunpack.c.l.s4 1983009808
  %v5357 = vunpack.c.0.s8 %v5356
  %v5358 = vlaneseq
  %v5359 = vshrl.u32 %v5358, 7
  %v5360 = vsub.s32 %v5357, %v5359
  %v5361 = vrot.slane %v5353, %v5360
  %v5363 = vunpack.c.l.s4 1983009808
  %v5364 = vunpack.c.0.s8 %v5363
  %v5365 = vlaneseq
  %v5366 = vshrl.u32 %v5365, 7
  %v5367 = vsub.s32 %v5364, %v5366
  %v5368 = vrot.slane %v5354, %v5367
  %v5369 = vcombine.low %v5361, %v5368
  %v5370 = vcombine.low %v4563, %v4571
  %v5372 = vunpack.c.l.s4 1983009808
  %v5373 = vunpack.c.0.s8 %v5372
  %v5374 = vlaneseq
  %v5375 = vshrl.u32 %v5374, 7
  %v5376 = vsub.s32 %v5373, %v5375
  %v5377 = vrot.slane %v5370, %v5376
  %v5378 = vcombine.low %v4572, %v4580
  %v5379 = vcombine.low %v4588, %v4587
  %v5381 = vunpack.c.l.s4 1983009808
  %v5382 = vunpack.c.0.s8 %v5381
  %v5383 = vlaneseq
  %v5384 = vshrl.u32 %v5383, 7
  %v5385 = vsub.s32 %v5382, %v5384
  %v5386 = vrot.slane %v5378, %v5385
  %v5388 = vunpack.c.l.s4 1983009808
  %v5389 = vunpack.c.0.s8 %v5388
  %v5390 = vlaneseq
  %v5391 = vshrl.u32 %v5390, 7
  %v5392 = vsub.s32 %v5389, %v5391
  %v5393 = vrot.slane %v5379, %v5392
  %v5394 = vcombine.low %v5386, %v5393
  %v5395 = vcombine.low %v4589, %v4597
  %v5397 = vunpack.c.l.s4 1983009808
  %v5398 = vunpack.c.0.s8 %v5397
  %v5399 = vlaneseq
  %v5400 = vshrl.u32 %v5399, 7
  %v5401 = vsub.s32 %v5398, %v5400
  %v5402 = vrot.slane %v5395, %v5401
  %v5403 = vcombine.low %v4604, %v4606
  %v5404 = vcombine.low %v4614, %v4622
  %v5406 = vunpack.c.l.s4 1983009808
  %v5407 = vunpack.c.0.s8 %v5406
  %v5408 = vlaneseq
  %v5409 = vshrl.u32 %v5408, 7
  %v5410 = vsub.s32 %v5407, %v5409
  %v5411 = vrot.slane %v5403, %v5410
  %v5413 = vunpack.c.l.s4 1983009808
  %v5414 = vunpack.c.0.s8 %v5413
  %v5415 = vlaneseq
  %v5416 = vshrl.u32 %v5415, 7
  %v5417 = vsub.s32 %v5414, %v5416
  %v5418 = vrot.slane %v5404, %v5417
  %v5419 = vcombine.low %v5411, %v5418
  %v5420 = vcombine.low %v4621, %v4623
  %v5422 = vunpack.c.l.s4 1983009808
  %v5423 = vunpack.c.0.s8 %v5422
  %v5424 = vlaneseq
  %v5425 = vshrl.u32 %v5424, 7
  %v5426 = vsub.s32 %v5423, %v5425
  %v5427 = vrot.slane %v5420, %v5426
  %v5428 = vcombine.low %v4639, %v4638
  %v5429 = vcombine.low %v4640, %v4648
  %v5431 = vunpack.c.l.s4 1983009808
  %v5432 = vunpack.c.0.s8 %v5431
  %v5433 = vlaneseq
  %v5434 = vshrl.u32 %v5433, 7
  %v5435 = vsub.s32 %v5432, %v5434
  %v5436 = vrot.slane %v5428, %v5435
  %v5438 = vunpack.c.l.s4 1983009808
  %v5439 = vunpack.c.0.s8 %v5438
  %v5440 = vlaneseq
  %v5441 = vshrl.u32 %v5440, 7
  %v5442 = vsub.s32 %v5439, %v5441
  %v5443 = vrot.slane %v5429, %v5442
  %v5444 = vcombine.low %v5436, %v5443
  %v5445 = vcombine.low %v4656, %v4655
  %v5447 = vunpack.c.l.s4 1983009808
  %v5448 = vunpack.c.0.s8 %v5447
  %v5449 = vlaneseq
  %v5450 = vshrl.u32 %v5449, 7
  %v5451 = vsub.s32 %v5448, %v5450
  %v5452 = vrot.slane %v5445, %v5451
  %v5453 = vcombine.low %v4665, %v4673
  %v5454 = vcombine.low %v4672, %v4674
  %v5456 = vunpack.c.l.s4 1983009808
  %v5457 = vunpack.c.0.s8 %v5456
  %v5458 = vlaneseq
  %v5459 = vshrl.u32 %v5458, 7
  %v5460 = vsub.s32 %v5457, %v5459
  %v5461 = vrot.slane %v5453, %v5460
  %v5463 = vunpack.c.l.s4 1983009808
  %v5464 = vunpack.c.0.s8 %v5463
  %v5465 = vlaneseq
  %v5466 = vshrl.u32 %v5465, 7
  %v5467 = vsub.s32 %v5464, %v5466
  %v5468 = vrot.slane %v5454, %v5467
  %v5469 = vcombine.low %v5461, %v5468
  %v5470 = vcombine.low %v4682, %v4690
  %v5472 = vunpack.c.l.s4 1983009808
  %v5473 = vunpack.c.0.s8 %v5472
  %v5474 = vlaneseq
  %v5475 = vshrl.u32 %v5474, 7
  %v5476 = vsub.s32 %v5473, %v5475
  %v5477 = vrot.slane %v5470, %v5476
  %v5478 = vcombine.low %v4691, %v4699
  %v5479 = vcombine.low %v4707, %v4706
  %v5481 = vunpack.c.l.s4 1983009808
  %v5482 = vunpack.c.0.s8 %v5481
  %v5483 = vlaneseq
  %v5484 = vshrl.u32 %v5483, 7
  %v5485 = vsub.s32 %v5482, %v5484
  %v5486 = vrot.slane %v5478, %v5485
  %v5488 = vunpack.c.l.s4 1983009808
  %v5489 = vunpack.c.0.s8 %v5488
  %v5490 = vlaneseq
  %v5491 = vshrl.u32 %v5490, 7
  %v5492 = vsub.s32 %v5489, %v5491
  %v5493 = vrot.slane %v5479, %v5492
  %v5494 = vcombine.low %v5486, %v5493
  %v5495 = vcombine.low %v4708, %v4716
  %v5497 = vunpack.c.l.s4 1983009808
  %v5498 = vunpack.c.0.s8 %v5497
  %v5499 = vlaneseq
  %v5500 = vshrl.u32 %v5499, 7
  %v5501 = vsub.s32 %v5498, %v5500
  %v5502 = vrot.slane %v5495, %v5501
  %v5503 = vcombine.low %v4723, %v4725
  %v5504 = vcombine.low %v4733, %v4741
  %v5506 = vunpack.c.l.s4 1983009808
  %v5507 = vunpack.c.0.s8 %v5506
  %v5508 = vlaneseq
  %v5509 = vshrl.u32 %v5508, 7
  %v5510 = vsub.s32 %v5507, %v5509
  %v5511 = vrot.slane %v5503, %v5510
  %v5513 = vunpack.c.l.s4 1983009808
  %v5514 = vunpack.c.0.s8 %v5513
  %v5515 = vlaneseq
  %v5516 = vshrl.u32 %v5515, 7
  %v5517 = vsub.s32 %v5514, %v5516
  %v5518 = vrot.slane %v5504, %v5517
  %v5519 = vcombine.low %v5511, %v5518
  %v5520 = vcombine.low %v4740, %v4742
  %v5522 = vunpack.c.l.s4 1983009808
  %v5523 = vunpack.c.0.s8 %v5522
  %v5524 = vlaneseq
  %v5525 = vshrl.u32 %v5524, 7
  %v5526 = vsub.s32 %v5523, %v5525
  %v5527 = vrot.slane %v5520, %v5526
  %v5528 = vcombine.low %v4758, %v4757
  %v5529 = vcombine.low %v4759, %v4767
  %v5531 = vunpack.c.l.s4 1983009808
  %v5532 = vunpack.c.0.s8 %v5531
  %v5533 = vlaneseq
  %v5534 = vshrl.u32 %v5533, 7
  %v5535 = vsub.s32 %v5532, %v5534
  %v5536 = vrot.slane %v5528, %v5535
  %v5538 = vunpack.c.l.s4 1983009808
  %v5539 = vunpack.c.0.s8 %v5538
  %v5540 = vlaneseq
  %v5541 = vshrl.u32 %v5540, 7
  %v5542 = vsub.s32 %v5539, %v5541
  %v5543 = vrot.slane %v5529, %v5542
  %v5544 = vcombine.low %v5536, %v5543
  %v5545 = vcombine.low %v4775, %v4774
  %v5547 = vunpack.c.l.s4 1983009808
  %v5548 = vunpack.c.0.s8 %v5547
  %v5549 = vlaneseq
  %v5550 = vshrl.u32 %v5549, 7
  %v5551 = vsub.s32 %v5548, %v5550
  %v5552 = vrot.slane %v5545, %v5551
  %v5553 = vcombine.low %v4842, %v4844
  %v5554 = vcombine.low %v4852, %v4860
  %v5556 = vunpack.c.l.s4 1983009808
  %v5557 = vunpack.c.0.s8 %v5556
  %v5558 = vlaneseq
  %v5559 = vshrl.u32 %v5558, 7
  %v5560 = vsub.s32 %v5557, %v5559
  %v5561 = vrot.slane %v5553, %v5560
  %v5563 = vunpack.c.l.s4 1983009808
  %v5564 = vunpack.c.0.s8 %v5563
  %v5565 = vlaneseq
  %v5566 = vshrl.u32 %v5565, 7
  %v5567 = vsub.s32 %v5564, %v5566
  %v5568 = vrot.slane %v5554, %v5567
  %v5569 = vcombine.low %v5561, %v5568
  %v5570 = vcombine.low %v4859, %v4861
  %v5572 = vunpack.c.l.s4 1983009808
  %v5573 = vunpack.c.0.s8 %v5572
  %v5574 = vlaneseq
  %v5575 = vshrl.u32 %v5574, 7
  %v5576 = vsub.s32 %v5573, %v5575
  %v5577 = vrot.slane %v5570, %v5576
  %v5578 = vcombine.low %v4877, %v4876
  %v5579 = vcombine.low %v4878, %v4886
  %v5581 = vunpack.c.l.s4 1983009808
  %v5582 = vunpack.c.0.s8 %v5581
  %v5583 = vlaneseq
  %v5584 = vshrl.u32 %v5583, 7
  %v5585 = vsub.s32 %v5582, %v5584
  %v5586 = vrot.slane %v5578, %v5585
  %v5588 = vunpack.c.l.s4 1983009808
  %v5589 = vunpack.c.0.s8 %v5588
  %v5590 = vlaneseq
  %v5591 = vshrl.u32 %v5590, 7
  %v5592 = vsub.s32 %v5589, %v5591
  %v5593 = vrot.slane %v5579, %v5592
  %v5594 = vcombine.low %v5586, %v5593
  %v5595 = vcombine.low %v4894, %v4893
  %v5597 = vunpack.c.l.s4 1983009808
  %v5598 = vunpack.c.0.s8 %v5597
  %v5599 = vlaneseq
  %v5600 = vshrl.u32 %v5599, 7
  %v5601 = vsub.s32 %v5598, %v5600
  %v5602 = vrot.slane %v5595, %v5601
  %v5603 = vcombine.low %v4903, %v4911
  %v5604 = vcombine.low %v4910, %v4912
  %v5606 = vunpack.c.l.s4 1983009808
  %v5607 = vunpack.c.0.s8 %v5606
  %v5608 = vlaneseq
  %v5609 = vshrl.u32 %v5608, 7
  %v5610 = vsub.s32 %v5607, %v5609
  %v5611 = vrot.slane %v5603, %v5610
  %v5613 = vunpack.c.l.s4 1983009808
  %v5614 = vunpack.c.0.s8 %v5613
  %v5615 = vlaneseq
  %v5616 = vshrl.u32 %v5615, 7
  %v5617 = vsub.s32 %v5614, %v5616
  %v5618 = vrot.slane %v5604, %v5617
  %v5619 = vcombine.low %v5611, %v5618
  %v5620 = vcombine.low %v4920, %v4928
  %v5622 = vunpack.c.l.s4 1983009808
  %v5623 = vunpack.c.0.s8 %v5622
  %v5624 = vlaneseq
  %v5625 = vshrl.u32 %v5624, 7
  %v5626 = vsub.s32 %v5623, %v5625
  %v5627 = vrot.slane %v5620, %v5626
  %v5628 = vcombine.low %v4929, %v4937
  %v5629 = vcombine.low %v4945, %v4944
  %v5631 = vunpack.c.l.s4 1983009808
  %v5632 = vunpack.c.0.s8 %v5631
  %v5633 = vlaneseq
  %v5634 = vshrl.u32 %v5633, 7
  %v5635 = vsub.s32 %v5632, %v5634
  %v5636 = vrot.slane %v5628, %v5635
  %v5638 = vunpack.c.l.s4 1983009808
  %v5639 = vunpack.c.0.s8 %v5638
  %v5640 = vlaneseq
  %v5641 = vshrl.u32 %v5640, 7
  %v5642 = vsub.s32 %v5639, %v5641
  %v5643 = vrot.slane %v5629, %v5642
  %v5644 = vcombine.low %v5636, %v5643
  %v5645 = vcombine.low %v4946, %v4954
  %v5647 = vunpack.c.l.s4 1983009808
  %v5648 = vunpack.c.0.s8 %v5647
  %v5649 = vlaneseq
  %v5650 = vshrl.u32 %v5649, 7
  %v5651 = vsub.s32 %v5648, %v5650
  %v5652 = vrot.slane %v5645, %v5651
  %v5653 = vcombine.low %v4961, %v4963
  %v5654 = vcombine.low %v4971, %v4979
  %v5656 = vunpack.c.l.s4 1983009808
  %v5657 = vunpack.c.0.s8 %v5656
  %v5658 = vlaneseq
  %v5659 = vshrl.u32 %v5658, 7
  %v5660 = vsub.s32 %v5657, %v5659
  %v5661 = vrot.slane %v5653, %v5660
  %v5663 = vunpack.c.l.s4 1983009808
  %v5664 = vunpack.c.0.s8 %v5663
  %v5665 = vlaneseq
  %v5666 = vshrl.u32 %v5665, 7
  %v5667 = vsub.s32 %v5664, %v5666
  %v5668 = vrot.slane %v5654, %v5667
  %v5669 = vcombine.low %v5661, %v5668
  %v5670 = vcombine.low %v4978, %v4980
  %v5672 = vunpack.c.l.s4 1983009808
  %v5673 = vunpack.c.0.s8 %v5672
  %v5674 = vlaneseq
  %v5675 = vshrl.u32 %v5674, 7
  %v5676 = vsub.s32 %v5673, %v5675
  %v5677 = vrot.slane %v5670, %v5676
  %v5678 = vcombine.low %v4996, %v4995
  %v5679 = vcombine.low %v4997, %v5005
  %v5681 = vunpack.c.l.s4 1983009808
  %v5682 = vunpack.c.0.s8 %v5681
  %v5683 = vlaneseq
  %v5684 = vshrl.u32 %v5683, 7
  %v5685 = vsub.s32 %v5682, %v5684
  %v5686 = vrot.slane %v5678, %v5685
  %v5688 = vunpack.c.l.s4 1983009808
  %v5689 = vunpack.c.0.s8 %v5688
  %v5690 = vlaneseq
  %v5691 = vshrl.u32 %v5690, 7
  %v5692 = vsub.s32 %v5689, %v5691
  %v5693 = vrot.slane %v5679, %v5692
  %v5694 = vcombine.low %v5686, %v5693
  %v5695 = vcombine.low %v5013, %v5012
  %v5697 = vunpack.c.l.s4 1983009808
  %v5698 = vunpack.c.0.s8 %v5697
  %v5699 = vlaneseq
  %v5700 = vshrl.u32 %v5699, 7
  %v5701 = vsub.s32 %v5698, %v5700
  %v5702 = vrot.slane %v5695, %v5701
  %v5703 = vcombine.low %v5022, %v5030
  %v5704 = vcombine.low %v5029, %v5031
  %v5706 = vunpack.c.l.s4 1983009808
  %v5707 = vunpack.c.0.s8 %v5706
  %v5708 = vlaneseq
  %v5709 = vshrl.u32 %v5708, 7
  %v5710 = vsub.s32 %v5707, %v5709
  %v5711 = vrot.slane %v5703, %v5710
  %v5713 = vunpack.c.l.s4 1983009808
  %v5714 = vunpack.c.0.s8 %v5713
  %v5715 = vlaneseq
  %v5716 = vshrl.u32 %v5715, 7
  %v5717 = vsub.s32 %v5714, %v5716
  %v5718 = vrot.slane %v5704, %v5717
  %v5719 = vcombine.low %v5711, %v5718
  %v5720 = vcombine.low %v5039, %v5047
  %v5722 = vunpack.c.l.s4 1983009808
  %v5723 = vunpack.c.0.s8 %v5722
  %v5724 = vlaneseq
  %v5725 = vshrl.u32 %v5724, 7
  %v5726 = vsub.s32 %v5723, %v5725
  %v5727 = vrot.slane %v5720, %v5726
  %v5728 = vcombine.low %v5048, %v5056
  %v5729 = vcombine.low %v5064, %v5063
  %v5731 = vunpack.c.l.s4 1983009808
  %v5732 = vunpack.c.0.s8 %v5731
  %v5733 = vlaneseq
  %v5734 = vshrl.u32 %v5733, 7
  %v5735 = vsub.s32 %v5732, %v5734
  %v5736 = vrot.slane %v5728, %v5735
  %v5738 = vunpack.c.l.s4 1983009808
  %v5739 = vunpack.c.0.s8 %v5738
  %v5740 = vlaneseq
  %v5741 = vshrl.u32 %v5740, 7
  %v5742 = vsub.s32 %v5739, %v5741
  %v5743 = vrot.slane %v5729, %v5742
  %v5744 = vcombine.low %v5736, %v5743
  %v5745 = vcombine.low %v5065, %v5073
  %v5747 = vunpack.c.l.s4 1983009808
  %v5748 = vunpack.c.0.s8 %v5747
  %v5749 = vlaneseq
  %v5750 = vshrl.u32 %v5749, 7
  %v5751 = vsub.s32 %v5748, %v5750
  %v5752 = vrot.slane %v5745, %v5751
  %v5753 = vcombine.low %v5080, %v5082
  %v5754 = vcombine.low %v5090, %v5098
  %v5756 = vunpack.c.l.s4 1983009808
  %v5757 = vunpack.c.0.s8 %v5756
  %v5758 = vlaneseq
  %v5759 = vshrl.u32 %v5758, 7
  %v5760 = vsub.s32 %v5757, %v5759
  %v5761 = vrot.slane %v5753, %v5760
  %v5763 = vunpack.c.l.s4 1983009808
  %v5764 = vunpack.c.0.s8 %v5763
  %v5765 = vlaneseq
  %v5766 = vshrl.u32 %v5765, 7
  %v5767 = vsub.s32 %v5764, %v5766
  %v5768 = vrot.slane %v5754, %v5767
  %v5769 = vcombine.low %v5761, %v5768
  %v5770 = vcombine.low %v5097, %v5099
  %v5772 = vunpack.c.l.s4 1983009808
  %v5773 = vunpack.c.0.s8 %v5772
  %v5774 = vlaneseq
  %v5775 = vshrl.u32 %v5774, 7
  %v5776 = vsub.s32 %v5773, %v5775
  %v5777 = vrot.slane %v5770, %v5776
  %v5778 = vcombine.low %v5115, %v5114
  %v5779 = vcombine.low %v5116, %v5124
  %v5781 = vunpack.c.l.s4 1983009808
  %v5782 = vunpack.c.0.s8 %v5781
  %v5783 = vlaneseq
  %v5784 = vshrl.u32 %v5783, 7
  %v5785 = vsub.s32 %v5782, %v5784
  %v5786 = vrot.slane %v5778, %v5785
  %v5788 = vunpack.c.l.s4 1983009808
  %v5789 = vunpack.c.0.s8 %v5788
  %v5790 = vlaneseq
  %v5791 = vshrl.u32 %v5790, 7
  %v5792 = vsub.s32 %v5789, %v5791
  %v5793 = vrot.slane %v5779, %v5792
  %v5794 = vcombine.low %v5786, %v5793
  %v5795 = vcombine.low %v5132, %v5131
  %v5797 = vunpack.c.l.s4 1983009808
  %v5798 = vunpack.c.0.s8 %v5797
  %v5799 = vlaneseq
  %v5800 = vshrl.u32 %v5799, 7
  %v5801 = vsub.s32 %v5798, %v5800
  %v5802 = vrot.slane %v5795, %v5801
  %v5803 = vcombine.low %v5141, %v5149
  %v5804 = vcombine.low %v5148, %v5150
  %v5806 = vunpack.c.l.s4 1983009808
  %v5807 = vunpack.c.0.s8 %v5806
  %v5808 = vlaneseq
  %v5809 = vshrl.u32 %v5808, 7
  %v5810 = vsub.s32 %v5807, %v5809
  %v5811 = vrot.slane %v5803, %v5810
  %v5813 = vunpack.c.l.s4 1983009808
  %v5814 = vunpack.c.0.s8 %v5813
  %v5815 = vlaneseq
  %v5816 = vshrl.u32 %v5815, 7
  %v5817 = vsub.s32 %v5814, %v5816
  %v5818 = vrot.slane %v5804, %v5817
  %v5819 = vcombine.low %v5811, %v5818
  %v5820 = vcombine.low %v5158, %v5166
  %v5822 = vunpack.c.l.s4 1983009808
  %v5823 = vunpack.c.0.s8 %v5822
  %v5824 = vlaneseq
  %v5825 = vshrl.u32 %v5824, 7
  %v5826 = vsub.s32 %v5823, %v5825
  %v5827 = vrot.slane %v5820, %v5826
  %v5828 = vcombine.low %v5167, %v5175
  %v5829 = vcombine.low %v5183, %v5182
  %v5831 = vunpack.c.l.s4 1983009808
  %v5832 = vunpack.c.0.s8 %v5831
  %v5833 = vlaneseq
  %v5834 = vshrl.u32 %v5833, 7
  %v5835 = vsub.s32 %v5832, %v5834
  %v5836 = vrot.slane %v5828, %v5835
  %v5838 = vunpack.c.l.s4 1983009808
  %v5839 = vunpack.c.0.s8 %v5838
  %v5840 = vlaneseq
  %v5841 = vshrl.u32 %v5840, 7
  %v5842 = vsub.s32 %v5839, %v5841
  %v5843 = vrot.slane %v5829, %v5842
  %v5844 = vcombine.low %v5836, %v5843
  %v5845 = vcombine.low %v5184, %v5192
  %v5847 = vunpack.c.l.s4 1983009808
  %v5848 = vunpack.c.0.s8 %v5847
  %v5849 = vlaneseq
  %v5850 = vshrl.u32 %v5849, 7
  %v5851 = vsub.s32 %v5848, %v5850
  %v5852 = vrot.slane %v5845, %v5851
  %v5902 = vunpack.c.l.s4 1983009808
  %v5903 = vunpack.c.0.s8 %v5902
  %v5904 = vlaneseq
  %v5905 = vshrl.u32 %v5904, 7
  %v5906 = vsub.s32 %v5903, %v5905
  %v5907 = vrot.slane %v4451, %v5906
  %v5908 = vcombine.low %v5277, %v5907
  %v5910 = vunpack.c.l.s4 1983009808
  %v5911 = vunpack.c.0.s8 %v5910
  %v5912 = vlaneseq
  %v5913 = vshrl.u32 %v5912, 7
  %v5914 = vsub.s32 %v5911, %v5913
  %v5915 = vrot.slane %v4486, %v5914
  %v5916 = vcombine.low %v5302, %v5915
  %v5918 = vunpack.c.l.s4 1983009808
  %v5919 = vunpack.c.0.s8 %v5918
  %v5920 = vlaneseq
  %v5921 = vshrl.u32 %v5920, 7
  %v5922 = vsub.s32 %v5919, %v5921
  %v5923 = vrot.slane %v4512, %v5922
  %v5924 = vcombine.low %v5327, %v5923
  %v5926 = vunpack.c.l.s4 1983009808
  %v5927 = vunpack.c.0.s8 %v5926
  %v5928 = vlaneseq
  %v5929 = vshrl.u32 %v5928, 7
  %v5930 = vsub.s32 %v5927, %v5929
  %v5931 = vrot.slane %v4538, %v5930
  %v5932 = vcombine.low %v5352, %v5931
  %v5934 = vunpack.c.l.s4 1983009808
  %v5935 = vunpack.c.0.s8 %v5934
  %v5936 = vlaneseq
  %v5937 = vshrl.u32 %v5936, 7
  %v5938 = vsub.s32 %v5935, %v5937
  %v5939 = vrot.slane %v4570, %v5938
  %v5940 = vcombine.low %v5377, %v5939
  %v5942 = vunpack.c.l.s4 1983009808
  %v5943 = vunpack.c.0.s8 %v5942
  %v5944 = vlaneseq
  %v5945 = vshrl.u32 %v5944, 7
  %v5946 = vsub.s32 %v5943, %v5945
  %v5947 = vrot.slane %v4605, %v5946
  %v5948 = vcombine.low %v5402, %v5947
  %v5950 = vunpack.c.l.s4 1983009808
  %v5951 = vunpack.c.0.s8 %v5950
  %v5952 = vlaneseq
  %v5953 = vshrl.u32 %v5952, 7
  %v5954 = vsub.s32 %v5951, %v5953
  %v5955 = vrot.slane %v4631, %v5954
  %v5956 = vcombine.low %v5427, %v5955
  %v5958 = vunpack.c.l.s4 1983009808
  %v5959 = vunpack.c.0.s8 %v5958
  %v5960 = vlaneseq
  %v5961 = vshrl.u32 %v5960, 7
  %v5962 = vsub.s32 %v5959, %v5961
  %v5963 = vrot.slane %v4657, %v5962
  %v5964 = vcombine.low %v5452, %v5963
  %v5966 = vunpack.c.l.s4 1983009808
  %v5967 = vunpack.c.0.s8 %v5966
  %v5968 = vlaneseq
  %v5969 = vshrl.u32 %v5968, 7
  %v5970 = vsub.s32 %v5967, %v5969
  %v5971 = vrot.slane %v4689, %v5970
  %v5972 = vcombine.low %v5477, %v5971
  %v5974 = vunpack.c.l.s4 1983009808
  %v5975 = vunpack.c.0.s8 %v5974
  %v5976 = vlaneseq
  %v5977 = vshrl.u32 %v5976, 7
  %v5978 = vsub.s32 %v5975, %v5977
  %v5979 = vrot.slane %v4724, %v5978
  %v5980 = vcombine.low %v5502, %v5979
  %v5982 = vunpack.c.l.s4 1983009808
  %v5983 = vunpack.c.0.s8 %v5982
  %v5984 = vlaneseq
  %v5985 = vshrl.u32 %v5984, 7
  %v5986 = vsub.s32 %v5983, %v5985
  %v5987 = vrot.slane %v4750, %v5986
  %v5988 = vcombine.low %v5527, %v5987
  %v5990 = vunpack.c.l.s4 1983009808
  %v5991 = vunpack.c.0.s8 %v5990
  %v5992 = vlaneseq
  %v5993 = vshrl.u32 %v5992, 7
  %v5994 = vsub.s32 %v5991, %v5993
  %v5995 = vrot.slane %v4776, %v5994
  %v5996 = vcombine.low %v5552, %v5995
  %v5998 = vunpack.c.l.s4 1983009808
  %v5999 = vunpack.c.0.s8 %v5998
  %v6000 = vlaneseq
  %v6001 = vshrl.u32 %v6000, 7
  %v6002 = vsub.s32 %v5999, %v6001
  %v6003 = vrot.slane %v4869, %v6002
  %v6004 = vcombine.low %v5577, %v6003
  %v6006 = vunpack.c.l.s4 1983009808
  %v6007 = vunpack.c.0.s8 %v6006
  %v6008 = vlaneseq
  %v6009 = vshrl.u32 %v6008, 7
  %v6010 = vsub.s32 %v6007, %v6009
  %v6011 = vrot.slane %v4895, %v6010
  %v6012 = vcombine.low %v5602, %v6011
  %v6014 = vunpack.c.l.s4 1983009808
  %v6015 = vunpack.c.0.s8 %v6014
  %v6016 = vlaneseq
  %v6017 = vshrl.u32 %v6016, 7
  %v6018 = vsub.s32 %v6015, %v6017
  %v6019 = vrot.slane %v4927, %v6018
  %v6020 = vcombine.low %v5627, %v6019
  %v6022 = vunpack.c.l.s4 1983009808
  %v6023 = vunpack.c.0.s8 %v6022
  %v6024 = vlaneseq
  %v6025 = vshrl.u32 %v6024, 7
  %v6026 = vsub.s32 %v6023, %v6025
  %v6027 = vrot.slane %v4962, %v6026
  %v6028 = vcombine.low %v5652, %v6027
  %v6030 = vunpack.c.l.s4 1983009808
  %v6031 = vunpack.c.0.s8 %v6030
  %v6032 = vlaneseq
  %v6033 = vshrl.u32 %v6032, 7
  %v6034 = vsub.s32 %v6031, %v6033
  %v6035 = vrot.slane %v4988, %v6034
  %v6036 = vcombine.low %v5677, %v6035
  %v6038 = vunpack.c.l.s4 1983009808
  %v6039 = vunpack.c.0.s8 %v6038
  %v6040 = vlaneseq
  %v6041 = vshrl.u32 %v6040, 7
  %v6042 = vsub.s32 %v6039, %v6041
  %v6043 = vrot.slane %v5014, %v6042
  %v6044 = vcombine.low %v5702, %v6043
  %v6046 = vunpack.c.l.s4 1983009808
  %v6047 = vunpack.c.0.s8 %v6046
  %v6048 = vlaneseq
  %v6049 = vshrl.u32 %v6048, 7
  %v6050 = vsub.s32 %v6047, %v6049
  %v6051 = vrot.slane %v5046, %v6050
  %v6052 = vcombine.low %v5727, %v6051
  %v6054 = vunpack.c.l.s4 1983009808
  %v6055 = vunpack.c.0.s8 %v6054
  %v6056 = vlaneseq
  %v6057 = vshrl.u32 %v6056, 7
  %v6058 = vsub.s32 %v6055, %v6057
  %v6059 = vrot.slane %v5081, %v6058
  %v6060 = vcombine.low %v5752, %v6059
  %v6062 = vunpack.c.l.s4 1983009808
  %v6063 = vunpack.c.0.s8 %v6062
  %v6064 = vlaneseq
  %v6065 = vshrl.u32 %v6064, 7
  %v6066 = vsub.s32 %v6063, %v6065
  %v6067 = vrot.slane %v5107, %v6066
  %v6068 = vcombine.low %v5777, %v6067
  %v6070 = vunpack.c.l.s4 1983009808
  %v6071 = vunpack.c.0.s8 %v6070
  %v6072 = vlaneseq
  %v6073 = vshrl.u32 %v6072, 7
  %v6074 = vsub.s32 %v6071, %v6073
  %v6075 = vrot.slane %v5133, %v6074
  %v6076 = vcombine.low %v5802, %v6075
  %v6078 = vunpack.c.l.s4 1983009808
  %v6079 = vunpack.c.0.s8 %v6078
  %v6080 = vlaneseq
  %v6081 = vshrl.u32 %v6080, 7
  %v6082 = vsub.s32 %v6079, %v6081
  %v6083 = vrot.slane %v5165, %v6082
  %v6084 = vcombine.low %v5827, %v6083
  %v6086 = vunpack.c.l.s4 1983009808
  %v6087 = vunpack.c.0.s8 %v6086
  %v6088 = vlaneseq
  %v6089 = vshrl.u32 %v6088, 7
  %v6090 = vsub.s32 %v6087, %v6089
  %v6091 = vrot.slane %v5200, %v6090
  %v6092 = vcombine.low %v5852, %v6091
  %v6093 = vrot.slane %v5269, 1
  %v6094 = vrot.slane %v5908, 1
  %v6095 = vsel %vm134, %v6093, %v6094
  %v6096 = vrot.slane %v5294, 1
  %v6097 = vrot.slane %v5916, 1
  %v6098 = vsel %vm134, %v6096, %v6097
  %v6099 = vrot.slane %v5319, 1
  %v6100 = vrot.slane %v5924, 1
  %v6101 = vsel %vm134, %v6099, %v6100
  %v6102 = vrot.slane %v5344, 1
  %v6103 = vrot.slane %v5932, 1
  %v6104 = vsel %vm134, %v6102, %v6103
  %v6105 = vrot.slane %v5369, 1
  %v6106 = vrot.slane %v5940, 1
  %v6107 = vsel %vm134, %v6105, %v6106
  %v6108 = vrot.slane %v5394, 1
  %v6109 = vrot.slane %v5948, 1
  %v6110 = vsel %vm134, %v6108, %v6109
  %v6111 = vrot.slane %v5419, 1
  %v6112 = vrot.slane %v5956, 1
  %v6113 = vsel %vm134, %v6111, %v6112
  %v6114 = vrot.slane %v5444, 1
  %v6115 = vrot.slane %v5964, 1
  %v6116 = vsel %vm134, %v6114, %v6115
  %v6117 = vrot.slane %v5469, 1
  %v6118 = vrot.slane %v5972, 1
  %v6119 = vsel %vm134, %v6117, %v6118
  %v6120 = vrot.slane %v5494, 1
  %v6121 = vrot.slane %v5980, 1
  %v6122 = vsel %vm134, %v6120, %v6121
  %v6123 = vrot.slane %v5519, 1
  %v6124 = vrot.slane %v5988, 1
  %v6125 = vsel %vm134, %v6123, %v6124
  %v6126 = vrot.slane %v5544, 1
  %v6127 = vrot.slane %v5996, 1
  %v6128 = vsel %vm134, %v6126, %v6127
  %v6129 = vrot.slane %v5569, 1
  %v6130 = vrot.slane %v6004, 1
  %v6131 = vsel %vm134, %v6129, %v6130
  %v6132 = vrot.slane %v5594, 1
  %v6133 = vrot.slane %v6012, 1
  %v6134 = vsel %vm134, %v6132, %v6133
  %v6135 = vrot.slane %v5619, 1
  %v6136 = vrot.slane %v6020, 1
  %v6137 = vsel %vm134, %v6135, %v6136
  %v6138 = vrot.slane %v5644, 1
  %v6139 = vrot.slane %v6028, 1
  %v6140 = vsel %vm134, %v6138, %v6139
  %v6141 = vrot.slane %v5669, 1
  %v6142 = vrot.slane %v6036, 1
  %v6143 = vsel %vm134, %v6141, %v6142
  %v6144 = vrot.slane %v5694, 1
  %v6145 = vrot.slane %v6044, 1
  %v6146 = vsel %vm134, %v6144, %v6145
  %v6147 = vrot.slane %v5719, 1
  %v6148 = vrot.slane %v6052, 1
  %v6149 = vsel %vm134, %v6147, %v6148
  %v6150 = vrot.slane %v5744, 1
  %v6151 = vrot.slane %v6060, 1
  %v6152 = vsel %vm134, %v6150, %v6151
  %v6153 = vrot.slane %v5769, 1
  %v6154 = vrot.slane %v6068, 1
  %v6155 = vsel %vm134, %v6153, %v6154
  %v6156 = vrot.slane %v5794, 1
  %v6157 = vrot.slane %v6076, 1
  %v6158 = vsel %vm134, %v6156, %v6157
  %v6159 = vrot.slane %v5819, 1
  %v6160 = vrot.slane %v6084, 1
  %v6161 = vsel %vm134, %v6159, %v6160
  %v6162 = vrot.slane %v5844, 1
  %v6163 = vrot.slane %v6092, 1
  %v6164 = vsel %vm134, %v6162, %v6163
  %6165 = vrot.lane.b32.xlu0 %v6095, 6
  %v6166 = vpop.permute.xlu0 %6165
  %6167 = vrot.lane.b32.xlu0 %v6094, 6
  %v6168 = vpop.permute.xlu0 %6167
  %6169 = vrot.lane.b32.xlu0 %v6098, 6
  %v6170 = vpop.permute.xlu0 %6169
  %6171 = vrot.lane.b32.xlu0 %v6097, 6
  %v6172 = vpop.permute.xlu0 %6171
  %6173 = vrot.lane.b32.xlu0 %v6101, 6
  %v6174 = vpop.permute.xlu0 %6173
  %6175 = vrot.lane.b32.xlu0 %v6100, 6
  %v6176 = vpop.permute.xlu0 %6175
  %6177 = vrot.lane.b32.xlu0 %v6104, 6
  %v6178 = vpop.permute.xlu0 %6177
  %6179 = vrot.lane.b32.xlu0 %v6103, 6
  %v6180 = vpop.permute.xlu0 %6179
  %6181 = vrot.lane.b32.xlu0 %v6107, 6
  %v6182 = vpop.permute.xlu0 %6181
  %6183 = vrot.lane.b32.xlu0 %v6106, 6
  %v6184 = vpop.permute.xlu0 %6183
  %6185 = vrot.lane.b32.xlu0 %v6110, 6
  %v6186 = vpop.permute.xlu0 %6185
  %6187 = vrot.lane.b32.xlu0 %v6109, 6
  %v6188 = vpop.permute.xlu0 %6187
  %6189 = vrot.lane.b32.xlu0 %v6113, 6
  %v6190 = vpop.permute.xlu0 %6189
  %6191 = vrot.lane.b32.xlu0 %v6112, 6
  %v6192 = vpop.permute.xlu0 %6191
  %6193 = vrot.lane.b32.xlu0 %v6116, 6
  %v6194 = vpop.permute.xlu0 %6193
  %6195 = vrot.lane.b32.xlu0 %v6115, 6
  %v6196 = vpop.permute.xlu0 %6195
  %6197 = vrot.lane.b32.xlu0 %v6119, 6
  %v6198 = vpop.permute.xlu0 %6197
  %6199 = vrot.lane.b32.xlu0 %v6118, 6
  %v6200 = vpop.permute.xlu0 %6199
  %6201 = vrot.lane.b32.xlu0 %v6122, 6
  %v6202 = vpop.permute.xlu0 %6201
  %6203 = vrot.lane.b32.xlu0 %v6121, 6
  %v6204 = vpop.permute.xlu0 %6203
  %6205 = vrot.lane.b32.xlu0 %v6125, 6
  %v6206 = vpop.permute.xlu0 %6205
  %6207 = vrot.lane.b32.xlu0 %v6124, 6
  %v6208 = vpop.permute.xlu0 %6207
  %6209 = vrot.lane.b32.xlu0 %v6128, 6
  %v6210 = vpop.permute.xlu0 %6209
  %6211 = vrot.lane.b32.xlu0 %v6127, 6
  %v6212 = vpop.permute.xlu0 %6211
  %6213 = vrot.lane.b32.xlu0 %v6131, 6
  %v6214 = vpop.permute.xlu0 %6213
  %6215 = vrot.lane.b32.xlu0 %v6130, 6
  %v6216 = vpop.permute.xlu0 %6215
  %6217 = vrot.lane.b32.xlu0 %v6134, 6
  %v6218 = vpop.permute.xlu0 %6217
  %6219 = vrot.lane.b32.xlu0 %v6133, 6
  %v6220 = vpop.permute.xlu0 %6219
  %6221 = vrot.lane.b32.xlu0 %v6137, 6
  %v6222 = vpop.permute.xlu0 %6221
  %6223 = vrot.lane.b32.xlu0 %v6136, 6
  %v6224 = vpop.permute.xlu0 %6223
  %6225 = vrot.lane.b32.xlu0 %v6140, 6
  %v6226 = vpop.permute.xlu0 %6225
  %6227 = vrot.lane.b32.xlu0 %v6139, 6
  %v6228 = vpop.permute.xlu0 %6227
  %6229 = vrot.lane.b32.xlu0 %v6143, 6
  %v6230 = vpop.permute.xlu0 %6229
  %6231 = vrot.lane.b32.xlu0 %v6142, 6
  %v6232 = vpop.permute.xlu0 %6231
  %6233 = vrot.lane.b32.xlu0 %v6146, 6
  %v6234 = vpop.permute.xlu0 %6233
  %6235 = vrot.lane.b32.xlu0 %v6145, 6
  %v6236 = vpop.permute.xlu0 %6235
  %6237 = vrot.lane.b32.xlu0 %v6149, 6
  %v6238 = vpop.permute.xlu0 %6237
  %6239 = vrot.lane.b32.xlu0 %v6148, 6
  %v6240 = vpop.permute.xlu0 %6239
  %6241 = vrot.lane.b32.xlu0 %v6152, 6
  %v6242 = vpop.permute.xlu0 %6241
  %6243 = vrot.lane.b32.xlu0 %v6151, 6
  %v6244 = vpop.permute.xlu0 %6243
  %6245 = vrot.lane.b32.xlu0 %v6155, 6
  %v6246 = vpop.permute.xlu0 %6245
  %6247 = vrot.lane.b32.xlu0 %v6154, 6
  %v6248 = vpop.permute.xlu0 %6247
  %6249 = vrot.lane.b32.xlu0 %v6158, 6
  %v6250 = vpop.permute.xlu0 %6249
  %6251 = vrot.lane.b32.xlu0 %v6157, 6
  %v6252 = vpop.permute.xlu0 %6251
  %6253 = vrot.lane.b32.xlu0 %v6161, 6
  %v6254 = vpop.permute.xlu0 %6253
  %6255 = vrot.lane.b32.xlu0 %v6160, 6
  %v6256 = vpop.permute.xlu0 %6255
  %6257 = vrot.lane.b32.xlu0 %v6164, 6
  %v6258 = vpop.permute.xlu0 %6257
  %6259 = vrot.lane.b32.xlu0 %v6163, 6
  %v6260 = vpop.permute.xlu0 %6259
  %v6309 = vcombine.low %v4435, %v4434
  %v6310 = vcombine.low %v4436, %v4444
  %v6312 = vunpack.c.l.s4 1983009808
  %v6313 = vunpack.c.0.s8 %v6312
  %v6314 = vlaneseq
  %v6315 = vshrl.u32 %v6314, 7
  %v6316 = vsub.s32 %v6313, %v6315
  %v6317 = vrot.slane %v6309, %v6316
  %v6319 = vunpack.c.l.s4 1983009808
  %v6320 = vunpack.c.0.s8 %v6319
  %v6321 = vlaneseq
  %v6322 = vshrl.u32 %v6321, 7
  %v6323 = vsub.s32 %v6320, %v6322
  %v6324 = vrot.slane %v6310, %v6323
  %v6325 = vcombine.low %v6317, %v6324
  %v6326 = vcombine.low %v4452, %v4451
  %v6328 = vunpack.c.l.s4 1983009808
  %v6329 = vunpack.c.0.s8 %v6328
  %v6330 = vlaneseq
  %v6331 = vshrl.u32 %v6330, 7
  %v6332 = vsub.s32 %v6329, %v6331
  %v6333 = vrot.slane %v6326, %v6332
  %v6334 = vcombine.low %v4461, %v4469
  %v6335 = vcombine.low %v4468, %v4470
  %v6337 = vunpack.c.l.s4 1983009808
  %v6338 = vunpack.c.0.s8 %v6337
  %v6339 = vlaneseq
  %v6340 = vshrl.u32 %v6339, 7
  %v6341 = vsub.s32 %v6338, %v6340
  %v6342 = vrot.slane %v6334, %v6341
  %v6344 = vunpack.c.l.s4 1983009808
  %v6345 = vunpack.c.0.s8 %v6344
  %v6346 = vlaneseq
  %v6347 = vshrl.u32 %v6346, 7
  %v6348 = vsub.s32 %v6345, %v6347
  %v6349 = vrot.slane %v6335, %v6348
  %v6350 = vcombine.low %v6342, %v6349
  %v6351 = vcombine.low %v4478, %v4486
  %v6353 = vunpack.c.l.s4 1983009808
  %v6354 = vunpack.c.0.s8 %v6353
  %v6355 = vlaneseq
  %v6356 = vshrl.u32 %v6355, 7
  %v6357 = vsub.s32 %v6354, %v6356
  %v6358 = vrot.slane %v6351, %v6357
  %v6359 = vcombine.low %v4487, %v4495
  %v6360 = vcombine.low %v4503, %v4502
  %v6362 = vunpack.c.l.s4 1983009808
  %v6363 = vunpack.c.0.s8 %v6362
  %v6364 = vlaneseq
  %v6365 = vshrl.u32 %v6364, 7
  %v6366 = vsub.s32 %v6363, %v6365
  %v6367 = vrot.slane %v6359, %v6366
  %v6369 = vunpack.c.l.s4 1983009808
  %v6370 = vunpack.c.0.s8 %v6369
  %v6371 = vlaneseq
  %v6372 = vshrl.u32 %v6371, 7
  %v6373 = vsub.s32 %v6370, %v6372
  %v6374 = vrot.slane %v6360, %v6373
  %v6375 = vcombine.low %v6367, %v6374
  %v6376 = vcombine.low %v4504, %v4512
  %v6378 = vunpack.c.l.s4 1983009808
  %v6379 = vunpack.c.0.s8 %v6378
  %v6380 = vlaneseq
  %v6381 = vshrl.u32 %v6380, 7
  %v6382 = vsub.s32 %v6379, %v6381
  %v6383 = vrot.slane %v6376, %v6382
  %v6384 = vcombine.low %v4519, %v4521
  %v6385 = vcombine.low %v4529, %v4537
  %v6387 = vunpack.c.l.s4 1983009808
  %v6388 = vunpack.c.0.s8 %v6387
  %v6389 = vlaneseq
  %v6390 = vshrl.u32 %v6389, 7
  %v6391 = vsub.s32 %v6388, %v6390
  %v6392 = vrot.slane %v6384, %v6391
  %v6394 = vunpack.c.l.s4 1983009808
  %v6395 = vunpack.c.0.s8 %v6394
  %v6396 = vlaneseq
  %v6397 = vshrl.u32 %v6396, 7
  %v6398 = vsub.s32 %v6395, %v6397
  %v6399 = vrot.slane %v6385, %v6398
  %v6400 = vcombine.low %v6392, %v6399
  %v6401 = vcombine.low %v4536, %v4538
  %v6403 = vunpack.c.l.s4 1983009808
  %v6404 = vunpack.c.0.s8 %v6403
  %v6405 = vlaneseq
  %v6406 = vshrl.u32 %v6405, 7
  %v6407 = vsub.s32 %v6404, %v6406
  %v6408 = vrot.slane %v6401, %v6407
  %v6409 = vcombine.low %v4554, %v4553
  %v6410 = vcombine.low %v4555, %v4563
  %v6412 = vunpack.c.l.s4 1983009808
  %v6413 = vunpack.c.0.s8 %v6412
  %v6414 = vlaneseq
  %v6415 = vshrl.u32 %v6414, 7
  %v6416 = vsub.s32 %v6413, %v6415
  %v6417 = vrot.slane %v6409, %v6416
  %v6419 = vunpack.c.l.s4 1983009808
  %v6420 = vunpack.c.0.s8 %v6419
  %v6421 = vlaneseq
  %v6422 = vshrl.u32 %v6421, 7
  %v6423 = vsub.s32 %v6420, %v6422
  %v6424 = vrot.slane %v6410, %v6423
  %v6425 = vcombine.low %v6417, %v6424
  %v6426 = vcombine.low %v4571, %v4570
  %v6428 = vunpack.c.l.s4 1983009808
  %v6429 = vunpack.c.0.s8 %v6428
  %v6430 = vlaneseq
  %v6431 = vshrl.u32 %v6430, 7
  %v6432 = vsub.s32 %v6429, %v6431
  %v6433 = vrot.slane %v6426, %v6432
  %v6434 = vcombine.low %v4580, %v4588
  %v6435 = vcombine.low %v4587, %v4589
  %v6437 = vunpack.c.l.s4 1983009808
  %v6438 = vunpack.c.0.s8 %v6437
  %v6439 = vlaneseq
  %v6440 = vshrl.u32 %v6439, 7
  %v6441 = vsub.s32 %v6438, %v6440
  %v6442 = vrot.slane %v6434, %v6441
  %v6444 = vunpack.c.l.s4 1983009808
  %v6445 = vunpack.c.0.s8 %v6444
  %v6446 = vlaneseq
  %v6447 = vshrl.u32 %v6446, 7
  %v6448 = vsub.s32 %v6445, %v6447
  %v6449 = vrot.slane %v6435, %v6448
  %v6450 = vcombine.low %v6442, %v6449
  %v6451 = vcombine.low %v4597, %v4605
  %v6453 = vunpack.c.l.s4 1983009808
  %v6454 = vunpack.c.0.s8 %v6453
  %v6455 = vlaneseq
  %v6456 = vshrl.u32 %v6455, 7
  %v6457 = vsub.s32 %v6454, %v6456
  %v6458 = vrot.slane %v6451, %v6457
  %v6459 = vcombine.low %v4606, %v4614
  %v6460 = vcombine.low %v4622, %v4621
  %v6462 = vunpack.c.l.s4 1983009808
  %v6463 = vunpack.c.0.s8 %v6462
  %v6464 = vlaneseq
  %v6465 = vshrl.u32 %v6464, 7
  %v6466 = vsub.s32 %v6463, %v6465
  %v6467 = vrot.slane %v6459, %v6466
  %v6469 = vunpack.c.l.s4 1983009808
  %v6470 = vunpack.c.0.s8 %v6469
  %v6471 = vlaneseq
  %v6472 = vshrl.u32 %v6471, 7
  %v6473 = vsub.s32 %v6470, %v6472
  %v6474 = vrot.slane %v6460, %v6473
  %v6475 = vcombine.low %v6467, %v6474
  %v6476 = vcombine.low %v4623, %v4631
  %v6478 = vunpack.c.l.s4 1983009808
  %v6479 = vunpack.c.0.s8 %v6478
  %v6480 = vlaneseq
  %v6481 = vshrl.u32 %v6480, 7
  %v6482 = vsub.s32 %v6479, %v6481
  %v6483 = vrot.slane %v6476, %v6482
  %v6484 = vcombine.low %v4638, %v4640
  %v6485 = vcombine.low %v4648, %v4656
  %v6487 = vunpack.c.l.s4 1983009808
  %v6488 = vunpack.c.0.s8 %v6487
  %v6489 = vlaneseq
  %v6490 = vshrl.u32 %v6489, 7
  %v6491 = vsub.s32 %v6488, %v6490
  %v6492 = vrot.slane %v6484, %v6491
  %v6494 = vunpack.c.l.s4 1983009808
  %v6495 = vunpack.c.0.s8 %v6494
  %v6496 = vlaneseq
  %v6497 = vshrl.u32 %v6496, 7
  %v6498 = vsub.s32 %v6495, %v6497
  %v6499 = vrot.slane %v6485, %v6498
  %v6500 = vcombine.low %v6492, %v6499
  %v6501 = vcombine.low %v4655, %v4657
  %v6503 = vunpack.c.l.s4 1983009808
  %v6504 = vunpack.c.0.s8 %v6503
  %v6505 = vlaneseq
  %v6506 = vshrl.u32 %v6505, 7
  %v6507 = vsub.s32 %v6504, %v6506
  %v6508 = vrot.slane %v6501, %v6507
  %v6509 = vcombine.low %v4673, %v4672
  %v6510 = vcombine.low %v4674, %v4682
  %v6512 = vunpack.c.l.s4 1983009808
  %v6513 = vunpack.c.0.s8 %v6512
  %v6514 = vlaneseq
  %v6515 = vshrl.u32 %v6514, 7
  %v6516 = vsub.s32 %v6513, %v6515
  %v6517 = vrot.slane %v6509, %v6516
  %v6519 = vunpack.c.l.s4 1983009808
  %v6520 = vunpack.c.0.s8 %v6519
  %v6521 = vlaneseq
  %v6522 = vshrl.u32 %v6521, 7
  %v6523 = vsub.s32 %v6520, %v6522
  %v6524 = vrot.slane %v6510, %v6523
  %v6525 = vcombine.low %v6517, %v6524
  %v6526 = vcombine.low %v4690, %v4689
  %v6528 = vunpack.c.l.s4 1983009808
  %v6529 = vunpack.c.0.s8 %v6528
  %v6530 = vlaneseq
  %v6531 = vshrl.u32 %v6530, 7
  %v6532 = vsub.s32 %v6529, %v6531
  %v6533 = vrot.slane %v6526, %v6532
  %v6534 = vcombine.low %v4699, %v4707
  %v6535 = vcombine.low %v4706, %v4708
  %v6537 = vunpack.c.l.s4 1983009808
  %v6538 = vunpack.c.0.s8 %v6537
  %v6539 = vlaneseq
  %v6540 = vshrl.u32 %v6539, 7
  %v6541 = vsub.s32 %v6538, %v6540
  %v6542 = vrot.slane %v6534, %v6541
  %v6544 = vunpack.c.l.s4 1983009808
  %v6545 = vunpack.c.0.s8 %v6544
  %v6546 = vlaneseq
  %v6547 = vshrl.u32 %v6546, 7
  %v6548 = vsub.s32 %v6545, %v6547
  %v6549 = vrot.slane %v6535, %v6548
  %v6550 = vcombine.low %v6542, %v6549
  %v6551 = vcombine.low %v4716, %v4724
  %v6553 = vunpack.c.l.s4 1983009808
  %v6554 = vunpack.c.0.s8 %v6553
  %v6555 = vlaneseq
  %v6556 = vshrl.u32 %v6555, 7
  %v6557 = vsub.s32 %v6554, %v6556
  %v6558 = vrot.slane %v6551, %v6557
  %v6559 = vcombine.low %v4725, %v4733
  %v6560 = vcombine.low %v4741, %v4740
  %v6562 = vunpack.c.l.s4 1983009808
  %v6563 = vunpack.c.0.s8 %v6562
  %v6564 = vlaneseq
  %v6565 = vshrl.u32 %v6564, 7
  %v6566 = vsub.s32 %v6563, %v6565
  %v6567 = vrot.slane %v6559, %v6566
  %v6569 = vunpack.c.l.s4 1983009808
  %v6570 = vunpack.c.0.s8 %v6569
  %v6571 = vlaneseq
  %v6572 = vshrl.u32 %v6571, 7
  %v6573 = vsub.s32 %v6570, %v6572
  %v6574 = vrot.slane %v6560, %v6573
  %v6575 = vcombine.low %v6567, %v6574
  %v6576 = vcombine.low %v4742, %v4750
  %v6578 = vunpack.c.l.s4 1983009808
  %v6579 = vunpack.c.0.s8 %v6578
  %v6580 = vlaneseq
  %v6581 = vshrl.u32 %v6580, 7
  %v6582 = vsub.s32 %v6579, %v6581
  %v6583 = vrot.slane %v6576, %v6582
  %v6584 = vcombine.low %v4757, %v4759
  %v6585 = vcombine.low %v4767, %v4775
  %v6587 = vunpack.c.l.s4 1983009808
  %v6588 = vunpack.c.0.s8 %v6587
  %v6589 = vlaneseq
  %v6590 = vshrl.u32 %v6589, 7
  %v6591 = vsub.s32 %v6588, %v6590
  %v6592 = vrot.slane %v6584, %v6591
  %v6594 = vunpack.c.l.s4 1983009808
  %v6595 = vunpack.c.0.s8 %v6594
  %v6596 = vlaneseq
  %v6597 = vshrl.u32 %v6596, 7
  %v6598 = vsub.s32 %v6595, %v6597
  %v6599 = vrot.slane %v6585, %v6598
  %v6600 = vcombine.low %v6592, %v6599
  %v6601 = vcombine.low %v4774, %v4776
  %v6603 = vunpack.c.l.s4 1983009808
  %v6604 = vunpack.c.0.s8 %v6603
  %v6605 = vlaneseq
  %v6606 = vshrl.u32 %v6605, 7
  %v6607 = vsub.s32 %v6604, %v6606
  %v6608 = vrot.slane %v6601, %v6607
  %v6609 = vcombine.low %v4844, %v4852
  %v6610 = vcombine.low %v4860, %v4859
  %v6612 = vunpack.c.l.s4 1983009808
  %v6613 = vunpack.c.0.s8 %v6612
  %v6614 = vlaneseq
  %v6615 = vshrl.u32 %v6614, 7
  %v6616 = vsub.s32 %v6613, %v6615
  %v6617 = vrot.slane %v6609, %v6616
  %v6619 = vunpack.c.l.s4 1983009808
  %v6620 = vunpack.c.0.s8 %v6619
  %v6621 = vlaneseq
  %v6622 = vshrl.u32 %v6621, 7
  %v6623 = vsub.s32 %v6620, %v6622
  %v6624 = vrot.slane %v6610, %v6623
  %v6625 = vcombine.low %v6617, %v6624
  %v6626 = vcombine.low %v4861, %v4869
  %v6628 = vunpack.c.l.s4 1983009808
  %v6629 = vunpack.c.0.s8 %v6628
  %v6630 = vlaneseq
  %v6631 = vshrl.u32 %v6630, 7
  %v6632 = vsub.s32 %v6629, %v6631
  %v6633 = vrot.slane %v6626, %v6632
  %v6634 = vcombine.low %v4876, %v4878
  %v6635 = vcombine.low %v4886, %v4894
  %v6637 = vunpack.c.l.s4 1983009808
  %v6638 = vunpack.c.0.s8 %v6637
  %v6639 = vlaneseq
  %v6640 = vshrl.u32 %v6639, 7
  %v6641 = vsub.s32 %v6638, %v6640
  %v6642 = vrot.slane %v6634, %v6641
  %v6644 = vunpack.c.l.s4 1983009808
  %v6645 = vunpack.c.0.s8 %v6644
  %v6646 = vlaneseq
  %v6647 = vshrl.u32 %v6646, 7
  %v6648 = vsub.s32 %v6645, %v6647
  %v6649 = vrot.slane %v6635, %v6648
  %v6650 = vcombine.low %v6642, %v6649
  %v6651 = vcombine.low %v4893, %v4895
  %v6653 = vunpack.c.l.s4 1983009808
  %v6654 = vunpack.c.0.s8 %v6653
  %v6655 = vlaneseq
  %v6656 = vshrl.u32 %v6655, 7
  %v6657 = vsub.s32 %v6654, %v6656
  %v6658 = vrot.slane %v6651, %v6657
  %v6659 = vcombine.low %v4911, %v4910
  %v6660 = vcombine.low %v4912, %v4920
  %v6662 = vunpack.c.l.s4 1983009808
  %v6663 = vunpack.c.0.s8 %v6662
  %v6664 = vlaneseq
  %v6665 = vshrl.u32 %v6664, 7
  %v6666 = vsub.s32 %v6663, %v6665
  %v6667 = vrot.slane %v6659, %v6666
  %v6669 = vunpack.c.l.s4 1983009808
  %v6670 = vunpack.c.0.s8 %v6669
  %v6671 = vlaneseq
  %v6672 = vshrl.u32 %v6671, 7
  %v6673 = vsub.s32 %v6670, %v6672
  %v6674 = vrot.slane %v6660, %v6673
  %v6675 = vcombine.low %v6667, %v6674
  %v6676 = vcombine.low %v4928, %v4927
  %v6678 = vunpack.c.l.s4 1983009808
  %v6679 = vunpack.c.0.s8 %v6678
  %v6680 = vlaneseq
  %v6681 = vshrl.u32 %v6680, 7
  %v6682 = vsub.s32 %v6679, %v6681
  %v6683 = vrot.slane %v6676, %v6682
  %v6684 = vcombine.low %v4937, %v4945
  %v6685 = vcombine.low %v4944, %v4946
  %v6687 = vunpack.c.l.s4 1983009808
  %v6688 = vunpack.c.0.s8 %v6687
  %v6689 = vlaneseq
  %v6690 = vshrl.u32 %v6689, 7
  %v6691 = vsub.s32 %v6688, %v6690
  %v6692 = vrot.slane %v6684, %v6691
  %v6694 = vunpack.c.l.s4 1983009808
  %v6695 = vunpack.c.0.s8 %v6694
  %v6696 = vlaneseq
  %v6697 = vshrl.u32 %v6696, 7
  %v6698 = vsub.s32 %v6695, %v6697
  %v6699 = vrot.slane %v6685, %v6698
  %v6700 = vcombine.low %v6692, %v6699
  %v6701 = vcombine.low %v4954, %v4962
  %v6703 = vunpack.c.l.s4 1983009808
  %v6704 = vunpack.c.0.s8 %v6703
  %v6705 = vlaneseq
  %v6706 = vshrl.u32 %v6705, 7
  %v6707 = vsub.s32 %v6704, %v6706
  %v6708 = vrot.slane %v6701, %v6707
  %v6709 = vcombine.low %v4963, %v4971
  %v6710 = vcombine.low %v4979, %v4978
  %v6712 = vunpack.c.l.s4 1983009808
  %v6713 = vunpack.c.0.s8 %v6712
  %v6714 = vlaneseq
  %v6715 = vshrl.u32 %v6714, 7
  %v6716 = vsub.s32 %v6713, %v6715
  %v6717 = vrot.slane %v6709, %v6716
  %v6719 = vunpack.c.l.s4 1983009808
  %v6720 = vunpack.c.0.s8 %v6719
  %v6721 = vlaneseq
  %v6722 = vshrl.u32 %v6721, 7
  %v6723 = vsub.s32 %v6720, %v6722
  %v6724 = vrot.slane %v6710, %v6723
  %v6725 = vcombine.low %v6717, %v6724
  %v6726 = vcombine.low %v4980, %v4988
  %v6728 = vunpack.c.l.s4 1983009808
  %v6729 = vunpack.c.0.s8 %v6728
  %v6730 = vlaneseq
  %v6731 = vshrl.u32 %v6730, 7
  %v6732 = vsub.s32 %v6729, %v6731
  %v6733 = vrot.slane %v6726, %v6732
  %v6734 = vcombine.low %v4995, %v4997
  %v6735 = vcombine.low %v5005, %v5013
  %v6737 = vunpack.c.l.s4 1983009808
  %v6738 = vunpack.c.0.s8 %v6737
  %v6739 = vlaneseq
  %v6740 = vshrl.u32 %v6739, 7
  %v6741 = vsub.s32 %v6738, %v6740
  %v6742 = vrot.slane %v6734, %v6741
  %v6744 = vunpack.c.l.s4 1983009808
  %v6745 = vunpack.c.0.s8 %v6744
  %v6746 = vlaneseq
  %v6747 = vshrl.u32 %v6746, 7
  %v6748 = vsub.s32 %v6745, %v6747
  %v6749 = vrot.slane %v6735, %v6748
  %v6750 = vcombine.low %v6742, %v6749
  %v6751 = vcombine.low %v5012, %v5014
  %v6753 = vunpack.c.l.s4 1983009808
  %v6754 = vunpack.c.0.s8 %v6753
  %v6755 = vlaneseq
  %v6756 = vshrl.u32 %v6755, 7
  %v6757 = vsub.s32 %v6754, %v6756
  %v6758 = vrot.slane %v6751, %v6757
  %v6759 = vcombine.low %v5030, %v5029
  %v6760 = vcombine.low %v5031, %v5039
  %v6762 = vunpack.c.l.s4 1983009808
  %v6763 = vunpack.c.0.s8 %v6762
  %v6764 = vlaneseq
  %v6765 = vshrl.u32 %v6764, 7
  %v6766 = vsub.s32 %v6763, %v6765
  %v6767 = vrot.slane %v6759, %v6766
  %v6769 = vunpack.c.l.s4 1983009808
  %v6770 = vunpack.c.0.s8 %v6769
  %v6771 = vlaneseq
  %v6772 = vshrl.u32 %v6771, 7
  %v6773 = vsub.s32 %v6770, %v6772
  %v6774 = vrot.slane %v6760, %v6773
  %v6775 = vcombine.low %v6767, %v6774
  %v6776 = vcombine.low %v5047, %v5046
  %v6778 = vunpack.c.l.s4 1983009808
  %v6779 = vunpack.c.0.s8 %v6778
  %v6780 = vlaneseq
  %v6781 = vshrl.u32 %v6780, 7
  %v6782 = vsub.s32 %v6779, %v6781
  %v6783 = vrot.slane %v6776, %v6782
  %v6784 = vcombine.low %v5056, %v5064
  %v6785 = vcombine.low %v5063, %v5065
  %v6787 = vunpack.c.l.s4 1983009808
  %v6788 = vunpack.c.0.s8 %v6787
  %v6789 = vlaneseq
  %v6790 = vshrl.u32 %v6789, 7
  %v6791 = vsub.s32 %v6788, %v6790
  %v6792 = vrot.slane %v6784, %v6791
  %v6794 = vunpack.c.l.s4 1983009808
  %v6795 = vunpack.c.0.s8 %v6794
  %v6796 = vlaneseq
  %v6797 = vshrl.u32 %v6796, 7
  %v6798 = vsub.s32 %v6795, %v6797
  %v6799 = vrot.slane %v6785, %v6798
  %v6800 = vcombine.low %v6792, %v6799
  %v6801 = vcombine.low %v5073, %v5081
  %v6803 = vunpack.c.l.s4 1983009808
  %v6804 = vunpack.c.0.s8 %v6803
  %v6805 = vlaneseq
  %v6806 = vshrl.u32 %v6805, 7
  %v6807 = vsub.s32 %v6804, %v6806
  %v6808 = vrot.slane %v6801, %v6807
  %v6809 = vcombine.low %v5082, %v5090
  %v6810 = vcombine.low %v5098, %v5097
  %v6812 = vunpack.c.l.s4 1983009808
  %v6813 = vunpack.c.0.s8 %v6812
  %v6814 = vlaneseq
  %v6815 = vshrl.u32 %v6814, 7
  %v6816 = vsub.s32 %v6813, %v6815
  %v6817 = vrot.slane %v6809, %v6816
  %v6819 = vunpack.c.l.s4 1983009808
  %v6820 = vunpack.c.0.s8 %v6819
  %v6821 = vlaneseq
  %v6822 = vshrl.u32 %v6821, 7
  %v6823 = vsub.s32 %v6820, %v6822
  %v6824 = vrot.slane %v6810, %v6823
  %v6825 = vcombine.low %v6817, %v6824
  %v6826 = vcombine.low %v5099, %v5107
  %v6828 = vunpack.c.l.s4 1983009808
  %v6829 = vunpack.c.0.s8 %v6828
  %v6830 = vlaneseq
  %v6831 = vshrl.u32 %v6830, 7
  %v6832 = vsub.s32 %v6829, %v6831
  %v6833 = vrot.slane %v6826, %v6832
  %v6834 = vcombine.low %v5114, %v5116
  %v6835 = vcombine.low %v5124, %v5132
  %v6837 = vunpack.c.l.s4 1983009808
  %v6838 = vunpack.c.0.s8 %v6837
  %v6839 = vlaneseq
  %v6840 = vshrl.u32 %v6839, 7
  %v6841 = vsub.s32 %v6838, %v6840
  %v6842 = vrot.slane %v6834, %v6841
  %v6844 = vunpack.c.l.s4 1983009808
  %v6845 = vunpack.c.0.s8 %v6844
  %v6846 = vlaneseq
  %v6847 = vshrl.u32 %v6846, 7
  %v6848 = vsub.s32 %v6845, %v6847
  %v6849 = vrot.slane %v6835, %v6848
  %v6850 = vcombine.low %v6842, %v6849
  %v6851 = vcombine.low %v5131, %v5133
  %v6853 = vunpack.c.l.s4 1983009808
  %v6854 = vunpack.c.0.s8 %v6853
  %v6855 = vlaneseq
  %v6856 = vshrl.u32 %v6855, 7
  %v6857 = vsub.s32 %v6854, %v6856
  %v6858 = vrot.slane %v6851, %v6857
  %v6859 = vcombine.low %v5149, %v5148
  %v6860 = vcombine.low %v5150, %v5158
  %v6862 = vunpack.c.l.s4 1983009808
  %v6863 = vunpack.c.0.s8 %v6862
  %v6864 = vlaneseq
  %v6865 = vshrl.u32 %v6864, 7
  %v6866 = vsub.s32 %v6863, %v6865
  %v6867 = vrot.slane %v6859, %v6866
  %v6869 = vunpack.c.l.s4 1983009808
  %v6870 = vunpack.c.0.s8 %v6869
  %v6871 = vlaneseq
  %v6872 = vshrl.u32 %v6871, 7
  %v6873 = vsub.s32 %v6870, %v6872
  %v6874 = vrot.slane %v6860, %v6873
  %v6875 = vcombine.low %v6867, %v6874
  %v6876 = vcombine.low %v5166, %v5165
  %v6878 = vunpack.c.l.s4 1983009808
  %v6879 = vunpack.c.0.s8 %v6878
  %v6880 = vlaneseq
  %v6881 = vshrl.u32 %v6880, 7
  %v6882 = vsub.s32 %v6879, %v6881
  %v6883 = vrot.slane %v6876, %v6882
  %v6884 = vcombine.low %v5175, %v5183
  %v6885 = vcombine.low %v5182, %v5184
  %v6887 = vunpack.c.l.s4 1983009808
  %v6888 = vunpack.c.0.s8 %v6887
  %v6889 = vlaneseq
  %v6890 = vshrl.u32 %v6889, 7
  %v6891 = vsub.s32 %v6888, %v6890
  %v6892 = vrot.slane %v6884, %v6891
  %v6894 = vunpack.c.l.s4 1983009808
  %v6895 = vunpack.c.0.s8 %v6894
  %v6896 = vlaneseq
  %v6897 = vshrl.u32 %v6896, 7
  %v6898 = vsub.s32 %v6895, %v6897
  %v6899 = vrot.slane %v6885, %v6898
  %v6900 = vcombine.low %v6892, %v6899
  %v6901 = vcombine.low %v5192, %v5200
  %v6903 = vunpack.c.l.s4 1983009808
  %v6904 = vunpack.c.0.s8 %v6903
  %v6905 = vlaneseq
  %v6906 = vshrl.u32 %v6905, 7
  %v6907 = vsub.s32 %v6904, %v6906
  %v6908 = vrot.slane %v6901, %v6907
  %6909 = vrot.lane.b32.xlu0 %v6325, 12
  %v6910 = vpop.permute.xlu0 %6909
  %6911 = vrot.lane.b32.xlu0 %v6333, 12
  %v6912 = vpop.permute.xlu0 %6911
  %6913 = vrot.lane.b32.xlu0 %v6350, 12
  %v6914 = vpop.permute.xlu0 %6913
  %6915 = vrot.lane.b32.xlu0 %v6358, 12
  %v6916 = vpop.permute.xlu0 %6915
  %6917 = vrot.lane.b32.xlu0 %v6375, 12
  %v6918 = vpop.permute.xlu0 %6917
  %6919 = vrot.lane.b32.xlu0 %v6383, 12
  %v6920 = vpop.permute.xlu0 %6919
  %6921 = vrot.lane.b32.xlu0 %v6400, 12
  %v6922 = vpop.permute.xlu0 %6921
  %6923 = vrot.lane.b32.xlu0 %v6408, 12
  %v6924 = vpop.permute.xlu0 %6923
  %6925 = vrot.lane.b32.xlu0 %v6425, 12
  %v6926 = vpop.permute.xlu0 %6925
  %6927 = vrot.lane.b32.xlu0 %v6433, 12
  %v6928 = vpop.permute.xlu0 %6927
  %6929 = vrot.lane.b32.xlu0 %v6450, 12
  %v6930 = vpop.permute.xlu0 %6929
  %6931 = vrot.lane.b32.xlu0 %v6458, 12
  %v6932 = vpop.permute.xlu0 %6931
  %6933 = vrot.lane.b32.xlu0 %v6475, 12
  %v6934 = vpop.permute.xlu0 %6933
  %6935 = vrot.lane.b32.xlu0 %v6483, 12
  %v6936 = vpop.permute.xlu0 %6935
  %6937 = vrot.lane.b32.xlu0 %v6500, 12
  %v6938 = vpop.permute.xlu0 %6937
  %6939 = vrot.lane.b32.xlu0 %v6508, 12
  %v6940 = vpop.permute.xlu0 %6939
  %6941 = vrot.lane.b32.xlu0 %v6525, 12
  %v6942 = vpop.permute.xlu0 %6941
  %6943 = vrot.lane.b32.xlu0 %v6533, 12
  %v6944 = vpop.permute.xlu0 %6943
  %6945 = vrot.lane.b32.xlu0 %v6550, 12
  %v6946 = vpop.permute.xlu0 %6945
  %6947 = vrot.lane.b32.xlu0 %v6558, 12
  %v6948 = vpop.permute.xlu0 %6947
  %6949 = vrot.lane.b32.xlu0 %v6575, 12
  %v6950 = vpop.permute.xlu0 %6949
  %6951 = vrot.lane.b32.xlu0 %v6583, 12
  %v6952 = vpop.permute.xlu0 %6951
  %6953 = vrot.lane.b32.xlu0 %v6600, 12
  %v6954 = vpop.permute.xlu0 %6953
  %6955 = vrot.lane.b32.xlu0 %v6608, 12
  %v6956 = vpop.permute.xlu0 %6955
  %6957 = vrot.lane.b32.xlu0 %v6625, 12
  %v6958 = vpop.permute.xlu0 %6957
  %6959 = vrot.lane.b32.xlu0 %v6633, 12
  %v6960 = vpop.permute.xlu0 %6959
  %6961 = vrot.lane.b32.xlu0 %v6650, 12
  %v6962 = vpop.permute.xlu0 %6961
  %6963 = vrot.lane.b32.xlu0 %v6658, 12
  %v6964 = vpop.permute.xlu0 %6963
  %6965 = vrot.lane.b32.xlu0 %v6675, 12
  %v6966 = vpop.permute.xlu0 %6965
  %6967 = vrot.lane.b32.xlu0 %v6683, 12
  %v6968 = vpop.permute.xlu0 %6967
  %6969 = vrot.lane.b32.xlu0 %v6700, 12
  %v6970 = vpop.permute.xlu0 %6969
  %6971 = vrot.lane.b32.xlu0 %v6708, 12
  %v6972 = vpop.permute.xlu0 %6971
  %6973 = vrot.lane.b32.xlu0 %v6725, 12
  %v6974 = vpop.permute.xlu0 %6973
  %6975 = vrot.lane.b32.xlu0 %v6733, 12
  %v6976 = vpop.permute.xlu0 %6975
  %6977 = vrot.lane.b32.xlu0 %v6750, 12
  %v6978 = vpop.permute.xlu0 %6977
  %6979 = vrot.lane.b32.xlu0 %v6758, 12
  %v6980 = vpop.permute.xlu0 %6979
  %6981 = vrot.lane.b32.xlu0 %v6775, 12
  %v6982 = vpop.permute.xlu0 %6981
  %6983 = vrot.lane.b32.xlu0 %v6783, 12
  %v6984 = vpop.permute.xlu0 %6983
  %6985 = vrot.lane.b32.xlu0 %v6800, 12
  %v6986 = vpop.permute.xlu0 %6985
  %6987 = vrot.lane.b32.xlu0 %v6808, 12
  %v6988 = vpop.permute.xlu0 %6987
  %6989 = vrot.lane.b32.xlu0 %v6825, 12
  %v6990 = vpop.permute.xlu0 %6989
  %6991 = vrot.lane.b32.xlu0 %v6833, 12
  %v6992 = vpop.permute.xlu0 %6991
  %6993 = vrot.lane.b32.xlu0 %v6850, 12
  %v6994 = vpop.permute.xlu0 %6993
  %6995 = vrot.lane.b32.xlu0 %v6858, 12
  %v6996 = vpop.permute.xlu0 %6995
  %6997 = vrot.lane.b32.xlu0 %v6875, 12
  %v6998 = vpop.permute.xlu0 %6997
  %6999 = vrot.lane.b32.xlu0 %v6883, 12
  %v7000 = vpop.permute.xlu0 %6999
  %7001 = vrot.lane.b32.xlu0 %v6900, 12
  %v7002 = vpop.permute.xlu0 %7001
  %7003 = vrot.lane.b32.xlu0 %v6908, 12
  %v7004 = vpop.permute.xlu0 %7003
  %v7053 = vcombine.low %v4784, %v4792
  %v7054 = vcombine.low %v4791, %v4793
  %v7056 = vunpack.c.l.s4 1983009808
  %v7057 = vunpack.c.0.s8 %v7056
  %v7058 = vlaneseq
  %v7059 = vshrl.u32 %v7058, 7
  %v7060 = vsub.s32 %v7057, %v7059
  %v7061 = vrot.slane %v7053, %v7060
  %v7063 = vunpack.c.l.s4 1983009808
  %v7064 = vunpack.c.0.s8 %v7063
  %v7065 = vlaneseq
  %v7066 = vshrl.u32 %v7065, 7
  %v7067 = vsub.s32 %v7064, %v7066
  %v7068 = vrot.slane %v7054, %v7067
  %v7069 = vcombine.low %v7061, %v7068
  %v7070 = vcombine.low %v4801, %v4809
  %v7072 = vunpack.c.l.s4 1983009808
  %v7073 = vunpack.c.0.s8 %v7072
  %v7074 = vlaneseq
  %v7075 = vshrl.u32 %v7074, 7
  %v7076 = vsub.s32 %v7073, %v7075
  %v7077 = vrot.slane %v7070, %v7076
  %v7078 = vcombine.low %v5199, %v5201
  %v7079 = vcombine.low %v5209, %v5217
  %v7081 = vunpack.c.l.s4 1983009808
  %v7082 = vunpack.c.0.s8 %v7081
  %v7083 = vlaneseq
  %v7084 = vshrl.u32 %v7083, 7
  %v7085 = vsub.s32 %v7082, %v7084
  %v7086 = vrot.slane %v7078, %v7085
  %v7088 = vunpack.c.l.s4 1983009808
  %v7089 = vunpack.c.0.s8 %v7088
  %v7090 = vlaneseq
  %v7091 = vshrl.u32 %v7090, 7
  %v7092 = vsub.s32 %v7089, %v7091
  %v7093 = vrot.slane %v7079, %v7092
  %v7094 = vcombine.low %v7086, %v7093
  %v7095 = vcombine.low %v5216, %v5218
  %v7097 = vunpack.c.l.s4 1983009808
  %v7098 = vunpack.c.0.s8 %v7097
  %v7099 = vlaneseq
  %v7100 = vshrl.u32 %v7099, 7
  %v7101 = vsub.s32 %v7098, %v7100
  %v7102 = vrot.slane %v7095, %v7101
  %7103 = vrot.lane.b32.xlu0 %v5294, 18
  %v7104 = vpop.permute.xlu0 %7103
  %7105 = vrot.lane.b32.xlu0 %v5302, 18
  %v7106 = vpop.permute.xlu0 %7105
  %7107 = vrot.lane.b32.xlu0 %v5319, 18
  %v7108 = vpop.permute.xlu0 %7107
  %7109 = vrot.lane.b32.xlu0 %v5327, 18
  %v7110 = vpop.permute.xlu0 %7109
  %7111 = vrot.lane.b32.xlu0 %v5344, 18
  %v7112 = vpop.permute.xlu0 %7111
  %7113 = vrot.lane.b32.xlu0 %v5352, 18
  %v7114 = vpop.permute.xlu0 %7113
  %7115 = vrot.lane.b32.xlu0 %v5369, 18
  %v7116 = vpop.permute.xlu0 %7115
  %7117 = vrot.lane.b32.xlu0 %v5377, 18
  %v7118 = vpop.permute.xlu0 %7117
  %7119 = vrot.lane.b32.xlu0 %v5394, 18
  %v7120 = vpop.permute.xlu0 %7119
  %7121 = vrot.lane.b32.xlu0 %v5402, 18
  %v7122 = vpop.permute.xlu0 %7121
  %7123 = vrot.lane.b32.xlu0 %v5419, 18
  %v7124 = vpop.permute.xlu0 %7123
  %7125 = vrot.lane.b32.xlu0 %v5427, 18
  %v7126 = vpop.permute.xlu0 %7125
  %7127 = vrot.lane.b32.xlu0 %v5444, 18
  %v7128 = vpop.permute.xlu0 %7127
  %7129 = vrot.lane.b32.xlu0 %v5452, 18
  %v7130 = vpop.permute.xlu0 %7129
  %7131 = vrot.lane.b32.xlu0 %v5469, 18
  %v7132 = vpop.permute.xlu0 %7131
  %7133 = vrot.lane.b32.xlu0 %v5477, 18
  %v7134 = vpop.permute.xlu0 %7133
  %7135 = vrot.lane.b32.xlu0 %v5494, 18
  %v7136 = vpop.permute.xlu0 %7135
  %7137 = vrot.lane.b32.xlu0 %v5502, 18
  %v7138 = vpop.permute.xlu0 %7137
  %7139 = vrot.lane.b32.xlu0 %v5519, 18
  %v7140 = vpop.permute.xlu0 %7139
  %7141 = vrot.lane.b32.xlu0 %v5527, 18
  %v7142 = vpop.permute.xlu0 %7141
  %7143 = vrot.lane.b32.xlu0 %v5544, 18
  %v7144 = vpop.permute.xlu0 %7143
  %7145 = vrot.lane.b32.xlu0 %v5552, 18
  %v7146 = vpop.permute.xlu0 %7145
  %7147 = vrot.lane.b32.xlu0 %v7069, 18
  %v7148 = vpop.permute.xlu0 %7147
  %7149 = vrot.lane.b32.xlu0 %v7077, 18
  %v7150 = vpop.permute.xlu0 %7149
  %7151 = vrot.lane.b32.xlu0 %v5594, 18
  %v7152 = vpop.permute.xlu0 %7151
  %7153 = vrot.lane.b32.xlu0 %v5602, 18
  %v7154 = vpop.permute.xlu0 %7153
  %7155 = vrot.lane.b32.xlu0 %v5619, 18
  %v7156 = vpop.permute.xlu0 %7155
  %7157 = vrot.lane.b32.xlu0 %v5627, 18
  %v7158 = vpop.permute.xlu0 %7157
  %7159 = vrot.lane.b32.xlu0 %v5644, 18
  %v7160 = vpop.permute.xlu0 %7159
  %7161 = vrot.lane.b32.xlu0 %v5652, 18
  %v7162 = vpop.permute.xlu0 %7161
  %7163 = vrot.lane.b32.xlu0 %v5669, 18
  %v7164 = vpop.permute.xlu0 %7163
  %7165 = vrot.lane.b32.xlu0 %v5677, 18
  %v7166 = vpop.permute.xlu0 %7165
  %7167 = vrot.lane.b32.xlu0 %v5694, 18
  %v7168 = vpop.permute.xlu0 %7167
  %7169 = vrot.lane.b32.xlu0 %v5702, 18
  %v7170 = vpop.permute.xlu0 %7169
  %7171 = vrot.lane.b32.xlu0 %v5719, 18
  %v7172 = vpop.permute.xlu0 %7171
  %7173 = vrot.lane.b32.xlu0 %v5727, 18
  %v7174 = vpop.permute.xlu0 %7173
  %7175 = vrot.lane.b32.xlu0 %v5744, 18
  %v7176 = vpop.permute.xlu0 %7175
  %7177 = vrot.lane.b32.xlu0 %v5752, 18
  %v7178 = vpop.permute.xlu0 %7177
  %7179 = vrot.lane.b32.xlu0 %v5769, 18
  %v7180 = vpop.permute.xlu0 %7179
  %7181 = vrot.lane.b32.xlu0 %v5777, 18
  %v7182 = vpop.permute.xlu0 %7181
  %7183 = vrot.lane.b32.xlu0 %v5794, 18
  %v7184 = vpop.permute.xlu0 %7183
  %7185 = vrot.lane.b32.xlu0 %v5802, 18
  %v7186 = vpop.permute.xlu0 %7185
  %7187 = vrot.lane.b32.xlu0 %v5819, 18
  %v7188 = vpop.permute.xlu0 %7187
  %7189 = vrot.lane.b32.xlu0 %v5827, 18
  %v7190 = vpop.permute.xlu0 %7189
  %7191 = vrot.lane.b32.xlu0 %v5844, 18
  %v7192 = vpop.permute.xlu0 %7191
  %7193 = vrot.lane.b32.xlu0 %v5852, 18
  %v7194 = vpop.permute.xlu0 %7193
  %7195 = vrot.lane.b32.xlu0 %v7094, 18
  %v7196 = vpop.permute.xlu0 %7195
  %7197 = vrot.lane.b32.xlu0 %v7102, 18
  %v7198 = vpop.permute.xlu0 %7197
  %v7248 = vunpack.c.l.s4 1983009808
  %v7249 = vunpack.c.0.s8 %v7248
  %v7250 = vlaneseq
  %v7251 = vshrl.u32 %v7250, 7
  %v7252 = vsub.s32 %v7249, %v7251
  %v7253 = vrot.slane %v4808, %v7252
  %v7254 = vcombine.low %v7077, %v7253
  %v7256 = vunpack.c.l.s4 1983009808
  %v7257 = vunpack.c.0.s8 %v7256
  %v7258 = vlaneseq
  %v7259 = vshrl.u32 %v7258, 7
  %v7260 = vsub.s32 %v7257, %v7259
  %v7261 = vrot.slane %v5226, %v7260
  %v7262 = vcombine.low %v7102, %v7261
  %v7263 = vrot.slane %v7069, 1
  %v7264 = vrot.slane %v7254, 1
  %v7265 = vsel %vm134, %v7263, %v7264
  %v7266 = vrot.slane %v7094, 1
  %v7267 = vrot.slane %v7262, 1
  %v7268 = vsel %vm134, %v7266, %v7267
  %7269 = vrot.lane.b32.xlu0 %v6098, 24
  %v7270 = vpop.permute.xlu0 %7269
  %7271 = vrot.lane.b32.xlu0 %v6097, 24
  %v7272 = vpop.permute.xlu0 %7271
  %7273 = vrot.lane.b32.xlu0 %v6101, 24
  %v7274 = vpop.permute.xlu0 %7273
  %7275 = vrot.lane.b32.xlu0 %v6100, 24
  %v7276 = vpop.permute.xlu0 %7275
  %7277 = vrot.lane.b32.xlu0 %v6104, 24
  %v7278 = vpop.permute.xlu0 %7277
  %7279 = vrot.lane.b32.xlu0 %v6103, 24
  %v7280 = vpop.permute.xlu0 %7279
  %7281 = vrot.lane.b32.xlu0 %v6107, 24
  %v7282 = vpop.permute.xlu0 %7281
  %7283 = vrot.lane.b32.xlu0 %v6106, 24
  %v7284 = vpop.permute.xlu0 %7283
  %7285 = vrot.lane.b32.xlu0 %v6110, 24
  %v7286 = vpop.permute.xlu0 %7285
  %7287 = vrot.lane.b32.xlu0 %v6109, 24
  %v7288 = vpop.permute.xlu0 %7287
  %7289 = vrot.lane.b32.xlu0 %v6113, 24
  %v7290 = vpop.permute.xlu0 %7289
  %7291 = vrot.lane.b32.xlu0 %v6112, 24
  %v7292 = vpop.permute.xlu0 %7291
  %7293 = vrot.lane.b32.xlu0 %v6116, 24
  %v7294 = vpop.permute.xlu0 %7293
  %7295 = vrot.lane.b32.xlu0 %v6115, 24
  %v7296 = vpop.permute.xlu0 %7295
  %7297 = vrot.lane.b32.xlu0 %v6119, 24
  %v7298 = vpop.permute.xlu0 %7297
  %7299 = vrot.lane.b32.xlu0 %v6118, 24
  %v7300 = vpop.permute.xlu0 %7299
  %7301 = vrot.lane.b32.xlu0 %v6122, 24
  %v7302 = vpop.permute.xlu0 %7301
  %7303 = vrot.lane.b32.xlu0 %v6121, 24
  %v7304 = vpop.permute.xlu0 %7303
  %7305 = vrot.lane.b32.xlu0 %v6125, 24
  %v7306 = vpop.permute.xlu0 %7305
  %7307 = vrot.lane.b32.xlu0 %v6124, 24
  %v7308 = vpop.permute.xlu0 %7307
  %7309 = vrot.lane.b32.xlu0 %v6128, 24
  %v7310 = vpop.permute.xlu0 %7309
  %7311 = vrot.lane.b32.xlu0 %v6127, 24
  %v7312 = vpop.permute.xlu0 %7311
  %7313 = vrot.lane.b32.xlu0 %v7265, 24
  %v7314 = vpop.permute.xlu0 %7313
  %7315 = vrot.lane.b32.xlu0 %v7264, 24
  %v7316 = vpop.permute.xlu0 %7315
  %7317 = vrot.lane.b32.xlu0 %v6134, 24
  %v7318 = vpop.permute.xlu0 %7317
  %7319 = vrot.lane.b32.xlu0 %v6133, 24
  %v7320 = vpop.permute.xlu0 %7319
  %7321 = vrot.lane.b32.xlu0 %v6137, 24
  %v7322 = vpop.permute.xlu0 %7321
  %7323 = vrot.lane.b32.xlu0 %v6136, 24
  %v7324 = vpop.permute.xlu0 %7323
  %7325 = vrot.lane.b32.xlu0 %v6140, 24
  %v7326 = vpop.permute.xlu0 %7325
  %7327 = vrot.lane.b32.xlu0 %v6139, 24
  %v7328 = vpop.permute.xlu0 %7327
  %7329 = vrot.lane.b32.xlu0 %v6143, 24
  %v7330 = vpop.permute.xlu0 %7329
  %7331 = vrot.lane.b32.xlu0 %v6142, 24
  %v7332 = vpop.permute.xlu0 %7331
  %7333 = vrot.lane.b32.xlu0 %v6146, 24
  %v7334 = vpop.permute.xlu0 %7333
  %7335 = vrot.lane.b32.xlu0 %v6145, 24
  %v7336 = vpop.permute.xlu0 %7335
  %7337 = vrot.lane.b32.xlu0 %v6149, 24
  %v7338 = vpop.permute.xlu0 %7337
  %7339 = vrot.lane.b32.xlu0 %v6148, 24
  %v7340 = vpop.permute.xlu0 %7339
  %7341 = vrot.lane.b32.xlu0 %v6152, 24
  %v7342 = vpop.permute.xlu0 %7341
  %7343 = vrot.lane.b32.xlu0 %v6151, 24
  %v7344 = vpop.permute.xlu0 %7343
  %7345 = vrot.lane.b32.xlu0 %v6155, 24
  %v7346 = vpop.permute.xlu0 %7345
  %7347 = vrot.lane.b32.xlu0 %v6154, 24
  %v7348 = vpop.permute.xlu0 %7347
  %7349 = vrot.lane.b32.xlu0 %v6158, 24
  %v7350 = vpop.permute.xlu0 %7349
  %7351 = vrot.lane.b32.xlu0 %v6157, 24
  %v7352 = vpop.permute.xlu0 %7351
  %7353 = vrot.lane.b32.xlu0 %v6161, 24
  %v7354 = vpop.permute.xlu0 %7353
  %7355 = vrot.lane.b32.xlu0 %v6160, 24
  %v7356 = vpop.permute.xlu0 %7355
  %7357 = vrot.lane.b32.xlu0 %v6164, 24
  %v7358 = vpop.permute.xlu0 %7357
  %7359 = vrot.lane.b32.xlu0 %v6163, 24
  %v7360 = vpop.permute.xlu0 %7359
  %7361 = vrot.lane.b32.xlu0 %v7268, 24
  %v7362 = vpop.permute.xlu0 %7361
  %7363 = vrot.lane.b32.xlu0 %v7267, 24
  %v7364 = vpop.permute.xlu0 %7363
  %v7413 = vcombine.low %v4792, %v4791
  %v7414 = vcombine.low %v4793, %v4801
  %v7416 = vunpack.c.l.s4 1983009808
  %v7417 = vunpack.c.0.s8 %v7416
  %v7418 = vlaneseq
  %v7419 = vshrl.u32 %v7418, 7
  %v7420 = vsub.s32 %v7417, %v7419
  %v7421 = vrot.slane %v7413, %v7420
  %v7423 = vunpack.c.l.s4 1983009808
  %v7424 = vunpack.c.0.s8 %v7423
  %v7425 = vlaneseq
  %v7426 = vshrl.u32 %v7425, 7
  %v7427 = vsub.s32 %v7424, %v7426
  %v7428 = vrot.slane %v7414, %v7427
  %v7429 = vcombine.low %v7421, %v7428
  %v7430 = vcombine.low %v4809, %v4808
  %v7432 = vunpack.c.l.s4 1983009808
  %v7433 = vunpack.c.0.s8 %v7432
  %v7434 = vlaneseq
  %v7435 = vshrl.u32 %v7434, 7
  %v7436 = vsub.s32 %v7433, %v7435
  %v7437 = vrot.slane %v7430, %v7436
  %v7438 = vcombine.low %v5201, %v5209
  %v7439 = vcombine.low %v5217, %v5216
  %v7441 = vunpack.c.l.s4 1983009808
  %v7442 = vunpack.c.0.s8 %v7441
  %v7443 = vlaneseq
  %v7444 = vshrl.u32 %v7443, 7
  %v7445 = vsub.s32 %v7442, %v7444
  %v7446 = vrot.slane %v7438, %v7445
  %v7448 = vunpack.c.l.s4 1983009808
  %v7449 = vunpack.c.0.s8 %v7448
  %v7450 = vlaneseq
  %v7451 = vshrl.u32 %v7450, 7
  %v7452 = vsub.s32 %v7449, %v7451
  %v7453 = vrot.slane %v7439, %v7452
  %v7454 = vcombine.low %v7446, %v7453
  %v7455 = vcombine.low %v5218, %v5226
  %v7457 = vunpack.c.l.s4 1983009808
  %v7458 = vunpack.c.0.s8 %v7457
  %v7459 = vlaneseq
  %v7460 = vshrl.u32 %v7459, 7
  %v7461 = vsub.s32 %v7458, %v7460
  %v7462 = vrot.slane %v7455, %v7461
  %7463 = vrot.lane.b32.xlu0 %v6350, 30
  %v7464 = vpop.permute.xlu0 %7463
  %7465 = vrot.lane.b32.xlu0 %v6358, 30
  %v7466 = vpop.permute.xlu0 %7465
  %7467 = vrot.lane.b32.xlu0 %v6375, 30
  %v7468 = vpop.permute.xlu0 %7467
  %7469 = vrot.lane.b32.xlu0 %v6383, 30
  %v7470 = vpop.permute.xlu0 %7469
  %7471 = vrot.lane.b32.xlu0 %v6400, 30
  %v7472 = vpop.permute.xlu0 %7471
  %7473 = vrot.lane.b32.xlu0 %v6408, 30
  %v7474 = vpop.permute.xlu0 %7473
  %7475 = vrot.lane.b32.xlu0 %v6425, 30
  %v7476 = vpop.permute.xlu0 %7475
  %7477 = vrot.lane.b32.xlu0 %v6433, 30
  %v7478 = vpop.permute.xlu0 %7477
  %7479 = vrot.lane.b32.xlu0 %v6450, 30
  %v7480 = vpop.permute.xlu0 %7479
  %7481 = vrot.lane.b32.xlu0 %v6458, 30
  %v7482 = vpop.permute.xlu0 %7481
  %7483 = vrot.lane.b32.xlu0 %v6475, 30
  %v7484 = vpop.permute.xlu0 %7483
  %7485 = vrot.lane.b32.xlu0 %v6483, 30
  %v7486 = vpop.permute.xlu0 %7485
  %7487 = vrot.lane.b32.xlu0 %v6500, 30
  %v7488 = vpop.permute.xlu0 %7487
  %7489 = vrot.lane.b32.xlu0 %v6508, 30
  %v7490 = vpop.permute.xlu0 %7489
  %7491 = vrot.lane.b32.xlu0 %v6525, 30
  %v7492 = vpop.permute.xlu0 %7491
  %7493 = vrot.lane.b32.xlu0 %v6533, 30
  %v7494 = vpop.permute.xlu0 %7493
  %7495 = vrot.lane.b32.xlu0 %v6550, 30
  %v7496 = vpop.permute.xlu0 %7495
  %7497 = vrot.lane.b32.xlu0 %v6558, 30
  %v7498 = vpop.permute.xlu0 %7497
  %7499 = vrot.lane.b32.xlu0 %v6575, 30
  %v7500 = vpop.permute.xlu0 %7499
  %7501 = vrot.lane.b32.xlu0 %v6583, 30
  %v7502 = vpop.permute.xlu0 %7501
  %7503 = vrot.lane.b32.xlu0 %v6600, 30
  %v7504 = vpop.permute.xlu0 %7503
  %7505 = vrot.lane.b32.xlu0 %v6608, 30
  %v7506 = vpop.permute.xlu0 %7505
  %7507 = vrot.lane.b32.xlu0 %v7429, 30
  %v7508 = vpop.permute.xlu0 %7507
  %7509 = vrot.lane.b32.xlu0 %v7437, 30
  %v7510 = vpop.permute.xlu0 %7509
  %7511 = vrot.lane.b32.xlu0 %v6650, 30
  %v7512 = vpop.permute.xlu0 %7511
  %7513 = vrot.lane.b32.xlu0 %v6658, 30
  %v7514 = vpop.permute.xlu0 %7513
  %7515 = vrot.lane.b32.xlu0 %v6675, 30
  %v7516 = vpop.permute.xlu0 %7515
  %7517 = vrot.lane.b32.xlu0 %v6683, 30
  %v7518 = vpop.permute.xlu0 %7517
  %7519 = vrot.lane.b32.xlu0 %v6700, 30
  %v7520 = vpop.permute.xlu0 %7519
  %7521 = vrot.lane.b32.xlu0 %v6708, 30
  %v7522 = vpop.permute.xlu0 %7521
  %7523 = vrot.lane.b32.xlu0 %v6725, 30
  %v7524 = vpop.permute.xlu0 %7523
  %7525 = vrot.lane.b32.xlu0 %v6733, 30
  %v7526 = vpop.permute.xlu0 %7525
  %7527 = vrot.lane.b32.xlu0 %v6750, 30
  %v7528 = vpop.permute.xlu0 %7527
  %7529 = vrot.lane.b32.xlu0 %v6758, 30
  %v7530 = vpop.permute.xlu0 %7529
  %7531 = vrot.lane.b32.xlu0 %v6775, 30
  %v7532 = vpop.permute.xlu0 %7531
  %7533 = vrot.lane.b32.xlu0 %v6783, 30
  %v7534 = vpop.permute.xlu0 %7533
  %7535 = vrot.lane.b32.xlu0 %v6800, 30
  %v7536 = vpop.permute.xlu0 %7535
  %7537 = vrot.lane.b32.xlu0 %v6808, 30
  %v7538 = vpop.permute.xlu0 %7537
  %7539 = vrot.lane.b32.xlu0 %v6825, 30
  %v7540 = vpop.permute.xlu0 %7539
  %7541 = vrot.lane.b32.xlu0 %v6833, 30
  %v7542 = vpop.permute.xlu0 %7541
  %7543 = vrot.lane.b32.xlu0 %v6850, 30
  %v7544 = vpop.permute.xlu0 %7543
  %7545 = vrot.lane.b32.xlu0 %v6858, 30
  %v7546 = vpop.permute.xlu0 %7545
  %7547 = vrot.lane.b32.xlu0 %v6875, 30
  %v7548 = vpop.permute.xlu0 %7547
  %7549 = vrot.lane.b32.xlu0 %v6883, 30
  %v7550 = vpop.permute.xlu0 %7549
  %7551 = vrot.lane.b32.xlu0 %v6900, 30
  %v7552 = vpop.permute.xlu0 %7551
  %7553 = vrot.lane.b32.xlu0 %v6908, 30
  %v7554 = vpop.permute.xlu0 %7553
  %7555 = vrot.lane.b32.xlu0 %v7454, 30
  %v7556 = vpop.permute.xlu0 %7555
  %7557 = vrot.lane.b32.xlu0 %v7462, 30
  %v7558 = vpop.permute.xlu0 %7557
  %v7607 = vcombine.low %v4810, %v4818
  %v7608 = vcombine.low %v4826, %v4825
  %v7610 = vunpack.c.l.s4 1983009808
  %v7611 = vunpack.c.0.s8 %v7610
  %v7612 = vlaneseq
  %v7613 = vshrl.u32 %v7612, 7
  %v7614 = vsub.s32 %v7611, %v7613
  %v7615 = vrot.slane %v7607, %v7614
  %v7617 = vunpack.c.l.s4 1983009808
  %v7618 = vunpack.c.0.s8 %v7617
  %v7619 = vlaneseq
  %v7620 = vshrl.u32 %v7619, 7
  %v7621 = vsub.s32 %v7618, %v7620
  %v7622 = vrot.slane %v7608, %v7621
  %v7623 = vcombine.low %v7615, %v7622
  %v7624 = vcombine.low %v4827, %v4835
  %v7626 = vunpack.c.l.s4 1983009808
  %v7627 = vunpack.c.0.s8 %v7626
  %v7628 = vlaneseq
  %v7629 = vshrl.u32 %v7628, 7
  %v7630 = vsub.s32 %v7627, %v7629
  %v7631 = vrot.slane %v7624, %v7630
  %v7632 = vcombine.low %v5234, %v5233
  %v7633 = vcombine.low %v5235, %v5243
  %v7635 = vunpack.c.l.s4 1983009808
  %v7636 = vunpack.c.0.s8 %v7635
  %v7637 = vlaneseq
  %v7638 = vshrl.u32 %v7637, 7
  %v7639 = vsub.s32 %v7636, %v7638
  %v7640 = vrot.slane %v7632, %v7639
  %v7642 = vunpack.c.l.s4 1983009808
  %v7643 = vunpack.c.0.s8 %v7642
  %v7644 = vlaneseq
  %v7645 = vshrl.u32 %v7644, 7
  %v7646 = vsub.s32 %v7643, %v7645
  %v7647 = vrot.slane %v7633, %v7646
  %v7648 = vcombine.low %v7640, %v7647
  %v7649 = vcombine.low %v5251, %v5250
  %v7651 = vunpack.c.l.s4 1983009808
  %v7652 = vunpack.c.0.s8 %v7651
  %v7653 = vlaneseq
  %v7654 = vshrl.u32 %v7653, 7
  %v7655 = vsub.s32 %v7652, %v7654
  %v7656 = vrot.slane %v7649, %v7655
  %7657 = vrot.lane.b32.xlu0 %v5319, 36
  %v7658 = vpop.permute.xlu0 %7657
  %7659 = vrot.lane.b32.xlu0 %v5327, 36
  %v7660 = vpop.permute.xlu0 %7659
  %7661 = vrot.lane.b32.xlu0 %v5344, 36
  %v7662 = vpop.permute.xlu0 %7661
  %7663 = vrot.lane.b32.xlu0 %v5352, 36
  %v7664 = vpop.permute.xlu0 %7663
  %7665 = vrot.lane.b32.xlu0 %v5369, 36
  %v7666 = vpop.permute.xlu0 %7665
  %7667 = vrot.lane.b32.xlu0 %v5377, 36
  %v7668 = vpop.permute.xlu0 %7667
  %7669 = vrot.lane.b32.xlu0 %v5394, 36
  %v7670 = vpop.permute.xlu0 %7669
  %7671 = vrot.lane.b32.xlu0 %v5402, 36
  %v7672 = vpop.permute.xlu0 %7671
  %7673 = vrot.lane.b32.xlu0 %v5419, 36
  %v7674 = vpop.permute.xlu0 %7673
  %7675 = vrot.lane.b32.xlu0 %v5427, 36
  %v7676 = vpop.permute.xlu0 %7675
  %7677 = vrot.lane.b32.xlu0 %v5444, 36
  %v7678 = vpop.permute.xlu0 %7677
  %7679 = vrot.lane.b32.xlu0 %v5452, 36
  %v7680 = vpop.permute.xlu0 %7679
  %7681 = vrot.lane.b32.xlu0 %v5469, 36
  %v7682 = vpop.permute.xlu0 %7681
  %7683 = vrot.lane.b32.xlu0 %v5477, 36
  %v7684 = vpop.permute.xlu0 %7683
  %7685 = vrot.lane.b32.xlu0 %v5494, 36
  %v7686 = vpop.permute.xlu0 %7685
  %7687 = vrot.lane.b32.xlu0 %v5502, 36
  %v7688 = vpop.permute.xlu0 %7687
  %7689 = vrot.lane.b32.xlu0 %v5519, 36
  %v7690 = vpop.permute.xlu0 %7689
  %7691 = vrot.lane.b32.xlu0 %v5527, 36
  %v7692 = vpop.permute.xlu0 %7691
  %7693 = vrot.lane.b32.xlu0 %v5544, 36
  %v7694 = vpop.permute.xlu0 %7693
  %7695 = vrot.lane.b32.xlu0 %v5552, 36
  %v7696 = vpop.permute.xlu0 %7695
  %7697 = vrot.lane.b32.xlu0 %v7069, 36
  %v7698 = vpop.permute.xlu0 %7697
  %7699 = vrot.lane.b32.xlu0 %v7077, 36
  %v7700 = vpop.permute.xlu0 %7699
  %7701 = vrot.lane.b32.xlu0 %v7623, 36
  %v7702 = vpop.permute.xlu0 %7701
  %7703 = vrot.lane.b32.xlu0 %v7631, 36
  %v7704 = vpop.permute.xlu0 %7703
  %7705 = vrot.lane.b32.xlu0 %v5619, 36
  %v7706 = vpop.permute.xlu0 %7705
  %7707 = vrot.lane.b32.xlu0 %v5627, 36
  %v7708 = vpop.permute.xlu0 %7707
  %7709 = vrot.lane.b32.xlu0 %v5644, 36
  %v7710 = vpop.permute.xlu0 %7709
  %7711 = vrot.lane.b32.xlu0 %v5652, 36
  %v7712 = vpop.permute.xlu0 %7711
  %7713 = vrot.lane.b32.xlu0 %v5669, 36
  %v7714 = vpop.permute.xlu0 %7713
  %7715 = vrot.lane.b32.xlu0 %v5677, 36
  %v7716 = vpop.permute.xlu0 %7715
  %7717 = vrot.lane.b32.xlu0 %v5694, 36
  %v7718 = vpop.permute.xlu0 %7717
  %7719 = vrot.lane.b32.xlu0 %v5702, 36
  %v7720 = vpop.permute.xlu0 %7719
  %7721 = vrot.lane.b32.xlu0 %v5719, 36
  %v7722 = vpop.permute.xlu0 %7721
  %7723 = vrot.lane.b32.xlu0 %v5727, 36
  %v7724 = vpop.permute.xlu0 %7723
  %7725 = vrot.lane.b32.xlu0 %v5744, 36
  %v7726 = vpop.permute.xlu0 %7725
  %7727 = vrot.lane.b32.xlu0 %v5752, 36
  %v7728 = vpop.permute.xlu0 %7727
  %7729 = vrot.lane.b32.xlu0 %v5769, 36
  %v7730 = vpop.permute.xlu0 %7729
  %7731 = vrot.lane.b32.xlu0 %v5777, 36
  %v7732 = vpop.permute.xlu0 %7731
  %7733 = vrot.lane.b32.xlu0 %v5794, 36
  %v7734 = vpop.permute.xlu0 %7733
  %7735 = vrot.lane.b32.xlu0 %v5802, 36
  %v7736 = vpop.permute.xlu0 %7735
  %7737 = vrot.lane.b32.xlu0 %v5819, 36
  %v7738 = vpop.permute.xlu0 %7737
  %7739 = vrot.lane.b32.xlu0 %v5827, 36
  %v7740 = vpop.permute.xlu0 %7739
  %7741 = vrot.lane.b32.xlu0 %v5844, 36
  %v7742 = vpop.permute.xlu0 %7741
  %7743 = vrot.lane.b32.xlu0 %v5852, 36
  %v7744 = vpop.permute.xlu0 %7743
  %7745 = vrot.lane.b32.xlu0 %v7094, 36
  %v7746 = vpop.permute.xlu0 %7745
  %7747 = vrot.lane.b32.xlu0 %v7102, 36
  %v7748 = vpop.permute.xlu0 %7747
  %7749 = vrot.lane.b32.xlu0 %v7648, 36
  %v7750 = vpop.permute.xlu0 %7749
  %7751 = vrot.lane.b32.xlu0 %v7656, 36
  %v7752 = vpop.permute.xlu0 %7751
  %v7802 = vunpack.c.l.s4 1983009808
  %v7803 = vunpack.c.0.s8 %v7802
  %v7804 = vlaneseq
  %v7805 = vshrl.u32 %v7804, 7
  %v7806 = vsub.s32 %v7803, %v7805
  %v7807 = vrot.slane %v4843, %v7806
  %v7808 = vcombine.low %v7631, %v7807
  %v7810 = vunpack.c.l.s4 1983009808
  %v7811 = vunpack.c.0.s8 %v7810
  %v7812 = vlaneseq
  %v7813 = vshrl.u32 %v7812, 7
  %v7814 = vsub.s32 %v7811, %v7813
  %v7815 = vrot.slane %v5252, %v7814
  %v7816 = vcombine.low %v7656, %v7815
  %v7817 = vrot.slane %v7623, 1
  %v7818 = vrot.slane %v7808, 1
  %v7819 = vsel %vm134, %v7817, %v7818
  %v7820 = vrot.slane %v7648, 1
  %v7821 = vrot.slane %v7816, 1
  %v7822 = vsel %vm134, %v7820, %v7821
  %7823 = vrot.lane.b32.xlu0 %v6101, 42
  %v7824 = vpop.permute.xlu0 %7823
  %7825 = vrot.lane.b32.xlu0 %v6100, 42
  %v7826 = vpop.permute.xlu0 %7825
  %7827 = vrot.lane.b32.xlu0 %v6104, 42
  %v7828 = vpop.permute.xlu0 %7827
  %7829 = vrot.lane.b32.xlu0 %v6103, 42
  %v7830 = vpop.permute.xlu0 %7829
  %7831 = vrot.lane.b32.xlu0 %v6107, 42
  %v7832 = vpop.permute.xlu0 %7831
  %7833 = vrot.lane.b32.xlu0 %v6106, 42
  %v7834 = vpop.permute.xlu0 %7833
  %7835 = vrot.lane.b32.xlu0 %v6110, 42
  %v7836 = vpop.permute.xlu0 %7835
  %7837 = vrot.lane.b32.xlu0 %v6109, 42
  %v7838 = vpop.permute.xlu0 %7837
  %7839 = vrot.lane.b32.xlu0 %v6113, 42
  %v7840 = vpop.permute.xlu0 %7839
  %7841 = vrot.lane.b32.xlu0 %v6112, 42
  %v7842 = vpop.permute.xlu0 %7841
  %7843 = vrot.lane.b32.xlu0 %v6116, 42
  %v7844 = vpop.permute.xlu0 %7843
  %7845 = vrot.lane.b32.xlu0 %v6115, 42
  %v7846 = vpop.permute.xlu0 %7845
  %7847 = vrot.lane.b32.xlu0 %v6119, 42
  %v7848 = vpop.permute.xlu0 %7847
  %7849 = vrot.lane.b32.xlu0 %v6118, 42
  %v7850 = vpop.permute.xlu0 %7849
  %7851 = vrot.lane.b32.xlu0 %v6122, 42
  %v7852 = vpop.permute.xlu0 %7851
  %7853 = vrot.lane.b32.xlu0 %v6121, 42
  %v7854 = vpop.permute.xlu0 %7853
  %7855 = vrot.lane.b32.xlu0 %v6125, 42
  %v7856 = vpop.permute.xlu0 %7855
  %7857 = vrot.lane.b32.xlu0 %v6124, 42
  %v7858 = vpop.permute.xlu0 %7857
  %7859 = vrot.lane.b32.xlu0 %v6128, 42
  %v7860 = vpop.permute.xlu0 %7859
  %7861 = vrot.lane.b32.xlu0 %v6127, 42
  %v7862 = vpop.permute.xlu0 %7861
  %7863 = vrot.lane.b32.xlu0 %v7265, 42
  %v7864 = vpop.permute.xlu0 %7863
  %7865 = vrot.lane.b32.xlu0 %v7264, 42
  %v7866 = vpop.permute.xlu0 %7865
  %7867 = vrot.lane.b32.xlu0 %v7819, 42
  %v7868 = vpop.permute.xlu0 %7867
  %7869 = vrot.lane.b32.xlu0 %v7818, 42
  %v7870 = vpop.permute.xlu0 %7869
  %7871 = vrot.lane.b32.xlu0 %v6137, 42
  %v7872 = vpop.permute.xlu0 %7871
  %7873 = vrot.lane.b32.xlu0 %v6136, 42
  %v7874 = vpop.permute.xlu0 %7873
  %7875 = vrot.lane.b32.xlu0 %v6140, 42
  %v7876 = vpop.permute.xlu0 %7875
  %7877 = vrot.lane.b32.xlu0 %v6139, 42
  %v7878 = vpop.permute.xlu0 %7877
  %7879 = vrot.lane.b32.xlu0 %v6143, 42
  %v7880 = vpop.permute.xlu0 %7879
  %7881 = vrot.lane.b32.xlu0 %v6142, 42
  %v7882 = vpop.permute.xlu0 %7881
  %7883 = vrot.lane.b32.xlu0 %v6146, 42
  %v7884 = vpop.permute.xlu0 %7883
  %7885 = vrot.lane.b32.xlu0 %v6145, 42
  %v7886 = vpop.permute.xlu0 %7885
  %7887 = vrot.lane.b32.xlu0 %v6149, 42
  %v7888 = vpop.permute.xlu0 %7887
  %7889 = vrot.lane.b32.xlu0 %v6148, 42
  %v7890 = vpop.permute.xlu0 %7889
  %7891 = vrot.lane.b32.xlu0 %v6152, 42
  %v7892 = vpop.permute.xlu0 %7891
  %7893 = vrot.lane.b32.xlu0 %v6151, 42
  %v7894 = vpop.permute.xlu0 %7893
  %7895 = vrot.lane.b32.xlu0 %v6155, 42
  %v7896 = vpop.permute.xlu0 %7895
  %7897 = vrot.lane.b32.xlu0 %v6154, 42
  %v7898 = vpop.permute.xlu0 %7897
  %7899 = vrot.lane.b32.xlu0 %v6158, 42
  %v7900 = vpop.permute.xlu0 %7899
  %7901 = vrot.lane.b32.xlu0 %v6157, 42
  %v7902 = vpop.permute.xlu0 %7901
  %7903 = vrot.lane.b32.xlu0 %v6161, 42
  %v7904 = vpop.permute.xlu0 %7903
  %7905 = vrot.lane.b32.xlu0 %v6160, 42
  %v7906 = vpop.permute.xlu0 %7905
  %7907 = vrot.lane.b32.xlu0 %v6164, 42
  %v7908 = vpop.permute.xlu0 %7907
  %7909 = vrot.lane.b32.xlu0 %v6163, 42
  %v7910 = vpop.permute.xlu0 %7909
  %7911 = vrot.lane.b32.xlu0 %v7268, 42
  %v7912 = vpop.permute.xlu0 %7911
  %7913 = vrot.lane.b32.xlu0 %v7267, 42
  %v7914 = vpop.permute.xlu0 %7913
  %7915 = vrot.lane.b32.xlu0 %v7822, 42
  %v7916 = vpop.permute.xlu0 %7915
  %7917 = vrot.lane.b32.xlu0 %v7821, 42
  %v7918 = vpop.permute.xlu0 %7917
  %v7967 = vcombine.low %v4818, %v4826
  %v7968 = vcombine.low %v4825, %v4827
  %v7970 = vunpack.c.l.s4 1983009808
  %v7971 = vunpack.c.0.s8 %v7970
  %v7972 = vlaneseq
  %v7973 = vshrl.u32 %v7972, 7
  %v7974 = vsub.s32 %v7971, %v7973
  %v7975 = vrot.slane %v7967, %v7974
  %v7977 = vunpack.c.l.s4 1983009808
  %v7978 = vunpack.c.0.s8 %v7977
  %v7979 = vlaneseq
  %v7980 = vshrl.u32 %v7979, 7
  %v7981 = vsub.s32 %v7978, %v7980
  %v7982 = vrot.slane %v7968, %v7981
  %v7983 = vcombine.low %v7975, %v7982
  %v7984 = vcombine.low %v4835, %v4843
  %v7986 = vunpack.c.l.s4 1983009808
  %v7987 = vunpack.c.0.s8 %v7986
  %v7988 = vlaneseq
  %v7989 = vshrl.u32 %v7988, 7
  %v7990 = vsub.s32 %v7987, %v7989
  %v7991 = vrot.slane %v7984, %v7990
  %v7992 = vcombine.low %v5233, %v5235
  %v7993 = vcombine.low %v5243, %v5251
  %v7995 = vunpack.c.l.s4 1983009808
  %v7996 = vunpack.c.0.s8 %v7995
  %v7997 = vlaneseq
  %v7998 = vshrl.u32 %v7997, 7
  %v7999 = vsub.s32 %v7996, %v7998
  %v8000 = vrot.slane %v7992, %v7999
  %v8002 = vunpack.c.l.s4 1983009808
  %v8003 = vunpack.c.0.s8 %v8002
  %v8004 = vlaneseq
  %v8005 = vshrl.u32 %v8004, 7
  %v8006 = vsub.s32 %v8003, %v8005
  %v8007 = vrot.slane %v7993, %v8006
  %v8008 = vcombine.low %v8000, %v8007
  %v8009 = vcombine.low %v5250, %v5252
  %v8011 = vunpack.c.l.s4 1983009808
  %v8012 = vunpack.c.0.s8 %v8011
  %v8013 = vlaneseq
  %v8014 = vshrl.u32 %v8013, 7
  %v8015 = vsub.s32 %v8012, %v8014
  %v8016 = vrot.slane %v8009, %v8015
  %8017 = vrot.lane.b32.xlu0 %v6375, 48
  %v8018 = vpop.permute.xlu0 %8017
  %8019 = vrot.lane.b32.xlu0 %v6383, 48
  %v8020 = vpop.permute.xlu0 %8019
  %8021 = vrot.lane.b32.xlu0 %v6400, 48
  %v8022 = vpop.permute.xlu0 %8021
  %8023 = vrot.lane.b32.xlu0 %v6408, 48
  %v8024 = vpop.permute.xlu0 %8023
  %8025 = vrot.lane.b32.xlu0 %v6425, 48
  %v8026 = vpop.permute.xlu0 %8025
  %8027 = vrot.lane.b32.xlu0 %v6433, 48
  %v8028 = vpop.permute.xlu0 %8027
  %8029 = vrot.lane.b32.xlu0 %v6450, 48
  %v8030 = vpop.permute.xlu0 %8029
  %8031 = vrot.lane.b32.xlu0 %v6458, 48
  %v8032 = vpop.permute.xlu0 %8031
  %8033 = vrot.lane.b32.xlu0 %v6475, 48
  %v8034 = vpop.permute.xlu0 %8033
  %8035 = vrot.lane.b32.xlu0 %v6483, 48
  %v8036 = vpop.permute.xlu0 %8035
  %8037 = vrot.lane.b32.xlu0 %v6500, 48
  %v8038 = vpop.permute.xlu0 %8037
  %8039 = vrot.lane.b32.xlu0 %v6508, 48
  %v8040 = vpop.permute.xlu0 %8039
  %8041 = vrot.lane.b32.xlu0 %v6525, 48
  %v8042 = vpop.permute.xlu0 %8041
  %8043 = vrot.lane.b32.xlu0 %v6533, 48
  %v8044 = vpop.permute.xlu0 %8043
  %8045 = vrot.lane.b32.xlu0 %v6550, 48
  %v8046 = vpop.permute.xlu0 %8045
  %8047 = vrot.lane.b32.xlu0 %v6558, 48
  %v8048 = vpop.permute.xlu0 %8047
  %8049 = vrot.lane.b32.xlu0 %v6575, 48
  %v8050 = vpop.permute.xlu0 %8049
  %8051 = vrot.lane.b32.xlu0 %v6583, 48
  %v8052 = vpop.permute.xlu0 %8051
  %8053 = vrot.lane.b32.xlu0 %v6600, 48
  %v8054 = vpop.permute.xlu0 %8053
  %8055 = vrot.lane.b32.xlu0 %v6608, 48
  %v8056 = vpop.permute.xlu0 %8055
  %8057 = vrot.lane.b32.xlu0 %v7429, 48
  %v8058 = vpop.permute.xlu0 %8057
  %8059 = vrot.lane.b32.xlu0 %v7437, 48
  %v8060 = vpop.permute.xlu0 %8059
  %8061 = vrot.lane.b32.xlu0 %v7983, 48
  %v8062 = vpop.permute.xlu0 %8061
  %8063 = vrot.lane.b32.xlu0 %v7991, 48
  %v8064 = vpop.permute.xlu0 %8063
  %8065 = vrot.lane.b32.xlu0 %v6675, 48
  %v8066 = vpop.permute.xlu0 %8065
  %8067 = vrot.lane.b32.xlu0 %v6683, 48
  %v8068 = vpop.permute.xlu0 %8067
  %8069 = vrot.lane.b32.xlu0 %v6700, 48
  %v8070 = vpop.permute.xlu0 %8069
  %8071 = vrot.lane.b32.xlu0 %v6708, 48
  %v8072 = vpop.permute.xlu0 %8071
  %8073 = vrot.lane.b32.xlu0 %v6725, 48
  %v8074 = vpop.permute.xlu0 %8073
  %8075 = vrot.lane.b32.xlu0 %v6733, 48
  %v8076 = vpop.permute.xlu0 %8075
  %8077 = vrot.lane.b32.xlu0 %v6750, 48
  %v8078 = vpop.permute.xlu0 %8077
  %8079 = vrot.lane.b32.xlu0 %v6758, 48
  %v8080 = vpop.permute.xlu0 %8079
  %8081 = vrot.lane.b32.xlu0 %v6775, 48
  %v8082 = vpop.permute.xlu0 %8081
  %8083 = vrot.lane.b32.xlu0 %v6783, 48
  %v8084 = vpop.permute.xlu0 %8083
  %8085 = vrot.lane.b32.xlu0 %v6800, 48
  %v8086 = vpop.permute.xlu0 %8085
  %8087 = vrot.lane.b32.xlu0 %v6808, 48
  %v8088 = vpop.permute.xlu0 %8087
  %8089 = vrot.lane.b32.xlu0 %v6825, 48
  %v8090 = vpop.permute.xlu0 %8089
  %8091 = vrot.lane.b32.xlu0 %v6833, 48
  %v8092 = vpop.permute.xlu0 %8091
  %8093 = vrot.lane.b32.xlu0 %v6850, 48
  %v8094 = vpop.permute.xlu0 %8093
  %8095 = vrot.lane.b32.xlu0 %v6858, 48
  %v8096 = vpop.permute.xlu0 %8095
  %8097 = vrot.lane.b32.xlu0 %v6875, 48
  %v8098 = vpop.permute.xlu0 %8097
  %8099 = vrot.lane.b32.xlu0 %v6883, 48
  %v8100 = vpop.permute.xlu0 %8099
  %8101 = vrot.lane.b32.xlu0 %v6900, 48
  %v8102 = vpop.permute.xlu0 %8101
  %8103 = vrot.lane.b32.xlu0 %v6908, 48
  %v8104 = vpop.permute.xlu0 %8103
  %8105 = vrot.lane.b32.xlu0 %v7454, 48
  %v8106 = vpop.permute.xlu0 %8105
  %8107 = vrot.lane.b32.xlu0 %v7462, 48
  %v8108 = vpop.permute.xlu0 %8107
  %8109 = vrot.lane.b32.xlu0 %v8008, 48
  %v8110 = vpop.permute.xlu0 %8109
  %8111 = vrot.lane.b32.xlu0 %v8016, 48
  %v8112 = vpop.permute.xlu0 %8111
  %v8161 = vsel %vm1737, %v5269, %v6166
  %v8162 = vsel %vm1737, %v5277, %v6168
  %v8163 = vsel %vm1737, %v5294, %v6170
  %v8164 = vsel %vm1737, %v5302, %v6172
  %v8165 = vsel %vm1737, %v5319, %v6174
  %v8166 = vsel %vm1737, %v5327, %v6176
  %v8167 = vsel %vm1737, %v5344, %v6178
  %v8168 = vsel %vm1737, %v5352, %v6180
  %v8169 = vsel %vm1737, %v5369, %v6182
  %v8170 = vsel %vm1737, %v5377, %v6184
  %v8171 = vsel %vm1737, %v5394, %v6186
  %v8172 = vsel %vm1737, %v5402, %v6188
  %v8173 = vsel %vm1737, %v5419, %v6190
  %v8174 = vsel %vm1737, %v5427, %v6192
  %v8175 = vsel %vm1737, %v5444, %v6194
  %v8176 = vsel %vm1737, %v5452, %v6196
  %v8177 = vsel %vm1737, %v5469, %v6198
  %v8178 = vsel %vm1737, %v5477, %v6200
  %v8179 = vsel %vm1737, %v5494, %v6202
  %v8180 = vsel %vm1737, %v5502, %v6204
  %v8181 = vsel %vm1737, %v5519, %v6206
  %v8182 = vsel %vm1737, %v5527, %v6208
  %v8183 = vsel %vm1737, %v5544, %v6210
  %v8184 = vsel %vm1737, %v5552, %v6212
  %v8185 = vsel %vm1737, %v5569, %v6214
  %v8186 = vsel %vm1737, %v5577, %v6216
  %v8187 = vsel %vm1737, %v5594, %v6218
  %v8188 = vsel %vm1737, %v5602, %v6220
  %v8189 = vsel %vm1737, %v5619, %v6222
  %v8190 = vsel %vm1737, %v5627, %v6224
  %v8191 = vsel %vm1737, %v5644, %v6226
  %v8192 = vsel %vm1737, %v5652, %v6228
  %v8193 = vsel %vm1737, %v5669, %v6230
  %v8194 = vsel %vm1737, %v5677, %v6232
  %v8195 = vsel %vm1737, %v5694, %v6234
  %v8196 = vsel %vm1737, %v5702, %v6236
  %v8197 = vsel %vm1737, %v5719, %v6238
  %v8198 = vsel %vm1737, %v5727, %v6240
  %v8199 = vsel %vm1737, %v5744, %v6242
  %v8200 = vsel %vm1737, %v5752, %v6244
  %v8201 = vsel %vm1737, %v5769, %v6246
  %v8202 = vsel %vm1737, %v5777, %v6248
  %v8203 = vsel %vm1737, %v5794, %v6250
  %v8204 = vsel %vm1737, %v5802, %v6252
  %v8205 = vsel %vm1737, %v5819, %v6254
  %v8206 = vsel %vm1737, %v5827, %v6256
  %v8207 = vsel %vm1737, %v5844, %v6258
  %v8208 = vsel %vm1737, %v5852, %v6260
  %v8209 = vsel %vm1851, %v8161, %v6910
  %v8210 = vsel %vm1851, %v8162, %v6912
  %v8211 = vsel %vm1851, %v8163, %v6914
  %v8212 = vsel %vm1851, %v8164, %v6916
  %v8213 = vsel %vm1851, %v8165, %v6918
  %v8214 = vsel %vm1851, %v8166, %v6920
  %v8215 = vsel %vm1851, %v8167, %v6922
  %v8216 = vsel %vm1851, %v8168, %v6924
  %v8217 = vsel %vm1851, %v8169, %v6926
  %v8218 = vsel %vm1851, %v8170, %v6928
  %v8219 = vsel %vm1851, %v8171, %v6930
  %v8220 = vsel %vm1851, %v8172, %v6932
  %v8221 = vsel %vm1851, %v8173, %v6934
  %v8222 = vsel %vm1851, %v8174, %v6936
  %v8223 = vsel %vm1851, %v8175, %v6938
  %v8224 = vsel %vm1851, %v8176, %v6940
  %v8225 = vsel %vm1851, %v8177, %v6942
  %v8226 = vsel %vm1851, %v8178, %v6944
  %v8227 = vsel %vm1851, %v8179, %v6946
  %v8228 = vsel %vm1851, %v8180, %v6948
  %v8229 = vsel %vm1851, %v8181, %v6950
  %v8230 = vsel %vm1851, %v8182, %v6952
  %v8231 = vsel %vm1851, %v8183, %v6954
  %v8232 = vsel %vm1851, %v8184, %v6956
  %v8233 = vsel %vm1851, %v8185, %v6958
  %v8234 = vsel %vm1851, %v8186, %v6960
  %v8235 = vsel %vm1851, %v8187, %v6962
  %v8236 = vsel %vm1851, %v8188, %v6964
  %v8237 = vsel %vm1851, %v8189, %v6966
  %v8238 = vsel %vm1851, %v8190, %v6968
  %v8239 = vsel %vm1851, %v8191, %v6970
  %v8240 = vsel %vm1851, %v8192, %v6972
  %v8241 = vsel %vm1851, %v8193, %v6974
  %v8242 = vsel %vm1851, %v8194, %v6976
  %v8243 = vsel %vm1851, %v8195, %v6978
  %v8244 = vsel %vm1851, %v8196, %v6980
  %v8245 = vsel %vm1851, %v8197, %v6982
  %v8246 = vsel %vm1851, %v8198, %v6984
  %v8247 = vsel %vm1851, %v8199, %v6986
  %v8248 = vsel %vm1851, %v8200, %v6988
  %v8249 = vsel %vm1851, %v8201, %v6990
  %v8250 = vsel %vm1851, %v8202, %v6992
  %v8251 = vsel %vm1851, %v8203, %v6994
  %v8252 = vsel %vm1851, %v8204, %v6996
  %v8253 = vsel %vm1851, %v8205, %v6998
  %v8254 = vsel %vm1851, %v8206, %v7000
  %v8255 = vsel %vm1851, %v8207, %v7002
  %v8256 = vsel %vm1851, %v8208, %v7004
  %v8257 = vsel %vm1965, %v8209, %v7104
  %v8258 = vsel %vm1965, %v8210, %v7106
  %v8259 = vsel %vm1965, %v8211, %v7108
  %v8260 = vsel %vm1965, %v8212, %v7110
  %v8261 = vsel %vm1965, %v8213, %v7112
  %v8262 = vsel %vm1965, %v8214, %v7114
  %v8263 = vsel %vm1965, %v8215, %v7116
  %v8264 = vsel %vm1965, %v8216, %v7118
  %v8265 = vsel %vm1965, %v8217, %v7120
  %v8266 = vsel %vm1965, %v8218, %v7122
  %v8267 = vsel %vm1965, %v8219, %v7124
  %v8268 = vsel %vm1965, %v8220, %v7126
  %v8269 = vsel %vm1965, %v8221, %v7128
  %v8270 = vsel %vm1965, %v8222, %v7130
  %v8271 = vsel %vm1965, %v8223, %v7132
  %v8272 = vsel %vm1965, %v8224, %v7134
  %v8273 = vsel %vm1965, %v8225, %v7136
  %v8274 = vsel %vm1965, %v8226, %v7138
  %v8275 = vsel %vm1965, %v8227, %v7140
  %v8276 = vsel %vm1965, %v8228, %v7142
  %v8277 = vsel %vm1965, %v8229, %v7144
  %v8278 = vsel %vm1965, %v8230, %v7146
  %v8279 = vsel %vm1965, %v8231, %v7148
  %v8280 = vsel %vm1965, %v8232, %v7150
  %v8281 = vsel %vm1965, %v8233, %v7152
  %v8282 = vsel %vm1965, %v8234, %v7154
  %v8283 = vsel %vm1965, %v8235, %v7156
  %v8284 = vsel %vm1965, %v8236, %v7158
  %v8285 = vsel %vm1965, %v8237, %v7160
  %v8286 = vsel %vm1965, %v8238, %v7162
  %v8287 = vsel %vm1965, %v8239, %v7164
  %v8288 = vsel %vm1965, %v8240, %v7166
  %v8289 = vsel %vm1965, %v8241, %v7168
  %v8290 = vsel %vm1965, %v8242, %v7170
  %v8291 = vsel %vm1965, %v8243, %v7172
  %v8292 = vsel %vm1965, %v8244, %v7174
  %v8293 = vsel %vm1965, %v8245, %v7176
  %v8294 = vsel %vm1965, %v8246, %v7178
  %v8295 = vsel %vm1965, %v8247, %v7180
  %v8296 = vsel %vm1965, %v8248, %v7182
  %v8297 = vsel %vm1965, %v8249, %v7184
  %v8298 = vsel %vm1965, %v8250, %v7186
  %v8299 = vsel %vm1965, %v8251, %v7188
  %v8300 = vsel %vm1965, %v8252, %v7190
  %v8301 = vsel %vm1965, %v8253, %v7192
  %v8302 = vsel %vm1965, %v8254, %v7194
  %v8303 = vsel %vm1965, %v8255, %v7196
  %v8304 = vsel %vm1965, %v8256, %v7198
  %v8305 = vsel %vm2079, %v8257, %v7270
  %v8306 = vsel %vm2079, %v8258, %v7272
  %v8307 = vsel %vm2079, %v8259, %v7274
  %v8308 = vsel %vm2079, %v8260, %v7276
  %v8309 = vsel %vm2079, %v8261, %v7278
  %v8310 = vsel %vm2079, %v8262, %v7280
  %v8311 = vsel %vm2079, %v8263, %v7282
  %v8312 = vsel %vm2079, %v8264, %v7284
  %v8313 = vsel %vm2079, %v8265, %v7286
  %v8314 = vsel %vm2079, %v8266, %v7288
  %v8315 = vsel %vm2079, %v8267, %v7290
  %v8316 = vsel %vm2079, %v8268, %v7292
  %v8317 = vsel %vm2079, %v8269, %v7294
  %v8318 = vsel %vm2079, %v8270, %v7296
  %v8319 = vsel %vm2079, %v8271, %v7298
  %v8320 = vsel %vm2079, %v8272, %v7300
  %v8321 = vsel %vm2079, %v8273, %v7302
  %v8322 = vsel %vm2079, %v8274, %v7304
  %v8323 = vsel %vm2079, %v8275, %v7306
  %v8324 = vsel %vm2079, %v8276, %v7308
  %v8325 = vsel %vm2079, %v8277, %v7310
  %v8326 = vsel %vm2079, %v8278, %v7312
  %v8327 = vsel %vm2079, %v8279, %v7314
  %v8328 = vsel %vm2079, %v8280, %v7316
  %v8329 = vsel %vm2079, %v8281, %v7318
  %v8330 = vsel %vm2079, %v8282, %v7320
  %v8331 = vsel %vm2079, %v8283, %v7322
  %v8332 = vsel %vm2079, %v8284, %v7324
  %v8333 = vsel %vm2079, %v8285, %v7326
  %v8334 = vsel %vm2079, %v8286, %v7328
  %v8335 = vsel %vm2079, %v8287, %v7330
  %v8336 = vsel %vm2079, %v8288, %v7332
  %v8337 = vsel %vm2079, %v8289, %v7334
  %v8338 = vsel %vm2079, %v8290, %v7336
  %v8339 = vsel %vm2079, %v8291, %v7338
  %v8340 = vsel %vm2079, %v8292, %v7340
  %v8341 = vsel %vm2079, %v8293, %v7342
  %v8342 = vsel %vm2079, %v8294, %v7344
  %v8343 = vsel %vm2079, %v8295, %v7346
  %v8344 = vsel %vm2079, %v8296, %v7348
  %v8345 = vsel %vm2079, %v8297, %v7350
  %v8346 = vsel %vm2079, %v8298, %v7352
  %v8347 = vsel %vm2079, %v8299, %v7354
  %v8348 = vsel %vm2079, %v8300, %v7356
  %v8349 = vsel %vm2079, %v8301, %v7358
  %v8350 = vsel %vm2079, %v8302, %v7360
  %v8351 = vsel %vm2079, %v8303, %v7362
  %v8352 = vsel %vm2079, %v8304, %v7364
  %vm8353 = vcmask 244736
  %v8354 = vsel %vm8353, %v8305, %v7464
  %v8355 = vsel %vm8353, %v8306, %v7466
  %v8356 = vsel %vm8353, %v8307, %v7468
  %v8357 = vsel %vm8353, %v8308, %v7470
  %v8358 = vsel %vm8353, %v8309, %v7472
  %v8359 = vsel %vm8353, %v8310, %v7474
  %v8360 = vsel %vm8353, %v8311, %v7476
  %v8361 = vsel %vm8353, %v8312, %v7478
  %v8362 = vsel %vm8353, %v8313, %v7480
  %v8363 = vsel %vm8353, %v8314, %v7482
  %v8364 = vsel %vm8353, %v8315, %v7484
  %v8365 = vsel %vm8353, %v8316, %v7486
  %v8366 = vsel %vm8353, %v8317, %v7488
  %v8367 = vsel %vm8353, %v8318, %v7490
  %v8368 = vsel %vm8353, %v8319, %v7492
  %v8369 = vsel %vm8353, %v8320, %v7494
  %v8370 = vsel %vm8353, %v8321, %v7496
  %v8371 = vsel %vm8353, %v8322, %v7498
  %v8372 = vsel %vm8353, %v8323, %v7500
  %v8373 = vsel %vm8353, %v8324, %v7502
  %v8374 = vsel %vm8353, %v8325, %v7504
  %v8375 = vsel %vm8353, %v8326, %v7506
  %v8376 = vsel %vm8353, %v8327, %v7508
  %v8377 = vsel %vm8353, %v8328, %v7510
  %v8378 = vsel %vm8353, %v8329, %v7512
  %v8379 = vsel %vm8353, %v8330, %v7514
  %v8380 = vsel %vm8353, %v8331, %v7516
  %v8381 = vsel %vm8353, %v8332, %v7518
  %v8382 = vsel %vm8353, %v8333, %v7520
  %v8383 = vsel %vm8353, %v8334, %v7522
  %v8384 = vsel %vm8353, %v8335, %v7524
  %v8385 = vsel %vm8353, %v8336, %v7526
  %v8386 = vsel %vm8353, %v8337, %v7528
  %v8387 = vsel %vm8353, %v8338, %v7530
  %v8388 = vsel %vm8353, %v8339, %v7532
  %v8389 = vsel %vm8353, %v8340, %v7534
  %v8390 = vsel %vm8353, %v8341, %v7536
  %v8391 = vsel %vm8353, %v8342, %v7538
  %v8392 = vsel %vm8353, %v8343, %v7540
  %v8393 = vsel %vm8353, %v8344, %v7542
  %v8394 = vsel %vm8353, %v8345, %v7544
  %v8395 = vsel %vm8353, %v8346, %v7546
  %v8396 = vsel %vm8353, %v8347, %v7548
  %v8397 = vsel %vm8353, %v8348, %v7550
  %v8398 = vsel %vm8353, %v8349, %v7552
  %v8399 = vsel %vm8353, %v8350, %v7554
  %v8400 = vsel %vm8353, %v8351, %v7556
  %v8401 = vsel %vm8353, %v8352, %v7558
  %vm8402 = vcmask 293888
  %v8403 = vsel %vm8402, %v8354, %v7658
  %v8404 = vsel %vm8402, %v8355, %v7660
  %v8405 = vsel %vm8402, %v8356, %v7662
  %v8406 = vsel %vm8402, %v8357, %v7664
  %v8407 = vsel %vm8402, %v8358, %v7666
  %v8408 = vsel %vm8402, %v8359, %v7668
  %v8409 = vsel %vm8402, %v8360, %v7670
  %v8410 = vsel %vm8402, %v8361, %v7672
  %v8411 = vsel %vm8402, %v8362, %v7674
  %v8412 = vsel %vm8402, %v8363, %v7676
  %v8413 = vsel %vm8402, %v8364, %v7678
  %v8414 = vsel %vm8402, %v8365, %v7680
  %v8415 = vsel %vm8402, %v8366, %v7682
  %v8416 = vsel %vm8402, %v8367, %v7684
  %v8417 = vsel %vm8402, %v8368, %v7686
  %v8418 = vsel %vm8402, %v8369, %v7688
  %v8419 = vsel %vm8402, %v8370, %v7690
  %v8420 = vsel %vm8402, %v8371, %v7692
  %v8421 = vsel %vm8402, %v8372, %v7694
  %v8422 = vsel %vm8402, %v8373, %v7696
  %v8423 = vsel %vm8402, %v8374, %v7698
  %v8424 = vsel %vm8402, %v8375, %v7700
  %v8425 = vsel %vm8402, %v8376, %v7702
  %v8426 = vsel %vm8402, %v8377, %v7704
  %v8427 = vsel %vm8402, %v8378, %v7706
  %v8428 = vsel %vm8402, %v8379, %v7708
  %v8429 = vsel %vm8402, %v8380, %v7710
  %v8430 = vsel %vm8402, %v8381, %v7712
  %v8431 = vsel %vm8402, %v8382, %v7714
  %v8432 = vsel %vm8402, %v8383, %v7716
  %v8433 = vsel %vm8402, %v8384, %v7718
  %v8434 = vsel %vm8402, %v8385, %v7720
  %v8435 = vsel %vm8402, %v8386, %v7722
  %v8436 = vsel %vm8402, %v8387, %v7724
  %v8437 = vsel %vm8402, %v8388, %v7726
  %v8438 = vsel %vm8402, %v8389, %v7728
  %v8439 = vsel %vm8402, %v8390, %v7730
  %v8440 = vsel %vm8402, %v8391, %v7732
  %v8441 = vsel %vm8402, %v8392, %v7734
  %v8442 = vsel %vm8402, %v8393, %v7736
  %v8443 = vsel %vm8402, %v8394, %v7738
  %v8444 = vsel %vm8402, %v8395, %v7740
  %v8445 = vsel %vm8402, %v8396, %v7742
  %v8446 = vsel %vm8402, %v8397, %v7744
  %v8447 = vsel %vm8402, %v8398, %v7746
  %v8448 = vsel %vm8402, %v8399, %v7748
  %v8449 = vsel %vm8402, %v8400, %v7750
  %v8450 = vsel %vm8402, %v8401, %v7752
  %vm8451 = vcmask 343040
  %v8452 = vsel %vm8451, %v8403, %v7824
  %v8453 = vsel %vm8451, %v8404, %v7826
  %v8454 = vsel %vm8451, %v8405, %v7828
  %v8455 = vsel %vm8451, %v8406, %v7830
  %v8456 = vsel %vm8451, %v8407, %v7832
  %v8457 = vsel %vm8451, %v8408, %v7834
  %v8458 = vsel %vm8451, %v8409, %v7836
  %v8459 = vsel %vm8451, %v8410, %v7838
  %v8460 = vsel %vm8451, %v8411, %v7840
  %v8461 = vsel %vm8451, %v8412, %v7842
  %v8462 = vsel %vm8451, %v8413, %v7844
  %v8463 = vsel %vm8451, %v8414, %v7846
  %v8464 = vsel %vm8451, %v8415, %v7848
  %v8465 = vsel %vm8451, %v8416, %v7850
  %v8466 = vsel %vm8451, %v8417, %v7852
  %v8467 = vsel %vm8451, %v8418, %v7854
  %v8468 = vsel %vm8451, %v8419, %v7856
  %v8469 = vsel %vm8451, %v8420, %v7858
  %v8470 = vsel %vm8451, %v8421, %v7860
  %v8471 = vsel %vm8451, %v8422, %v7862
  %v8472 = vsel %vm8451, %v8423, %v7864
  %v8473 = vsel %vm8451, %v8424, %v7866
  %v8474 = vsel %vm8451, %v8425, %v7868
  %v8475 = vsel %vm8451, %v8426, %v7870
  %v8476 = vsel %vm8451, %v8427, %v7872
  %v8477 = vsel %vm8451, %v8428, %v7874
  %v8478 = vsel %vm8451, %v8429, %v7876
  %v8479 = vsel %vm8451, %v8430, %v7878
  %v8480 = vsel %vm8451, %v8431, %v7880
  %v8481 = vsel %vm8451, %v8432, %v7882
  %v8482 = vsel %vm8451, %v8433, %v7884
  %v8483 = vsel %vm8451, %v8434, %v7886
  %v8484 = vsel %vm8451, %v8435, %v7888
  %v8485 = vsel %vm8451, %v8436, %v7890
  %v8486 = vsel %vm8451, %v8437, %v7892
  %v8487 = vsel %vm8451, %v8438, %v7894
  %v8488 = vsel %vm8451, %v8439, %v7896
  %v8489 = vsel %vm8451, %v8440, %v7898
  %v8490 = vsel %vm8451, %v8441, %v7900
  %v8491 = vsel %vm8451, %v8442, %v7902
  %v8492 = vsel %vm8451, %v8443, %v7904
  %v8493 = vsel %vm8451, %v8444, %v7906
  %v8494 = vsel %vm8451, %v8445, %v7908
  %v8495 = vsel %vm8451, %v8446, %v7910
  %v8496 = vsel %vm8451, %v8447, %v7912
  %v8497 = vsel %vm8451, %v8448, %v7914
  %v8498 = vsel %vm8451, %v8449, %v7916
  %v8499 = vsel %vm8451, %v8450, %v7918
  %vm8500 = vcmask 392192
  %v8501 = vsel %vm8500, %v8452, %v8018
  %v8502 = vsel %vm8500, %v8453, %v8020
  %v8503 = vsel %vm8500, %v8454, %v8022
  %v8504 = vsel %vm8500, %v8455, %v8024
  %v8505 = vsel %vm8500, %v8456, %v8026
  %v8506 = vsel %vm8500, %v8457, %v8028
  %v8507 = vsel %vm8500, %v8458, %v8030
  %v8508 = vsel %vm8500, %v8459, %v8032
  %v8509 = vsel %vm8500, %v8460, %v8034
  %v8510 = vsel %vm8500, %v8461, %v8036
  %v8511 = vsel %vm8500, %v8462, %v8038
  %v8512 = vsel %vm8500, %v8463, %v8040
  %v8513 = vsel %vm8500, %v8464, %v8042
  %v8514 = vsel %vm8500, %v8465, %v8044
  %v8515 = vsel %vm8500, %v8466, %v8046
  %v8516 = vsel %vm8500, %v8467, %v8048
  %v8517 = vsel %vm8500, %v8468, %v8050
  %v8518 = vsel %vm8500, %v8469, %v8052
  %v8519 = vsel %vm8500, %v8470, %v8054
  %v8520 = vsel %vm8500, %v8471, %v8056
  %v8521 = vsel %vm8500, %v8472, %v8058
  %v8522 = vsel %vm8500, %v8473, %v8060
  %v8523 = vsel %vm8500, %v8474, %v8062
  %v8524 = vsel %vm8500, %v8475, %v8064
  %v8525 = vsel %vm8500, %v8476, %v8066
  %v8526 = vsel %vm8500, %v8477, %v8068
  %v8527 = vsel %vm8500, %v8478, %v8070
  %v8528 = vsel %vm8500, %v8479, %v8072
  %v8529 = vsel %vm8500, %v8480, %v8074
  %v8530 = vsel %vm8500, %v8481, %v8076
  %v8531 = vsel %vm8500, %v8482, %v8078
  %v8532 = vsel %vm8500, %v8483, %v8080
  %v8533 = vsel %vm8500, %v8484, %v8082
  %v8534 = vsel %vm8500, %v8485, %v8084
  %v8535 = vsel %vm8500, %v8486, %v8086
  %v8536 = vsel %vm8500, %v8487, %v8088
  %v8537 = vsel %vm8500, %v8488, %v8090
  %v8538 = vsel %vm8500, %v8489, %v8092
  %v8539 = vsel %vm8500, %v8490, %v8094
  %v8540 = vsel %vm8500, %v8491, %v8096
  %v8541 = vsel %vm8500, %v8492, %v8098
  %v8542 = vsel %vm8500, %v8493, %v8100
  %v8543 = vsel %vm8500, %v8494, %v8102
  %v8544 = vsel %vm8500, %v8495, %v8104
  %v8545 = vsel %vm8500, %v8496, %v8106
  %v8546 = vsel %vm8500, %v8497, %v8108
  %v8547 = vsel %vm8500, %v8498, %v8110
  %v8548 = vsel %vm8500, %v8499, %v8112
  %v8597 = vcombine.high %v8501, %v8501
  %v8598 = vcombine.high %v8503, %v8503
  %v8599 = vcombine.high %v8505, %v8505
  %v8600 = vcombine.high %v8507, %v8507
  %v8601 = vcombine.high %v8509, %v8509
  %v8602 = vcombine.high %v8511, %v8511
  %v8603 = vcombine.high %v8513, %v8513
  %v8604 = vcombine.high %v8515, %v8515
  %v8605 = vcombine.high %v8517, %v8517
  %v8606 = vcombine.high %v8519, %v8519
  %v8607 = vcombine.high %v8521, %v8521
  %v8608 = vcombine.high %v8523, %v8523
  %v8609 = vcombine.high %v8525, %v8525
  %v8610 = vcombine.high %v8527, %v8527
  %v8611 = vcombine.high %v8529, %v8529
  %v8612 = vcombine.high %v8531, %v8531
  %v8613 = vcombine.high %v8533, %v8533
  %v8614 = vcombine.high %v8535, %v8535
  %v8615 = vcombine.high %v8537, %v8537
  %v8616 = vcombine.high %v8539, %v8539
  %v8617 = vcombine.high %v8541, %v8541
  %v8618 = vcombine.high %v8543, %v8543
  %v8619 = vcombine.high %v8545, %v8545
  %v8620 = vcombine.high %v8547, %v8547
  %s8621 = scalar_lea.vmem %s1, 88
  %v8622 = vld [vmem:[%s8621] sm:$0xff]
  %v8623 = vld [vmem:[%s8621 + $0x8] sm:$0xff]
  %v8624 = vld [vmem:[%s8621 + $0x10] sm:$0xff]
  %v8625 = vld [vmem:[%s8621 + $0x18] sm:$0xff]
  %v8626 = vld [vmem:[%s8621 + $0x20] sm:$0xff]
  %v8627 = vld [vmem:[%s8621 + $0x28] sm:$0xff]
  %v8628 = vld [vmem:[%s8621 + $0x30] sm:$0x3f]
  %v8629 = vld [vmem:[%s2 + $0x1] sm:$0x1]
  %v8630 = vlaneseq
  %v8631 = vshrl.u32 %v8630, 7
  %v8632 = vsub.s32 0, %v8631
  %v8633 = vrot.slane %v8629, %v8632
  %v8634 = vcombine.low %v8501, %v8597
  %v8635 = vcombine.low %v8502, %v8503
  %v8636 = vcombine.low %v8598, %v8504
  %v8637 = vcombine.low %v8505, %v8599
  %v8638 = vcombine.low %v8506, %v8507
  %v8639 = vcombine.low %v8600, %v8508
  %v8640 = vcombine.low %v8509, %v8601
  %v8641 = vcombine.low %v8510, %v8511
  %v8642 = vcombine.low %v8602, %v8512
  %v8643 = vcombine.low %v8513, %v8603
  %v8644 = vcombine.low %v8514, %v8515
  %v8645 = vcombine.low %v8604, %v8516
  %v8646 = vcombine.low %v8517, %v8605
  %v8647 = vcombine.low %v8518, %v8519
  %v8648 = vcombine.low %v8606, %v8520
  %v8649 = vcombine.low %v8521, %v8607
  %v8650 = vcombine.low %v8522, %v8523
  %v8651 = vcombine.low %v8608, %v8524
  %v8652 = vcombine.low %v8525, %v8609
  %v8653 = vcombine.low %v8526, %v8527
  %v8654 = vcombine.low %v8610, %v8528
  %v8655 = vcombine.low %v8529, %v8611
  %v8656 = vcombine.low %v8530, %v8531
  %v8657 = vcombine.low %v8612, %v8532
  %v8658 = vcombine.low %v8533, %v8613
  %v8659 = vcombine.low %v8534, %v8535
  %v8660 = vcombine.low %v8614, %v8536
  %v8661 = vcombine.low %v8537, %v8615
  %v8662 = vcombine.low %v8538, %v8539
  %v8663 = vcombine.low %v8616, %v8540
  %v8664 = vcombine.low %v8541, %v8617
  %v8665 = vcombine.low %v8542, %v8543
  %v8666 = vcombine.low %v8618, %v8544
  %v8667 = vcombine.low %v8545, %v8619
  %v8668 = vcombine.low %v8546, %v8547
  %v8669 = vcombine.low %v8620, %v8548
  %vm8670 = vcmask 441344
  %v8671 = vsel %vm8670, %v8634, 0
  %v8673 = vsel %vm8670, %v8635, 0
  %v8675 = vsel %vm8670, %v8636, 0
  %v8677 = vsel %vm8670, %v8637, 0
  %v8679 = vsel %vm8670, %v8638, 0
  %v8681 = vsel %vm8670, %v8639, 0
  %v8683 = vsel %vm8670, %v8640, 0
  %v8685 = vsel %vm8670, %v8641, 0
  %v8687 = vsel %vm8670, %v8642, 0
  %v8689 = vsel %vm8670, %v8643, 0
  %v8691 = vsel %vm8670, %v8644, 0
  %v8693 = vsel %vm8670, %v8645, 0
  %v8695 = vsel %vm8670, %v8646, 0
  %v8697 = vsel %vm8670, %v8647, 0
  %v8699 = vsel %vm8670, %v8648, 0
  %v8701 = vsel %vm8670, %v8649, 0
  %v8703 = vsel %vm8670, %v8650, 0
  %v8705 = vsel %vm8670, %v8651, 0
  %v8707 = vsel %vm8670, %v8652, 0
  %v8709 = vsel %vm8670, %v8653, 0
  %v8711 = vsel %vm8670, %v8654, 0
  %v8713 = vsel %vm8670, %v8655, 0
  %v8715 = vsel %vm8670, %v8656, 0
  %v8717 = vsel %vm8670, %v8657, 0
  %v8719 = vsel %vm8670, %v8658, 0
  %v8721 = vsel %vm8670, %v8659, 0
  %v8723 = vsel %vm8670, %v8660, 0
  %v8725 = vsel %vm8670, %v8661, 0
  %v8727 = vsel %vm8670, %v8662, 0
  %v8729 = vsel %vm8670, %v8663, 0
  %v8731 = vsel %vm8670, %v8664, 0
  %v8733 = vsel %vm8670, %v8665, 0
  %v8735 = vsel %vm8670, %v8666, 0
  %v8737 = vsel %vm8670, %v8667, 0
  %v8739 = vsel %vm8670, %v8668, 0
  %v8741 = vsel %vm8670, %v8669, 0
  %v8744 = vsel %vm387, %v8628, 0
  %8746 = vmatprep.subr.mxu0 0.0
  %8747 = vmatpush1.msra.mxu0 %v8622
  %8748 = vmatprep.subr.mxu0 0.0
  %8749 = vmatpush1.msra.mxu0 %v8623
  %8750 = vmatprep.subr.mxu0 0.0
  %8751 = vmatpush1.msra.mxu0 %v8624
  %8752 = vmatprep.subr.mxu0 0.0
  %8753 = vmatpush1.msra.mxu0 %v8625
  %8754 = vmatprep.subr.mxu0 0.0
  %8755 = vmatpush1.msra.mxu0 %v8626
  %8756 = vmatprep.subr.mxu0 0.0
  %8757 = vmatpush1.msra.mxu0 %v8627
  %8758 = vmatprep.subr.mxu0 0.0
  %8759 = vmatpush1.msra.mxu0 %v8744
  %8760 = vmatprep.subr.mxu0 0.0
  %8761 = vmatpush1.msra.mxu0 0.0
  %8762 = vmatprep.subr.mxu0 0.0
  %8763 = vmatpush1.msra.mxu0 0.0
  %8764 = vmatprep.subr.mxu0 0.0
  %8765 = vmatpush1.msra.mxu0 0.0
  %8766 = vmatprep.subr.mxu0 0.0
  %8767 = vmatpush1.msra.mxu0 0.0
  %8768 = vmatprep.subr.mxu0 0.0
  %8769 = vmatpush1.msra.mxu0 0.0
  %8770 = vmatprep.subr.mxu0 0.0
  %8771 = vmatpush1.msra.mxu0 0.0
  %8772 = vmatprep.subr.mxu0 0.0
  %8773 = vmatpush1.msra.mxu0 0.0
  %8774 = vmatprep.subr.mxu0 0.0
  %8775 = vmatpush1.msra.mxu0 0.0
  %8776 = vmatprep.subr.mxu0 0.0
  %8777 = vmatpush1.msra.mxu0 0.0
  %8778 = vmatprep.subr.mxu0 0.0
  %8779 = vmatpush1.msra.mxu0 0.0
  %8780 = vmatprep.subr.mxu0 0.0
  %8781 = vmatpush1.msra.mxu0 0.0
  %8782 = vmatprep.subr.mxu0 0.0
  %8783 = vmatpush1.msra.mxu0 0.0
  %8784 = vmatprep.subr.mxu0 0.0
  %8785 = vmatpush1.msra.mxu0 0.0
  %8786 = vmatprep.subr.mxu0 0.0
  %8787 = vmatpush1.msra.mxu0 0.0
  %8788 = vmatprep.subr.mxu0 0.0
  %8789 = vmatpush1.msra.mxu0 0.0
  %8790 = vmatprep.subr.mxu0 0.0
  %8791 = vmatpush1.msra.mxu0 0.0
  %8792 = vmatprep.subr.mxu0 0.0
  %8793 = vmatpush1.msra.mxu0 0.0
  %8794 = vmatprep.subr.mxu0 0.0
  %8795 = vmatpush1.msra.mxu0 0.0
  %8796 = vmatprep.subr.mxu0 0.0
  %8797 = vmatpush1.msra.mxu0 0.0
  %8798 = vmatprep.subr.mxu0 0.0
  %8799 = vmatpush1.msra.mxu0 0.0
  %8800 = vmatprep.subr.mxu0 0.0
  %8801 = vmatpush1.msra.mxu0 0.0
  %8802 = vmatprep.subr.mxu0 0.0
  %8803 = vmatpush1.msra.mxu0 0.0
  %8804 = vmatprep.subr.mxu0 0.0
  %8805 = vmatpush1.msra.mxu0 0.0
  %8806 = vmatprep.subr.mxu0 0.0
  %8807 = vmatpush1.msra.mxu0 0.0
  %8808 = vmatprep.subr.mxu0 0.0
  %8809 = vmatpush1.msra.mxu0 0.0
  %8810 = vmatprep.mubr.f32.mxu0 0.0
  %8811 = vmatmul.mubr.f32.gmra.mrb[0].mxu0 %v8671
  %v8812 = vpop.f32.mrb[0].mxu0
  %v8813 = vadd.f32 %v8633, %v8812
  %v8814 = vpop.f32.mrb[0].mxu0
  %8815 = vmatprep.mubr.f32.mxu0 0.0
  %8816 = vmatmul.mubr.f32.gmra.mrb[0].mxu0 %v8673
  %v8817 = vpop.f32.mrb[0].mxu0
  %v8818 = vadd.f32 %v8633, %v8817
  %v8819 = vpop.f32.mrb[0].mxu0
  %8820 = vmatprep.mubr.f32.mxu0 0.0
  %8821 = vmatmul.mubr.f32.gmra.mrb[0].mxu0 %v8675
  %v8822 = vpop.f32.mrb[0].mxu0
  %v8823 = vadd.f32 %v8633, %v8822
  %v8824 = vpop.f32.mrb[0].mxu0
  %8825 = vmatprep.mubr.f32.mxu0 0.0
  %8826 = vmatmul.mubr.f32.gmra.mrb[0].mxu0 %v8677
  %v8827 = vpop.f32.mrb[0].mxu0
  %v8828 = vadd.f32 %v8633, %v8827
  %v8829 = vpop.f32.mrb[0].mxu0
  %8830 = vmatprep.mubr.f32.mxu0 0.0
  %8831 = vmatmul.mubr.f32.gmra.mrb[0].mxu0 %v8679
  %v8832 = vpop.f32.mrb[0].mxu0
  %v8833 = vadd.f32 %v8633, %v8832
  %v8834 = vpop.f32.mrb[0].mxu0
  %8835 = vmatprep.mubr.f32.mxu0 0.0
  %8836 = vmatmul.mubr.f32.gmra.mrb[0].mxu0 %v8681
  %v8837 = vpop.f32.mrb[0].mxu0
  %v8838 = vadd.f32 %v8633, %v8837
  %v8839 = vpop.f32.mrb[0].mxu0
  %8840 = vmatprep.mubr.f32.mxu0 0.0
  %8841 = vmatmul.mubr.f32.gmra.mrb[0].mxu0 %v8683
  %v8842 = vpop.f32.mrb[0].mxu0
  %v8843 = vadd.f32 %v8633, %v8842
  %v8844 = vpop.f32.mrb[0].mxu0
  %8845 = vmatprep.mubr.f32.mxu0 0.0
  %8846 = vmatmul.mubr.f32.gmra.mrb[0].mxu0 %v8685
  %v8847 = vpop.f32.mrb[0].mxu0
  %v8848 = vadd.f32 %v8633, %v8847
  %v8849 = vpop.f32.mrb[0].mxu0
  %8850 = vmatprep.mubr.f32.mxu0 0.0
  %8851 = vmatmul.mubr.f32.gmra.mrb[0].mxu0 %v8687
  %v8852 = vpop.f32.mrb[0].mxu0
  %v8853 = vadd.f32 %v8633, %v8852
  %v8854 = vpop.f32.mrb[0].mxu0
  %8855 = vmatprep.mubr.f32.mxu0 0.0
  %8856 = vmatmul.mubr.f32.gmra.mrb[0].mxu0 %v8689
  %v8857 = vpop.f32.mrb[0].mxu0
  %v8858 = vadd.f32 %v8633, %v8857
  %v8859 = vpop.f32.mrb[0].mxu0
  %8860 = vmatprep.mubr.f32.mxu0 0.0
  %8861 = vmatmul.mubr.f32.gmra.mrb[0].mxu0 %v8691
  %v8862 = vpop.f32.mrb[0].mxu0
  %v8863 = vadd.f32 %v8633, %v8862
  %v8864 = vpop.f32.mrb[0].mxu0
  %8865 = vmatprep.mubr.f32.mxu0 0.0
  %8866 = vmatmul.mubr.f32.gmra.mrb[0].mxu0 %v8693
  %v8867 = vpop.f32.mrb[0].mxu0
  %v8868 = vadd.f32 %v8633, %v8867
  %v8869 = vpop.f32.mrb[0].mxu0
  %8870 = vmatprep.mubr.f32.mxu0 0.0
  %8871 = vmatmul.mubr.f32.gmra.mrb[0].mxu0 %v8695
  %v8872 = vpop.f32.mrb[0].mxu0
  %v8873 = vadd.f32 %v8633, %v8872
  %v8874 = vpop.f32.mrb[0].mxu0
  %8875 = vmatprep.mubr.f32.mxu0 0.0
  %8876 = vmatmul.mubr.f32.gmra.mrb[0].mxu0 %v8697
  %v8877 = vpop.f32.mrb[0].mxu0
  %v8878 = vadd.f32 %v8633, %v8877
  %v8879 = vpop.f32.mrb[0].mxu0
  %8880 = vmatprep.mubr.f32.mxu0 0.0
  %8881 = vmatmul.mubr.f32.gmra.mrb[0].mxu0 %v8699
  %v8882 = vpop.f32.mrb[0].mxu0
  %v8883 = vadd.f32 %v8633, %v8882
  %v8884 = vpop.f32.mrb[0].mxu0
  %8885 = vmatprep.mubr.f32.mxu0 0.0
  %8886 = vmatmul.mubr.f32.gmra.mrb[0].mxu0 %v8701
  %v8887 = vpop.f32.mrb[0].mxu0
  %v8888 = vadd.f32 %v8633, %v8887
  %v8889 = vpop.f32.mrb[0].mxu0
  %8890 = vmatprep.mubr.f32.mxu0 0.0
  %8891 = vmatmul.mubr.f32.gmra.mrb[0].mxu0 %v8703
  %v8892 = vpop.f32.mrb[0].mxu0
  %v8893 = vadd.f32 %v8633, %v8892
  %v8894 = vpop.f32.mrb[0].mxu0
  %8895 = vmatprep.mubr.f32.mxu0 0.0
  %8896 = vmatmul.mubr.f32.gmra.mrb[0].mxu0 %v8705
  %v8897 = vpop.f32.mrb[0].mxu0
  %v8898 = vadd.f32 %v8633, %v8897
  %v8899 = vpop.f32.mrb[0].mxu0
  %8900 = vmatprep.mubr.f32.mxu0 0.0
  %8901 = vmatmul.mubr.f32.gmra.mrb[0].mxu0 %v8707
  %v8902 = vpop.f32.mrb[0].mxu0
  %v8903 = vadd.f32 %v8633, %v8902
  %v8904 = vpop.f32.mrb[0].mxu0
  %8905 = vmatprep.mubr.f32.mxu0 0.0
  %8906 = vmatmul.mubr.f32.gmra.mrb[0].mxu0 %v8709
  %v8907 = vpop.f32.mrb[0].mxu0
  %v8908 = vadd.f32 %v8633, %v8907
  %v8909 = vpop.f32.mrb[0].mxu0
  %8910 = vmatprep.mubr.f32.mxu0 0.0
  %8911 = vmatmul.mubr.f32.gmra.mrb[0].mxu0 %v8711
  %v8912 = vpop.f32.mrb[0].mxu0
  %v8913 = vadd.f32 %v8633, %v8912
  %v8914 = vpop.f32.mrb[0].mxu0
  %8915 = vmatprep.mubr.f32.mxu0 0.0
  %8916 = vmatmul.mubr.f32.gmra.mrb[0].mxu0 %v8713
  %v8917 = vpop.f32.mrb[0].mxu0
  %v8918 = vadd.f32 %v8633, %v8917
  %v8919 = vpop.f32.mrb[0].mxu0
  %8920 = vmatprep.mubr.f32.mxu0 0.0
  %8921 = vmatmul.mubr.f32.gmra.mrb[0].mxu0 %v8715
  %v8922 = vpop.f32.mrb[0].mxu0
  %v8923 = vadd.f32 %v8633, %v8922
  %v8924 = vpop.f32.mrb[0].mxu0
  %8925 = vmatprep.mubr.f32.mxu0 0.0
  %8926 = vmatmul.mubr.f32.gmra.mrb[0].mxu0 %v8717
  %v8927 = vpop.f32.mrb[0].mxu0
  %v8928 = vadd.f32 %v8633, %v8927
  %v8929 = vpop.f32.mrb[0].mxu0
  %8930 = vmatprep.mubr.f32.mxu0 0.0
  %8931 = vmatmul.mubr.f32.gmra.mrb[0].mxu0 %v8719
  %v8932 = vpop.f32.mrb[0].mxu0
  %v8933 = vadd.f32 %v8633, %v8932
  %v8934 = vpop.f32.mrb[0].mxu0
  %8935 = vmatprep.mubr.f32.mxu0 0.0
  %8936 = vmatmul.mubr.f32.gmra.mrb[0].mxu0 %v8721
  %v8937 = vpop.f32.mrb[0].mxu0
  %v8938 = vadd.f32 %v8633, %v8937
  %v8939 = vpop.f32.mrb[0].mxu0
  %8940 = vmatprep.mubr.f32.mxu0 0.0
  %8941 = vmatmul.mubr.f32.gmra.mrb[0].mxu0 %v8723
  %v8942 = vpop.f32.mrb[0].mxu0
  %v8943 = vadd.f32 %v8633, %v8942
  %v8944 = vpop.f32.mrb[0].mxu0
  %8945 = vmatprep.mubr.f32.mxu0 0.0
  %8946 = vmatmul.mubr.f32.gmra.mrb[0].mxu0 %v8725
  %v8947 = vpop.f32.mrb[0].mxu0
  %v8948 = vadd.f32 %v8633, %v8947
  %v8949 = vpop.f32.mrb[0].mxu0
  %8950 = vmatprep.mubr.f32.mxu0 0.0
  %8951 = vmatmul.mubr.f32.gmra.mrb[0].mxu0 %v8727
  %v8952 = vpop.f32.mrb[0].mxu0
  %v8953 = vadd.f32 %v8633, %v8952
  %v8954 = vpop.f32.mrb[0].mxu0
  %8955 = vmatprep.mubr.f32.mxu0 0.0
  %8956 = vmatmul.mubr.f32.gmra.mrb[0].mxu0 %v8729
  %v8957 = vpop.f32.mrb[0].mxu0
  %v8958 = vadd.f32 %v8633, %v8957
  %v8959 = vpop.f32.mrb[0].mxu0
  %8960 = vmatprep.mubr.f32.mxu0 0.0
  %8961 = vmatmul.mubr.f32.gmra.mrb[0].mxu0 %v8731
  %v8962 = vpop.f32.mrb[0].mxu0
  %v8963 = vadd.f32 %v8633, %v8962
  %v8964 = vpop.f32.mrb[0].mxu0
  %8965 = vmatprep.mubr.f32.mxu0 0.0
  %8966 = vmatmul.mubr.f32.gmra.mrb[0].mxu0 %v8733
  %v8967 = vpop.f32.mrb[0].mxu0
  %v8968 = vadd.f32 %v8633, %v8967
  %v8969 = vpop.f32.mrb[0].mxu0
  %8970 = vmatprep.mubr.f32.mxu0 0.0
  %8971 = vmatmul.mubr.f32.gmra.mrb[0].mxu0 %v8735
  %v8972 = vpop.f32.mrb[0].mxu0
  %v8973 = vadd.f32 %v8633, %v8972
  %v8974 = vpop.f32.mrb[0].mxu0
  %8975 = vmatprep.mubr.f32.mxu0 0.0
  %8976 = vmatmul.mubr.f32.gmra.mrb[0].mxu0 %v8737
  %v8977 = vpop.f32.mrb[0].mxu0
  %v8978 = vadd.f32 %v8633, %v8977
  %v8979 = vpop.f32.mrb[0].mxu0
  %8980 = vmatprep.mubr.f32.mxu0 0.0
  %8981 = vmatmul.mubr.f32.gmra.mrb[0].mxu0 %v8739
  %v8982 = vpop.f32.mrb[0].mxu0
  %v8983 = vadd.f32 %v8633, %v8982
  %v8984 = vpop.f32.mrb[0].mxu0
  %8985 = vmatprep.mubr.f32.mxu0 0.0
  %8986 = vmatmul.mubr.f32.gmra.mrb[0].mxu0 %v8741
  %v8987 = vpop.f32.mrb[0].mxu0
  %v8988 = vadd.f32 %v8633, %v8987
  %v8989 = vpop.f32.mrb[0].mxu0
  %8990 = vdwg.mxu0
  %v9027 = vcombine.high %v8813, %v8813
  %v9028 = vcombine.high %v8818, %v8818
  %v9029 = vcombine.high %v8823, %v8823
  %v9030 = vcombine.high %v8828, %v8828
  %v9031 = vcombine.high %v8833, %v8833
  %v9032 = vcombine.high %v8838, %v8838
  %v9033 = vcombine.high %v8843, %v8843
  %v9034 = vcombine.high %v8848, %v8848
  %v9035 = vcombine.high %v8853, %v8853
  %v9036 = vcombine.high %v8858, %v8858
  %v9037 = vcombine.high %v8863, %v8863
  %v9038 = vcombine.high %v8868, %v8868
  %v9039 = vcombine.high %v8873, %v8873
  %v9040 = vcombine.high %v8878, %v8878
  %v9041 = vcombine.high %v8883, %v8883
  %v9042 = vcombine.high %v8888, %v8888
  %v9043 = vcombine.high %v8893, %v8893
  %v9044 = vcombine.high %v8898, %v8898
  %v9045 = vcombine.high %v8903, %v8903
  %v9046 = vcombine.high %v8908, %v8908
  %v9047 = vcombine.high %v8913, %v8913
  %v9048 = vcombine.high %v8918, %v8918
  %v9049 = vcombine.high %v8923, %v8923
  %v9050 = vcombine.high %v8928, %v8928
  %v9051 = vcombine.high %v8933, %v8933
  %v9052 = vcombine.high %v8938, %v8938
  %v9053 = vcombine.high %v8943, %v8943
  %v9054 = vcombine.high %v8948, %v8948
  %v9055 = vcombine.high %v8953, %v8953
  %v9056 = vcombine.high %v8958, %v8958
  %v9057 = vcombine.high %v8963, %v8963
  %v9058 = vcombine.high %v8968, %v8968
  %v9059 = vcombine.high %v8973, %v8973
  %v9060 = vcombine.high %v8978, %v8978
  %v9061 = vcombine.high %v8983, %v8983
  %v9062 = vcombine.high %v8988, %v8988
  %v9073 = vcombine.low %v8813, %v9027
  %v9074 = vcombine.low %v9028, %v8823
  %v9075 = vcombine.low %v8828, %v9030
  %v9076 = vcombine.low %v9031, %v8838
  %v9077 = vcombine.low %v8843, %v9033
  %v9078 = vcombine.low %v9034, %v8853
  %v9079 = vcombine.low %v8858, %v9036
  %v9080 = vcombine.low %v9037, %v8868
  %v9081 = vcombine.low %v8873, %v9039
  %v9082 = vcombine.low %v9040, %v8883
  %v9083 = vcombine.low %v8903, %v9045
  %v9084 = vcombine.low %v9046, %v8913
  %v9085 = vcombine.low %v8918, %v9048
  %v9086 = vcombine.low %v9049, %v8928
  %v9087 = vcombine.low %v8933, %v9051
  %v9088 = vcombine.low %v9052, %v8943
  %v9089 = vcombine.low %v8948, %v9054
  %v9090 = vcombine.low %v9055, %v8958
  %v9091 = vcombine.low %v8963, %v9057
  %v9092 = vcombine.low %v9058, %v8973
  %v9113 = vrot.slane %v9073, 1
  %v9114 = vrot.slane %v8818, 1
  %v9115 = vsel %vm134, %v9113, %v9114
  %v9116 = vrot.slane %v9074, 1
  %v9117 = vrot.slane %v9029, 1
  %v9118 = vsel %vm134, %v9116, %v9117
  %v9119 = vrot.slane %v9075, 1
  %v9120 = vrot.slane %v8833, 1
  %v9121 = vsel %vm134, %v9119, %v9120
  %v9122 = vrot.slane %v9076, 1
  %v9123 = vrot.slane %v9032, 1
  %v9124 = vsel %vm134, %v9122, %v9123
  %v9125 = vrot.slane %v9077, 1
  %v9126 = vrot.slane %v8848, 1
  %v9127 = vsel %vm134, %v9125, %v9126
  %v9128 = vrot.slane %v9078, 1
  %v9129 = vrot.slane %v9035, 1
  %v9130 = vsel %vm134, %v9128, %v9129
  %v9131 = vrot.slane %v9079, 1
  %v9132 = vrot.slane %v8863, 1
  %v9133 = vsel %vm134, %v9131, %v9132
  %v9134 = vrot.slane %v9080, 1
  %v9135 = vrot.slane %v9038, 1
  %v9136 = vsel %vm134, %v9134, %v9135
  %v9137 = vrot.slane %v9081, 1
  %v9138 = vrot.slane %v8878, 1
  %v9139 = vsel %vm134, %v9137, %v9138
  %v9140 = vrot.slane %v9082, 1
  %v9141 = vrot.slane %v9041, 1
  %v9142 = vsel %vm134, %v9140, %v9141
  %v9143 = vrot.slane %v9083, 1
  %v9144 = vrot.slane %v8908, 1
  %v9145 = vsel %vm134, %v9143, %v9144
  %v9146 = vrot.slane %v9084, 1
  %v9147 = vrot.slane %v9047, 1
  %v9148 = vsel %vm134, %v9146, %v9147
  %v9149 = vrot.slane %v9085, 1
  %v9150 = vrot.slane %v8923, 1
  %v9151 = vsel %vm134, %v9149, %v9150
  %v9152 = vrot.slane %v9086, 1
  %v9153 = vrot.slane %v9050, 1
  %v9154 = vsel %vm134, %v9152, %v9153
  %v9155 = vrot.slane %v9087, 1
  %v9156 = vrot.slane %v8938, 1
  %v9157 = vsel %vm134, %v9155, %v9156
  %v9158 = vrot.slane %v9088, 1
  %v9159 = vrot.slane %v9053, 1
  %v9160 = vsel %vm134, %v9158, %v9159
  %v9161 = vrot.slane %v9089, 1
  %v9162 = vrot.slane %v8953, 1
  %v9163 = vsel %vm134, %v9161, %v9162
  %v9164 = vrot.slane %v9090, 1
  %v9165 = vrot.slane %v9056, 1
  %v9166 = vsel %vm134, %v9164, %v9165
  %v9167 = vrot.slane %v9091, 1
  %v9168 = vrot.slane %v8968, 1
  %v9169 = vsel %vm134, %v9167, %v9168
  %v9170 = vrot.slane %v9092, 1
  %v9171 = vrot.slane %v9059, 1
  %v9172 = vsel %vm134, %v9170, %v9171
  %9173 = vrot.lane.b32.xlu0 %v9115, 8
  %v9174 = vpop.permute.xlu0 %9173
  %9175 = vrot.lane.b32.xlu0 %v9114, 8
  %v9176 = vpop.permute.xlu0 %9175
  %9177 = vrot.lane.b32.xlu0 %v9118, 8
  %v9178 = vpop.permute.xlu0 %9177
  %9179 = vrot.lane.b32.xlu0 %v9117, 8
  %v9180 = vpop.permute.xlu0 %9179
  %9181 = vrot.lane.b32.xlu0 %v9121, 8
  %v9182 = vpop.permute.xlu0 %9181
  %9183 = vrot.lane.b32.xlu0 %v9120, 8
  %v9184 = vpop.permute.xlu0 %9183
  %9185 = vrot.lane.b32.xlu0 %v9124, 8
  %v9186 = vpop.permute.xlu0 %9185
  %9187 = vrot.lane.b32.xlu0 %v9123, 8
  %v9188 = vpop.permute.xlu0 %9187
  %9189 = vrot.lane.b32.xlu0 %v9127, 8
  %v9190 = vpop.permute.xlu0 %9189
  %9191 = vrot.lane.b32.xlu0 %v9126, 8
  %v9192 = vpop.permute.xlu0 %9191
  %9193 = vrot.lane.b32.xlu0 %v9130, 8
  %v9194 = vpop.permute.xlu0 %9193
  %9195 = vrot.lane.b32.xlu0 %v9129, 8
  %v9196 = vpop.permute.xlu0 %9195
  %9197 = vrot.lane.b32.xlu0 %v9133, 8
  %v9198 = vpop.permute.xlu0 %9197
  %9199 = vrot.lane.b32.xlu0 %v9132, 8
  %v9200 = vpop.permute.xlu0 %9199
  %9201 = vrot.lane.b32.xlu0 %v9136, 8
  %v9202 = vpop.permute.xlu0 %9201
  %9203 = vrot.lane.b32.xlu0 %v9135, 8
  %v9204 = vpop.permute.xlu0 %9203
  %9205 = vrot.lane.b32.xlu0 %v9139, 8
  %v9206 = vpop.permute.xlu0 %9205
  %9207 = vrot.lane.b32.xlu0 %v9138, 8
  %v9208 = vpop.permute.xlu0 %9207
  %9209 = vrot.lane.b32.xlu0 %v9142, 8
  %v9210 = vpop.permute.xlu0 %9209
  %9211 = vrot.lane.b32.xlu0 %v9141, 8
  %v9212 = vpop.permute.xlu0 %9211
  %9213 = vrot.lane.b32.xlu0 %v9145, 8
  %v9214 = vpop.permute.xlu0 %9213
  %9215 = vrot.lane.b32.xlu0 %v9144, 8
  %v9216 = vpop.permute.xlu0 %9215
  %9217 = vrot.lane.b32.xlu0 %v9148, 8
  %v9218 = vpop.permute.xlu0 %9217
  %9219 = vrot.lane.b32.xlu0 %v9147, 8
  %v9220 = vpop.permute.xlu0 %9219
  %9221 = vrot.lane.b32.xlu0 %v9151, 8
  %v9222 = vpop.permute.xlu0 %9221
  %9223 = vrot.lane.b32.xlu0 %v9150, 8
  %v9224 = vpop.permute.xlu0 %9223
  %9225 = vrot.lane.b32.xlu0 %v9154, 8
  %v9226 = vpop.permute.xlu0 %9225
  %9227 = vrot.lane.b32.xlu0 %v9153, 8
  %v9228 = vpop.permute.xlu0 %9227
  %9229 = vrot.lane.b32.xlu0 %v9157, 8
  %v9230 = vpop.permute.xlu0 %9229
  %9231 = vrot.lane.b32.xlu0 %v9156, 8
  %v9232 = vpop.permute.xlu0 %9231
  %9233 = vrot.lane.b32.xlu0 %v9160, 8
  %v9234 = vpop.permute.xlu0 %9233
  %9235 = vrot.lane.b32.xlu0 %v9159, 8
  %v9236 = vpop.permute.xlu0 %9235
  %9237 = vrot.lane.b32.xlu0 %v9163, 8
  %v9238 = vpop.permute.xlu0 %9237
  %9239 = vrot.lane.b32.xlu0 %v9162, 8
  %v9240 = vpop.permute.xlu0 %9239
  %9241 = vrot.lane.b32.xlu0 %v9166, 8
  %v9242 = vpop.permute.xlu0 %9241
  %9243 = vrot.lane.b32.xlu0 %v9165, 8
  %v9244 = vpop.permute.xlu0 %9243
  %9245 = vrot.lane.b32.xlu0 %v9169, 8
  %v9246 = vpop.permute.xlu0 %9245
  %9247 = vrot.lane.b32.xlu0 %v9168, 8
  %v9248 = vpop.permute.xlu0 %9247
  %9249 = vrot.lane.b32.xlu0 %v9172, 8
  %v9250 = vpop.permute.xlu0 %9249
  %9251 = vrot.lane.b32.xlu0 %v9171, 8
  %v9252 = vpop.permute.xlu0 %9251
  %v9293 = vrot.slane %v9073, 2
  %v9294 = vrot.slane %v8818, 2
  %v9295 = vsel %vm387, %v9293, %v9294
  %v9296 = vrot.slane %v9074, 2
  %v9297 = vrot.slane %v9029, 2
  %v9298 = vsel %vm387, %v9296, %v9297
  %v9299 = vrot.slane %v9075, 2
  %v9300 = vrot.slane %v8833, 2
  %v9301 = vsel %vm387, %v9299, %v9300
  %v9302 = vrot.slane %v9076, 2
  %v9303 = vrot.slane %v9032, 2
  %v9304 = vsel %vm387, %v9302, %v9303
  %v9305 = vrot.slane %v9077, 2
  %v9306 = vrot.slane %v8848, 2
  %v9307 = vsel %vm387, %v9305, %v9306
  %v9308 = vrot.slane %v9078, 2
  %v9309 = vrot.slane %v9035, 2
  %v9310 = vsel %vm387, %v9308, %v9309
  %v9311 = vrot.slane %v9079, 2
  %v9312 = vrot.slane %v8863, 2
  %v9313 = vsel %vm387, %v9311, %v9312
  %v9314 = vrot.slane %v9080, 2
  %v9315 = vrot.slane %v9038, 2
  %v9316 = vsel %vm387, %v9314, %v9315
  %v9317 = vrot.slane %v9081, 2
  %v9318 = vrot.slane %v8878, 2
  %v9319 = vsel %vm387, %v9317, %v9318
  %v9320 = vrot.slane %v9082, 2
  %v9321 = vrot.slane %v9041, 2
  %v9322 = vsel %vm387, %v9320, %v9321
  %v9323 = vrot.slane %v9083, 2
  %v9324 = vrot.slane %v8908, 2
  %v9325 = vsel %vm387, %v9323, %v9324
  %v9326 = vrot.slane %v9084, 2
  %v9327 = vrot.slane %v9047, 2
  %v9328 = vsel %vm387, %v9326, %v9327
  %v9329 = vrot.slane %v9085, 2
  %v9330 = vrot.slane %v8923, 2
  %v9331 = vsel %vm387, %v9329, %v9330
  %v9332 = vrot.slane %v9086, 2
  %v9333 = vrot.slane %v9050, 2
  %v9334 = vsel %vm387, %v9332, %v9333
  %v9335 = vrot.slane %v9087, 2
  %v9336 = vrot.slane %v8938, 2
  %v9337 = vsel %vm387, %v9335, %v9336
  %v9338 = vrot.slane %v9088, 2
  %v9339 = vrot.slane %v9053, 2
  %v9340 = vsel %vm387, %v9338, %v9339
  %v9341 = vrot.slane %v9089, 2
  %v9342 = vrot.slane %v8953, 2
  %v9343 = vsel %vm387, %v9341, %v9342
  %v9344 = vrot.slane %v9090, 2
  %v9345 = vrot.slane %v9056, 2
  %v9346 = vsel %vm387, %v9344, %v9345
  %v9347 = vrot.slane %v9091, 2
  %v9348 = vrot.slane %v8968, 2
  %v9349 = vsel %vm387, %v9347, %v9348
  %v9350 = vrot.slane %v9092, 2
  %v9351 = vrot.slane %v9059, 2
  %v9352 = vsel %vm387, %v9350, %v9351
  %9353 = vrot.lane.b32.xlu0 %v9295, 16
  %v9354 = vpop.permute.xlu0 %9353
  %9355 = vrot.lane.b32.xlu0 %v9294, 16
  %v9356 = vpop.permute.xlu0 %9355
  %9357 = vrot.lane.b32.xlu0 %v9298, 16
  %v9358 = vpop.permute.xlu0 %9357
  %9359 = vrot.lane.b32.xlu0 %v9297, 16
  %v9360 = vpop.permute.xlu0 %9359
  %9361 = vrot.lane.b32.xlu0 %v9301, 16
  %v9362 = vpop.permute.xlu0 %9361
  %9363 = vrot.lane.b32.xlu0 %v9300, 16
  %v9364 = vpop.permute.xlu0 %9363
  %9365 = vrot.lane.b32.xlu0 %v9304, 16
  %v9366 = vpop.permute.xlu0 %9365
  %9367 = vrot.lane.b32.xlu0 %v9303, 16
  %v9368 = vpop.permute.xlu0 %9367
  %9369 = vrot.lane.b32.xlu0 %v9307, 16
  %v9370 = vpop.permute.xlu0 %9369
  %9371 = vrot.lane.b32.xlu0 %v9306, 16
  %v9372 = vpop.permute.xlu0 %9371
  %9373 = vrot.lane.b32.xlu0 %v9310, 16
  %v9374 = vpop.permute.xlu0 %9373
  %9375 = vrot.lane.b32.xlu0 %v9309, 16
  %v9376 = vpop.permute.xlu0 %9375
  %9377 = vrot.lane.b32.xlu0 %v9313, 16
  %v9378 = vpop.permute.xlu0 %9377
  %9379 = vrot.lane.b32.xlu0 %v9312, 16
  %v9380 = vpop.permute.xlu0 %9379
  %9381 = vrot.lane.b32.xlu0 %v9316, 16
  %v9382 = vpop.permute.xlu0 %9381
  %9383 = vrot.lane.b32.xlu0 %v9315, 16
  %v9384 = vpop.permute.xlu0 %9383
  %9385 = vrot.lane.b32.xlu0 %v9319, 16
  %v9386 = vpop.permute.xlu0 %9385
  %9387 = vrot.lane.b32.xlu0 %v9318, 16
  %v9388 = vpop.permute.xlu0 %9387
  %9389 = vrot.lane.b32.xlu0 %v9322, 16
  %v9390 = vpop.permute.xlu0 %9389
  %9391 = vrot.lane.b32.xlu0 %v9321, 16
  %v9392 = vpop.permute.xlu0 %9391
  %9393 = vrot.lane.b32.xlu0 %v9325, 16
  %v9394 = vpop.permute.xlu0 %9393
  %9395 = vrot.lane.b32.xlu0 %v9324, 16
  %v9396 = vpop.permute.xlu0 %9395
  %9397 = vrot.lane.b32.xlu0 %v9328, 16
  %v9398 = vpop.permute.xlu0 %9397
  %9399 = vrot.lane.b32.xlu0 %v9327, 16
  %v9400 = vpop.permute.xlu0 %9399
  %9401 = vrot.lane.b32.xlu0 %v9331, 16
  %v9402 = vpop.permute.xlu0 %9401
  %9403 = vrot.lane.b32.xlu0 %v9330, 16
  %v9404 = vpop.permute.xlu0 %9403
  %9405 = vrot.lane.b32.xlu0 %v9334, 16
  %v9406 = vpop.permute.xlu0 %9405
  %9407 = vrot.lane.b32.xlu0 %v9333, 16
  %v9408 = vpop.permute.xlu0 %9407
  %9409 = vrot.lane.b32.xlu0 %v9337, 16
  %v9410 = vpop.permute.xlu0 %9409
  %9411 = vrot.lane.b32.xlu0 %v9336, 16
  %v9412 = vpop.permute.xlu0 %9411
  %9413 = vrot.lane.b32.xlu0 %v9340, 16
  %v9414 = vpop.permute.xlu0 %9413
  %9415 = vrot.lane.b32.xlu0 %v9339, 16
  %v9416 = vpop.permute.xlu0 %9415
  %9417 = vrot.lane.b32.xlu0 %v9343, 16
  %v9418 = vpop.permute.xlu0 %9417
  %9419 = vrot.lane.b32.xlu0 %v9342, 16
  %v9420 = vpop.permute.xlu0 %9419
  %9421 = vrot.lane.b32.xlu0 %v9346, 16
  %v9422 = vpop.permute.xlu0 %9421
  %9423 = vrot.lane.b32.xlu0 %v9345, 16
  %v9424 = vpop.permute.xlu0 %9423
  %9425 = vrot.lane.b32.xlu0 %v9349, 16
  %v9426 = vpop.permute.xlu0 %9425
  %9427 = vrot.lane.b32.xlu0 %v9348, 16
  %v9428 = vpop.permute.xlu0 %9427
  %9429 = vrot.lane.b32.xlu0 %v9352, 16
  %v9430 = vpop.permute.xlu0 %9429
  %9431 = vrot.lane.b32.xlu0 %v9351, 16
  %v9432 = vpop.permute.xlu0 %9431
  %v9473 = vcombine.low %v8888, %v9042
  %v9474 = vcombine.low %v8978, %v9060
  %9475 = vrot.lane.b32.xlu0 %v9074, 24
  %v9476 = vpop.permute.xlu0 %9475
  %9477 = vrot.lane.b32.xlu0 %v9029, 24
  %v9478 = vpop.permute.xlu0 %9477
  %9479 = vrot.lane.b32.xlu0 %v9075, 24
  %v9480 = vpop.permute.xlu0 %9479
  %9481 = vrot.lane.b32.xlu0 %v8833, 24
  %v9482 = vpop.permute.xlu0 %9481
  %9483 = vrot.lane.b32.xlu0 %v9076, 24
  %v9484 = vpop.permute.xlu0 %9483
  %9485 = vrot.lane.b32.xlu0 %v9032, 24
  %v9486 = vpop.permute.xlu0 %9485
  %9487 = vrot.lane.b32.xlu0 %v9077, 24
  %v9488 = vpop.permute.xlu0 %9487
  %9489 = vrot.lane.b32.xlu0 %v8848, 24
  %v9490 = vpop.permute.xlu0 %9489
  %9491 = vrot.lane.b32.xlu0 %v9078, 24
  %v9492 = vpop.permute.xlu0 %9491
  %9493 = vrot.lane.b32.xlu0 %v9035, 24
  %v9494 = vpop.permute.xlu0 %9493
  %9495 = vrot.lane.b32.xlu0 %v9079, 24
  %v9496 = vpop.permute.xlu0 %9495
  %9497 = vrot.lane.b32.xlu0 %v8863, 24
  %v9498 = vpop.permute.xlu0 %9497
  %9499 = vrot.lane.b32.xlu0 %v9080, 24
  %v9500 = vpop.permute.xlu0 %9499
  %9501 = vrot.lane.b32.xlu0 %v9038, 24
  %v9502 = vpop.permute.xlu0 %9501
  %9503 = vrot.lane.b32.xlu0 %v9081, 24
  %v9504 = vpop.permute.xlu0 %9503
  %9505 = vrot.lane.b32.xlu0 %v8878, 24
  %v9506 = vpop.permute.xlu0 %9505
  %9507 = vrot.lane.b32.xlu0 %v9082, 24
  %v9508 = vpop.permute.xlu0 %9507
  %9509 = vrot.lane.b32.xlu0 %v9041, 24
  %v9510 = vpop.permute.xlu0 %9509
  %9511 = vrot.lane.b32.xlu0 %v9473, 24
  %v9512 = vpop.permute.xlu0 %9511
  %9513 = vrot.lane.b32.xlu0 %v8893, 24
  %v9514 = vpop.permute.xlu0 %9513
  %9515 = vrot.lane.b32.xlu0 %v9084, 24
  %v9516 = vpop.permute.xlu0 %9515
  %9517 = vrot.lane.b32.xlu0 %v9047, 24
  %v9518 = vpop.permute.xlu0 %9517
  %9519 = vrot.lane.b32.xlu0 %v9085, 24
  %v9520 = vpop.permute.xlu0 %9519
  %9521 = vrot.lane.b32.xlu0 %v8923, 24
  %v9522 = vpop.permute.xlu0 %9521
  %9523 = vrot.lane.b32.xlu0 %v9086, 24
  %v9524 = vpop.permute.xlu0 %9523
  %9525 = vrot.lane.b32.xlu0 %v9050, 24
  %v9526 = vpop.permute.xlu0 %9525
  %9527 = vrot.lane.b32.xlu0 %v9087, 24
  %v9528 = vpop.permute.xlu0 %9527
  %9529 = vrot.lane.b32.xlu0 %v8938, 24
  %v9530 = vpop.permute.xlu0 %9529
  %9531 = vrot.lane.b32.xlu0 %v9088, 24
  %v9532 = vpop.permute.xlu0 %9531
  %9533 = vrot.lane.b32.xlu0 %v9053, 24
  %v9534 = vpop.permute.xlu0 %9533
  %9535 = vrot.lane.b32.xlu0 %v9089, 24
  %v9536 = vpop.permute.xlu0 %9535
  %9537 = vrot.lane.b32.xlu0 %v8953, 24
  %v9538 = vpop.permute.xlu0 %9537
  %9539 = vrot.lane.b32.xlu0 %v9090, 24
  %v9540 = vpop.permute.xlu0 %9539
  %9541 = vrot.lane.b32.xlu0 %v9056, 24
  %v9542 = vpop.permute.xlu0 %9541
  %9543 = vrot.lane.b32.xlu0 %v9091, 24
  %v9544 = vpop.permute.xlu0 %9543
  %9545 = vrot.lane.b32.xlu0 %v8968, 24
  %v9546 = vpop.permute.xlu0 %9545
  %9547 = vrot.lane.b32.xlu0 %v9092, 24
  %v9548 = vpop.permute.xlu0 %9547
  %9549 = vrot.lane.b32.xlu0 %v9059, 24
  %v9550 = vpop.permute.xlu0 %9549
  %9551 = vrot.lane.b32.xlu0 %v9474, 24
  %v9552 = vpop.permute.xlu0 %9551
  %9553 = vrot.lane.b32.xlu0 %v8983, 24
  %v9554 = vpop.permute.xlu0 %9553
  %v9595 = vrot.slane %v9473, 1
  %v9596 = vrot.slane %v8893, 1
  %v9597 = vsel %vm134, %v9595, %v9596
  %v9598 = vrot.slane %v9474, 1
  %v9599 = vrot.slane %v8983, 1
  %v9600 = vsel %vm134, %v9598, %v9599
  %9601 = vrot.lane.b32.xlu0 %v9118, 32
  %v9602 = vpop.permute.xlu0 %9601
  %9603 = vrot.lane.b32.xlu0 %v9117, 32
  %v9604 = vpop.permute.xlu0 %9603
  %9605 = vrot.lane.b32.xlu0 %v9121, 32
  %v9606 = vpop.permute.xlu0 %9605
  %9607 = vrot.lane.b32.xlu0 %v9120, 32
  %v9608 = vpop.permute.xlu0 %9607
  %9609 = vrot.lane.b32.xlu0 %v9124, 32
  %v9610 = vpop.permute.xlu0 %9609
  %9611 = vrot.lane.b32.xlu0 %v9123, 32
  %v9612 = vpop.permute.xlu0 %9611
  %9613 = vrot.lane.b32.xlu0 %v9127, 32
  %v9614 = vpop.permute.xlu0 %9613
  %9615 = vrot.lane.b32.xlu0 %v9126, 32
  %v9616 = vpop.permute.xlu0 %9615
  %9617 = vrot.lane.b32.xlu0 %v9130, 32
  %v9618 = vpop.permute.xlu0 %9617
  %9619 = vrot.lane.b32.xlu0 %v9129, 32
  %v9620 = vpop.permute.xlu0 %9619
  %9621 = vrot.lane.b32.xlu0 %v9133, 32
  %v9622 = vpop.permute.xlu0 %9621
  %9623 = vrot.lane.b32.xlu0 %v9132, 32
  %v9624 = vpop.permute.xlu0 %9623
  %9625 = vrot.lane.b32.xlu0 %v9136, 32
  %v9626 = vpop.permute.xlu0 %9625
  %9627 = vrot.lane.b32.xlu0 %v9135, 32
  %v9628 = vpop.permute.xlu0 %9627
  %9629 = vrot.lane.b32.xlu0 %v9139, 32
  %v9630 = vpop.permute.xlu0 %9629
  %9631 = vrot.lane.b32.xlu0 %v9138, 32
  %v9632 = vpop.permute.xlu0 %9631
  %9633 = vrot.lane.b32.xlu0 %v9142, 32
  %v9634 = vpop.permute.xlu0 %9633
  %9635 = vrot.lane.b32.xlu0 %v9141, 32
  %v9636 = vpop.permute.xlu0 %9635
  %9637 = vrot.lane.b32.xlu0 %v9597, 32
  %v9638 = vpop.permute.xlu0 %9637
  %9639 = vrot.lane.b32.xlu0 %v9596, 32
  %v9640 = vpop.permute.xlu0 %9639
  %9641 = vrot.lane.b32.xlu0 %v9148, 32
  %v9642 = vpop.permute.xlu0 %9641
  %9643 = vrot.lane.b32.xlu0 %v9147, 32
  %v9644 = vpop.permute.xlu0 %9643
  %9645 = vrot.lane.b32.xlu0 %v9151, 32
  %v9646 = vpop.permute.xlu0 %9645
  %9647 = vrot.lane.b32.xlu0 %v9150, 32
  %v9648 = vpop.permute.xlu0 %9647
  %9649 = vrot.lane.b32.xlu0 %v9154, 32
  %v9650 = vpop.permute.xlu0 %9649
  %9651 = vrot.lane.b32.xlu0 %v9153, 32
  %v9652 = vpop.permute.xlu0 %9651
  %9653 = vrot.lane.b32.xlu0 %v9157, 32
  %v9654 = vpop.permute.xlu0 %9653
  %9655 = vrot.lane.b32.xlu0 %v9156, 32
  %v9656 = vpop.permute.xlu0 %9655
  %9657 = vrot.lane.b32.xlu0 %v9160, 32
  %v9658 = vpop.permute.xlu0 %9657
  %9659 = vrot.lane.b32.xlu0 %v9159, 32
  %v9660 = vpop.permute.xlu0 %9659
  %9661 = vrot.lane.b32.xlu0 %v9163, 32
  %v9662 = vpop.permute.xlu0 %9661
  %9663 = vrot.lane.b32.xlu0 %v9162, 32
  %v9664 = vpop.permute.xlu0 %9663
  %9665 = vrot.lane.b32.xlu0 %v9166, 32
  %v9666 = vpop.permute.xlu0 %9665
  %9667 = vrot.lane.b32.xlu0 %v9165, 32
  %v9668 = vpop.permute.xlu0 %9667
  %9669 = vrot.lane.b32.xlu0 %v9169, 32
  %v9670 = vpop.permute.xlu0 %9669
  %9671 = vrot.lane.b32.xlu0 %v9168, 32
  %v9672 = vpop.permute.xlu0 %9671
  %9673 = vrot.lane.b32.xlu0 %v9172, 32
  %v9674 = vpop.permute.xlu0 %9673
  %9675 = vrot.lane.b32.xlu0 %v9171, 32
  %v9676 = vpop.permute.xlu0 %9675
  %9677 = vrot.lane.b32.xlu0 %v9600, 32
  %v9678 = vpop.permute.xlu0 %9677
  %9679 = vrot.lane.b32.xlu0 %v9599, 32
  %v9680 = vpop.permute.xlu0 %9679
  %v9721 = vrot.slane %v9473, 2
  %v9722 = vrot.slane %v8893, 2
  %v9723 = vsel %vm387, %v9721, %v9722
  %v9724 = vrot.slane %v9474, 2
  %v9725 = vrot.slane %v8983, 2
  %v9726 = vsel %vm387, %v9724, %v9725
  %9727 = vrot.lane.b32.xlu0 %v9298, 40
  %v9728 = vpop.permute.xlu0 %9727
  %9729 = vrot.lane.b32.xlu0 %v9297, 40
  %v9730 = vpop.permute.xlu0 %9729
  %9731 = vrot.lane.b32.xlu0 %v9301, 40
  %v9732 = vpop.permute.xlu0 %9731
  %9733 = vrot.lane.b32.xlu0 %v9300, 40
  %v9734 = vpop.permute.xlu0 %9733
  %9735 = vrot.lane.b32.xlu0 %v9304, 40
  %v9736 = vpop.permute.xlu0 %9735
  %9737 = vrot.lane.b32.xlu0 %v9303, 40
  %v9738 = vpop.permute.xlu0 %9737
  %9739 = vrot.lane.b32.xlu0 %v9307, 40
  %v9740 = vpop.permute.xlu0 %9739
  %9741 = vrot.lane.b32.xlu0 %v9306, 40
  %v9742 = vpop.permute.xlu0 %9741
  %9743 = vrot.lane.b32.xlu0 %v9310, 40
  %v9744 = vpop.permute.xlu0 %9743
  %9745 = vrot.lane.b32.xlu0 %v9309, 40
  %v9746 = vpop.permute.xlu0 %9745
  %9747 = vrot.lane.b32.xlu0 %v9313, 40
  %v9748 = vpop.permute.xlu0 %9747
  %9749 = vrot.lane.b32.xlu0 %v9312, 40
  %v9750 = vpop.permute.xlu0 %9749
  %9751 = vrot.lane.b32.xlu0 %v9316, 40
  %v9752 = vpop.permute.xlu0 %9751
  %9753 = vrot.lane.b32.xlu0 %v9315, 40
  %v9754 = vpop.permute.xlu0 %9753
  %9755 = vrot.lane.b32.xlu0 %v9319, 40
  %v9756 = vpop.permute.xlu0 %9755
  %9757 = vrot.lane.b32.xlu0 %v9318, 40
  %v9758 = vpop.permute.xlu0 %9757
  %9759 = vrot.lane.b32.xlu0 %v9322, 40
  %v9760 = vpop.permute.xlu0 %9759
  %9761 = vrot.lane.b32.xlu0 %v9321, 40
  %v9762 = vpop.permute.xlu0 %9761
  %9763 = vrot.lane.b32.xlu0 %v9723, 40
  %v9764 = vpop.permute.xlu0 %9763
  %9765 = vrot.lane.b32.xlu0 %v9722, 40
  %v9766 = vpop.permute.xlu0 %9765
  %9767 = vrot.lane.b32.xlu0 %v9328, 40
  %v9768 = vpop.permute.xlu0 %9767
  %9769 = vrot.lane.b32.xlu0 %v9327, 40
  %v9770 = vpop.permute.xlu0 %9769
  %9771 = vrot.lane.b32.xlu0 %v9331, 40
  %v9772 = vpop.permute.xlu0 %9771
  %9773 = vrot.lane.b32.xlu0 %v9330, 40
  %v9774 = vpop.permute.xlu0 %9773
  %9775 = vrot.lane.b32.xlu0 %v9334, 40
  %v9776 = vpop.permute.xlu0 %9775
  %9777 = vrot.lane.b32.xlu0 %v9333, 40
  %v9778 = vpop.permute.xlu0 %9777
  %9779 = vrot.lane.b32.xlu0 %v9337, 40
  %v9780 = vpop.permute.xlu0 %9779
  %9781 = vrot.lane.b32.xlu0 %v9336, 40
  %v9782 = vpop.permute.xlu0 %9781
  %9783 = vrot.lane.b32.xlu0 %v9340, 40
  %v9784 = vpop.permute.xlu0 %9783
  %9785 = vrot.lane.b32.xlu0 %v9339, 40
  %v9786 = vpop.permute.xlu0 %9785
  %9787 = vrot.lane.b32.xlu0 %v9343, 40
  %v9788 = vpop.permute.xlu0 %9787
  %9789 = vrot.lane.b32.xlu0 %v9342, 40
  %v9790 = vpop.permute.xlu0 %9789
  %9791 = vrot.lane.b32.xlu0 %v9346, 40
  %v9792 = vpop.permute.xlu0 %9791
  %9793 = vrot.lane.b32.xlu0 %v9345, 40
  %v9794 = vpop.permute.xlu0 %9793
  %9795 = vrot.lane.b32.xlu0 %v9349, 40
  %v9796 = vpop.permute.xlu0 %9795
  %9797 = vrot.lane.b32.xlu0 %v9348, 40
  %v9798 = vpop.permute.xlu0 %9797
  %9799 = vrot.lane.b32.xlu0 %v9352, 40
  %v9800 = vpop.permute.xlu0 %9799
  %9801 = vrot.lane.b32.xlu0 %v9351, 40
  %v9802 = vpop.permute.xlu0 %9801
  %9803 = vrot.lane.b32.xlu0 %v9726, 40
  %v9804 = vpop.permute.xlu0 %9803
  %9805 = vrot.lane.b32.xlu0 %v9725, 40
  %v9806 = vpop.permute.xlu0 %9805
  %v9847 = vcombine.low %v9043, %v8898
  %v9848 = vcombine.low %v9061, %v8988
  %9849 = vrot.lane.b32.xlu0 %v9075, 48
  %v9850 = vpop.permute.xlu0 %9849
  %9851 = vrot.lane.b32.xlu0 %v8833, 48
  %v9852 = vpop.permute.xlu0 %9851
  %9853 = vrot.lane.b32.xlu0 %v9076, 48
  %v9854 = vpop.permute.xlu0 %9853
  %9855 = vrot.lane.b32.xlu0 %v9032, 48
  %v9856 = vpop.permute.xlu0 %9855
  %9857 = vrot.lane.b32.xlu0 %v9077, 48
  %v9858 = vpop.permute.xlu0 %9857
  %9859 = vrot.lane.b32.xlu0 %v8848, 48
  %v9860 = vpop.permute.xlu0 %9859
  %9861 = vrot.lane.b32.xlu0 %v9078, 48
  %v9862 = vpop.permute.xlu0 %9861
  %9863 = vrot.lane.b32.xlu0 %v9035, 48
  %v9864 = vpop.permute.xlu0 %9863
  %9865 = vrot.lane.b32.xlu0 %v9079, 48
  %v9866 = vpop.permute.xlu0 %9865
  %9867 = vrot.lane.b32.xlu0 %v8863, 48
  %v9868 = vpop.permute.xlu0 %9867
  %9869 = vrot.lane.b32.xlu0 %v9080, 48
  %v9870 = vpop.permute.xlu0 %9869
  %9871 = vrot.lane.b32.xlu0 %v9038, 48
  %v9872 = vpop.permute.xlu0 %9871
  %9873 = vrot.lane.b32.xlu0 %v9081, 48
  %v9874 = vpop.permute.xlu0 %9873
  %9875 = vrot.lane.b32.xlu0 %v8878, 48
  %v9876 = vpop.permute.xlu0 %9875
  %9877 = vrot.lane.b32.xlu0 %v9082, 48
  %v9878 = vpop.permute.xlu0 %9877
  %9879 = vrot.lane.b32.xlu0 %v9041, 48
  %v9880 = vpop.permute.xlu0 %9879
  %9881 = vrot.lane.b32.xlu0 %v9473, 48
  %v9882 = vpop.permute.xlu0 %9881
  %9883 = vrot.lane.b32.xlu0 %v8893, 48
  %v9884 = vpop.permute.xlu0 %9883
  %9885 = vrot.lane.b32.xlu0 %v9847, 48
  %v9886 = vpop.permute.xlu0 %9885
  %9887 = vrot.lane.b32.xlu0 %v9044, 48
  %v9888 = vpop.permute.xlu0 %9887
  %9889 = vrot.lane.b32.xlu0 %v9085, 48
  %v9890 = vpop.permute.xlu0 %9889
  %9891 = vrot.lane.b32.xlu0 %v8923, 48
  %v9892 = vpop.permute.xlu0 %9891
  %9893 = vrot.lane.b32.xlu0 %v9086, 48
  %v9894 = vpop.permute.xlu0 %9893
  %9895 = vrot.lane.b32.xlu0 %v9050, 48
  %v9896 = vpop.permute.xlu0 %9895
  %9897 = vrot.lane.b32.xlu0 %v9087, 48
  %v9898 = vpop.permute.xlu0 %9897
  %9899 = vrot.lane.b32.xlu0 %v8938, 48
  %v9900 = vpop.permute.xlu0 %9899
  %9901 = vrot.lane.b32.xlu0 %v9088, 48
  %v9902 = vpop.permute.xlu0 %9901
  %9903 = vrot.lane.b32.xlu0 %v9053, 48
  %v9904 = vpop.permute.xlu0 %9903
  %9905 = vrot.lane.b32.xlu0 %v9089, 48
  %v9906 = vpop.permute.xlu0 %9905
  %9907 = vrot.lane.b32.xlu0 %v8953, 48
  %v9908 = vpop.permute.xlu0 %9907
  %9909 = vrot.lane.b32.xlu0 %v9090, 48
  %v9910 = vpop.permute.xlu0 %9909
  %9911 = vrot.lane.b32.xlu0 %v9056, 48
  %v9912 = vpop.permute.xlu0 %9911
  %9913 = vrot.lane.b32.xlu0 %v9091, 48
  %v9914 = vpop.permute.xlu0 %9913
  %9915 = vrot.lane.b32.xlu0 %v8968, 48
  %v9916 = vpop.permute.xlu0 %9915
  %9917 = vrot.lane.b32.xlu0 %v9092, 48
  %v9918 = vpop.permute.xlu0 %9917
  %9919 = vrot.lane.b32.xlu0 %v9059, 48
  %v9920 = vpop.permute.xlu0 %9919
  %9921 = vrot.lane.b32.xlu0 %v9474, 48
  %v9922 = vpop.permute.xlu0 %9921
  %9923 = vrot.lane.b32.xlu0 %v8983, 48
  %v9924 = vpop.permute.xlu0 %9923
  %9925 = vrot.lane.b32.xlu0 %v9848, 48
  %v9926 = vpop.permute.xlu0 %9925
  %9927 = vrot.lane.b32.xlu0 %v9062, 48
  %v9928 = vpop.permute.xlu0 %9927
  %v9969 = vrot.slane %v9847, 1
  %v9970 = vrot.slane %v9044, 1
  %v9971 = vsel %vm134, %v9969, %v9970
  %v9972 = vrot.slane %v9848, 1
  %v9973 = vrot.slane %v9062, 1
  %v9974 = vsel %vm134, %v9972, %v9973
  %9975 = vrot.lane.b32.xlu0 %v9121, 56
  %v9976 = vpop.permute.xlu0 %9975
  %9977 = vrot.lane.b32.xlu0 %v9120, 56
  %v9978 = vpop.permute.xlu0 %9977
  %9979 = vrot.lane.b32.xlu0 %v9124, 56
  %v9980 = vpop.permute.xlu0 %9979
  %9981 = vrot.lane.b32.xlu0 %v9123, 56
  %v9982 = vpop.permute.xlu0 %9981
  %9983 = vrot.lane.b32.xlu0 %v9127, 56
  %v9984 = vpop.permute.xlu0 %9983
  %9985 = vrot.lane.b32.xlu0 %v9126, 56
  %v9986 = vpop.permute.xlu0 %9985
  %9987 = vrot.lane.b32.xlu0 %v9130, 56
  %v9988 = vpop.permute.xlu0 %9987
  %9989 = vrot.lane.b32.xlu0 %v9129, 56
  %v9990 = vpop.permute.xlu0 %9989
  %9991 = vrot.lane.b32.xlu0 %v9133, 56
  %v9992 = vpop.permute.xlu0 %9991
  %9993 = vrot.lane.b32.xlu0 %v9132, 56
  %v9994 = vpop.permute.xlu0 %9993
  %9995 = vrot.lane.b32.xlu0 %v9136, 56
  %v9996 = vpop.permute.xlu0 %9995
  %9997 = vrot.lane.b32.xlu0 %v9135, 56
  %v9998 = vpop.permute.xlu0 %9997
  %9999 = vrot.lane.b32.xlu0 %v9139, 56
  %v10000 = vpop.permute.xlu0 %9999
  %10001 = vrot.lane.b32.xlu0 %v9138, 56
  %v10002 = vpop.permute.xlu0 %10001
  %10003 = vrot.lane.b32.xlu0 %v9142, 56
  %v10004 = vpop.permute.xlu0 %10003
  %10005 = vrot.lane.b32.xlu0 %v9141, 56
  %v10006 = vpop.permute.xlu0 %10005
  %10007 = vrot.lane.b32.xlu0 %v9597, 56
  %v10008 = vpop.permute.xlu0 %10007
  %10009 = vrot.lane.b32.xlu0 %v9596, 56
  %v10010 = vpop.permute.xlu0 %10009
  %10011 = vrot.lane.b32.xlu0 %v9971, 56
  %v10012 = vpop.permute.xlu0 %10011
  %10013 = vrot.lane.b32.xlu0 %v9970, 56
  %v10014 = vpop.permute.xlu0 %10013
  %10015 = vrot.lane.b32.xlu0 %v9151, 56
  %v10016 = vpop.permute.xlu0 %10015
  %10017 = vrot.lane.b32.xlu0 %v9150, 56
  %v10018 = vpop.permute.xlu0 %10017
  %10019 = vrot.lane.b32.xlu0 %v9154, 56
  %v10020 = vpop.permute.xlu0 %10019
  %10021 = vrot.lane.b32.xlu0 %v9153, 56
  %v10022 = vpop.permute.xlu0 %10021
  %10023 = vrot.lane.b32.xlu0 %v9157, 56
  %v10024 = vpop.permute.xlu0 %10023
  %10025 = vrot.lane.b32.xlu0 %v9156, 56
  %v10026 = vpop.permute.xlu0 %10025
  %10027 = vrot.lane.b32.xlu0 %v9160, 56
  %v10028 = vpop.permute.xlu0 %10027
  %10029 = vrot.lane.b32.xlu0 %v9159, 56
  %v10030 = vpop.permute.xlu0 %10029
  %10031 = vrot.lane.b32.xlu0 %v9163, 56
  %v10032 = vpop.permute.xlu0 %10031
  %10033 = vrot.lane.b32.xlu0 %v9162, 56
  %v10034 = vpop.permute.xlu0 %10033
  %10035 = vrot.lane.b32.xlu0 %v9166, 56
  %v10036 = vpop.permute.xlu0 %10035
  %10037 = vrot.lane.b32.xlu0 %v9165, 56
  %v10038 = vpop.permute.xlu0 %10037
  %10039 = vrot.lane.b32.xlu0 %v9169, 56
  %v10040 = vpop.permute.xlu0 %10039
  %10041 = vrot.lane.b32.xlu0 %v9168, 56
  %v10042 = vpop.permute.xlu0 %10041
  %10043 = vrot.lane.b32.xlu0 %v9172, 56
  %v10044 = vpop.permute.xlu0 %10043
  %10045 = vrot.lane.b32.xlu0 %v9171, 56
  %v10046 = vpop.permute.xlu0 %10045
  %10047 = vrot.lane.b32.xlu0 %v9600, 56
  %v10048 = vpop.permute.xlu0 %10047
  %10049 = vrot.lane.b32.xlu0 %v9599, 56
  %v10050 = vpop.permute.xlu0 %10049
  %10051 = vrot.lane.b32.xlu0 %v9974, 56
  %v10052 = vpop.permute.xlu0 %10051
  %10053 = vrot.lane.b32.xlu0 %v9973, 56
  %v10054 = vpop.permute.xlu0 %10053
  %v10095 = vrot.slane %v9847, 2
  %v10096 = vrot.slane %v9044, 2
  %v10097 = vsel %vm387, %v10095, %v10096
  %v10098 = vrot.slane %v9848, 2
  %v10099 = vrot.slane %v9062, 2
  %v10100 = vsel %vm387, %v10098, %v10099
  %10101 = vrot.lane.b32.xlu0 %v9301, 64
  %v10102 = vpop.permute.xlu0 %10101
  %10103 = vrot.lane.b32.xlu0 %v9300, 64
  %v10104 = vpop.permute.xlu0 %10103
  %10105 = vrot.lane.b32.xlu0 %v9304, 64
  %v10106 = vpop.permute.xlu0 %10105
  %10107 = vrot.lane.b32.xlu0 %v9303, 64
  %v10108 = vpop.permute.xlu0 %10107
  %10109 = vrot.lane.b32.xlu0 %v9307, 64
  %v10110 = vpop.permute.xlu0 %10109
  %10111 = vrot.lane.b32.xlu0 %v9306, 64
  %v10112 = vpop.permute.xlu0 %10111
  %10113 = vrot.lane.b32.xlu0 %v9310, 64
  %v10114 = vpop.permute.xlu0 %10113
  %10115 = vrot.lane.b32.xlu0 %v9309, 64
  %v10116 = vpop.permute.xlu0 %10115
  %10117 = vrot.lane.b32.xlu0 %v9313, 64
  %v10118 = vpop.permute.xlu0 %10117
  %10119 = vrot.lane.b32.xlu0 %v9312, 64
  %v10120 = vpop.permute.xlu0 %10119
  %10121 = vrot.lane.b32.xlu0 %v9316, 64
  %v10122 = vpop.permute.xlu0 %10121
  %10123 = vrot.lane.b32.xlu0 %v9315, 64
  %v10124 = vpop.permute.xlu0 %10123
  %10125 = vrot.lane.b32.xlu0 %v9319, 64
  %v10126 = vpop.permute.xlu0 %10125
  %10127 = vrot.lane.b32.xlu0 %v9318, 64
  %v10128 = vpop.permute.xlu0 %10127
  %10129 = vrot.lane.b32.xlu0 %v9322, 64
  %v10130 = vpop.permute.xlu0 %10129
  %10131 = vrot.lane.b32.xlu0 %v9321, 64
  %v10132 = vpop.permute.xlu0 %10131
  %10133 = vrot.lane.b32.xlu0 %v9723, 64
  %v10134 = vpop.permute.xlu0 %10133
  %10135 = vrot.lane.b32.xlu0 %v9722, 64
  %v10136 = vpop.permute.xlu0 %10135
  %10137 = vrot.lane.b32.xlu0 %v10097, 64
  %v10138 = vpop.permute.xlu0 %10137
  %10139 = vrot.lane.b32.xlu0 %v10096, 64
  %v10140 = vpop.permute.xlu0 %10139
  %10141 = vrot.lane.b32.xlu0 %v9331, 64
  %v10142 = vpop.permute.xlu0 %10141
  %10143 = vrot.lane.b32.xlu0 %v9330, 64
  %v10144 = vpop.permute.xlu0 %10143
  %10145 = vrot.lane.b32.xlu0 %v9334, 64
  %v10146 = vpop.permute.xlu0 %10145
  %10147 = vrot.lane.b32.xlu0 %v9333, 64
  %v10148 = vpop.permute.xlu0 %10147
  %10149 = vrot.lane.b32.xlu0 %v9337, 64
  %v10150 = vpop.permute.xlu0 %10149
  %10151 = vrot.lane.b32.xlu0 %v9336, 64
  %v10152 = vpop.permute.xlu0 %10151
  %10153 = vrot.lane.b32.xlu0 %v9340, 64
  %v10154 = vpop.permute.xlu0 %10153
  %10155 = vrot.lane.b32.xlu0 %v9339, 64
  %v10156 = vpop.permute.xlu0 %10155
  %10157 = vrot.lane.b32.xlu0 %v9343, 64
  %v10158 = vpop.permute.xlu0 %10157
  %10159 = vrot.lane.b32.xlu0 %v9342, 64
  %v10160 = vpop.permute.xlu0 %10159
  %10161 = vrot.lane.b32.xlu0 %v9346, 64
  %v10162 = vpop.permute.xlu0 %10161
  %10163 = vrot.lane.b32.xlu0 %v9345, 64
  %v10164 = vpop.permute.xlu0 %10163
  %10165 = vrot.lane.b32.xlu0 %v9349, 64
  %v10166 = vpop.permute.xlu0 %10165
  %10167 = vrot.lane.b32.xlu0 %v9348, 64
  %v10168 = vpop.permute.xlu0 %10167
  %10169 = vrot.lane.b32.xlu0 %v9352, 64
  %v10170 = vpop.permute.xlu0 %10169
  %10171 = vrot.lane.b32.xlu0 %v9351, 64
  %v10172 = vpop.permute.xlu0 %10171
  %10173 = vrot.lane.b32.xlu0 %v9726, 64
  %v10174 = vpop.permute.xlu0 %10173
  %10175 = vrot.lane.b32.xlu0 %v9725, 64
  %v10176 = vpop.permute.xlu0 %10175
  %10177 = vrot.lane.b32.xlu0 %v10100, 64
  %v10178 = vpop.permute.xlu0 %10177
  %10179 = vrot.lane.b32.xlu0 %v10099, 64
  %v10180 = vpop.permute.xlu0 %10179
  %vm10221 = vcmask 64512
  %v10222 = vsel %vm10221, %v9073, %v9174
  %v10223 = vsel %vm10221, %v8818, %v9176
  %v10224 = vsel %vm10221, %v9074, %v9178
  %v10225 = vsel %vm10221, %v9029, %v9180
  %v10226 = vsel %vm10221, %v9075, %v9182
  %v10227 = vsel %vm10221, %v8833, %v9184
  %v10228 = vsel %vm10221, %v9076, %v9186
  %v10229 = vsel %vm10221, %v9032, %v9188
  %v10230 = vsel %vm10221, %v9077, %v9190
  %v10231 = vsel %vm10221, %v8848, %v9192
  %v10232 = vsel %vm10221, %v9078, %v9194
  %v10233 = vsel %vm10221, %v9035, %v9196
  %v10234 = vsel %vm10221, %v9079, %v9198
  %v10235 = vsel %vm10221, %v8863, %v9200
  %v10236 = vsel %vm10221, %v9080, %v9202
  %v10237 = vsel %vm10221, %v9038, %v9204
  %v10238 = vsel %vm10221, %v9081, %v9206
  %v10239 = vsel %vm10221, %v8878, %v9208
  %v10240 = vsel %vm10221, %v9082, %v9210
  %v10241 = vsel %vm10221, %v9041, %v9212
  %v10242 = vsel %vm10221, %v9083, %v9214
  %v10243 = vsel %vm10221, %v8908, %v9216
  %v10244 = vsel %vm10221, %v9084, %v9218
  %v10245 = vsel %vm10221, %v9047, %v9220
  %v10246 = vsel %vm10221, %v9085, %v9222
  %v10247 = vsel %vm10221, %v8923, %v9224
  %v10248 = vsel %vm10221, %v9086, %v9226
  %v10249 = vsel %vm10221, %v9050, %v9228
  %v10250 = vsel %vm10221, %v9087, %v9230
  %v10251 = vsel %vm10221, %v8938, %v9232
  %v10252 = vsel %vm10221, %v9088, %v9234
  %v10253 = vsel %vm10221, %v9053, %v9236
  %v10254 = vsel %vm10221, %v9089, %v9238
  %v10255 = vsel %vm10221, %v8953, %v9240
  %v10256 = vsel %vm10221, %v9090, %v9242
  %v10257 = vsel %vm10221, %v9056, %v9244
  %v10258 = vsel %vm10221, %v9091, %v9246
  %v10259 = vsel %vm10221, %v8968, %v9248
  %v10260 = vsel %vm10221, %v9092, %v9250
  %v10261 = vsel %vm10221, %v9059, %v9252
  %vm10262 = vcmask 130048
  %v10263 = vsel %vm10262, %v10222, %v9354
  %v10264 = vsel %vm10262, %v10223, %v9356
  %v10265 = vsel %vm10262, %v10224, %v9358
  %v10266 = vsel %vm10262, %v10225, %v9360
  %v10267 = vsel %vm10262, %v10226, %v9362
  %v10268 = vsel %vm10262, %v10227, %v9364
  %v10269 = vsel %vm10262, %v10228, %v9366
  %v10270 = vsel %vm10262, %v10229, %v9368
  %v10271 = vsel %vm10262, %v10230, %v9370
  %v10272 = vsel %vm10262, %v10231, %v9372
  %v10273 = vsel %vm10262, %v10232, %v9374
  %v10274 = vsel %vm10262, %v10233, %v9376
  %v10275 = vsel %vm10262, %v10234, %v9378
  %v10276 = vsel %vm10262, %v10235, %v9380
  %v10277 = vsel %vm10262, %v10236, %v9382
  %v10278 = vsel %vm10262, %v10237, %v9384
  %v10279 = vsel %vm10262, %v10238, %v9386
  %v10280 = vsel %vm10262, %v10239, %v9388
  %v10281 = vsel %vm10262, %v10240, %v9390
  %v10282 = vsel %vm10262, %v10241, %v9392
  %v10283 = vsel %vm10262, %v10242, %v9394
  %v10284 = vsel %vm10262, %v10243, %v9396
  %v10285 = vsel %vm10262, %v10244, %v9398
  %v10286 = vsel %vm10262, %v10245, %v9400
  %v10287 = vsel %vm10262, %v10246, %v9402
  %v10288 = vsel %vm10262, %v10247, %v9404
  %v10289 = vsel %vm10262, %v10248, %v9406
  %v10290 = vsel %vm10262, %v10249, %v9408
  %v10291 = vsel %vm10262, %v10250, %v9410
  %v10292 = vsel %vm10262, %v10251, %v9412
  %v10293 = vsel %vm10262, %v10252, %v9414
  %v10294 = vsel %vm10262, %v10253, %v9416
  %v10295 = vsel %vm10262, %v10254, %v9418
  %v10296 = vsel %vm10262, %v10255, %v9420
  %v10297 = vsel %vm10262, %v10256, %v9422
  %v10298 = vsel %vm10262, %v10257, %v9424
  %v10299 = vsel %vm10262, %v10258, %v9426
  %v10300 = vsel %vm10262, %v10259, %v9428
  %v10301 = vsel %vm10262, %v10260, %v9430
  %v10302 = vsel %vm10262, %v10261, %v9432
  %v10303 = vsel %vm2079, %v10263, %v9476
  %v10304 = vsel %vm2079, %v10264, %v9478
  %v10305 = vsel %vm2079, %v10265, %v9480
  %v10306 = vsel %vm2079, %v10266, %v9482
  %v10307 = vsel %vm2079, %v10267, %v9484
  %v10308 = vsel %vm2079, %v10268, %v9486
  %v10309 = vsel %vm2079, %v10269, %v9488
  %v10310 = vsel %vm2079, %v10270, %v9490
  %v10311 = vsel %vm2079, %v10271, %v9492
  %v10312 = vsel %vm2079, %v10272, %v9494
  %v10313 = vsel %vm2079, %v10273, %v9496
  %v10314 = vsel %vm2079, %v10274, %v9498
  %v10315 = vsel %vm2079, %v10275, %v9500
  %v10316 = vsel %vm2079, %v10276, %v9502
  %v10317 = vsel %vm2079, %v10277, %v9504
  %v10318 = vsel %vm2079, %v10278, %v9506
  %v10319 = vsel %vm2079, %v10279, %v9508
  %v10320 = vsel %vm2079, %v10280, %v9510
  %v10321 = vsel %vm2079, %v10281, %v9512
  %v10322 = vsel %vm2079, %v10282, %v9514
  %v10323 = vsel %vm2079, %v10283, %v9516
  %v10324 = vsel %vm2079, %v10284, %v9518
  %v10325 = vsel %vm2079, %v10285, %v9520
  %v10326 = vsel %vm2079, %v10286, %v9522
  %v10327 = vsel %vm2079, %v10287, %v9524
  %v10328 = vsel %vm2079, %v10288, %v9526
  %v10329 = vsel %vm2079, %v10289, %v9528
  %v10330 = vsel %vm2079, %v10290, %v9530
  %v10331 = vsel %vm2079, %v10291, %v9532
  %v10332 = vsel %vm2079, %v10292, %v9534
  %v10333 = vsel %vm2079, %v10293, %v9536
  %v10334 = vsel %vm2079, %v10294, %v9538
  %v10335 = vsel %vm2079, %v10295, %v9540
  %v10336 = vsel %vm2079, %v10296, %v9542
  %v10337 = vsel %vm2079, %v10297, %v9544
  %v10338 = vsel %vm2079, %v10298, %v9546
  %v10339 = vsel %vm2079, %v10299, %v9548
  %v10340 = vsel %vm2079, %v10300, %v9550
  %v10341 = vsel %vm2079, %v10301, %v9552
  %v10342 = vsel %vm2079, %v10302, %v9554
  %vm10343 = vcmask 261120
  %v10344 = vsel %vm10343, %v10303, %v9602
  %v10345 = vsel %vm10343, %v10304, %v9604
  %v10346 = vsel %vm10343, %v10305, %v9606
  %v10347 = vsel %vm10343, %v10306, %v9608
  %v10348 = vsel %vm10343, %v10307, %v9610
  %v10349 = vsel %vm10343, %v10308, %v9612
  %v10350 = vsel %vm10343, %v10309, %v9614
  %v10351 = vsel %vm10343, %v10310, %v9616
  %v10352 = vsel %vm10343, %v10311, %v9618
  %v10353 = vsel %vm10343, %v10312, %v9620
  %v10354 = vsel %vm10343, %v10313, %v9622
  %v10355 = vsel %vm10343, %v10314, %v9624
  %v10356 = vsel %vm10343, %v10315, %v9626
  %v10357 = vsel %vm10343, %v10316, %v9628
  %v10358 = vsel %vm10343, %v10317, %v9630
  %v10359 = vsel %vm10343, %v10318, %v9632
  %v10360 = vsel %vm10343, %v10319, %v9634
  %v10361 = vsel %vm10343, %v10320, %v9636
  %v10362 = vsel %vm10343, %v10321, %v9638
  %v10363 = vsel %vm10343, %v10322, %v9640
  %v10364 = vsel %vm10343, %v10323, %v9642
  %v10365 = vsel %vm10343, %v10324, %v9644
  %v10366 = vsel %vm10343, %v10325, %v9646
  %v10367 = vsel %vm10343, %v10326, %v9648
  %v10368 = vsel %vm10343, %v10327, %v9650
  %v10369 = vsel %vm10343, %v10328, %v9652
  %v10370 = vsel %vm10343, %v10329, %v9654
  %v10371 = vsel %vm10343, %v10330, %v9656
  %v10372 = vsel %vm10343, %v10331, %v9658
  %v10373 = vsel %vm10343, %v10332, %v9660
  %v10374 = vsel %vm10343, %v10333, %v9662
  %v10375 = vsel %vm10343, %v10334, %v9664
  %v10376 = vsel %vm10343, %v10335, %v9666
  %v10377 = vsel %vm10343, %v10336, %v9668
  %v10378 = vsel %vm10343, %v10337, %v9670
  %v10379 = vsel %vm10343, %v10338, %v9672
  %v10380 = vsel %vm10343, %v10339, %v9674
  %v10381 = vsel %vm10343, %v10340, %v9676
  %v10382 = vsel %vm10343, %v10341, %v9678
  %v10383 = vsel %vm10343, %v10342, %v9680
  %vm10384 = vcmask 326656
  %v10385 = vsel %vm10384, %v10344, %v9728
  %v10386 = vsel %vm10384, %v10345, %v9730
  %v10387 = vsel %vm10384, %v10346, %v9732
  %v10388 = vsel %vm10384, %v10347, %v9734
  %v10389 = vsel %vm10384, %v10348, %v9736
  %v10390 = vsel %vm10384, %v10349, %v9738
  %v10391 = vsel %vm10384, %v10350, %v9740
  %v10392 = vsel %vm10384, %v10351, %v9742
  %v10393 = vsel %vm10384, %v10352, %v9744
  %v10394 = vsel %vm10384, %v10353, %v9746
  %v10395 = vsel %vm10384, %v10354, %v9748
  %v10396 = vsel %vm10384, %v10355, %v9750
  %v10397 = vsel %vm10384, %v10356, %v9752
  %v10398 = vsel %vm10384, %v10357, %v9754
  %v10399 = vsel %vm10384, %v10358, %v9756
  %v10400 = vsel %vm10384, %v10359, %v9758
  %v10401 = vsel %vm10384, %v10360, %v9760
  %v10402 = vsel %vm10384, %v10361, %v9762
  %v10403 = vsel %vm10384, %v10362, %v9764
  %v10404 = vsel %vm10384, %v10363, %v9766
  %v10405 = vsel %vm10384, %v10364, %v9768
  %v10406 = vsel %vm10384, %v10365, %v9770
  %v10407 = vsel %vm10384, %v10366, %v9772
  %v10408 = vsel %vm10384, %v10367, %v9774
  %v10409 = vsel %vm10384, %v10368, %v9776
  %v10410 = vsel %vm10384, %v10369, %v9778
  %v10411 = vsel %vm10384, %v10370, %v9780
  %v10412 = vsel %vm10384, %v10371, %v9782
  %v10413 = vsel %vm10384, %v10372, %v9784
  %v10414 = vsel %vm10384, %v10373, %v9786
  %v10415 = vsel %vm10384, %v10374, %v9788
  %v10416 = vsel %vm10384, %v10375, %v9790
  %v10417 = vsel %vm10384, %v10376, %v9792
  %v10418 = vsel %vm10384, %v10377, %v9794
  %v10419 = vsel %vm10384, %v10378, %v9796
  %v10420 = vsel %vm10384, %v10379, %v9798
  %v10421 = vsel %vm10384, %v10380, %v9800
  %v10422 = vsel %vm10384, %v10381, %v9802
  %v10423 = vsel %vm10384, %v10382, %v9804
  %v10424 = vsel %vm10384, %v10383, %v9806
  %v10425 = vsel %vm8500, %v10385, %v9850
  %v10426 = vsel %vm8500, %v10386, %v9852
  %v10427 = vsel %vm8500, %v10387, %v9854
  %v10428 = vsel %vm8500, %v10388, %v9856
  %v10429 = vsel %vm8500, %v10389, %v9858
  %v10430 = vsel %vm8500, %v10390, %v9860
  %v10431 = vsel %vm8500, %v10391, %v9862
  %v10432 = vsel %vm8500, %v10392, %v9864
  %v10433 = vsel %vm8500, %v10393, %v9866
  %v10434 = vsel %vm8500, %v10394, %v9868
  %v10435 = vsel %vm8500, %v10395, %v9870
  %v10436 = vsel %vm8500, %v10396, %v9872
  %v10437 = vsel %vm8500, %v10397, %v9874
  %v10438 = vsel %vm8500, %v10398, %v9876
  %v10439 = vsel %vm8500, %v10399, %v9878
  %v10440 = vsel %vm8500, %v10400, %v9880
  %v10441 = vsel %vm8500, %v10401, %v9882
  %v10442 = vsel %vm8500, %v10402, %v9884
  %v10443 = vsel %vm8500, %v10403, %v9886
  %v10444 = vsel %vm8500, %v10404, %v9888
  %v10445 = vsel %vm8500, %v10405, %v9890
  %v10446 = vsel %vm8500, %v10406, %v9892
  %v10447 = vsel %vm8500, %v10407, %v9894
  %v10448 = vsel %vm8500, %v10408, %v9896
  %v10449 = vsel %vm8500, %v10409, %v9898
  %v10450 = vsel %vm8500, %v10410, %v9900
  %v10451 = vsel %vm8500, %v10411, %v9902
  %v10452 = vsel %vm8500, %v10412, %v9904
  %v10453 = vsel %vm8500, %v10413, %v9906
  %v10454 = vsel %vm8500, %v10414, %v9908
  %v10455 = vsel %vm8500, %v10415, %v9910
  %v10456 = vsel %vm8500, %v10416, %v9912
  %v10457 = vsel %vm8500, %v10417, %v9914
  %v10458 = vsel %vm8500, %v10418, %v9916
  %v10459 = vsel %vm8500, %v10419, %v9918
  %v10460 = vsel %vm8500, %v10420, %v9920
  %v10461 = vsel %vm8500, %v10421, %v9922
  %v10462 = vsel %vm8500, %v10422, %v9924
  %v10463 = vsel %vm8500, %v10423, %v9926
  %v10464 = vsel %vm8500, %v10424, %v9928
  %vm10465 = vcmask 457728
  %v10466 = vsel %vm10465, %v10425, %v9976
  %v10467 = vsel %vm10465, %v10426, %v9978
  %v10468 = vsel %vm10465, %v10427, %v9980
  %v10469 = vsel %vm10465, %v10428, %v9982
  %v10470 = vsel %vm10465, %v10429, %v9984
  %v10471 = vsel %vm10465, %v10430, %v9986
  %v10472 = vsel %vm10465, %v10431, %v9988
  %v10473 = vsel %vm10465, %v10432, %v9990
  %v10474 = vsel %vm10465, %v10433, %v9992
  %v10475 = vsel %vm10465, %v10434, %v9994
  %v10476 = vsel %vm10465, %v10435, %v9996
  %v10477 = vsel %vm10465, %v10436, %v9998
  %v10478 = vsel %vm10465, %v10437, %v10000
  %v10479 = vsel %vm10465, %v10438, %v10002
  %v10480 = vsel %vm10465, %v10439, %v10004
  %v10481 = vsel %vm10465, %v10440, %v10006
  %v10482 = vsel %vm10465, %v10441, %v10008
  %v10483 = vsel %vm10465, %v10442, %v10010
  %v10484 = vsel %vm10465, %v10443, %v10012
  %v10485 = vsel %vm10465, %v10444, %v10014
  %v10486 = vsel %vm10465, %v10445, %v10016
  %v10487 = vsel %vm10465, %v10446, %v10018
  %v10488 = vsel %vm10465, %v10447, %v10020
  %v10489 = vsel %vm10465, %v10448, %v10022
  %v10490 = vsel %vm10465, %v10449, %v10024
  %v10491 = vsel %vm10465, %v10450, %v10026
  %v10492 = vsel %vm10465, %v10451, %v10028
  %v10493 = vsel %vm10465, %v10452, %v10030
  %v10494 = vsel %vm10465, %v10453, %v10032
  %v10495 = vsel %vm10465, %v10454, %v10034
  %v10496 = vsel %vm10465, %v10455, %v10036
  %v10497 = vsel %vm10465, %v10456, %v10038
  %v10498 = vsel %vm10465, %v10457, %v10040
  %v10499 = vsel %vm10465, %v10458, %v10042
  %v10500 = vsel %vm10465, %v10459, %v10044
  %v10501 = vsel %vm10465, %v10460, %v10046
  %v10502 = vsel %vm10465, %v10461, %v10048
  %v10503 = vsel %vm10465, %v10462, %v10050
  %v10504 = vsel %vm10465, %v10463, %v10052
  %v10505 = vsel %vm10465, %v10464, %v10054
  %vm10506 = vcmask 523264
  %v10507 = vsel %vm10506, %v10466, %v10102
  %v10508 = vsel %vm10506, %v10467, %v10104
  %v10509 = vsel %vm10506, %v10468, %v10106
  %v10510 = vsel %vm10506, %v10469, %v10108
  %v10511 = vsel %vm10506, %v10470, %v10110
  %v10512 = vsel %vm10506, %v10471, %v10112
  %v10513 = vsel %vm10506, %v10472, %v10114
  %v10514 = vsel %vm10506, %v10473, %v10116
  %v10515 = vsel %vm10506, %v10474, %v10118
  %v10516 = vsel %vm10506, %v10475, %v10120
  %v10517 = vsel %vm10506, %v10476, %v10122
  %v10518 = vsel %vm10506, %v10477, %v10124
  %v10519 = vsel %vm10506, %v10478, %v10126
  %v10520 = vsel %vm10506, %v10479, %v10128
  %v10521 = vsel %vm10506, %v10480, %v10130
  %v10522 = vsel %vm10506, %v10481, %v10132
  %v10523 = vsel %vm10506, %v10482, %v10134
  %v10524 = vsel %vm10506, %v10483, %v10136
  %v10525 = vsel %vm10506, %v10484, %v10138
  %v10526 = vsel %vm10506, %v10485, %v10140
  %v10527 = vsel %vm10506, %v10486, %v10142
  %v10528 = vsel %vm10506, %v10487, %v10144
  %v10529 = vsel %vm10506, %v10488, %v10146
  %v10530 = vsel %vm10506, %v10489, %v10148
  %v10531 = vsel %vm10506, %v10490, %v10150
  %v10532 = vsel %vm10506, %v10491, %v10152
  %v10533 = vsel %vm10506, %v10492, %v10154
  %v10534 = vsel %vm10506, %v10493, %v10156
  %v10535 = vsel %vm10506, %v10494, %v10158
  %v10536 = vsel %vm10506, %v10495, %v10160
  %v10537 = vsel %vm10506, %v10496, %v10162
  %v10538 = vsel %vm10506, %v10497, %v10164
  %v10539 = vsel %vm10506, %v10498, %v10166
  %v10540 = vsel %vm10506, %v10499, %v10168
  %v10541 = vsel %vm10506, %v10500, %v10170
  %v10542 = vsel %vm10506, %v10501, %v10172
  %v10543 = vsel %vm10506, %v10502, %v10174
  %v10544 = vsel %vm10506, %v10503, %v10176
  %v10545 = vsel %vm10506, %v10504, %v10178
  %v10546 = vsel %vm10506, %v10505, %v10180
  %v10587 = vcombine.high %v10507, %v10507
  %v10589 = vunpack.c.l.s4 1983009808
  %v10590 = vunpack.c.0.s8 %v10589
  %v10591 = vlaneseq
  %v10592 = vshrl.u32 %v10591, 7
  %v10593 = vsub.s32 %v10590, %v10592
  %v10594 = vrot.slane %v10507, %v10593
  %v10596 = vunpack.c.l.s4 1983009808
  %v10597 = vunpack.c.0.s8 %v10596
  %v10598 = vlaneseq
  %v10599 = vshrl.u32 %v10598, 7
  %v10600 = vsub.s32 %v10597, %v10599
  %v10601 = vrot.slane %v10587, %v10600
  %v10602 = vcombine.high %v10594, %v10594
  %v10603 = vcombine.high %v10601, %v10601
  %v10605 = vunpack.c.l.s4 1983009808
  %v10606 = vunpack.c.0.s8 %v10605
  %v10607 = vlaneseq
  %v10608 = vshrl.u32 %v10607, 7
  %v10609 = vsub.s32 %v10606, %v10608
  %v10610 = vrot.slane %v10508, %v10609
  %v10611 = vcombine.high %v10509, %v10509
  %v10613 = vunpack.c.l.s4 1983009808
  %v10614 = vunpack.c.0.s8 %v10613
  %v10615 = vlaneseq
  %v10616 = vshrl.u32 %v10615, 7
  %v10617 = vsub.s32 %v10614, %v10616
  %v10618 = vrot.slane %v10509, %v10617
  %v10620 = vunpack.c.l.s4 1983009808
  %v10621 = vunpack.c.0.s8 %v10620
  %v10622 = vlaneseq
  %v10623 = vshrl.u32 %v10622, 7
  %v10624 = vsub.s32 %v10621, %v10623
  %v10625 = vrot.slane %v10611, %v10624
  %v10626 = vcombine.high %v10618, %v10618
  %v10627 = vcombine.high %v10625, %v10625
  %v10629 = vunpack.c.l.s4 1983009808
  %v10630 = vunpack.c.0.s8 %v10629
  %v10631 = vlaneseq
  %v10632 = vshrl.u32 %v10631, 7
  %v10633 = vsub.s32 %v10630, %v10632
  %v10634 = vrot.slane %v10510, %v10633
  %v10635 = vcombine.high %v10511, %v10511
  %v10637 = vunpack.c.l.s4 1983009808
  %v10638 = vunpack.c.0.s8 %v10637
  %v10639 = vlaneseq
  %v10640 = vshrl.u32 %v10639, 7
  %v10641 = vsub.s32 %v10638, %v10640
  %v10642 = vrot.slane %v10511, %v10641
  %v10644 = vunpack.c.l.s4 1983009808
  %v10645 = vunpack.c.0.s8 %v10644
  %v10646 = vlaneseq
  %v10647 = vshrl.u32 %v10646, 7
  %v10648 = vsub.s32 %v10645, %v10647
  %v10649 = vrot.slane %v10635, %v10648
  %v10650 = vcombine.high %v10642, %v10642
  %v10651 = vcombine.high %v10649, %v10649
  %v10653 = vunpack.c.l.s4 1983009808
  %v10654 = vunpack.c.0.s8 %v10653
  %v10655 = vlaneseq
  %v10656 = vshrl.u32 %v10655, 7
  %v10657 = vsub.s32 %v10654, %v10656
  %v10658 = vrot.slane %v10512, %v10657
  %v10659 = vcombine.high %v10513, %v10513
  %v10661 = vunpack.c.l.s4 1983009808
  %v10662 = vunpack.c.0.s8 %v10661
  %v10663 = vlaneseq
  %v10664 = vshrl.u32 %v10663, 7
  %v10665 = vsub.s32 %v10662, %v10664
  %v10666 = vrot.slane %v10513, %v10665
  %v10668 = vunpack.c.l.s4 1983009808
  %v10669 = vunpack.c.0.s8 %v10668
  %v10670 = vlaneseq
  %v10671 = vshrl.u32 %v10670, 7
  %v10672 = vsub.s32 %v10669, %v10671
  %v10673 = vrot.slane %v10659, %v10672
  %v10674 = vcombine.high %v10666, %v10666
  %v10675 = vcombine.high %v10673, %v10673
  %v10677 = vunpack.c.l.s4 1983009808
  %v10678 = vunpack.c.0.s8 %v10677
  %v10679 = vlaneseq
  %v10680 = vshrl.u32 %v10679, 7
  %v10681 = vsub.s32 %v10678, %v10680
  %v10682 = vrot.slane %v10514, %v10681
  %v10683 = vcombine.high %v10515, %v10515
  %v10685 = vunpack.c.l.s4 1983009808
  %v10686 = vunpack.c.0.s8 %v10685
  %v10687 = vlaneseq
  %v10688 = vshrl.u32 %v10687, 7
  %v10689 = vsub.s32 %v10686, %v10688
  %v10690 = vrot.slane %v10515, %v10689
  %v10692 = vunpack.c.l.s4 1983009808
  %v10693 = vunpack.c.0.s8 %v10692
  %v10694 = vlaneseq
  %v10695 = vshrl.u32 %v10694, 7
  %v10696 = vsub.s32 %v10693, %v10695
  %v10697 = vrot.slane %v10683, %v10696
  %v10698 = vcombine.high %v10690, %v10690
  %v10699 = vcombine.high %v10697, %v10697
  %v10701 = vunpack.c.l.s4 1983009808
  %v10702 = vunpack.c.0.s8 %v10701
  %v10703 = vlaneseq
  %v10704 = vshrl.u32 %v10703, 7
  %v10705 = vsub.s32 %v10702, %v10704
  %v10706 = vrot.slane %v10516, %v10705
  %v10707 = vcombine.high %v10517, %v10517
  %v10709 = vunpack.c.l.s4 1983009808
  %v10710 = vunpack.c.0.s8 %v10709
  %v10711 = vlaneseq
  %v10712 = vshrl.u32 %v10711, 7
  %v10713 = vsub.s32 %v10710, %v10712
  %v10714 = vrot.slane %v10517, %v10713
  %v10716 = vunpack.c.l.s4 1983009808
  %v10717 = vunpack.c.0.s8 %v10716
  %v10718 = vlaneseq
  %v10719 = vshrl.u32 %v10718, 7
  %v10720 = vsub.s32 %v10717, %v10719
  %v10721 = vrot.slane %v10707, %v10720
  %v10722 = vcombine.high %v10714, %v10714
  %v10723 = vcombine.high %v10721, %v10721
  %v10725 = vunpack.c.l.s4 1983009808
  %v10726 = vunpack.c.0.s8 %v10725
  %v10727 = vlaneseq
  %v10728 = vshrl.u32 %v10727, 7
  %v10729 = vsub.s32 %v10726, %v10728
  %v10730 = vrot.slane %v10518, %v10729
  %v10731 = vcombine.high %v10519, %v10519
  %v10733 = vunpack.c.l.s4 1983009808
  %v10734 = vunpack.c.0.s8 %v10733
  %v10735 = vlaneseq
  %v10736 = vshrl.u32 %v10735, 7
  %v10737 = vsub.s32 %v10734, %v10736
  %v10738 = vrot.slane %v10519, %v10737
  %v10740 = vunpack.c.l.s4 1983009808
  %v10741 = vunpack.c.0.s8 %v10740
  %v10742 = vlaneseq
  %v10743 = vshrl.u32 %v10742, 7
  %v10744 = vsub.s32 %v10741, %v10743
  %v10745 = vrot.slane %v10731, %v10744
  %v10746 = vcombine.high %v10738, %v10738
  %v10747 = vcombine.high %v10745, %v10745
  %v10749 = vunpack.c.l.s4 1983009808
  %v10750 = vunpack.c.0.s8 %v10749
  %v10751 = vlaneseq
  %v10752 = vshrl.u32 %v10751, 7
  %v10753 = vsub.s32 %v10750, %v10752
  %v10754 = vrot.slane %v10520, %v10753
  %v10755 = vcombine.high %v10521, %v10521
  %v10757 = vunpack.c.l.s4 1983009808
  %v10758 = vunpack.c.0.s8 %v10757
  %v10759 = vlaneseq
  %v10760 = vshrl.u32 %v10759, 7
  %v10761 = vsub.s32 %v10758, %v10760
  %v10762 = vrot.slane %v10521, %v10761
  %v10764 = vunpack.c.l.s4 1983009808
  %v10765 = vunpack.c.0.s8 %v10764
  %v10766 = vlaneseq
  %v10767 = vshrl.u32 %v10766, 7
  %v10768 = vsub.s32 %v10765, %v10767
  %v10769 = vrot.slane %v10755, %v10768
  %v10770 = vcombine.high %v10762, %v10762
  %v10771 = vcombine.high %v10769, %v10769
  %v10773 = vunpack.c.l.s4 1983009808
  %v10774 = vunpack.c.0.s8 %v10773
  %v10775 = vlaneseq
  %v10776 = vshrl.u32 %v10775, 7
  %v10777 = vsub.s32 %v10774, %v10776
  %v10778 = vrot.slane %v10522, %v10777
  %v10779 = vcombine.high %v10523, %v10523
  %v10781 = vunpack.c.l.s4 1983009808
  %v10782 = vunpack.c.0.s8 %v10781
  %v10783 = vlaneseq
  %v10784 = vshrl.u32 %v10783, 7
  %v10785 = vsub.s32 %v10782, %v10784
  %v10786 = vrot.slane %v10523, %v10785
  %v10788 = vunpack.c.l.s4 1983009808
  %v10789 = vunpack.c.0.s8 %v10788
  %v10790 = vlaneseq
  %v10791 = vshrl.u32 %v10790, 7
  %v10792 = vsub.s32 %v10789, %v10791
  %v10793 = vrot.slane %v10779, %v10792
  %v10794 = vcombine.high %v10786, %v10786
  %v10795 = vcombine.high %v10793, %v10793
  %v10797 = vunpack.c.l.s4 1983009808
  %v10798 = vunpack.c.0.s8 %v10797
  %v10799 = vlaneseq
  %v10800 = vshrl.u32 %v10799, 7
  %v10801 = vsub.s32 %v10798, %v10800
  %v10802 = vrot.slane %v10524, %v10801
  %v10803 = vcombine.high %v10525, %v10525
  %v10805 = vunpack.c.l.s4 1983009808
  %v10806 = vunpack.c.0.s8 %v10805
  %v10807 = vlaneseq
  %v10808 = vshrl.u32 %v10807, 7
  %v10809 = vsub.s32 %v10806, %v10808
  %v10810 = vrot.slane %v10525, %v10809
  %v10812 = vunpack.c.l.s4 1983009808
  %v10813 = vunpack.c.0.s8 %v10812
  %v10814 = vlaneseq
  %v10815 = vshrl.u32 %v10814, 7
  %v10816 = vsub.s32 %v10813, %v10815
  %v10817 = vrot.slane %v10803, %v10816
  %v10818 = vcombine.high %v10810, %v10810
  %v10819 = vcombine.high %v10817, %v10817
  %v10821 = vunpack.c.l.s4 1983009808
  %v10822 = vunpack.c.0.s8 %v10821
  %v10823 = vlaneseq
  %v10824 = vshrl.u32 %v10823, 7
  %v10825 = vsub.s32 %v10822, %v10824
  %v10826 = vrot.slane %v10526, %v10825
  %v10827 = vcombine.high %v10527, %v10527
  %v10829 = vunpack.c.l.s4 1983009808
  %v10830 = vunpack.c.0.s8 %v10829
  %v10831 = vlaneseq
  %v10832 = vshrl.u32 %v10831, 7
  %v10833 = vsub.s32 %v10830, %v10832
  %v10834 = vrot.slane %v10527, %v10833
  %v10836 = vunpack.c.l.s4 1983009808
  %v10837 = vunpack.c.0.s8 %v10836
  %v10838 = vlaneseq
  %v10839 = vshrl.u32 %v10838, 7
  %v10840 = vsub.s32 %v10837, %v10839
  %v10841 = vrot.slane %v10827, %v10840
  %v10842 = vcombine.high %v10834, %v10834
  %v10843 = vcombine.high %v10841, %v10841
  %v10845 = vunpack.c.l.s4 1983009808
  %v10846 = vunpack.c.0.s8 %v10845
  %v10847 = vlaneseq
  %v10848 = vshrl.u32 %v10847, 7
  %v10849 = vsub.s32 %v10846, %v10848
  %v10850 = vrot.slane %v10528, %v10849
  %v10851 = vcombine.high %v10529, %v10529
  %v10853 = vunpack.c.l.s4 1983009808
  %v10854 = vunpack.c.0.s8 %v10853
  %v10855 = vlaneseq
  %v10856 = vshrl.u32 %v10855, 7
  %v10857 = vsub.s32 %v10854, %v10856
  %v10858 = vrot.slane %v10529, %v10857
  %v10860 = vunpack.c.l.s4 1983009808
  %v10861 = vunpack.c.0.s8 %v10860
  %v10862 = vlaneseq
  %v10863 = vshrl.u32 %v10862, 7
  %v10864 = vsub.s32 %v10861, %v10863
  %v10865 = vrot.slane %v10851, %v10864
  %v10866 = vcombine.high %v10858, %v10858
  %v10867 = vcombine.high %v10865, %v10865
  %v10869 = vunpack.c.l.s4 1983009808
  %v10870 = vunpack.c.0.s8 %v10869
  %v10871 = vlaneseq
  %v10872 = vshrl.u32 %v10871, 7
  %v10873 = vsub.s32 %v10870, %v10872
  %v10874 = vrot.slane %v10530, %v10873
  %v10875 = vcombine.high %v10531, %v10531
  %v10877 = vunpack.c.l.s4 1983009808
  %v10878 = vunpack.c.0.s8 %v10877
  %v10879 = vlaneseq
  %v10880 = vshrl.u32 %v10879, 7
  %v10881 = vsub.s32 %v10878, %v10880
  %v10882 = vrot.slane %v10531, %v10881
  %v10884 = vunpack.c.l.s4 1983009808
  %v10885 = vunpack.c.0.s8 %v10884
  %v10886 = vlaneseq
  %v10887 = vshrl.u32 %v10886, 7
  %v10888 = vsub.s32 %v10885, %v10887
  %v10889 = vrot.slane %v10875, %v10888
  %v10890 = vcombine.high %v10882, %v10882
  %v10891 = vcombine.high %v10889, %v10889
  %v10893 = vunpack.c.l.s4 1983009808
  %v10894 = vunpack.c.0.s8 %v10893
  %v10895 = vlaneseq
  %v10896 = vshrl.u32 %v10895, 7
  %v10897 = vsub.s32 %v10894, %v10896
  %v10898 = vrot.slane %v10532, %v10897
  %v10899 = vcombine.high %v10533, %v10533
  %v10901 = vunpack.c.l.s4 1983009808
  %v10902 = vunpack.c.0.s8 %v10901
  %v10903 = vlaneseq
  %v10904 = vshrl.u32 %v10903, 7
  %v10905 = vsub.s32 %v10902, %v10904
  %v10906 = vrot.slane %v10533, %v10905
  %v10908 = vunpack.c.l.s4 1983009808
  %v10909 = vunpack.c.0.s8 %v10908
  %v10910 = vlaneseq
  %v10911 = vshrl.u32 %v10910, 7
  %v10912 = vsub.s32 %v10909, %v10911
  %v10913 = vrot.slane %v10899, %v10912
  %v10914 = vcombine.high %v10906, %v10906
  %v10915 = vcombine.high %v10913, %v10913
  %v10917 = vunpack.c.l.s4 1983009808
  %v10918 = vunpack.c.0.s8 %v10917
  %v10919 = vlaneseq
  %v10920 = vshrl.u32 %v10919, 7
  %v10921 = vsub.s32 %v10918, %v10920
  %v10922 = vrot.slane %v10534, %v10921
  %v10923 = vcombine.high %v10535, %v10535
  %v10925 = vunpack.c.l.s4 1983009808
  %v10926 = vunpack.c.0.s8 %v10925
  %v10927 = vlaneseq
  %v10928 = vshrl.u32 %v10927, 7
  %v10929 = vsub.s32 %v10926, %v10928
  %v10930 = vrot.slane %v10535, %v10929
  %v10932 = vunpack.c.l.s4 1983009808
  %v10933 = vunpack.c.0.s8 %v10932
  %v10934 = vlaneseq
  %v10935 = vshrl.u32 %v10934, 7
  %v10936 = vsub.s32 %v10933, %v10935
  %v10937 = vrot.slane %v10923, %v10936
  %v10938 = vcombine.high %v10930, %v10930
  %v10939 = vcombine.high %v10937, %v10937
  %v10941 = vunpack.c.l.s4 1983009808
  %v10942 = vunpack.c.0.s8 %v10941
  %v10943 = vlaneseq
  %v10944 = vshrl.u32 %v10943, 7
  %v10945 = vsub.s32 %v10942, %v10944
  %v10946 = vrot.slane %v10536, %v10945
  %v10947 = vcombine.high %v10537, %v10537
  %v10949 = vunpack.c.l.s4 1983009808
  %v10950 = vunpack.c.0.s8 %v10949
  %v10951 = vlaneseq
  %v10952 = vshrl.u32 %v10951, 7
  %v10953 = vsub.s32 %v10950, %v10952
  %v10954 = vrot.slane %v10537, %v10953
  %v10956 = vunpack.c.l.s4 1983009808
  %v10957 = vunpack.c.0.s8 %v10956
  %v10958 = vlaneseq
  %v10959 = vshrl.u32 %v10958, 7
  %v10960 = vsub.s32 %v10957, %v10959
  %v10961 = vrot.slane %v10947, %v10960
  %v10962 = vcombine.high %v10954, %v10954
  %v10963 = vcombine.high %v10961, %v10961
  %v10965 = vunpack.c.l.s4 1983009808
  %v10966 = vunpack.c.0.s8 %v10965
  %v10967 = vlaneseq
  %v10968 = vshrl.u32 %v10967, 7
  %v10969 = vsub.s32 %v10966, %v10968
  %v10970 = vrot.slane %v10538, %v10969
  %v10971 = vcombine.high %v10539, %v10539
  %v10973 = vunpack.c.l.s4 1983009808
  %v10974 = vunpack.c.0.s8 %v10973
  %v10975 = vlaneseq
  %v10976 = vshrl.u32 %v10975, 7
  %v10977 = vsub.s32 %v10974, %v10976
  %v10978 = vrot.slane %v10539, %v10977
  %v10980 = vunpack.c.l.s4 1983009808
  %v10981 = vunpack.c.0.s8 %v10980
  %v10982 = vlaneseq
  %v10983 = vshrl.u32 %v10982, 7
  %v10984 = vsub.s32 %v10981, %v10983
  %v10985 = vrot.slane %v10971, %v10984
  %v10986 = vcombine.high %v10978, %v10978
  %v10987 = vcombine.high %v10985, %v10985
  %v10989 = vunpack.c.l.s4 1983009808
  %v10990 = vunpack.c.0.s8 %v10989
  %v10991 = vlaneseq
  %v10992 = vshrl.u32 %v10991, 7
  %v10993 = vsub.s32 %v10990, %v10992
  %v10994 = vrot.slane %v10540, %v10993
  %v10995 = vcombine.high %v10541, %v10541
  %v10997 = vunpack.c.l.s4 1983009808
  %v10998 = vunpack.c.0.s8 %v10997
  %v10999 = vlaneseq
  %v11000 = vshrl.u32 %v10999, 7
  %v11001 = vsub.s32 %v10998, %v11000
  %v11002 = vrot.slane %v10541, %v11001
  %v11004 = vunpack.c.l.s4 1983009808
  %v11005 = vunpack.c.0.s8 %v11004
  %v11006 = vlaneseq
  %v11007 = vshrl.u32 %v11006, 7
  %v11008 = vsub.s32 %v11005, %v11007
  %v11009 = vrot.slane %v10995, %v11008
  %v11010 = vcombine.high %v11002, %v11002
  %v11011 = vcombine.high %v11009, %v11009
  %v11013 = vunpack.c.l.s4 1983009808
  %v11014 = vunpack.c.0.s8 %v11013
  %v11015 = vlaneseq
  %v11016 = vshrl.u32 %v11015, 7
  %v11017 = vsub.s32 %v11014, %v11016
  %v11018 = vrot.slane %v10542, %v11017
  %v11019 = vcombine.high %v10543, %v10543
  %v11021 = vunpack.c.l.s4 1983009808
  %v11022 = vunpack.c.0.s8 %v11021
  %v11023 = vlaneseq
  %v11024 = vshrl.u32 %v11023, 7
  %v11025 = vsub.s32 %v11022, %v11024
  %v11026 = vrot.slane %v10543, %v11025
  %v11028 = vunpack.c.l.s4 1983009808
  %v11029 = vunpack.c.0.s8 %v11028
  %v11030 = vlaneseq
  %v11031 = vshrl.u32 %v11030, 7
  %v11032 = vsub.s32 %v11029, %v11031
  %v11033 = vrot.slane %v11019, %v11032
  %v11034 = vcombine.high %v11026, %v11026
  %v11035 = vcombine.high %v11033, %v11033
  %v11037 = vunpack.c.l.s4 1983009808
  %v11038 = vunpack.c.0.s8 %v11037
  %v11039 = vlaneseq
  %v11040 = vshrl.u32 %v11039, 7
  %v11041 = vsub.s32 %v11038, %v11040
  %v11042 = vrot.slane %v10544, %v11041
  %v11043 = vcombine.high %v10545, %v10545
  %v11045 = vunpack.c.l.s4 1983009808
  %v11046 = vunpack.c.0.s8 %v11045
  %v11047 = vlaneseq
  %v11048 = vshrl.u32 %v11047, 7
  %v11049 = vsub.s32 %v11046, %v11048
  %v11050 = vrot.slane %v10545, %v11049
  %v11052 = vunpack.c.l.s4 1983009808
  %v11053 = vunpack.c.0.s8 %v11052
  %v11054 = vlaneseq
  %v11055 = vshrl.u32 %v11054, 7
  %v11056 = vsub.s32 %v11053, %v11055
  %v11057 = vrot.slane %v11043, %v11056
  %v11058 = vcombine.high %v11050, %v11050
  %v11059 = vcombine.high %v11057, %v11057
  %v11061 = vunpack.c.l.s4 1983009808
  %v11062 = vunpack.c.0.s8 %v11061
  %v11063 = vlaneseq
  %v11064 = vshrl.u32 %v11063, 7
  %v11065 = vsub.s32 %v11062, %v11064
  %v11066 = vrot.slane %v10546, %v11065
  %s11067 = scalar_lea.vmem %s1, 176
  %v11068 = vld [vmem:[%s11067] sm:$0xff]
  %v11069 = vld [vmem:[%s11067 + $0x8] sm:$0xff]
  %v11070 = vld [vmem:[%s11067 + $0x10] sm:$0xff]
  %v11071 = vld [vmem:[%s11067 + $0x18] sm:$0xff]
  %v11072 = vld [vmem:[%s11067 + $0x20] sm:$0xff]
  %v11073 = vld [vmem:[%s11067 + $0x28] sm:$0xff]
  %v11074 = vld [vmem:[%s11067 + $0x30] sm:$0xff]
  %v11075 = vld [vmem:[%s11067 + $0x38] sm:$0xff]
  %v11076 = vld [vmem:[%s11067 + $0x40] sm:$0xff]
  %v11077 = vld [vmem:[%s2 + $0x2] sm:$0x1]
  %v11078 = vlaneseq
  %v11079 = vshrl.u32 %v11078, 7
  %v11080 = vsub.s32 0, %v11079
  %v11081 = vrot.slane %v11077, %v11080
  %v11082 = vcombine.low %v10594, %v10602
  %v11083 = vcombine.low %v10601, %v10603
  %v11085 = vunpack.c.l.s4 1983009808
  %v11086 = vunpack.c.0.s8 %v11085
  %v11087 = vlaneseq
  %v11088 = vshrl.u32 %v11087, 7
  %v11089 = vsub.s32 %v11086, %v11088
  %v11090 = vrot.slane %v11082, %v11089
  %v11092 = vunpack.c.l.s4 1983009808
  %v11093 = vunpack.c.0.s8 %v11092
  %v11094 = vlaneseq
  %v11095 = vshrl.u32 %v11094, 7
  %v11096 = vsub.s32 %v11093, %v11095
  %v11097 = vrot.slane %v11083, %v11096
  %v11098 = vcombine.low %v11090, %v11097
  %v11099 = vcombine.low %v10610, %v10618
  %v11100 = vcombine.low %v10626, %v10625
  %v11102 = vunpack.c.l.s4 1983009808
  %v11103 = vunpack.c.0.s8 %v11102
  %v11104 = vlaneseq
  %v11105 = vshrl.u32 %v11104, 7
  %v11106 = vsub.s32 %v11103, %v11105
  %v11107 = vrot.slane %v11099, %v11106
  %v11109 = vunpack.c.l.s4 1983009808
  %v11110 = vunpack.c.0.s8 %v11109
  %v11111 = vlaneseq
  %v11112 = vshrl.u32 %v11111, 7
  %v11113 = vsub.s32 %v11110, %v11112
  %v11114 = vrot.slane %v11100, %v11113
  %v11115 = vcombine.low %v11107, %v11114
  %v11116 = vcombine.low %v10627, %v10634
  %v11117 = vcombine.low %v10642, %v10650
  %v11119 = vunpack.c.l.s4 1983009808
  %v11120 = vunpack.c.0.s8 %v11119
  %v11121 = vlaneseq
  %v11122 = vshrl.u32 %v11121, 7
  %v11123 = vsub.s32 %v11120, %v11122
  %v11124 = vrot.slane %v11116, %v11123
  %v11126 = vunpack.c.l.s4 1983009808
  %v11127 = vunpack.c.0.s8 %v11126
  %v11128 = vlaneseq
  %v11129 = vshrl.u32 %v11128, 7
  %v11130 = vsub.s32 %v11127, %v11129
  %v11131 = vrot.slane %v11117, %v11130
  %v11132 = vcombine.low %v11124, %v11131
  %v11133 = vcombine.low %v10649, %v10651
  %v11134 = vcombine.low %v10658, %v10666
  %v11136 = vunpack.c.l.s4 1983009808
  %v11137 = vunpack.c.0.s8 %v11136
  %v11138 = vlaneseq
  %v11139 = vshrl.u32 %v11138, 7
  %v11140 = vsub.s32 %v11137, %v11139
  %v11141 = vrot.slane %v11133, %v11140
  %v11143 = vunpack.c.l.s4 1983009808
  %v11144 = vunpack.c.0.s8 %v11143
  %v11145 = vlaneseq
  %v11146 = vshrl.u32 %v11145, 7
  %v11147 = vsub.s32 %v11144, %v11146
  %v11148 = vrot.slane %v11134, %v11147
  %v11149 = vcombine.low %v11141, %v11148
  %v11150 = vcombine.low %v10674, %v10673
  %v11151 = vcombine.low %v10675, %v10682
  %v11153 = vunpack.c.l.s4 1983009808
  %v11154 = vunpack.c.0.s8 %v11153
  %v11155 = vlaneseq
  %v11156 = vshrl.u32 %v11155, 7
  %v11157 = vsub.s32 %v11154, %v11156
  %v11158 = vrot.slane %v11150, %v11157
  %v11160 = vunpack.c.l.s4 1983009808
  %v11161 = vunpack.c.0.s8 %v11160
  %v11162 = vlaneseq
  %v11163 = vshrl.u32 %v11162, 7
  %v11164 = vsub.s32 %v11161, %v11163
  %v11165 = vrot.slane %v11151, %v11164
  %v11166 = vcombine.low %v11158, %v11165
  %v11167 = vcombine.low %v10690, %v10698
  %v11168 = vcombine.low %v10697, %v10699
  %v11170 = vunpack.c.l.s4 1983009808
  %v11171 = vunpack.c.0.s8 %v11170
  %v11172 = vlaneseq
  %v11173 = vshrl.u32 %v11172, 7
  %v11174 = vsub.s32 %v11171, %v11173
  %v11175 = vrot.slane %v11167, %v11174
  %v11177 = vunpack.c.l.s4 1983009808
  %v11178 = vunpack.c.0.s8 %v11177
  %v11179 = vlaneseq
  %v11180 = vshrl.u32 %v11179, 7
  %v11181 = vsub.s32 %v11178, %v11180
  %v11182 = vrot.slane %v11168, %v11181
  %v11183 = vcombine.low %v11175, %v11182
  %v11184 = vcombine.low %v10706, %v10714
  %v11185 = vcombine.low %v10722, %v10721
  %v11187 = vunpack.c.l.s4 1983009808
  %v11188 = vunpack.c.0.s8 %v11187
  %v11189 = vlaneseq
  %v11190 = vshrl.u32 %v11189, 7
  %v11191 = vsub.s32 %v11188, %v11190
  %v11192 = vrot.slane %v11184, %v11191
  %v11194 = vunpack.c.l.s4 1983009808
  %v11195 = vunpack.c.0.s8 %v11194
  %v11196 = vlaneseq
  %v11197 = vshrl.u32 %v11196, 7
  %v11198 = vsub.s32 %v11195, %v11197
  %v11199 = vrot.slane %v11185, %v11198
  %v11200 = vcombine.low %v11192, %v11199
  %v11201 = vcombine.low %v10723, %v10730
  %v11202 = vcombine.low %v10738, %v10746
  %v11204 = vunpack.c.l.s4 1983009808
  %v11205 = vunpack.c.0.s8 %v11204
  %v11206 = vlaneseq
  %v11207 = vshrl.u32 %v11206, 7
  %v11208 = vsub.s32 %v11205, %v11207
  %v11209 = vrot.slane %v11201, %v11208
  %v11211 = vunpack.c.l.s4 1983009808
  %v11212 = vunpack.c.0.s8 %v11211
  %v11213 = vlaneseq
  %v11214 = vshrl.u32 %v11213, 7
  %v11215 = vsub.s32 %v11212, %v11214
  %v11216 = vrot.slane %v11202, %v11215
  %v11217 = vcombine.low %v11209, %v11216
  %v11218 = vcombine.low %v10745, %v10747
  %v11219 = vcombine.low %v10754, %v10762
  %v11221 = vunpack.c.l.s4 1983009808
  %v11222 = vunpack.c.0.s8 %v11221
  %v11223 = vlaneseq
  %v11224 = vshrl.u32 %v11223, 7
  %v11225 = vsub.s32 %v11222, %v11224
  %v11226 = vrot.slane %v11218, %v11225
  %v11228 = vunpack.c.l.s4 1983009808
  %v11229 = vunpack.c.0.s8 %v11228
  %v11230 = vlaneseq
  %v11231 = vshrl.u32 %v11230, 7
  %v11232 = vsub.s32 %v11229, %v11231
  %v11233 = vrot.slane %v11219, %v11232
  %v11234 = vcombine.low %v11226, %v11233
  %v11235 = vcombine.low %v10770, %v10769
  %v11236 = vcombine.low %v10771, %v10778
  %v11238 = vunpack.c.l.s4 1983009808
  %v11239 = vunpack.c.0.s8 %v11238
  %v11240 = vlaneseq
  %v11241 = vshrl.u32 %v11240, 7
  %v11242 = vsub.s32 %v11239, %v11241
  %v11243 = vrot.slane %v11235, %v11242
  %v11245 = vunpack.c.l.s4 1983009808
  %v11246 = vunpack.c.0.s8 %v11245
  %v11247 = vlaneseq
  %v11248 = vshrl.u32 %v11247, 7
  %v11249 = vsub.s32 %v11246, %v11248
  %v11250 = vrot.slane %v11236, %v11249
  %v11251 = vcombine.low %v11243, %v11250
  %v11252 = vcombine.low %v10786, %v10794
  %v11253 = vcombine.low %v10793, %v10795
  %v11255 = vunpack.c.l.s4 1983009808
  %v11256 = vunpack.c.0.s8 %v11255
  %v11257 = vlaneseq
  %v11258 = vshrl.u32 %v11257, 7
  %v11259 = vsub.s32 %v11256, %v11258
  %v11260 = vrot.slane %v11252, %v11259
  %v11262 = vunpack.c.l.s4 1983009808
  %v11263 = vunpack.c.0.s8 %v11262
  %v11264 = vlaneseq
  %v11265 = vshrl.u32 %v11264, 7
  %v11266 = vsub.s32 %v11263, %v11265
  %v11267 = vrot.slane %v11253, %v11266
  %v11268 = vcombine.low %v11260, %v11267
  %v11269 = vcombine.low %v10802, %v10810
  %v11270 = vcombine.low %v10818, %v10817
  %v11272 = vunpack.c.l.s4 1983009808
  %v11273 = vunpack.c.0.s8 %v11272
  %v11274 = vlaneseq
  %v11275 = vshrl.u32 %v11274, 7
  %v11276 = vsub.s32 %v11273, %v11275
  %v11277 = vrot.slane %v11269, %v11276
  %v11279 = vunpack.c.l.s4 1983009808
  %v11280 = vunpack.c.0.s8 %v11279
  %v11281 = vlaneseq
  %v11282 = vshrl.u32 %v11281, 7
  %v11283 = vsub.s32 %v11280, %v11282
  %v11284 = vrot.slane %v11270, %v11283
  %v11285 = vcombine.low %v11277, %v11284
  %v11286 = vcombine.low %v10819, %v10826
  %v11287 = vcombine.low %v10834, %v10842
  %v11289 = vunpack.c.l.s4 1983009808
  %v11290 = vunpack.c.0.s8 %v11289
  %v11291 = vlaneseq
  %v11292 = vshrl.u32 %v11291, 7
  %v11293 = vsub.s32 %v11290, %v11292
  %v11294 = vrot.slane %v11286, %v11293
  %v11296 = vunpack.c.l.s4 1983009808
  %v11297 = vunpack.c.0.s8 %v11296
  %v11298 = vlaneseq
  %v11299 = vshrl.u32 %v11298, 7
  %v11300 = vsub.s32 %v11297, %v11299
  %v11301 = vrot.slane %v11287, %v11300
  %v11302 = vcombine.low %v11294, %v11301
  %v11303 = vcombine.low %v10841, %v10843
  %v11304 = vcombine.low %v10850, %v10858
  %v11306 = vunpack.c.l.s4 1983009808
  %v11307 = vunpack.c.0.s8 %v11306
  %v11308 = vlaneseq
  %v11309 = vshrl.u32 %v11308, 7
  %v11310 = vsub.s32 %v11307, %v11309
  %v11311 = vrot.slane %v11303, %v11310
  %v11313 = vunpack.c.l.s4 1983009808
  %v11314 = vunpack.c.0.s8 %v11313
  %v11315 = vlaneseq
  %v11316 = vshrl.u32 %v11315, 7
  %v11317 = vsub.s32 %v11314, %v11316
  %v11318 = vrot.slane %v11304, %v11317
  %v11319 = vcombine.low %v11311, %v11318
  %v11320 = vcombine.low %v10866, %v10865
  %v11321 = vcombine.low %v10867, %v10874
  %v11323 = vunpack.c.l.s4 1983009808
  %v11324 = vunpack.c.0.s8 %v11323
  %v11325 = vlaneseq
  %v11326 = vshrl.u32 %v11325, 7
  %v11327 = vsub.s32 %v11324, %v11326
  %v11328 = vrot.slane %v11320, %v11327
  %v11330 = vunpack.c.l.s4 1983009808
  %v11331 = vunpack.c.0.s8 %v11330
  %v11332 = vlaneseq
  %v11333 = vshrl.u32 %v11332, 7
  %v11334 = vsub.s32 %v11331, %v11333
  %v11335 = vrot.slane %v11321, %v11334
  %v11336 = vcombine.low %v11328, %v11335
  %v11337 = vcombine.low %v10882, %v10890
  %v11338 = vcombine.low %v10889, %v10891
  %v11340 = vunpack.c.l.s4 1983009808
  %v11341 = vunpack.c.0.s8 %v11340
  %v11342 = vlaneseq
  %v11343 = vshrl.u32 %v11342, 7
  %v11344 = vsub.s32 %v11341, %v11343
  %v11345 = vrot.slane %v11337, %v11344
  %v11347 = vunpack.c.l.s4 1983009808
  %v11348 = vunpack.c.0.s8 %v11347
  %v11349 = vlaneseq
  %v11350 = vshrl.u32 %v11349, 7
  %v11351 = vsub.s32 %v11348, %v11350
  %v11352 = vrot.slane %v11338, %v11351
  %v11353 = vcombine.low %v11345, %v11352
  %v11354 = vcombine.low %v10898, %v10906
  %v11355 = vcombine.low %v10914, %v10913
  %v11357 = vunpack.c.l.s4 1983009808
  %v11358 = vunpack.c.0.s8 %v11357
  %v11359 = vlaneseq
  %v11360 = vshrl.u32 %v11359, 7
  %v11361 = vsub.s32 %v11358, %v11360
  %v11362 = vrot.slane %v11354, %v11361
  %v11364 = vunpack.c.l.s4 1983009808
  %v11365 = vunpack.c.0.s8 %v11364
  %v11366 = vlaneseq
  %v11367 = vshrl.u32 %v11366, 7
  %v11368 = vsub.s32 %v11365, %v11367
  %v11369 = vrot.slane %v11355, %v11368
  %v11370 = vcombine.low %v11362, %v11369
  %v11371 = vcombine.low %v10915, %v10922
  %v11372 = vcombine.low %v10930, %v10938
  %v11374 = vunpack.c.l.s4 1983009808
  %v11375 = vunpack.c.0.s8 %v11374
  %v11376 = vlaneseq
  %v11377 = vshrl.u32 %v11376, 7
  %v11378 = vsub.s32 %v11375, %v11377
  %v11379 = vrot.slane %v11371, %v11378
  %v11381 = vunpack.c.l.s4 1983009808
  %v11382 = vunpack.c.0.s8 %v11381
  %v11383 = vlaneseq
  %v11384 = vshrl.u32 %v11383, 7
  %v11385 = vsub.s32 %v11382, %v11384
  %v11386 = vrot.slane %v11372, %v11385
  %v11387 = vcombine.low %v11379, %v11386
  %v11388 = vcombine.low %v10937, %v10939
  %v11389 = vcombine.low %v10946, %v10954
  %v11391 = vunpack.c.l.s4 1983009808
  %v11392 = vunpack.c.0.s8 %v11391
  %v11393 = vlaneseq
  %v11394 = vshrl.u32 %v11393, 7
  %v11395 = vsub.s32 %v11392, %v11394
  %v11396 = vrot.slane %v11388, %v11395
  %v11398 = vunpack.c.l.s4 1983009808
  %v11399 = vunpack.c.0.s8 %v11398
  %v11400 = vlaneseq
  %v11401 = vshrl.u32 %v11400, 7
  %v11402 = vsub.s32 %v11399, %v11401
  %v11403 = vrot.slane %v11389, %v11402
  %v11404 = vcombine.low %v11396, %v11403
  %v11405 = vcombine.low %v10962, %v10961
  %v11406 = vcombine.low %v10963, %v10970
  %v11408 = vunpack.c.l.s4 1983009808
  %v11409 = vunpack.c.0.s8 %v11408
  %v11410 = vlaneseq
  %v11411 = vshrl.u32 %v11410, 7
  %v11412 = vsub.s32 %v11409, %v11411
  %v11413 = vrot.slane %v11405, %v11412
  %v11415 = vunpack.c.l.s4 1983009808
  %v11416 = vunpack.c.0.s8 %v11415
  %v11417 = vlaneseq
  %v11418 = vshrl.u32 %v11417, 7
  %v11419 = vsub.s32 %v11416, %v11418
  %v11420 = vrot.slane %v11406, %v11419
  %v11421 = vcombine.low %v11413, %v11420
  %v11422 = vcombine.low %v10978, %v10986
  %v11423 = vcombine.low %v10985, %v10987
  %v11425 = vunpack.c.l.s4 1983009808
  %v11426 = vunpack.c.0.s8 %v11425
  %v11427 = vlaneseq
  %v11428 = vshrl.u32 %v11427, 7
  %v11429 = vsub.s32 %v11426, %v11428
  %v11430 = vrot.slane %v11422, %v11429
  %v11432 = vunpack.c.l.s4 1983009808
  %v11433 = vunpack.c.0.s8 %v11432
  %v11434 = vlaneseq
  %v11435 = vshrl.u32 %v11434, 7
  %v11436 = vsub.s32 %v11433, %v11435
  %v11437 = vrot.slane %v11423, %v11436
  %v11438 = vcombine.low %v11430, %v11437
  %v11439 = vcombine.low %v10994, %v11002
  %v11440 = vcombine.low %v11010, %v11009
  %v11442 = vunpack.c.l.s4 1983009808
  %v11443 = vunpack.c.0.s8 %v11442
  %v11444 = vlaneseq
  %v11445 = vshrl.u32 %v11444, 7
  %v11446 = vsub.s32 %v11443, %v11445
  %v11447 = vrot.slane %v11439, %v11446
  %v11449 = vunpack.c.l.s4 1983009808
  %v11450 = vunpack.c.0.s8 %v11449
  %v11451 = vlaneseq
  %v11452 = vshrl.u32 %v11451, 7
  %v11453 = vsub.s32 %v11450, %v11452
  %v11454 = vrot.slane %v11440, %v11453
  %v11455 = vcombine.low %v11447, %v11454
  %v11456 = vcombine.low %v11011, %v11018
  %v11457 = vcombine.low %v11026, %v11034
  %v11459 = vunpack.c.l.s4 1983009808
  %v11460 = vunpack.c.0.s8 %v11459
  %v11461 = vlaneseq
  %v11462 = vshrl.u32 %v11461, 7
  %v11463 = vsub.s32 %v11460, %v11462
  %v11464 = vrot.slane %v11456, %v11463
  %v11466 = vunpack.c.l.s4 1983009808
  %v11467 = vunpack.c.0.s8 %v11466
  %v11468 = vlaneseq
  %v11469 = vshrl.u32 %v11468, 7
  %v11470 = vsub.s32 %v11467, %v11469
  %v11471 = vrot.slane %v11457, %v11470
  %v11472 = vcombine.low %v11464, %v11471
  %v11473 = vcombine.low %v11033, %v11035
  %v11474 = vcombine.low %v11042, %v11050
  %v11476 = vunpack.c.l.s4 1983009808
  %v11477 = vunpack.c.0.s8 %v11476
  %v11478 = vlaneseq
  %v11479 = vshrl.u32 %v11478, 7
  %v11480 = vsub.s32 %v11477, %v11479
  %v11481 = vrot.slane %v11473, %v11480
  %v11483 = vunpack.c.l.s4 1983009808
  %v11484 = vunpack.c.0.s8 %v11483
  %v11485 = vlaneseq
  %v11486 = vshrl.u32 %v11485, 7
  %v11487 = vsub.s32 %v11484, %v11486
  %v11488 = vrot.slane %v11474, %v11487
  %v11489 = vcombine.low %v11481, %v11488
  %v11490 = vcombine.low %v11058, %v11057
  %v11491 = vcombine.low %v11059, %v11066
  %v11493 = vunpack.c.l.s4 1983009808
  %v11494 = vunpack.c.0.s8 %v11493
  %v11495 = vlaneseq
  %v11496 = vshrl.u32 %v11495, 7
  %v11497 = vsub.s32 %v11494, %v11496
  %v11498 = vrot.slane %v11490, %v11497
  %v11500 = vunpack.c.l.s4 1983009808
  %v11501 = vunpack.c.0.s8 %v11500
  %v11502 = vlaneseq
  %v11503 = vshrl.u32 %v11502, 7
  %v11504 = vsub.s32 %v11501, %v11503
  %v11505 = vrot.slane %v11491, %v11504
  %v11506 = vcombine.low %v11498, %v11505
  %vm11507 = vcmask 588800
  %v11508 = vsel %vm11507, %v11098, 0
  %v11510 = vsel %vm11507, %v11115, 0
  %v11512 = vsel %vm11507, %v11132, 0
  %v11514 = vsel %vm11507, %v11149, 0
  %v11516 = vsel %vm11507, %v11166, 0
  %v11518 = vsel %vm11507, %v11183, 0
  %v11520 = vsel %vm11507, %v11200, 0
  %v11522 = vsel %vm11507, %v11217, 0
  %v11524 = vsel %vm11507, %v11234, 0
  %v11526 = vsel %vm11507, %v11251, 0
  %v11528 = vsel %vm11507, %v11268, 0
  %v11530 = vsel %vm11507, %v11285, 0
  %v11532 = vsel %vm11507, %v11302, 0
  %v11534 = vsel %vm11507, %v11319, 0
  %v11536 = vsel %vm11507, %v11336, 0
  %v11538 = vsel %vm11507, %v11353, 0
  %v11540 = vsel %vm11507, %v11370, 0
  %v11542 = vsel %vm11507, %v11387, 0
  %v11544 = vsel %vm11507, %v11404, 0
  %v11546 = vsel %vm11507, %v11421, 0
  %v11548 = vsel %vm11507, %v11438, 0
  %v11550 = vsel %vm11507, %v11455, 0
  %v11552 = vsel %vm11507, %v11472, 0
  %v11554 = vsel %vm11507, %v11489, 0
  %v11556 = vsel %vm11507, %v11506, 0
  %11558 = vmatprep.subr.mxu0 0.0
  %11559 = vmatpush1.msra.mxu0 %v11068
  %11560 = vmatprep.subr.mxu0 0.0
  %11561 = vmatpush1.msra.mxu0 %v11069
  %11562 = vmatprep.subr.mxu0 0.0
  %11563 = vmatpush1.msra.mxu0 %v11070
  %11564 = vmatprep.subr.mxu0 0.0
  %11565 = vmatpush1.msra.mxu0 %v11071
  %11566 = vmatprep.subr.mxu0 0.0
  %11567 = vmatpush1.msra.mxu0 %v11072
  %11568 = vmatprep.subr.mxu0 0.0
  %11569 = vmatpush1.msra.mxu0 %v11073
  %11570 = vmatprep.subr.mxu0 0.0
  %11571 = vmatpush1.msra.mxu0 %v11074
  %11572 = vmatprep.subr.mxu0 0.0
  %11573 = vmatpush1.msra.mxu0 %v11075
  %11574 = vmatprep.subr.mxu0 0.0
  %11575 = vmatpush1.msra.mxu0 %v11076
  %11576 = vmatprep.subr.mxu0 0.0
  %11577 = vmatpush1.msra.mxu0 0.0
  %11578 = vmatprep.subr.mxu0 0.0
  %11579 = vmatpush1.msra.mxu0 0.0
  %11580 = vmatprep.subr.mxu0 0.0
  %11581 = vmatpush1.msra.mxu0 0.0
  %11582 = vmatprep.subr.mxu0 0.0
  %11583 = vmatpush1.msra.mxu0 0.0
  %11584 = vmatprep.subr.mxu0 0.0
  %11585 = vmatpush1.msra.mxu0 0.0
  %11586 = vmatprep.subr.mxu0 0.0
  %11587 = vmatpush1.msra.mxu0 0.0
  %11588 = vmatprep.subr.mxu0 0.0
  %11589 = vmatpush1.msra.mxu0 0.0
  %11590 = vmatprep.subr.mxu0 0.0
  %11591 = vmatpush1.msra.mxu0 0.0
  %11592 = vmatprep.subr.mxu0 0.0
  %11593 = vmatpush1.msra.mxu0 0.0
  %11594 = vmatprep.subr.mxu0 0.0
  %11595 = vmatpush1.msra.mxu0 0.0
  %11596 = vmatprep.subr.mxu0 0.0
  %11597 = vmatpush1.msra.mxu0 0.0
  %11598 = vmatprep.subr.mxu0 0.0
  %11599 = vmatpush1.msra.mxu0 0.0
  %11600 = vmatprep.subr.mxu0 0.0
  %11601 = vmatpush1.msra.mxu0 0.0
  %11602 = vmatprep.subr.mxu0 0.0
  %11603 = vmatpush1.msra.mxu0 0.0
  %11604 = vmatprep.subr.mxu0 0.0
  %11605 = vmatpush1.msra.mxu0 0.0
  %11606 = vmatprep.subr.mxu0 0.0
  %11607 = vmatpush1.msra.mxu0 0.0
  %11608 = vmatprep.subr.mxu0 0.0
  %11609 = vmatpush1.msra.mxu0 0.0
  %11610 = vmatprep.subr.mxu0 0.0
  %11611 = vmatpush1.msra.mxu0 0.0
  %11612 = vmatprep.subr.mxu0 0.0
  %11613 = vmatpush1.msra.mxu0 0.0
  %11614 = vmatprep.subr.mxu0 0.0
  %11615 = vmatpush1.msra.mxu0 0.0
  %11616 = vmatprep.subr.mxu0 0.0
  %11617 = vmatpush1.msra.mxu0 0.0
  %11618 = vmatprep.subr.mxu0 0.0
  %11619 = vmatpush1.msra.mxu0 0.0
  %11620 = vmatprep.subr.mxu0 0.0
  %11621 = vmatpush1.msra.mxu0 0.0
  %11622 = vmatprep.mubr.f32.mxu0 0.0
  %11623 = vmatmul.mubr.f32.gmra.mrb[0].mxu0 %v11508
  %v11624 = vpop.f32.mrb[0].mxu0
  %v11625 = vadd.f32 %v11081, %v11624
  %v11626 = vpop.f32.mrb[0].mxu0
  %11627 = vmatprep.mubr.f32.mxu0 0.0
  %11628 = vmatmul.mubr.f32.gmra.mrb[0].mxu0 %v11510
  %v11629 = vpop.f32.mrb[0].mxu0
  %v11630 = vadd.f32 %v11081, %v11629
  %v11631 = vpop.f32.mrb[0].mxu0
  %11632 = vmatprep.mubr.f32.mxu0 0.0
  %11633 = vmatmul.mubr.f32.gmra.mrb[0].mxu0 %v11512
  %v11634 = vpop.f32.mrb[0].mxu0
  %v11635 = vadd.f32 %v11081, %v11634
  %v11636 = vpop.f32.mrb[0].mxu0
  %11637 = vmatprep.mubr.f32.mxu0 0.0
  %11638 = vmatmul.mubr.f32.gmra.mrb[0].mxu0 %v11514
  %v11639 = vpop.f32.mrb[0].mxu0
  %v11640 = vadd.f32 %v11081, %v11639
  %v11641 = vpop.f32.mrb[0].mxu0
  %11642 = vmatprep.mubr.f32.mxu0 0.0
  %11643 = vmatmul.mubr.f32.gmra.mrb[0].mxu0 %v11516
  %v11644 = vpop.f32.mrb[0].mxu0
  %v11645 = vadd.f32 %v11081, %v11644
  %v11646 = vpop.f32.mrb[0].mxu0
  %11647 = vmatprep.mubr.f32.mxu0 0.0
  %11648 = vmatmul.mubr.f32.gmra.mrb[0].mxu0 %v11518
  %v11649 = vpop.f32.mrb[0].mxu0
  %v11650 = vadd.f32 %v11081, %v11649
  %v11651 = vpop.f32.mrb[0].mxu0
  %11652 = vmatprep.mubr.f32.mxu0 0.0
  %11653 = vmatmul.mubr.f32.gmra.mrb[0].mxu0 %v11520
  %v11654 = vpop.f32.mrb[0].mxu0
  %v11655 = vadd.f32 %v11081, %v11654
  %v11656 = vpop.f32.mrb[0].mxu0
  %11657 = vmatprep.mubr.f32.mxu0 0.0
  %11658 = vmatmul.mubr.f32.gmra.mrb[0].mxu0 %v11522
  %v11659 = vpop.f32.mrb[0].mxu0
  %v11660 = vadd.f32 %v11081, %v11659
  %v11661 = vpop.f32.mrb[0].mxu0
  %11662 = vmatprep.mubr.f32.mxu0 0.0
  %11663 = vmatmul.mubr.f32.gmra.mrb[0].mxu0 %v11524
  %v11664 = vpop.f32.mrb[0].mxu0
  %v11665 = vadd.f32 %v11081, %v11664
  %v11666 = vpop.f32.mrb[0].mxu0
  %11667 = vmatprep.mubr.f32.mxu0 0.0
  %11668 = vmatmul.mubr.f32.gmra.mrb[0].mxu0 %v11526
  %v11669 = vpop.f32.mrb[0].mxu0
  %v11670 = vadd.f32 %v11081, %v11669
  %v11671 = vpop.f32.mrb[0].mxu0
  %11672 = vmatprep.mubr.f32.mxu0 0.0
  %11673 = vmatmul.mubr.f32.gmra.mrb[0].mxu0 %v11528
  %v11674 = vpop.f32.mrb[0].mxu0
  %v11675 = vadd.f32 %v11081, %v11674
  %v11676 = vpop.f32.mrb[0].mxu0
  %11677 = vmatprep.mubr.f32.mxu0 0.0
  %11678 = vmatmul.mubr.f32.gmra.mrb[0].mxu0 %v11530
  %v11679 = vpop.f32.mrb[0].mxu0
  %v11680 = vadd.f32 %v11081, %v11679
  %v11681 = vpop.f32.mrb[0].mxu0
  %11682 = vmatprep.mubr.f32.mxu0 0.0
  %11683 = vmatmul.mubr.f32.gmra.mrb[0].mxu0 %v11532
  %v11684 = vpop.f32.mrb[0].mxu0
  %v11685 = vadd.f32 %v11081, %v11684
  %v11686 = vpop.f32.mrb[0].mxu0
  %11687 = vmatprep.mubr.f32.mxu0 0.0
  %11688 = vmatmul.mubr.f32.gmra.mrb[0].mxu0 %v11534
  %v11689 = vpop.f32.mrb[0].mxu0
  %v11690 = vadd.f32 %v11081, %v11689
  %v11691 = vpop.f32.mrb[0].mxu0
  %11692 = vmatprep.mubr.f32.mxu0 0.0
  %11693 = vmatmul.mubr.f32.gmra.mrb[0].mxu0 %v11536
  %v11694 = vpop.f32.mrb[0].mxu0
  %v11695 = vadd.f32 %v11081, %v11694
  %v11696 = vpop.f32.mrb[0].mxu0
  %11697 = vmatprep.mubr.f32.mxu0 0.0
  %11698 = vmatmul.mubr.f32.gmra.mrb[0].mxu0 %v11538
  %v11699 = vpop.f32.mrb[0].mxu0
  %v11700 = vadd.f32 %v11081, %v11699
  %v11701 = vpop.f32.mrb[0].mxu0
  %11702 = vmatprep.mubr.f32.mxu0 0.0
  %11703 = vmatmul.mubr.f32.gmra.mrb[0].mxu0 %v11540
  %v11704 = vpop.f32.mrb[0].mxu0
  %v11705 = vadd.f32 %v11081, %v11704
  %v11706 = vpop.f32.mrb[0].mxu0
  %11707 = vmatprep.mubr.f32.mxu0 0.0
  %11708 = vmatmul.mubr.f32.gmra.mrb[0].mxu0 %v11542
  %v11709 = vpop.f32.mrb[0].mxu0
  %v11710 = vadd.f32 %v11081, %v11709
  %v11711 = vpop.f32.mrb[0].mxu0
  %11712 = vmatprep.mubr.f32.mxu0 0.0
  %11713 = vmatmul.mubr.f32.gmra.mrb[0].mxu0 %v11544
  %v11714 = vpop.f32.mrb[0].mxu0
  %v11715 = vadd.f32 %v11081, %v11714
  %v11716 = vpop.f32.mrb[0].mxu0
  %11717 = vmatprep.mubr.f32.mxu0 0.0
  %11718 = vmatmul.mubr.f32.gmra.mrb[0].mxu0 %v11546
  %v11719 = vpop.f32.mrb[0].mxu0
  %v11720 = vadd.f32 %v11081, %v11719
  %v11721 = vpop.f32.mrb[0].mxu0
  %11722 = vmatprep.mubr.f32.mxu0 0.0
  %11723 = vmatmul.mubr.f32.gmra.mrb[0].mxu0 %v11548
  %v11724 = vpop.f32.mrb[0].mxu0
  %v11725 = vadd.f32 %v11081, %v11724
  %v11726 = vpop.f32.mrb[0].mxu0
  %11727 = vmatprep.mubr.f32.mxu0 0.0
  %11728 = vmatmul.mubr.f32.gmra.mrb[0].mxu0 %v11550
  %v11729 = vpop.f32.mrb[0].mxu0
  %v11730 = vadd.f32 %v11081, %v11729
  %v11731 = vpop.f32.mrb[0].mxu0
  %11732 = vmatprep.mubr.f32.mxu0 0.0
  %11733 = vmatmul.mubr.f32.gmra.mrb[0].mxu0 %v11552
  %v11734 = vpop.f32.mrb[0].mxu0
  %v11735 = vadd.f32 %v11081, %v11734
  %v11736 = vpop.f32.mrb[0].mxu0
  %11737 = vmatprep.mubr.f32.mxu0 0.0
  %11738 = vmatmul.mubr.f32.gmra.mrb[0].mxu0 %v11554
  %v11739 = vpop.f32.mrb[0].mxu0
  %v11740 = vadd.f32 %v11081, %v11739
  %v11741 = vpop.f32.mrb[0].mxu0
  %11742 = vmatprep.mubr.f32.mxu0 0.0
  %11743 = vmatmul.mubr.f32.gmra.mrb[0].mxu0 %v11556
  %v11744 = vpop.f32.mrb[0].mxu0
  %v11745 = vadd.f32 %v11081, %v11744
  %v11746 = vpop.f32.mrb[0].mxu0
  %11747 = vdwg.mxu0
  %v11773 = vcombine.high %v11625, %v11625
  %v11775 = vunpack.c.l.s4 1983009808
  %v11776 = vunpack.c.0.s8 %v11775
  %v11777 = vlaneseq
  %v11778 = vshrl.u32 %v11777, 7
  %v11779 = vsub.s32 %v11776, %v11778
  %v11780 = vrot.slane %v11625, %v11779
  %v11782 = vunpack.c.l.s4 1983009808
  %v11783 = vunpack.c.0.s8 %v11782
  %v11784 = vlaneseq
  %v11785 = vshrl.u32 %v11784, 7
  %v11786 = vsub.s32 %v11783, %v11785
  %v11787 = vrot.slane %v11773, %v11786
  %v11788 = vcombine.high %v11780, %v11780
  %v11789 = vcombine.high %v11787, %v11787
  %v11790 = vcombine.high %v11630, %v11630
  %v11792 = vunpack.c.l.s4 1983009808
  %v11793 = vunpack.c.0.s8 %v11792
  %v11794 = vlaneseq
  %v11795 = vshrl.u32 %v11794, 7
  %v11796 = vsub.s32 %v11793, %v11795
  %v11797 = vrot.slane %v11630, %v11796
  %v11799 = vunpack.c.l.s4 1983009808
  %v11800 = vunpack.c.0.s8 %v11799
  %v11801 = vlaneseq
  %v11802 = vshrl.u32 %v11801, 7
  %v11803 = vsub.s32 %v11800, %v11802
  %v11804 = vrot.slane %v11790, %v11803
  %v11805 = vcombine.high %v11797, %v11797
  %v11806 = vcombine.high %v11804, %v11804
  %v11807 = vcombine.high %v11635, %v11635
  %v11809 = vunpack.c.l.s4 1983009808
  %v11810 = vunpack.c.0.s8 %v11809
  %v11811 = vlaneseq
  %v11812 = vshrl.u32 %v11811, 7
  %v11813 = vsub.s32 %v11810, %v11812
  %v11814 = vrot.slane %v11635, %v11813
  %v11816 = vunpack.c.l.s4 1983009808
  %v11817 = vunpack.c.0.s8 %v11816
  %v11818 = vlaneseq
  %v11819 = vshrl.u32 %v11818, 7
  %v11820 = vsub.s32 %v11817, %v11819
  %v11821 = vrot.slane %v11807, %v11820
  %v11822 = vcombine.high %v11814, %v11814
  %v11823 = vcombine.high %v11821, %v11821
  %v11824 = vcombine.high %v11640, %v11640
  %v11826 = vunpack.c.l.s4 1983009808
  %v11827 = vunpack.c.0.s8 %v11826
  %v11828 = vlaneseq
  %v11829 = vshrl.u32 %v11828, 7
  %v11830 = vsub.s32 %v11827, %v11829
  %v11831 = vrot.slane %v11640, %v11830
  %v11833 = vunpack.c.l.s4 1983009808
  %v11834 = vunpack.c.0.s8 %v11833
  %v11835 = vlaneseq
  %v11836 = vshrl.u32 %v11835, 7
  %v11837 = vsub.s32 %v11834, %v11836
  %v11838 = vrot.slane %v11824, %v11837
  %v11839 = vcombine.high %v11831, %v11831
  %v11840 = vcombine.high %v11838, %v11838
  %v11841 = vcombine.high %v11645, %v11645
  %v11843 = vunpack.c.l.s4 1983009808
  %v11844 = vunpack.c.0.s8 %v11843
  %v11845 = vlaneseq
  %v11846 = vshrl.u32 %v11845, 7
  %v11847 = vsub.s32 %v11844, %v11846
  %v11848 = vrot.slane %v11645, %v11847
  %v11850 = vunpack.c.l.s4 1983009808
  %v11851 = vunpack.c.0.s8 %v11850
  %v11852 = vlaneseq
  %v11853 = vshrl.u32 %v11852, 7
  %v11854 = vsub.s32 %v11851, %v11853
  %v11855 = vrot.slane %v11841, %v11854
  %v11856 = vcombine.high %v11848, %v11848
  %v11857 = vcombine.high %v11855, %v11855
  %v11858 = vcombine.high %v11650, %v11650
  %v11860 = vunpack.c.l.s4 1983009808
  %v11861 = vunpack.c.0.s8 %v11860
  %v11862 = vlaneseq
  %v11863 = vshrl.u32 %v11862, 7
  %v11864 = vsub.s32 %v11861, %v11863
  %v11865 = vrot.slane %v11650, %v11864
  %v11867 = vunpack.c.l.s4 1983009808
  %v11868 = vunpack.c.0.s8 %v11867
  %v11869 = vlaneseq
  %v11870 = vshrl.u32 %v11869, 7
  %v11871 = vsub.s32 %v11868, %v11870
  %v11872 = vrot.slane %v11858, %v11871
  %v11873 = vcombine.high %v11865, %v11865
  %v11874 = vcombine.high %v11872, %v11872
  %v11875 = vcombine.high %v11655, %v11655
  %v11877 = vunpack.c.l.s4 1983009808
  %v11878 = vunpack.c.0.s8 %v11877
  %v11879 = vlaneseq
  %v11880 = vshrl.u32 %v11879, 7
  %v11881 = vsub.s32 %v11878, %v11880
  %v11882 = vrot.slane %v11655, %v11881
  %v11884 = vunpack.c.l.s4 1983009808
  %v11885 = vunpack.c.0.s8 %v11884
  %v11886 = vlaneseq
  %v11887 = vshrl.u32 %v11886, 7
  %v11888 = vsub.s32 %v11885, %v11887
  %v11889 = vrot.slane %v11875, %v11888
  %v11890 = vcombine.high %v11882, %v11882
  %v11891 = vcombine.high %v11889, %v11889
  %v11892 = vcombine.high %v11660, %v11660
  %v11894 = vunpack.c.l.s4 1983009808
  %v11895 = vunpack.c.0.s8 %v11894
  %v11896 = vlaneseq
  %v11897 = vshrl.u32 %v11896, 7
  %v11898 = vsub.s32 %v11895, %v11897
  %v11899 = vrot.slane %v11660, %v11898
  %v11901 = vunpack.c.l.s4 1983009808
  %v11902 = vunpack.c.0.s8 %v11901
  %v11903 = vlaneseq
  %v11904 = vshrl.u32 %v11903, 7
  %v11905 = vsub.s32 %v11902, %v11904
  %v11906 = vrot.slane %v11892, %v11905
  %v11907 = vcombine.high %v11899, %v11899
  %v11908 = vcombine.high %v11906, %v11906
  %v11909 = vcombine.high %v11665, %v11665
  %v11911 = vunpack.c.l.s4 1983009808
  %v11912 = vunpack.c.0.s8 %v11911
  %v11913 = vlaneseq
  %v11914 = vshrl.u32 %v11913, 7
  %v11915 = vsub.s32 %v11912, %v11914
  %v11916 = vrot.slane %v11665, %v11915
  %v11918 = vunpack.c.l.s4 1983009808
  %v11919 = vunpack.c.0.s8 %v11918
  %v11920 = vlaneseq
  %v11921 = vshrl.u32 %v11920, 7
  %v11922 = vsub.s32 %v11919, %v11921
  %v11923 = vrot.slane %v11909, %v11922
  %v11924 = vcombine.high %v11916, %v11916
  %v11925 = vcombine.high %v11923, %v11923
  %v11926 = vcombine.high %v11670, %v11670
  %v11928 = vunpack.c.l.s4 1983009808
  %v11929 = vunpack.c.0.s8 %v11928
  %v11930 = vlaneseq
  %v11931 = vshrl.u32 %v11930, 7
  %v11932 = vsub.s32 %v11929, %v11931
  %v11933 = vrot.slane %v11670, %v11932
  %v11935 = vunpack.c.l.s4 1983009808
  %v11936 = vunpack.c.0.s8 %v11935
  %v11937 = vlaneseq
  %v11938 = vshrl.u32 %v11937, 7
  %v11939 = vsub.s32 %v11936, %v11938
  %v11940 = vrot.slane %v11926, %v11939
  %v11941 = vcombine.high %v11933, %v11933
  %v11942 = vcombine.high %v11940, %v11940
  %v11943 = vcombine.high %v11675, %v11675
  %v11945 = vunpack.c.l.s4 1983009808
  %v11946 = vunpack.c.0.s8 %v11945
  %v11947 = vlaneseq
  %v11948 = vshrl.u32 %v11947, 7
  %v11949 = vsub.s32 %v11946, %v11948
  %v11950 = vrot.slane %v11675, %v11949
  %v11952 = vunpack.c.l.s4 1983009808
  %v11953 = vunpack.c.0.s8 %v11952
  %v11954 = vlaneseq
  %v11955 = vshrl.u32 %v11954, 7
  %v11956 = vsub.s32 %v11953, %v11955
  %v11957 = vrot.slane %v11943, %v11956
  %v11958 = vcombine.high %v11950, %v11950
  %v11959 = vcombine.high %v11957, %v11957
  %v11960 = vcombine.high %v11680, %v11680
  %v11962 = vunpack.c.l.s4 1983009808
  %v11963 = vunpack.c.0.s8 %v11962
  %v11964 = vlaneseq
  %v11965 = vshrl.u32 %v11964, 7
  %v11966 = vsub.s32 %v11963, %v11965
  %v11967 = vrot.slane %v11680, %v11966
  %v11969 = vunpack.c.l.s4 1983009808
  %v11970 = vunpack.c.0.s8 %v11969
  %v11971 = vlaneseq
  %v11972 = vshrl.u32 %v11971, 7
  %v11973 = vsub.s32 %v11970, %v11972
  %v11974 = vrot.slane %v11960, %v11973
  %v11975 = vcombine.high %v11967, %v11967
  %v11976 = vcombine.high %v11974, %v11974
  %v11977 = vcombine.high %v11685, %v11685
  %v11979 = vunpack.c.l.s4 1983009808
  %v11980 = vunpack.c.0.s8 %v11979
  %v11981 = vlaneseq
  %v11982 = vshrl.u32 %v11981, 7
  %v11983 = vsub.s32 %v11980, %v11982
  %v11984 = vrot.slane %v11685, %v11983
  %v11986 = vunpack.c.l.s4 1983009808
  %v11987 = vunpack.c.0.s8 %v11986
  %v11988 = vlaneseq
  %v11989 = vshrl.u32 %v11988, 7
  %v11990 = vsub.s32 %v11987, %v11989
  %v11991 = vrot.slane %v11977, %v11990
  %v11992 = vcombine.high %v11984, %v11984
  %v11993 = vcombine.high %v11991, %v11991
  %v11994 = vcombine.high %v11690, %v11690
  %v11996 = vunpack.c.l.s4 1983009808
  %v11997 = vunpack.c.0.s8 %v11996
  %v11998 = vlaneseq
  %v11999 = vshrl.u32 %v11998, 7
  %v12000 = vsub.s32 %v11997, %v11999
  %v12001 = vrot.slane %v11690, %v12000
  %v12003 = vunpack.c.l.s4 1983009808
  %v12004 = vunpack.c.0.s8 %v12003
  %v12005 = vlaneseq
  %v12006 = vshrl.u32 %v12005, 7
  %v12007 = vsub.s32 %v12004, %v12006
  %v12008 = vrot.slane %v11994, %v12007
  %v12009 = vcombine.high %v12001, %v12001
  %v12010 = vcombine.high %v12008, %v12008
  %v12011 = vcombine.high %v11695, %v11695
  %v12013 = vunpack.c.l.s4 1983009808
  %v12014 = vunpack.c.0.s8 %v12013
  %v12015 = vlaneseq
  %v12016 = vshrl.u32 %v12015, 7
  %v12017 = vsub.s32 %v12014, %v12016
  %v12018 = vrot.slane %v11695, %v12017
  %v12020 = vunpack.c.l.s4 1983009808
  %v12021 = vunpack.c.0.s8 %v12020
  %v12022 = vlaneseq
  %v12023 = vshrl.u32 %v12022, 7
  %v12024 = vsub.s32 %v12021, %v12023
  %v12025 = vrot.slane %v12011, %v12024
  %v12026 = vcombine.high %v12018, %v12018
  %v12027 = vcombine.high %v12025, %v12025
  %v12028 = vcombine.high %v11700, %v11700
  %v12030 = vunpack.c.l.s4 1983009808
  %v12031 = vunpack.c.0.s8 %v12030
  %v12032 = vlaneseq
  %v12033 = vshrl.u32 %v12032, 7
  %v12034 = vsub.s32 %v12031, %v12033
  %v12035 = vrot.slane %v11700, %v12034
  %v12037 = vunpack.c.l.s4 1983009808
  %v12038 = vunpack.c.0.s8 %v12037
  %v12039 = vlaneseq
  %v12040 = vshrl.u32 %v12039, 7
  %v12041 = vsub.s32 %v12038, %v12040
  %v12042 = vrot.slane %v12028, %v12041
  %v12043 = vcombine.high %v12035, %v12035
  %v12044 = vcombine.high %v12042, %v12042
  %v12045 = vcombine.high %v11705, %v11705
  %v12047 = vunpack.c.l.s4 1983009808
  %v12048 = vunpack.c.0.s8 %v12047
  %v12049 = vlaneseq
  %v12050 = vshrl.u32 %v12049, 7
  %v12051 = vsub.s32 %v12048, %v12050
  %v12052 = vrot.slane %v11705, %v12051
  %v12054 = vunpack.c.l.s4 1983009808
  %v12055 = vunpack.c.0.s8 %v12054
  %v12056 = vlaneseq
  %v12057 = vshrl.u32 %v12056, 7
  %v12058 = vsub.s32 %v12055, %v12057
  %v12059 = vrot.slane %v12045, %v12058
  %v12060 = vcombine.high %v12052, %v12052
  %v12061 = vcombine.high %v12059, %v12059
  %v12062 = vcombine.high %v11710, %v11710
  %v12064 = vunpack.c.l.s4 1983009808
  %v12065 = vunpack.c.0.s8 %v12064
  %v12066 = vlaneseq
  %v12067 = vshrl.u32 %v12066, 7
  %v12068 = vsub.s32 %v12065, %v12067
  %v12069 = vrot.slane %v11710, %v12068
  %v12071 = vunpack.c.l.s4 1983009808
  %v12072 = vunpack.c.0.s8 %v12071
  %v12073 = vlaneseq
  %v12074 = vshrl.u32 %v12073, 7
  %v12075 = vsub.s32 %v12072, %v12074
  %v12076 = vrot.slane %v12062, %v12075
  %v12077 = vcombine.high %v12069, %v12069
  %v12078 = vcombine.high %v12076, %v12076
  %v12079 = vcombine.high %v11715, %v11715
  %v12081 = vunpack.c.l.s4 1983009808
  %v12082 = vunpack.c.0.s8 %v12081
  %v12083 = vlaneseq
  %v12084 = vshrl.u32 %v12083, 7
  %v12085 = vsub.s32 %v12082, %v12084
  %v12086 = vrot.slane %v11715, %v12085
  %v12088 = vunpack.c.l.s4 1983009808
  %v12089 = vunpack.c.0.s8 %v12088
  %v12090 = vlaneseq
  %v12091 = vshrl.u32 %v12090, 7
  %v12092 = vsub.s32 %v12089, %v12091
  %v12093 = vrot.slane %v12079, %v12092
  %v12094 = vcombine.high %v12086, %v12086
  %v12095 = vcombine.high %v12093, %v12093
  %v12096 = vcombine.high %v11720, %v11720
  %v12098 = vunpack.c.l.s4 1983009808
  %v12099 = vunpack.c.0.s8 %v12098
  %v12100 = vlaneseq
  %v12101 = vshrl.u32 %v12100, 7
  %v12102 = vsub.s32 %v12099, %v12101
  %v12103 = vrot.slane %v11720, %v12102
  %v12105 = vunpack.c.l.s4 1983009808
  %v12106 = vunpack.c.0.s8 %v12105
  %v12107 = vlaneseq
  %v12108 = vshrl.u32 %v12107, 7
  %v12109 = vsub.s32 %v12106, %v12108
  %v12110 = vrot.slane %v12096, %v12109
  %v12111 = vcombine.high %v12103, %v12103
  %v12112 = vcombine.high %v12110, %v12110
  %v12113 = vcombine.high %v11725, %v11725
  %v12115 = vunpack.c.l.s4 1983009808
  %v12116 = vunpack.c.0.s8 %v12115
  %v12117 = vlaneseq
  %v12118 = vshrl.u32 %v12117, 7
  %v12119 = vsub.s32 %v12116, %v12118
  %v12120 = vrot.slane %v11725, %v12119
  %v12122 = vunpack.c.l.s4 1983009808
  %v12123 = vunpack.c.0.s8 %v12122
  %v12124 = vlaneseq
  %v12125 = vshrl.u32 %v12124, 7
  %v12126 = vsub.s32 %v12123, %v12125
  %v12127 = vrot.slane %v12113, %v12126
  %v12128 = vcombine.high %v12120, %v12120
  %v12129 = vcombine.high %v12127, %v12127
  %v12130 = vcombine.high %v11730, %v11730
  %v12132 = vunpack.c.l.s4 1983009808
  %v12133 = vunpack.c.0.s8 %v12132
  %v12134 = vlaneseq
  %v12135 = vshrl.u32 %v12134, 7
  %v12136 = vsub.s32 %v12133, %v12135
  %v12137 = vrot.slane %v11730, %v12136
  %v12139 = vunpack.c.l.s4 1983009808
  %v12140 = vunpack.c.0.s8 %v12139
  %v12141 = vlaneseq
  %v12142 = vshrl.u32 %v12141, 7
  %v12143 = vsub.s32 %v12140, %v12142
  %v12144 = vrot.slane %v12130, %v12143
  %v12145 = vcombine.high %v12137, %v12137
  %v12146 = vcombine.high %v12144, %v12144
  %v12147 = vcombine.high %v11735, %v11735
  %v12149 = vunpack.c.l.s4 1983009808
  %v12150 = vunpack.c.0.s8 %v12149
  %v12151 = vlaneseq
  %v12152 = vshrl.u32 %v12151, 7
  %v12153 = vsub.s32 %v12150, %v12152
  %v12154 = vrot.slane %v11735, %v12153
  %v12156 = vunpack.c.l.s4 1983009808
  %v12157 = vunpack.c.0.s8 %v12156
  %v12158 = vlaneseq
  %v12159 = vshrl.u32 %v12158, 7
  %v12160 = vsub.s32 %v12157, %v12159
  %v12161 = vrot.slane %v12147, %v12160
  %v12162 = vcombine.high %v12154, %v12154
  %v12163 = vcombine.high %v12161, %v12161
  %v12164 = vcombine.high %v11740, %v11740
  %v12166 = vunpack.c.l.s4 1983009808
  %v12167 = vunpack.c.0.s8 %v12166
  %v12168 = vlaneseq
  %v12169 = vshrl.u32 %v12168, 7
  %v12170 = vsub.s32 %v12167, %v12169
  %v12171 = vrot.slane %v11740, %v12170
  %v12173 = vunpack.c.l.s4 1983009808
  %v12174 = vunpack.c.0.s8 %v12173
  %v12175 = vlaneseq
  %v12176 = vshrl.u32 %v12175, 7
  %v12177 = vsub.s32 %v12174, %v12176
  %v12178 = vrot.slane %v12164, %v12177
  %v12179 = vcombine.high %v12171, %v12171
  %v12180 = vcombine.high %v12178, %v12178
  %v12181 = vcombine.high %v11745, %v11745
  %v12183 = vunpack.c.l.s4 1983009808
  %v12184 = vunpack.c.0.s8 %v12183
  %v12185 = vlaneseq
  %v12186 = vshrl.u32 %v12185, 7
  %v12187 = vsub.s32 %v12184, %v12186
  %v12188 = vrot.slane %v11745, %v12187
  %v12190 = vunpack.c.l.s4 1983009808
  %v12191 = vunpack.c.0.s8 %v12190
  %v12192 = vlaneseq
  %v12193 = vshrl.u32 %v12192, 7
  %v12194 = vsub.s32 %v12191, %v12193
  %v12195 = vrot.slane %v12181, %v12194
  %v12196 = vcombine.high %v12188, %v12188
  %v12197 = vcombine.high %v12195, %v12195
  %v12198 = vcombine.low %v11780, %v11788
  %v12199 = vcombine.low %v11787, %v11789
  %v12201 = vunpack.c.l.s4 1983009808
  %v12202 = vunpack.c.0.s8 %v12201
  %v12203 = vlaneseq
  %v12204 = vshrl.u32 %v12203, 7
  %v12205 = vsub.s32 %v12202, %v12204
  %v12206 = vrot.slane %v12198, %v12205
  %v12208 = vunpack.c.l.s4 1983009808
  %v12209 = vunpack.c.0.s8 %v12208
  %v12210 = vlaneseq
  %v12211 = vshrl.u32 %v12210, 7
  %v12212 = vsub.s32 %v12209, %v12211
  %v12213 = vrot.slane %v12199, %v12212
  %v12214 = vcombine.low %v12206, %v12213
  %v12215 = vcombine.low %v11805, %v11804
  %v12216 = vcombine.low %v11806, %v11814
  %v12218 = vunpack.c.l.s4 1983009808
  %v12219 = vunpack.c.0.s8 %v12218
  %v12220 = vlaneseq
  %v12221 = vshrl.u32 %v12220, 7
  %v12222 = vsub.s32 %v12219, %v12221
  %v12223 = vrot.slane %v12215, %v12222
  %v12225 = vunpack.c.l.s4 1983009808
  %v12226 = vunpack.c.0.s8 %v12225
  %v12227 = vlaneseq
  %v12228 = vshrl.u32 %v12227, 7
  %v12229 = vsub.s32 %v12226, %v12228
  %v12230 = vrot.slane %v12216, %v12229
  %v12231 = vcombine.low %v12223, %v12230
  %v12232 = vcombine.low %v11821, %v11823
  %v12233 = vcombine.low %v11831, %v11839
  %v12235 = vunpack.c.l.s4 1983009808
  %v12236 = vunpack.c.0.s8 %v12235
  %v12237 = vlaneseq
  %v12238 = vshrl.u32 %v12237, 7
  %v12239 = vsub.s32 %v12236, %v12238
  %v12240 = vrot.slane %v12232, %v12239
  %v12242 = vunpack.c.l.s4 1983009808
  %v12243 = vunpack.c.0.s8 %v12242
  %v12244 = vlaneseq
  %v12245 = vshrl.u32 %v12244, 7
  %v12246 = vsub.s32 %v12243, %v12245
  %v12247 = vrot.slane %v12233, %v12246
  %v12248 = vcombine.low %v12240, %v12247
  %v12249 = vcombine.low %v11840, %v11848
  %v12250 = vcombine.low %v11856, %v11855
  %v12252 = vunpack.c.l.s4 1983009808
  %v12253 = vunpack.c.0.s8 %v12252
  %v12254 = vlaneseq
  %v12255 = vshrl.u32 %v12254, 7
  %v12256 = vsub.s32 %v12253, %v12255
  %v12257 = vrot.slane %v12249, %v12256
  %v12259 = vunpack.c.l.s4 1983009808
  %v12260 = vunpack.c.0.s8 %v12259
  %v12261 = vlaneseq
  %v12262 = vshrl.u32 %v12261, 7
  %v12263 = vsub.s32 %v12260, %v12262
  %v12264 = vrot.slane %v12250, %v12263
  %v12265 = vcombine.low %v12257, %v12264
  %v12266 = vcombine.low %v11865, %v11873
  %v12267 = vcombine.low %v11872, %v11874
  %v12269 = vunpack.c.l.s4 1983009808
  %v12270 = vunpack.c.0.s8 %v12269
  %v12271 = vlaneseq
  %v12272 = vshrl.u32 %v12271, 7
  %v12273 = vsub.s32 %v12270, %v12272
  %v12274 = vrot.slane %v12266, %v12273
  %v12276 = vunpack.c.l.s4 1983009808
  %v12277 = vunpack.c.0.s8 %v12276
  %v12278 = vlaneseq
  %v12279 = vshrl.u32 %v12278, 7
  %v12280 = vsub.s32 %v12277, %v12279
  %v12281 = vrot.slane %v12267, %v12280
  %v12282 = vcombine.low %v12274, %v12281
  %v12283 = vcombine.low %v11890, %v11889
  %v12284 = vcombine.low %v11891, %v11899
  %v12286 = vunpack.c.l.s4 1983009808
  %v12287 = vunpack.c.0.s8 %v12286
  %v12288 = vlaneseq
  %v12289 = vshrl.u32 %v12288, 7
  %v12290 = vsub.s32 %v12287, %v12289
  %v12291 = vrot.slane %v12283, %v12290
  %v12293 = vunpack.c.l.s4 1983009808
  %v12294 = vunpack.c.0.s8 %v12293
  %v12295 = vlaneseq
  %v12296 = vshrl.u32 %v12295, 7
  %v12297 = vsub.s32 %v12294, %v12296
  %v12298 = vrot.slane %v12284, %v12297
  %v12299 = vcombine.low %v12291, %v12298
  %v12300 = vcombine.low %v11906, %v11908
  %v12301 = vcombine.low %v11916, %v11924
  %v12303 = vunpack.c.l.s4 1983009808
  %v12304 = vunpack.c.0.s8 %v12303
  %v12305 = vlaneseq
  %v12306 = vshrl.u32 %v12305, 7
  %v12307 = vsub.s32 %v12304, %v12306
  %v12308 = vrot.slane %v12300, %v12307
  %v12310 = vunpack.c.l.s4 1983009808
  %v12311 = vunpack.c.0.s8 %v12310
  %v12312 = vlaneseq
  %v12313 = vshrl.u32 %v12312, 7
  %v12314 = vsub.s32 %v12311, %v12313
  %v12315 = vrot.slane %v12301, %v12314
  %v12316 = vcombine.low %v12308, %v12315
  %v12317 = vcombine.low %v11925, %v11933
  %v12318 = vcombine.low %v11941, %v11940
  %v12320 = vunpack.c.l.s4 1983009808
  %v12321 = vunpack.c.0.s8 %v12320
  %v12322 = vlaneseq
  %v12323 = vshrl.u32 %v12322, 7
  %v12324 = vsub.s32 %v12321, %v12323
  %v12325 = vrot.slane %v12317, %v12324
  %v12327 = vunpack.c.l.s4 1983009808
  %v12328 = vunpack.c.0.s8 %v12327
  %v12329 = vlaneseq
  %v12330 = vshrl.u32 %v12329, 7
  %v12331 = vsub.s32 %v12328, %v12330
  %v12332 = vrot.slane %v12318, %v12331
  %v12333 = vcombine.low %v12325, %v12332
  %v12334 = vcombine.low %v11991, %v11993
  %v12335 = vcombine.low %v12001, %v12009
  %v12337 = vunpack.c.l.s4 1983009808
  %v12338 = vunpack.c.0.s8 %v12337
  %v12339 = vlaneseq
  %v12340 = vshrl.u32 %v12339, 7
  %v12341 = vsub.s32 %v12338, %v12340
  %v12342 = vrot.slane %v12334, %v12341
  %v12344 = vunpack.c.l.s4 1983009808
  %v12345 = vunpack.c.0.s8 %v12344
  %v12346 = vlaneseq
  %v12347 = vshrl.u32 %v12346, 7
  %v12348 = vsub.s32 %v12345, %v12347
  %v12349 = vrot.slane %v12335, %v12348
  %v12350 = vcombine.low %v12342, %v12349
  %v12351 = vcombine.low %v12010, %v12018
  %v12352 = vcombine.low %v12026, %v12025
  %v12354 = vunpack.c.l.s4 1983009808
  %v12355 = vunpack.c.0.s8 %v12354
  %v12356 = vlaneseq
  %v12357 = vshrl.u32 %v12356, 7
  %v12358 = vsub.s32 %v12355, %v12357
  %v12359 = vrot.slane %v12351, %v12358
  %v12361 = vunpack.c.l.s4 1983009808
  %v12362 = vunpack.c.0.s8 %v12361
  %v12363 = vlaneseq
  %v12364 = vshrl.u32 %v12363, 7
  %v12365 = vsub.s32 %v12362, %v12364
  %v12366 = vrot.slane %v12352, %v12365
  %v12367 = vcombine.low %v12359, %v12366
  %v12368 = vcombine.low %v12035, %v12043
  %v12369 = vcombine.low %v12042, %v12044
  %v12371 = vunpack.c.l.s4 1983009808
  %v12372 = vunpack.c.0.s8 %v12371
  %v12373 = vlaneseq
  %v12374 = vshrl.u32 %v12373, 7
  %v12375 = vsub.s32 %v12372, %v12374
  %v12376 = vrot.slane %v12368, %v12375
  %v12378 = vunpack.c.l.s4 1983009808
  %v12379 = vunpack.c.0.s8 %v12378
  %v12380 = vlaneseq
  %v12381 = vshrl.u32 %v12380, 7
  %v12382 = vsub.s32 %v12379, %v12381
  %v12383 = vrot.slane %v12369, %v12382
  %v12384 = vcombine.low %v12376, %v12383
  %v12385 = vcombine.low %v12060, %v12059
  %v12386 = vcombine.low %v12061, %v12069
  %v12388 = vunpack.c.l.s4 1983009808
  %v12389 = vunpack.c.0.s8 %v12388
  %v12390 = vlaneseq
  %v12391 = vshrl.u32 %v12390, 7
  %v12392 = vsub.s32 %v12389, %v12391
  %v12393 = vrot.slane %v12385, %v12392
  %v12395 = vunpack.c.l.s4 1983009808
  %v12396 = vunpack.c.0.s8 %v12395
  %v12397 = vlaneseq
  %v12398 = vshrl.u32 %v12397, 7
  %v12399 = vsub.s32 %v12396, %v12398
  %v12400 = vrot.slane %v12386, %v12399
  %v12401 = vcombine.low %v12393, %v12400
  %v12402 = vcombine.low %v12076, %v12078
  %v12403 = vcombine.low %v12086, %v12094
  %v12405 = vunpack.c.l.s4 1983009808
  %v12406 = vunpack.c.0.s8 %v12405
  %v12407 = vlaneseq
  %v12408 = vshrl.u32 %v12407, 7
  %v12409 = vsub.s32 %v12406, %v12408
  %v12410 = vrot.slane %v12402, %v12409
  %v12412 = vunpack.c.l.s4 1983009808
  %v12413 = vunpack.c.0.s8 %v12412
  %v12414 = vlaneseq
  %v12415 = vshrl.u32 %v12414, 7
  %v12416 = vsub.s32 %v12413, %v12415
  %v12417 = vrot.slane %v12403, %v12416
  %v12418 = vcombine.low %v12410, %v12417
  %v12419 = vcombine.low %v12095, %v12103
  %v12420 = vcombine.low %v12111, %v12110
  %v12422 = vunpack.c.l.s4 1983009808
  %v12423 = vunpack.c.0.s8 %v12422
  %v12424 = vlaneseq
  %v12425 = vshrl.u32 %v12424, 7
  %v12426 = vsub.s32 %v12423, %v12425
  %v12427 = vrot.slane %v12419, %v12426
  %v12429 = vunpack.c.l.s4 1983009808
  %v12430 = vunpack.c.0.s8 %v12429
  %v12431 = vlaneseq
  %v12432 = vshrl.u32 %v12431, 7
  %v12433 = vsub.s32 %v12430, %v12432
  %v12434 = vrot.slane %v12420, %v12433
  %v12435 = vcombine.low %v12427, %v12434
  %v12436 = vcombine.low %v12120, %v12128
  %v12437 = vcombine.low %v12127, %v12129
  %v12439 = vunpack.c.l.s4 1983009808
  %v12440 = vunpack.c.0.s8 %v12439
  %v12441 = vlaneseq
  %v12442 = vshrl.u32 %v12441, 7
  %v12443 = vsub.s32 %v12440, %v12442
  %v12444 = vrot.slane %v12436, %v12443
  %v12446 = vunpack.c.l.s4 1983009808
  %v12447 = vunpack.c.0.s8 %v12446
  %v12448 = vlaneseq
  %v12449 = vshrl.u32 %v12448, 7
  %v12450 = vsub.s32 %v12447, %v12449
  %v12451 = vrot.slane %v12437, %v12450
  %v12452 = vcombine.low %v12444, %v12451
  %v12453 = vcombine.low %v12145, %v12144
  %v12454 = vcombine.low %v12146, %v12154
  %v12456 = vunpack.c.l.s4 1983009808
  %v12457 = vunpack.c.0.s8 %v12456
  %v12458 = vlaneseq
  %v12459 = vshrl.u32 %v12458, 7
  %v12460 = vsub.s32 %v12457, %v12459
  %v12461 = vrot.slane %v12453, %v12460
  %v12463 = vunpack.c.l.s4 1983009808
  %v12464 = vunpack.c.0.s8 %v12463
  %v12465 = vlaneseq
  %v12466 = vshrl.u32 %v12465, 7
  %v12467 = vsub.s32 %v12464, %v12466
  %v12468 = vrot.slane %v12454, %v12467
  %v12469 = vcombine.low %v12461, %v12468
  %v12487 = vunpack.c.l.s4 1983009808
  %v12488 = vunpack.c.0.s8 %v12487
  %v12489 = vlaneseq
  %v12490 = vshrl.u32 %v12489, 7
  %v12491 = vsub.s32 %v12488, %v12490
  %v12492 = vrot.slane %v11797, %v12491
  %v12494 = vunpack.c.l.s4 1983009808
  %v12495 = vunpack.c.0.s8 %v12494
  %v12496 = vlaneseq
  %v12497 = vshrl.u32 %v12496, 7
  %v12498 = vsub.s32 %v12495, %v12497
  %v12499 = vrot.slane %v11822, %v12498
  %v12501 = vunpack.c.l.s4 1983009808
  %v12502 = vunpack.c.0.s8 %v12501
  %v12503 = vlaneseq
  %v12504 = vshrl.u32 %v12503, 7
  %v12505 = vsub.s32 %v12502, %v12504
  %v12506 = vrot.slane %v11838, %v12505
  %v12508 = vunpack.c.l.s4 1983009808
  %v12509 = vunpack.c.0.s8 %v12508
  %v12510 = vlaneseq
  %v12511 = vshrl.u32 %v12510, 7
  %v12512 = vsub.s32 %v12509, %v12511
  %v12513 = vrot.slane %v11857, %v12512
  %v12515 = vunpack.c.l.s4 1983009808
  %v12516 = vunpack.c.0.s8 %v12515
  %v12517 = vlaneseq
  %v12518 = vshrl.u32 %v12517, 7
  %v12519 = vsub.s32 %v12516, %v12518
  %v12520 = vrot.slane %v11882, %v12519
  %v12522 = vunpack.c.l.s4 1983009808
  %v12523 = vunpack.c.0.s8 %v12522
  %v12524 = vlaneseq
  %v12525 = vshrl.u32 %v12524, 7
  %v12526 = vsub.s32 %v12523, %v12525
  %v12527 = vrot.slane %v11907, %v12526
  %v12529 = vunpack.c.l.s4 1983009808
  %v12530 = vunpack.c.0.s8 %v12529
  %v12531 = vlaneseq
  %v12532 = vshrl.u32 %v12531, 7
  %v12533 = vsub.s32 %v12530, %v12532
  %v12534 = vrot.slane %v11923, %v12533
  %v12536 = vunpack.c.l.s4 1983009808
  %v12537 = vunpack.c.0.s8 %v12536
  %v12538 = vlaneseq
  %v12539 = vshrl.u32 %v12538, 7
  %v12540 = vsub.s32 %v12537, %v12539
  %v12541 = vrot.slane %v11942, %v12540
  %v12543 = vunpack.c.l.s4 1983009808
  %v12544 = vunpack.c.0.s8 %v12543
  %v12545 = vlaneseq
  %v12546 = vshrl.u32 %v12545, 7
  %v12547 = vsub.s32 %v12544, %v12546
  %v12548 = vrot.slane %v12008, %v12547
  %v12550 = vunpack.c.l.s4 1983009808
  %v12551 = vunpack.c.0.s8 %v12550
  %v12552 = vlaneseq
  %v12553 = vshrl.u32 %v12552, 7
  %v12554 = vsub.s32 %v12551, %v12553
  %v12555 = vrot.slane %v12027, %v12554
  %v12557 = vunpack.c.l.s4 1983009808
  %v12558 = vunpack.c.0.s8 %v12557
  %v12559 = vlaneseq
  %v12560 = vshrl.u32 %v12559, 7
  %v12561 = vsub.s32 %v12558, %v12560
  %v12562 = vrot.slane %v12052, %v12561
  %v12564 = vunpack.c.l.s4 1983009808
  %v12565 = vunpack.c.0.s8 %v12564
  %v12566 = vlaneseq
  %v12567 = vshrl.u32 %v12566, 7
  %v12568 = vsub.s32 %v12565, %v12567
  %v12569 = vrot.slane %v12077, %v12568
  %v12571 = vunpack.c.l.s4 1983009808
  %v12572 = vunpack.c.0.s8 %v12571
  %v12573 = vlaneseq
  %v12574 = vshrl.u32 %v12573, 7
  %v12575 = vsub.s32 %v12572, %v12574
  %v12576 = vrot.slane %v12093, %v12575
  %v12578 = vunpack.c.l.s4 1983009808
  %v12579 = vunpack.c.0.s8 %v12578
  %v12580 = vlaneseq
  %v12581 = vshrl.u32 %v12580, 7
  %v12582 = vsub.s32 %v12579, %v12581
  %v12583 = vrot.slane %v12112, %v12582
  %v12585 = vunpack.c.l.s4 1983009808
  %v12586 = vunpack.c.0.s8 %v12585
  %v12587 = vlaneseq
  %v12588 = vshrl.u32 %v12587, 7
  %v12589 = vsub.s32 %v12586, %v12588
  %v12590 = vrot.slane %v12137, %v12589
  %v12592 = vunpack.c.l.s4 1983009808
  %v12593 = vunpack.c.0.s8 %v12592
  %v12594 = vlaneseq
  %v12595 = vshrl.u32 %v12594, 7
  %v12596 = vsub.s32 %v12593, %v12595
  %v12597 = vrot.slane %v12162, %v12596
  %v12598 = vrot.slane %v12214, 1
  %v12599 = vrot.slane %v12492, 1
  %v12600 = vsel %vm134, %v12598, %v12599
  %v12601 = vrot.slane %v12231, 1
  %v12602 = vrot.slane %v12499, 1
  %v12603 = vsel %vm134, %v12601, %v12602
  %v12604 = vrot.slane %v12248, 1
  %v12605 = vrot.slane %v12506, 1
  %v12606 = vsel %vm134, %v12604, %v12605
  %v12607 = vrot.slane %v12265, 1
  %v12608 = vrot.slane %v12513, 1
  %v12609 = vsel %vm134, %v12607, %v12608
  %v12610 = vrot.slane %v12282, 1
  %v12611 = vrot.slane %v12520, 1
  %v12612 = vsel %vm134, %v12610, %v12611
  %v12613 = vrot.slane %v12299, 1
  %v12614 = vrot.slane %v12527, 1
  %v12615 = vsel %vm134, %v12613, %v12614
  %v12616 = vrot.slane %v12316, 1
  %v12617 = vrot.slane %v12534, 1
  %v12618 = vsel %vm134, %v12616, %v12617
  %v12619 = vrot.slane %v12333, 1
  %v12620 = vrot.slane %v12541, 1
  %v12621 = vsel %vm134, %v12619, %v12620
  %v12622 = vrot.slane %v12350, 1
  %v12623 = vrot.slane %v12548, 1
  %v12624 = vsel %vm134, %v12622, %v12623
  %v12625 = vrot.slane %v12367, 1
  %v12626 = vrot.slane %v12555, 1
  %v12627 = vsel %vm134, %v12625, %v12626
  %v12628 = vrot.slane %v12384, 1
  %v12629 = vrot.slane %v12562, 1
  %v12630 = vsel %vm134, %v12628, %v12629
  %v12631 = vrot.slane %v12401, 1
  %v12632 = vrot.slane %v12569, 1
  %v12633 = vsel %vm134, %v12631, %v12632
  %v12634 = vrot.slane %v12418, 1
  %v12635 = vrot.slane %v12576, 1
  %v12636 = vsel %vm134, %v12634, %v12635
  %v12637 = vrot.slane %v12435, 1
  %v12638 = vrot.slane %v12583, 1
  %v12639 = vsel %vm134, %v12637, %v12638
  %v12640 = vrot.slane %v12452, 1
  %v12641 = vrot.slane %v12590, 1
  %v12642 = vsel %vm134, %v12640, %v12641
  %v12643 = vrot.slane %v12469, 1
  %v12644 = vrot.slane %v12597, 1
  %v12645 = vsel %vm134, %v12643, %v12644
  %12646 = vrot.lane.b32.xlu0 %v12600, 9
  %v12647 = vpop.permute.xlu0 %12646
  %12648 = vrot.lane.b32.xlu0 %v12603, 9
  %v12649 = vpop.permute.xlu0 %12648
  %12650 = vrot.lane.b32.xlu0 %v12606, 9
  %v12651 = vpop.permute.xlu0 %12650
  %12652 = vrot.lane.b32.xlu0 %v12609, 9
  %v12653 = vpop.permute.xlu0 %12652
  %12654 = vrot.lane.b32.xlu0 %v12612, 9
  %v12655 = vpop.permute.xlu0 %12654
  %12656 = vrot.lane.b32.xlu0 %v12615, 9
  %v12657 = vpop.permute.xlu0 %12656
  %12658 = vrot.lane.b32.xlu0 %v12618, 9
  %v12659 = vpop.permute.xlu0 %12658
  %12660 = vrot.lane.b32.xlu0 %v12621, 9
  %v12661 = vpop.permute.xlu0 %12660
  %12662 = vrot.lane.b32.xlu0 %v12624, 9
  %v12663 = vpop.permute.xlu0 %12662
  %12664 = vrot.lane.b32.xlu0 %v12627, 9
  %v12665 = vpop.permute.xlu0 %12664
  %12666 = vrot.lane.b32.xlu0 %v12630, 9
  %v12667 = vpop.permute.xlu0 %12666
  %12668 = vrot.lane.b32.xlu0 %v12633, 9
  %v12669 = vpop.permute.xlu0 %12668
  %12670 = vrot.lane.b32.xlu0 %v12636, 9
  %v12671 = vpop.permute.xlu0 %12670
  %12672 = vrot.lane.b32.xlu0 %v12639, 9
  %v12673 = vpop.permute.xlu0 %12672
  %12674 = vrot.lane.b32.xlu0 %v12642, 9
  %v12675 = vpop.permute.xlu0 %12674
  %12676 = vrot.lane.b32.xlu0 %v12645, 9
  %v12677 = vpop.permute.xlu0 %12676
  %v12694 = vcombine.low %v11788, %v11787
  %v12695 = vcombine.low %v11789, %v11797
  %v12697 = vunpack.c.l.s4 1983009808
  %v12698 = vunpack.c.0.s8 %v12697
  %v12699 = vlaneseq
  %v12700 = vshrl.u32 %v12699, 7
  %v12701 = vsub.s32 %v12698, %v12700
  %v12702 = vrot.slane %v12694, %v12701
  %v12704 = vunpack.c.l.s4 1983009808
  %v12705 = vunpack.c.0.s8 %v12704
  %v12706 = vlaneseq
  %v12707 = vshrl.u32 %v12706, 7
  %v12708 = vsub.s32 %v12705, %v12707
  %v12709 = vrot.slane %v12695, %v12708
  %v12710 = vcombine.low %v12702, %v12709
  %v12711 = vcombine.low %v11804, %v11806
  %v12712 = vcombine.low %v11814, %v11822
  %v12714 = vunpack.c.l.s4 1983009808
  %v12715 = vunpack.c.0.s8 %v12714
  %v12716 = vlaneseq
  %v12717 = vshrl.u32 %v12716, 7
  %v12718 = vsub.s32 %v12715, %v12717
  %v12719 = vrot.slane %v12711, %v12718
  %v12721 = vunpack.c.l.s4 1983009808
  %v12722 = vunpack.c.0.s8 %v12721
  %v12723 = vlaneseq
  %v12724 = vshrl.u32 %v12723, 7
  %v12725 = vsub.s32 %v12722, %v12724
  %v12726 = vrot.slane %v12712, %v12725
  %v12727 = vcombine.low %v12719, %v12726
  %v12728 = vcombine.low %v11823, %v11831
  %v12729 = vcombine.low %v11839, %v11838
  %v12731 = vunpack.c.l.s4 1983009808
  %v12732 = vunpack.c.0.s8 %v12731
  %v12733 = vlaneseq
  %v12734 = vshrl.u32 %v12733, 7
  %v12735 = vsub.s32 %v12732, %v12734
  %v12736 = vrot.slane %v12728, %v12735
  %v12738 = vunpack.c.l.s4 1983009808
  %v12739 = vunpack.c.0.s8 %v12738
  %v12740 = vlaneseq
  %v12741 = vshrl.u32 %v12740, 7
  %v12742 = vsub.s32 %v12739, %v12741
  %v12743 = vrot.slane %v12729, %v12742
  %v12744 = vcombine.low %v12736, %v12743
  %v12745 = vcombine.low %v11848, %v11856
  %v12746 = vcombine.low %v11855, %v11857
  %v12748 = vunpack.c.l.s4 1983009808
  %v12749 = vunpack.c.0.s8 %v12748
  %v12750 = vlaneseq
  %v12751 = vshrl.u32 %v12750, 7
  %v12752 = vsub.s32 %v12749, %v12751
  %v12753 = vrot.slane %v12745, %v12752
  %v12755 = vunpack.c.l.s4 1983009808
  %v12756 = vunpack.c.0.s8 %v12755
  %v12757 = vlaneseq
  %v12758 = vshrl.u32 %v12757, 7
  %v12759 = vsub.s32 %v12756, %v12758
  %v12760 = vrot.slane %v12746, %v12759
  %v12761 = vcombine.low %v12753, %v12760
  %v12762 = vcombine.low %v11873, %v11872
  %v12763 = vcombine.low %v11874, %v11882
  %v12765 = vunpack.c.l.s4 1983009808
  %v12766 = vunpack.c.0.s8 %v12765
  %v12767 = vlaneseq
  %v12768 = vshrl.u32 %v12767, 7
  %v12769 = vsub.s32 %v12766, %v12768
  %v12770 = vrot.slane %v12762, %v12769
  %v12772 = vunpack.c.l.s4 1983009808
  %v12773 = vunpack.c.0.s8 %v12772
  %v12774 = vlaneseq
  %v12775 = vshrl.u32 %v12774, 7
  %v12776 = vsub.s32 %v12773, %v12775
  %v12777 = vrot.slane %v12763, %v12776
  %v12778 = vcombine.low %v12770, %v12777
  %v12779 = vcombine.low %v11889, %v11891
  %v12780 = vcombine.low %v11899, %v11907
  %v12782 = vunpack.c.l.s4 1983009808
  %v12783 = vunpack.c.0.s8 %v12782
  %v12784 = vlaneseq
  %v12785 = vshrl.u32 %v12784, 7
  %v12786 = vsub.s32 %v12783, %v12785
  %v12787 = vrot.slane %v12779, %v12786
  %v12789 = vunpack.c.l.s4 1983009808
  %v12790 = vunpack.c.0.s8 %v12789
  %v12791 = vlaneseq
  %v12792 = vshrl.u32 %v12791, 7
  %v12793 = vsub.s32 %v12790, %v12792
  %v12794 = vrot.slane %v12780, %v12793
  %v12795 = vcombine.low %v12787, %v12794
  %v12796 = vcombine.low %v11908, %v11916
  %v12797 = vcombine.low %v11924, %v11923
  %v12799 = vunpack.c.l.s4 1983009808
  %v12800 = vunpack.c.0.s8 %v12799
  %v12801 = vlaneseq
  %v12802 = vshrl.u32 %v12801, 7
  %v12803 = vsub.s32 %v12800, %v12802
  %v12804 = vrot.slane %v12796, %v12803
  %v12806 = vunpack.c.l.s4 1983009808
  %v12807 = vunpack.c.0.s8 %v12806
  %v12808 = vlaneseq
  %v12809 = vshrl.u32 %v12808, 7
  %v12810 = vsub.s32 %v12807, %v12809
  %v12811 = vrot.slane %v12797, %v12810
  %v12812 = vcombine.low %v12804, %v12811
  %v12813 = vcombine.low %v11933, %v11941
  %v12814 = vcombine.low %v11940, %v11942
  %v12816 = vunpack.c.l.s4 1983009808
  %v12817 = vunpack.c.0.s8 %v12816
  %v12818 = vlaneseq
  %v12819 = vshrl.u32 %v12818, 7
  %v12820 = vsub.s32 %v12817, %v12819
  %v12821 = vrot.slane %v12813, %v12820
  %v12823 = vunpack.c.l.s4 1983009808
  %v12824 = vunpack.c.0.s8 %v12823
  %v12825 = vlaneseq
  %v12826 = vshrl.u32 %v12825, 7
  %v12827 = vsub.s32 %v12824, %v12826
  %v12828 = vrot.slane %v12814, %v12827
  %v12829 = vcombine.low %v12821, %v12828
  %v12830 = vcombine.low %v11993, %v12001
  %v12831 = vcombine.low %v12009, %v12008
  %v12833 = vunpack.c.l.s4 1983009808
  %v12834 = vunpack.c.0.s8 %v12833
  %v12835 = vlaneseq
  %v12836 = vshrl.u32 %v12835, 7
  %v12837 = vsub.s32 %v12834, %v12836
  %v12838 = vrot.slane %v12830, %v12837
  %v12840 = vunpack.c.l.s4 1983009808
  %v12841 = vunpack.c.0.s8 %v12840
  %v12842 = vlaneseq
  %v12843 = vshrl.u32 %v12842, 7
  %v12844 = vsub.s32 %v12841, %v12843
  %v12845 = vrot.slane %v12831, %v12844
  %v12846 = vcombine.low %v12838, %v12845
  %v12847 = vcombine.low %v12018, %v12026
  %v12848 = vcombine.low %v12025, %v12027
  %v12850 = vunpack.c.l.s4 1983009808
  %v12851 = vunpack.c.0.s8 %v12850
  %v12852 = vlaneseq
  %v12853 = vshrl.u32 %v12852, 7
  %v12854 = vsub.s32 %v12851, %v12853
  %v12855 = vrot.slane %v12847, %v12854
  %v12857 = vunpack.c.l.s4 1983009808
  %v12858 = vunpack.c.0.s8 %v12857
  %v12859 = vlaneseq
  %v12860 = vshrl.u32 %v12859, 7
  %v12861 = vsub.s32 %v12858, %v12860
  %v12862 = vrot.slane %v12848, %v12861
  %v12863 = vcombine.low %v12855, %v12862
  %v12864 = vcombine.low %v12043, %v12042
  %v12865 = vcombine.low %v12044, %v12052
  %v12867 = vunpack.c.l.s4 1983009808
  %v12868 = vunpack.c.0.s8 %v12867
  %v12869 = vlaneseq
  %v12870 = vshrl.u32 %v12869, 7
  %v12871 = vsub.s32 %v12868, %v12870
  %v12872 = vrot.slane %v12864, %v12871
  %v12874 = vunpack.c.l.s4 1983009808
  %v12875 = vunpack.c.0.s8 %v12874
  %v12876 = vlaneseq
  %v12877 = vshrl.u32 %v12876, 7
  %v12878 = vsub.s32 %v12875, %v12877
  %v12879 = vrot.slane %v12865, %v12878
  %v12880 = vcombine.low %v12872, %v12879
  %v12881 = vcombine.low %v12059, %v12061
  %v12882 = vcombine.low %v12069, %v12077
  %v12884 = vunpack.c.l.s4 1983009808
  %v12885 = vunpack.c.0.s8 %v12884
  %v12886 = vlaneseq
  %v12887 = vshrl.u32 %v12886, 7
  %v12888 = vsub.s32 %v12885, %v12887
  %v12889 = vrot.slane %v12881, %v12888
  %v12891 = vunpack.c.l.s4 1983009808
  %v12892 = vunpack.c.0.s8 %v12891
  %v12893 = vlaneseq
  %v12894 = vshrl.u32 %v12893, 7
  %v12895 = vsub.s32 %v12892, %v12894
  %v12896 = vrot.slane %v12882, %v12895
  %v12897 = vcombine.low %v12889, %v12896
  %v12898 = vcombine.low %v12078, %v12086
  %v12899 = vcombine.low %v12094, %v12093
  %v12901 = vunpack.c.l.s4 1983009808
  %v12902 = vunpack.c.0.s8 %v12901
  %v12903 = vlaneseq
  %v12904 = vshrl.u32 %v12903, 7
  %v12905 = vsub.s32 %v12902, %v12904
  %v12906 = vrot.slane %v12898, %v12905
  %v12908 = vunpack.c.l.s4 1983009808
  %v12909 = vunpack.c.0.s8 %v12908
  %v12910 = vlaneseq
  %v12911 = vshrl.u32 %v12910, 7
  %v12912 = vsub.s32 %v12909, %v12911
  %v12913 = vrot.slane %v12899, %v12912
  %v12914 = vcombine.low %v12906, %v12913
  %v12915 = vcombine.low %v12103, %v12111
  %v12916 = vcombine.low %v12110, %v12112
  %v12918 = vunpack.c.l.s4 1983009808
  %v12919 = vunpack.c.0.s8 %v12918
  %v12920 = vlaneseq
  %v12921 = vshrl.u32 %v12920, 7
  %v12922 = vsub.s32 %v12919, %v12921
  %v12923 = vrot.slane %v12915, %v12922
  %v12925 = vunpack.c.l.s4 1983009808
  %v12926 = vunpack.c.0.s8 %v12925
  %v12927 = vlaneseq
  %v12928 = vshrl.u32 %v12927, 7
  %v12929 = vsub.s32 %v12926, %v12928
  %v12930 = vrot.slane %v12916, %v12929
  %v12931 = vcombine.low %v12923, %v12930
  %v12932 = vcombine.low %v12128, %v12127
  %v12933 = vcombine.low %v12129, %v12137
  %v12935 = vunpack.c.l.s4 1983009808
  %v12936 = vunpack.c.0.s8 %v12935
  %v12937 = vlaneseq
  %v12938 = vshrl.u32 %v12937, 7
  %v12939 = vsub.s32 %v12936, %v12938
  %v12940 = vrot.slane %v12932, %v12939
  %v12942 = vunpack.c.l.s4 1983009808
  %v12943 = vunpack.c.0.s8 %v12942
  %v12944 = vlaneseq
  %v12945 = vshrl.u32 %v12944, 7
  %v12946 = vsub.s32 %v12943, %v12945
  %v12947 = vrot.slane %v12933, %v12946
  %v12948 = vcombine.low %v12940, %v12947
  %v12949 = vcombine.low %v12144, %v12146
  %v12950 = vcombine.low %v12154, %v12162
  %v12952 = vunpack.c.l.s4 1983009808
  %v12953 = vunpack.c.0.s8 %v12952
  %v12954 = vlaneseq
  %v12955 = vshrl.u32 %v12954, 7
  %v12956 = vsub.s32 %v12953, %v12955
  %v12957 = vrot.slane %v12949, %v12956
  %v12959 = vunpack.c.l.s4 1983009808
  %v12960 = vunpack.c.0.s8 %v12959
  %v12961 = vlaneseq
  %v12962 = vshrl.u32 %v12961, 7
  %v12963 = vsub.s32 %v12960, %v12962
  %v12964 = vrot.slane %v12950, %v12963
  %v12965 = vcombine.low %v12957, %v12964
  %12966 = vrot.lane.b32.xlu0 %v12710, 18
  %v12967 = vpop.permute.xlu0 %12966
  %12968 = vrot.lane.b32.xlu0 %v12727, 18
  %v12969 = vpop.permute.xlu0 %12968
  %12970 = vrot.lane.b32.xlu0 %v12744, 18
  %v12971 = vpop.permute.xlu0 %12970
  %12972 = vrot.lane.b32.xlu0 %v12761, 18
  %v12973 = vpop.permute.xlu0 %12972
  %12974 = vrot.lane.b32.xlu0 %v12778, 18
  %v12975 = vpop.permute.xlu0 %12974
  %12976 = vrot.lane.b32.xlu0 %v12795, 18
  %v12977 = vpop.permute.xlu0 %12976
  %12978 = vrot.lane.b32.xlu0 %v12812, 18
  %v12979 = vpop.permute.xlu0 %12978
  %12980 = vrot.lane.b32.xlu0 %v12829, 18
  %v12981 = vpop.permute.xlu0 %12980
  %12982 = vrot.lane.b32.xlu0 %v12846, 18
  %v12983 = vpop.permute.xlu0 %12982
  %12984 = vrot.lane.b32.xlu0 %v12863, 18
  %v12985 = vpop.permute.xlu0 %12984
  %12986 = vrot.lane.b32.xlu0 %v12880, 18
  %v12987 = vpop.permute.xlu0 %12986
  %12988 = vrot.lane.b32.xlu0 %v12897, 18
  %v12989 = vpop.permute.xlu0 %12988
  %12990 = vrot.lane.b32.xlu0 %v12914, 18
  %v12991 = vpop.permute.xlu0 %12990
  %12992 = vrot.lane.b32.xlu0 %v12931, 18
  %v12993 = vpop.permute.xlu0 %12992
  %12994 = vrot.lane.b32.xlu0 %v12948, 18
  %v12995 = vpop.permute.xlu0 %12994
  %12996 = vrot.lane.b32.xlu0 %v12965, 18
  %v12997 = vpop.permute.xlu0 %12996
  %v13014 = vcombine.low %v11950, %v11958
  %v13015 = vcombine.low %v11957, %v11959
  %v13017 = vunpack.c.l.s4 1983009808
  %v13018 = vunpack.c.0.s8 %v13017
  %v13019 = vlaneseq
  %v13020 = vshrl.u32 %v13019, 7
  %v13021 = vsub.s32 %v13018, %v13020
  %v13022 = vrot.slane %v13014, %v13021
  %v13024 = vunpack.c.l.s4 1983009808
  %v13025 = vunpack.c.0.s8 %v13024
  %v13026 = vlaneseq
  %v13027 = vshrl.u32 %v13026, 7
  %v13028 = vsub.s32 %v13025, %v13027
  %v13029 = vrot.slane %v13015, %v13028
  %v13030 = vcombine.low %v13022, %v13029
  %v13031 = vcombine.low %v12161, %v12163
  %v13032 = vcombine.low %v12171, %v12179
  %v13034 = vunpack.c.l.s4 1983009808
  %v13035 = vunpack.c.0.s8 %v13034
  %v13036 = vlaneseq
  %v13037 = vshrl.u32 %v13036, 7
  %v13038 = vsub.s32 %v13035, %v13037
  %v13039 = vrot.slane %v13031, %v13038
  %v13041 = vunpack.c.l.s4 1983009808
  %v13042 = vunpack.c.0.s8 %v13041
  %v13043 = vlaneseq
  %v13044 = vshrl.u32 %v13043, 7
  %v13045 = vsub.s32 %v13042, %v13044
  %v13046 = vrot.slane %v13032, %v13045
  %v13047 = vcombine.low %v13039, %v13046
  %13048 = vrot.lane.b32.xlu0 %v12231, 27
  %v13049 = vpop.permute.xlu0 %13048
  %13050 = vrot.lane.b32.xlu0 %v12248, 27
  %v13051 = vpop.permute.xlu0 %13050
  %13052 = vrot.lane.b32.xlu0 %v12265, 27
  %v13053 = vpop.permute.xlu0 %13052
  %13054 = vrot.lane.b32.xlu0 %v12282, 27
  %v13055 = vpop.permute.xlu0 %13054
  %13056 = vrot.lane.b32.xlu0 %v12299, 27
  %v13057 = vpop.permute.xlu0 %13056
  %13058 = vrot.lane.b32.xlu0 %v12316, 27
  %v13059 = vpop.permute.xlu0 %13058
  %13060 = vrot.lane.b32.xlu0 %v12333, 27
  %v13061 = vpop.permute.xlu0 %13060
  %13062 = vrot.lane.b32.xlu0 %v13030, 27
  %v13063 = vpop.permute.xlu0 %13062
  %13064 = vrot.lane.b32.xlu0 %v12367, 27
  %v13065 = vpop.permute.xlu0 %13064
  %13066 = vrot.lane.b32.xlu0 %v12384, 27
  %v13067 = vpop.permute.xlu0 %13066
  %13068 = vrot.lane.b32.xlu0 %v12401, 27
  %v13069 = vpop.permute.xlu0 %13068
  %13070 = vrot.lane.b32.xlu0 %v12418, 27
  %v13071 = vpop.permute.xlu0 %13070
  %13072 = vrot.lane.b32.xlu0 %v12435, 27
  %v13073 = vpop.permute.xlu0 %13072
  %13074 = vrot.lane.b32.xlu0 %v12452, 27
  %v13075 = vpop.permute.xlu0 %13074
  %13076 = vrot.lane.b32.xlu0 %v12469, 27
  %v13077 = vpop.permute.xlu0 %13076
  %13078 = vrot.lane.b32.xlu0 %v13047, 27
  %v13079 = vpop.permute.xlu0 %13078
  %v13097 = vunpack.c.l.s4 1983009808
  %v13098 = vunpack.c.0.s8 %v13097
  %v13099 = vlaneseq
  %v13100 = vshrl.u32 %v13099, 7
  %v13101 = vsub.s32 %v13098, %v13100
  %v13102 = vrot.slane %v11967, %v13101
  %v13104 = vunpack.c.l.s4 1983009808
  %v13105 = vunpack.c.0.s8 %v13104
  %v13106 = vlaneseq
  %v13107 = vshrl.u32 %v13106, 7
  %v13108 = vsub.s32 %v13105, %v13107
  %v13109 = vrot.slane %v12178, %v13108
  %v13110 = vrot.slane %v13030, 1
  %v13111 = vrot.slane %v13102, 1
  %v13112 = vsel %vm134, %v13110, %v13111
  %v13113 = vrot.slane %v13047, 1
  %v13114 = vrot.slane %v13109, 1
  %v13115 = vsel %vm134, %v13113, %v13114
  %13116 = vrot.lane.b32.xlu0 %v12603, 36
  %v13117 = vpop.permute.xlu0 %13116
  %13118 = vrot.lane.b32.xlu0 %v12606, 36
  %v13119 = vpop.permute.xlu0 %13118
  %13120 = vrot.lane.b32.xlu0 %v12609, 36
  %v13121 = vpop.permute.xlu0 %13120
  %13122 = vrot.lane.b32.xlu0 %v12612, 36
  %v13123 = vpop.permute.xlu0 %13122
  %13124 = vrot.lane.b32.xlu0 %v12615, 36
  %v13125 = vpop.permute.xlu0 %13124
  %13126 = vrot.lane.b32.xlu0 %v12618, 36
  %v13127 = vpop.permute.xlu0 %13126
  %13128 = vrot.lane.b32.xlu0 %v12621, 36
  %v13129 = vpop.permute.xlu0 %13128
  %13130 = vrot.lane.b32.xlu0 %v13112, 36
  %v13131 = vpop.permute.xlu0 %13130
  %13132 = vrot.lane.b32.xlu0 %v12627, 36
  %v13133 = vpop.permute.xlu0 %13132
  %13134 = vrot.lane.b32.xlu0 %v12630, 36
  %v13135 = vpop.permute.xlu0 %13134
  %13136 = vrot.lane.b32.xlu0 %v12633, 36
  %v13137 = vpop.permute.xlu0 %13136
  %13138 = vrot.lane.b32.xlu0 %v12636, 36
  %v13139 = vpop.permute.xlu0 %13138
  %13140 = vrot.lane.b32.xlu0 %v12639, 36
  %v13141 = vpop.permute.xlu0 %13140
  %13142 = vrot.lane.b32.xlu0 %v12642, 36
  %v13143 = vpop.permute.xlu0 %13142
  %13144 = vrot.lane.b32.xlu0 %v12645, 36
  %v13145 = vpop.permute.xlu0 %13144
  %13146 = vrot.lane.b32.xlu0 %v13115, 36
  %v13147 = vpop.permute.xlu0 %13146
  %v13164 = vcombine.low %v11958, %v11957
  %v13165 = vcombine.low %v11959, %v11967
  %v13167 = vunpack.c.l.s4 1983009808
  %v13168 = vunpack.c.0.s8 %v13167
  %v13169 = vlaneseq
  %v13170 = vshrl.u32 %v13169, 7
  %v13171 = vsub.s32 %v13168, %v13170
  %v13172 = vrot.slane %v13164, %v13171
  %v13174 = vunpack.c.l.s4 1983009808
  %v13175 = vunpack.c.0.s8 %v13174
  %v13176 = vlaneseq
  %v13177 = vshrl.u32 %v13176, 7
  %v13178 = vsub.s32 %v13175, %v13177
  %v13179 = vrot.slane %v13165, %v13178
  %v13180 = vcombine.low %v13172, %v13179
  %v13181 = vcombine.low %v12163, %v12171
  %v13182 = vcombine.low %v12179, %v12178
  %v13184 = vunpack.c.l.s4 1983009808
  %v13185 = vunpack.c.0.s8 %v13184
  %v13186 = vlaneseq
  %v13187 = vshrl.u32 %v13186, 7
  %v13188 = vsub.s32 %v13185, %v13187
  %v13189 = vrot.slane %v13181, %v13188
  %v13191 = vunpack.c.l.s4 1983009808
  %v13192 = vunpack.c.0.s8 %v13191
  %v13193 = vlaneseq
  %v13194 = vshrl.u32 %v13193, 7
  %v13195 = vsub.s32 %v13192, %v13194
  %v13196 = vrot.slane %v13182, %v13195
  %v13197 = vcombine.low %v13189, %v13196
  %13198 = vrot.lane.b32.xlu0 %v12727, 45
  %v13199 = vpop.permute.xlu0 %13198
  %13200 = vrot.lane.b32.xlu0 %v12744, 45
  %v13201 = vpop.permute.xlu0 %13200
  %13202 = vrot.lane.b32.xlu0 %v12761, 45
  %v13203 = vpop.permute.xlu0 %13202
  %13204 = vrot.lane.b32.xlu0 %v12778, 45
  %v13205 = vpop.permute.xlu0 %13204
  %13206 = vrot.lane.b32.xlu0 %v12795, 45
  %v13207 = vpop.permute.xlu0 %13206
  %13208 = vrot.lane.b32.xlu0 %v12812, 45
  %v13209 = vpop.permute.xlu0 %13208
  %13210 = vrot.lane.b32.xlu0 %v12829, 45
  %v13211 = vpop.permute.xlu0 %13210
  %13212 = vrot.lane.b32.xlu0 %v13180, 45
  %v13213 = vpop.permute.xlu0 %13212
  %13214 = vrot.lane.b32.xlu0 %v12863, 45
  %v13215 = vpop.permute.xlu0 %13214
  %13216 = vrot.lane.b32.xlu0 %v12880, 45
  %v13217 = vpop.permute.xlu0 %13216
  %13218 = vrot.lane.b32.xlu0 %v12897, 45
  %v13219 = vpop.permute.xlu0 %13218
  %13220 = vrot.lane.b32.xlu0 %v12914, 45
  %v13221 = vpop.permute.xlu0 %13220
  %13222 = vrot.lane.b32.xlu0 %v12931, 45
  %v13223 = vpop.permute.xlu0 %13222
  %13224 = vrot.lane.b32.xlu0 %v12948, 45
  %v13225 = vpop.permute.xlu0 %13224
  %13226 = vrot.lane.b32.xlu0 %v12965, 45
  %v13227 = vpop.permute.xlu0 %13226
  %13228 = vrot.lane.b32.xlu0 %v13197, 45
  %v13229 = vpop.permute.xlu0 %13228
  %v13246 = vcombine.low %v11975, %v11974
  %v13247 = vcombine.low %v11976, %v11984
  %v13249 = vunpack.c.l.s4 1983009808
  %v13250 = vunpack.c.0.s8 %v13249
  %v13251 = vlaneseq
  %v13252 = vshrl.u32 %v13251, 7
  %v13253 = vsub.s32 %v13250, %v13252
  %v13254 = vrot.slane %v13246, %v13253
  %v13256 = vunpack.c.l.s4 1983009808
  %v13257 = vunpack.c.0.s8 %v13256
  %v13258 = vlaneseq
  %v13259 = vshrl.u32 %v13258, 7
  %v13260 = vsub.s32 %v13257, %v13259
  %v13261 = vrot.slane %v13247, %v13260
  %v13262 = vcombine.low %v13254, %v13261
  %v13263 = vcombine.low %v12180, %v12188
  %v13264 = vcombine.low %v12196, %v12195
  %v13266 = vunpack.c.l.s4 1983009808
  %v13267 = vunpack.c.0.s8 %v13266
  %v13268 = vlaneseq
  %v13269 = vshrl.u32 %v13268, 7
  %v13270 = vsub.s32 %v13267, %v13269
  %v13271 = vrot.slane %v13263, %v13270
  %v13273 = vunpack.c.l.s4 1983009808
  %v13274 = vunpack.c.0.s8 %v13273
  %v13275 = vlaneseq
  %v13276 = vshrl.u32 %v13275, 7
  %v13277 = vsub.s32 %v13274, %v13276
  %v13278 = vrot.slane %v13264, %v13277
  %v13279 = vcombine.low %v13271, %v13278
  %13280 = vrot.lane.b32.xlu0 %v12248, 54
  %v13281 = vpop.permute.xlu0 %13280
  %13282 = vrot.lane.b32.xlu0 %v12265, 54
  %v13283 = vpop.permute.xlu0 %13282
  %13284 = vrot.lane.b32.xlu0 %v12282, 54
  %v13285 = vpop.permute.xlu0 %13284
  %13286 = vrot.lane.b32.xlu0 %v12299, 54
  %v13287 = vpop.permute.xlu0 %13286
  %13288 = vrot.lane.b32.xlu0 %v12316, 54
  %v13289 = vpop.permute.xlu0 %13288
  %13290 = vrot.lane.b32.xlu0 %v12333, 54
  %v13291 = vpop.permute.xlu0 %13290
  %13292 = vrot.lane.b32.xlu0 %v13030, 54
  %v13293 = vpop.permute.xlu0 %13292
  %13294 = vrot.lane.b32.xlu0 %v13262, 54
  %v13295 = vpop.permute.xlu0 %13294
  %13296 = vrot.lane.b32.xlu0 %v12384, 54
  %v13297 = vpop.permute.xlu0 %13296
  %13298 = vrot.lane.b32.xlu0 %v12401, 54
  %v13299 = vpop.permute.xlu0 %13298
  %13300 = vrot.lane.b32.xlu0 %v12418, 54
  %v13301 = vpop.permute.xlu0 %13300
  %13302 = vrot.lane.b32.xlu0 %v12435, 54
  %v13303 = vpop.permute.xlu0 %13302
  %13304 = vrot.lane.b32.xlu0 %v12452, 54
  %v13305 = vpop.permute.xlu0 %13304
  %13306 = vrot.lane.b32.xlu0 %v12469, 54
  %v13307 = vpop.permute.xlu0 %13306
  %13308 = vrot.lane.b32.xlu0 %v13047, 54
  %v13309 = vpop.permute.xlu0 %13308
  %13310 = vrot.lane.b32.xlu0 %v13279, 54
  %v13311 = vpop.permute.xlu0 %13310
  %v13329 = vunpack.c.l.s4 1983009808
  %v13330 = vunpack.c.0.s8 %v13329
  %v13331 = vlaneseq
  %v13332 = vshrl.u32 %v13331, 7
  %v13333 = vsub.s32 %v13330, %v13332
  %v13334 = vrot.slane %v11992, %v13333
  %v13336 = vunpack.c.l.s4 1983009808
  %v13337 = vunpack.c.0.s8 %v13336
  %v13338 = vlaneseq
  %v13339 = vshrl.u32 %v13338, 7
  %v13340 = vsub.s32 %v13337, %v13339
  %v13341 = vrot.slane %v12197, %v13340
  %v13342 = vrot.slane %v13262, 1
  %v13343 = vrot.slane %v13334, 1
  %v13344 = vsel %vm134, %v13342, %v13343
  %v13345 = vrot.slane %v13279, 1
  %v13346 = vrot.slane %v13341, 1
  %v13347 = vsel %vm134, %v13345, %v13346
  %13348 = vrot.lane.b32.xlu0 %v12606, 63
  %v13349 = vpop.permute.xlu0 %13348
  %13350 = vrot.lane.b32.xlu0 %v12609, 63
  %v13351 = vpop.permute.xlu0 %13350
  %13352 = vrot.lane.b32.xlu0 %v12612, 63
  %v13353 = vpop.permute.xlu0 %13352
  %13354 = vrot.lane.b32.xlu0 %v12615, 63
  %v13355 = vpop.permute.xlu0 %13354
  %13356 = vrot.lane.b32.xlu0 %v12618, 63
  %v13357 = vpop.permute.xlu0 %13356
  %13358 = vrot.lane.b32.xlu0 %v12621, 63
  %v13359 = vpop.permute.xlu0 %13358
  %13360 = vrot.lane.b32.xlu0 %v13112, 63
  %v13361 = vpop.permute.xlu0 %13360
  %13362 = vrot.lane.b32.xlu0 %v13344, 63
  %v13363 = vpop.permute.xlu0 %13362
  %13364 = vrot.lane.b32.xlu0 %v12630, 63
  %v13365 = vpop.permute.xlu0 %13364
  %13366 = vrot.lane.b32.xlu0 %v12633, 63
  %v13367 = vpop.permute.xlu0 %13366
  %13368 = vrot.lane.b32.xlu0 %v12636, 63
  %v13369 = vpop.permute.xlu0 %13368
  %13370 = vrot.lane.b32.xlu0 %v12639, 63
  %v13371 = vpop.permute.xlu0 %13370
  %13372 = vrot.lane.b32.xlu0 %v12642, 63
  %v13373 = vpop.permute.xlu0 %13372
  %13374 = vrot.lane.b32.xlu0 %v12645, 63
  %v13375 = vpop.permute.xlu0 %13374
  %13376 = vrot.lane.b32.xlu0 %v13115, 63
  %v13377 = vpop.permute.xlu0 %13376
  %13378 = vrot.lane.b32.xlu0 %v13347, 63
  %v13379 = vpop.permute.xlu0 %13378
  %v13396 = vcombine.low %v11974, %v11976
  %v13397 = vcombine.low %v11984, %v11992
  %v13399 = vunpack.c.l.s4 1983009808
  %v13400 = vunpack.c.0.s8 %v13399
  %v13401 = vlaneseq
  %v13402 = vshrl.u32 %v13401, 7
  %v13403 = vsub.s32 %v13400, %v13402
  %v13404 = vrot.slane %v13396, %v13403
  %v13406 = vunpack.c.l.s4 1983009808
  %v13407 = vunpack.c.0.s8 %v13406
  %v13408 = vlaneseq
  %v13409 = vshrl.u32 %v13408, 7
  %v13410 = vsub.s32 %v13407, %v13409
  %v13411 = vrot.slane %v13397, %v13410
  %v13412 = vcombine.low %v13404, %v13411
  %v13413 = vcombine.low %v12188, %v12196
  %v13414 = vcombine.low %v12195, %v12197
  %v13416 = vunpack.c.l.s4 1983009808
  %v13417 = vunpack.c.0.s8 %v13416
  %v13418 = vlaneseq
  %v13419 = vshrl.u32 %v13418, 7
  %v13420 = vsub.s32 %v13417, %v13419
  %v13421 = vrot.slane %v13413, %v13420
  %v13423 = vunpack.c.l.s4 1983009808
  %v13424 = vunpack.c.0.s8 %v13423
  %v13425 = vlaneseq
  %v13426 = vshrl.u32 %v13425, 7
  %v13427 = vsub.s32 %v13424, %v13426
  %v13428 = vrot.slane %v13414, %v13427
  %v13429 = vcombine.low %v13421, %v13428
  %13430 = vrot.lane.b32.xlu0 %v12744, 72
  %v13431 = vpop.permute.xlu0 %13430
  %13432 = vrot.lane.b32.xlu0 %v12761, 72
  %v13433 = vpop.permute.xlu0 %13432
  %13434 = vrot.lane.b32.xlu0 %v12778, 72
  %v13435 = vpop.permute.xlu0 %13434
  %13436 = vrot.lane.b32.xlu0 %v12795, 72
  %v13437 = vpop.permute.xlu0 %13436
  %13438 = vrot.lane.b32.xlu0 %v12812, 72
  %v13439 = vpop.permute.xlu0 %13438
  %13440 = vrot.lane.b32.xlu0 %v12829, 72
  %v13441 = vpop.permute.xlu0 %13440
  %13442 = vrot.lane.b32.xlu0 %v13180, 72
  %v13443 = vpop.permute.xlu0 %13442
  %13444 = vrot.lane.b32.xlu0 %v13412, 72
  %v13445 = vpop.permute.xlu0 %13444
  %13446 = vrot.lane.b32.xlu0 %v12880, 72
  %v13447 = vpop.permute.xlu0 %13446
  %13448 = vrot.lane.b32.xlu0 %v12897, 72
  %v13449 = vpop.permute.xlu0 %13448
  %13450 = vrot.lane.b32.xlu0 %v12914, 72
  %v13451 = vpop.permute.xlu0 %13450
  %13452 = vrot.lane.b32.xlu0 %v12931, 72
  %v13453 = vpop.permute.xlu0 %13452
  %13454 = vrot.lane.b32.xlu0 %v12948, 72
  %v13455 = vpop.permute.xlu0 %13454
  %13456 = vrot.lane.b32.xlu0 %v12965, 72
  %v13457 = vpop.permute.xlu0 %13456
  %13458 = vrot.lane.b32.xlu0 %v13197, 72
  %v13459 = vpop.permute.xlu0 %13458
  %13460 = vrot.lane.b32.xlu0 %v13429, 72
  %v13461 = vpop.permute.xlu0 %13460
  %v13478 = vsel %vm1794, %v12214, %v12647
  %v13479 = vsel %vm1794, %v12231, %v12649
  %v13480 = vsel %vm1794, %v12248, %v12651
  %v13481 = vsel %vm1794, %v12265, %v12653
  %v13482 = vsel %vm1794, %v12282, %v12655
  %v13483 = vsel %vm1794, %v12299, %v12657
  %v13484 = vsel %vm1794, %v12316, %v12659
  %v13485 = vsel %vm1794, %v12333, %v12661
  %v13486 = vsel %vm1794, %v12350, %v12663
  %v13487 = vsel %vm1794, %v12367, %v12665
  %v13488 = vsel %vm1794, %v12384, %v12667
  %v13489 = vsel %vm1794, %v12401, %v12669
  %v13490 = vsel %vm1794, %v12418, %v12671
  %v13491 = vsel %vm1794, %v12435, %v12673
  %v13492 = vsel %vm1794, %v12452, %v12675
  %v13493 = vsel %vm1794, %v12469, %v12677
  %v13494 = vsel %vm1965, %v13478, %v12967
  %v13495 = vsel %vm1965, %v13479, %v12969
  %v13496 = vsel %vm1965, %v13480, %v12971
  %v13497 = vsel %vm1965, %v13481, %v12973
  %v13498 = vsel %vm1965, %v13482, %v12975
  %v13499 = vsel %vm1965, %v13483, %v12977
  %v13500 = vsel %vm1965, %v13484, %v12979
  %v13501 = vsel %vm1965, %v13485, %v12981
  %v13502 = vsel %vm1965, %v13486, %v12983
  %v13503 = vsel %vm1965, %v13487, %v12985
  %v13504 = vsel %vm1965, %v13488, %v12987
  %v13505 = vsel %vm1965, %v13489, %v12989
  %v13506 = vsel %vm1965, %v13490, %v12991
  %v13507 = vsel %vm1965, %v13491, %v12993
  %v13508 = vsel %vm1965, %v13492, %v12995
  %v13509 = vsel %vm1965, %v13493, %v12997
  %v13510 = vsel %vm3958, %v13494, %v13049
  %v13511 = vsel %vm3958, %v13495, %v13051
  %v13512 = vsel %vm3958, %v13496, %v13053
  %v13513 = vsel %vm3958, %v13497, %v13055
  %v13514 = vsel %vm3958, %v13498, %v13057
  %v13515 = vsel %vm3958, %v13499, %v13059
  %v13516 = vsel %vm3958, %v13500, %v13061
  %v13517 = vsel %vm3958, %v13501, %v13063
  %v13518 = vsel %vm3958, %v13502, %v13065
  %v13519 = vsel %vm3958, %v13503, %v13067
  %v13520 = vsel %vm3958, %v13504, %v13069
  %v13521 = vsel %vm3958, %v13505, %v13071
  %v13522 = vsel %vm3958, %v13506, %v13073
  %v13523 = vsel %vm3958, %v13507, %v13075
  %v13524 = vsel %vm3958, %v13508, %v13077
  %v13525 = vsel %vm3958, %v13509, %v13079
  %v13526 = vsel %vm8402, %v13510, %v13117
  %v13527 = vsel %vm8402, %v13511, %v13119
  %v13528 = vsel %vm8402, %v13512, %v13121
  %v13529 = vsel %vm8402, %v13513, %v13123
  %v13530 = vsel %vm8402, %v13514, %v13125
  %v13531 = vsel %vm8402, %v13515, %v13127
  %v13532 = vsel %vm8402, %v13516, %v13129
  %v13533 = vsel %vm8402, %v13517, %v13131
  %v13534 = vsel %vm8402, %v13518, %v13133
  %v13535 = vsel %vm8402, %v13519, %v13135
  %v13536 = vsel %vm8402, %v13520, %v13137
  %v13537 = vsel %vm8402, %v13521, %v13139
  %v13538 = vsel %vm8402, %v13522, %v13141
  %v13539 = vsel %vm8402, %v13523, %v13143
  %v13540 = vsel %vm8402, %v13524, %v13145
  %v13541 = vsel %vm8402, %v13525, %v13147
  %vm13542 = vcmask 367616
  %v13543 = vsel %vm13542, %v13526, %v13199
  %v13544 = vsel %vm13542, %v13527, %v13201
  %v13545 = vsel %vm13542, %v13528, %v13203
  %v13546 = vsel %vm13542, %v13529, %v13205
  %v13547 = vsel %vm13542, %v13530, %v13207
  %v13548 = vsel %vm13542, %v13531, %v13209
  %v13549 = vsel %vm13542, %v13532, %v13211
  %v13550 = vsel %vm13542, %v13533, %v13213
  %v13551 = vsel %vm13542, %v13534, %v13215
  %v13552 = vsel %vm13542, %v13535, %v13217
  %v13553 = vsel %vm13542, %v13536, %v13219
  %v13554 = vsel %vm13542, %v13537, %v13221
  %v13555 = vsel %vm13542, %v13538, %v13223
  %v13556 = vsel %vm13542, %v13539, %v13225
  %v13557 = vsel %vm13542, %v13540, %v13227
  %v13558 = vsel %vm13542, %v13541, %v13229
  %v13559 = vsel %vm8670, %v13543, %v13281
  %v13560 = vsel %vm8670, %v13544, %v13283
  %v13561 = vsel %vm8670, %v13545, %v13285
  %v13562 = vsel %vm8670, %v13546, %v13287
  %v13563 = vsel %vm8670, %v13547, %v13289
  %v13564 = vsel %vm8670, %v13548, %v13291
  %v13565 = vsel %vm8670, %v13549, %v13293
  %v13566 = vsel %vm8670, %v13550, %v13295
  %v13567 = vsel %vm8670, %v13551, %v13297
  %v13568 = vsel %vm8670, %v13552, %v13299
  %v13569 = vsel %vm8670, %v13553, %v13301
  %v13570 = vsel %vm8670, %v13554, %v13303
  %v13571 = vsel %vm8670, %v13555, %v13305
  %v13572 = vsel %vm8670, %v13556, %v13307
  %v13573 = vsel %vm8670, %v13557, %v13309
  %v13574 = vsel %vm8670, %v13558, %v13311
  %vm13575 = vcmask 515072
  %v13576 = vsel %vm13575, %v13559, %v13349
  %v13577 = vsel %vm13575, %v13560, %v13351
  %v13578 = vsel %vm13575, %v13561, %v13353
  %v13579 = vsel %vm13575, %v13562, %v13355
  %v13580 = vsel %vm13575, %v13563, %v13357
  %v13581 = vsel %vm13575, %v13564, %v13359
  %v13582 = vsel %vm13575, %v13565, %v13361
  %v13583 = vsel %vm13575, %v13566, %v13363
  %v13584 = vsel %vm13575, %v13567, %v13365
  %v13585 = vsel %vm13575, %v13568, %v13367
  %v13586 = vsel %vm13575, %v13569, %v13369
  %v13587 = vsel %vm13575, %v13570, %v13371
  %v13588 = vsel %vm13575, %v13571, %v13373
  %v13589 = vsel %vm13575, %v13572, %v13375
  %v13590 = vsel %vm13575, %v13573, %v13377
  %v13591 = vsel %vm13575, %v13574, %v13379
  %v13592 = vsel %vm11507, %v13576, %v13431
  %v13593 = vsel %vm11507, %v13577, %v13433
  %v13594 = vsel %vm11507, %v13578, %v13435
  %v13595 = vsel %vm11507, %v13579, %v13437
  %v13596 = vsel %vm11507, %v13580, %v13439
  %v13597 = vsel %vm11507, %v13581, %v13441
  %v13598 = vsel %vm11507, %v13582, %v13443
  %v13599 = vsel %vm11507, %v13583, %v13445
  %v13600 = vsel %vm11507, %v13584, %v13447
  %v13601 = vsel %vm11507, %v13585, %v13449
  %v13602 = vsel %vm11507, %v13586, %v13451
  %v13603 = vsel %vm11507, %v13587, %v13453
  %v13604 = vsel %vm11507, %v13588, %v13455
  %v13605 = vsel %vm11507, %v13589, %v13457
  %v13606 = vsel %vm11507, %v13590, %v13459
  %v13607 = vsel %vm11507, %v13591, %v13461
  %s13608 = scalar_lea.vmem %s1, 264
  %v13609 = vld [vmem:[%s13608] sm:$0xff]
  %v13610 = vld [vmem:[%s13608 + $0x8] sm:$0xff]
  %v13611 = vld [vmem:[%s13608 + $0x10] sm:$0xff]
  %v13612 = vld [vmem:[%s13608 + $0x18] sm:$0xff]
  %v13613 = vld [vmem:[%s13608 + $0x20] sm:$0xff]
  %v13614 = vld [vmem:[%s13608 + $0x28] sm:$0xff]
  %v13615 = vld [vmem:[%s13608 + $0x30] sm:$0xff]
  %v13616 = vld [vmem:[%s13608 + $0x38] sm:$0xff]
  %v13617 = vld [vmem:[%s13608 + $0x40] sm:$0xff]
  %v13618 = vld [vmem:[%s13608 + $0x48] sm:$0xff]
  %v13619 = vld [vmem:[%s13608 + $0x50] sm:$0x1]
  %v13620 = vld [vmem:[%s2 + $0x3] sm:$0x1]
  %v13621 = vlaneseq
  %v13622 = vshrl.u32 %v13621, 7
  %v13623 = vsub.s32 0, %v13622
  %v13624 = vrot.slane %v13620, %v13623
  %vm13625 = vcmask 662528
  %v13627 = vsel %vm13625, %v13592, 0
  %v13630 = vsel %vm13625, %v13593, 0
  %v13633 = vsel %vm13625, %v13594, 0
  %v13636 = vsel %vm13625, %v13595, 0
  %v13639 = vsel %vm13625, %v13596, 0
  %v13642 = vsel %vm13625, %v13597, 0
  %v13645 = vsel %vm13625, %v13598, 0
  %v13648 = vsel %vm13625, %v13599, 0
  %v13651 = vsel %vm13625, %v13600, 0
  %v13654 = vsel %vm13625, %v13601, 0
  %v13657 = vsel %vm13625, %v13602, 0
  %v13660 = vsel %vm13625, %v13603, 0
  %v13663 = vsel %vm13625, %v13604, 0
  %v13666 = vsel %vm13625, %v13605, 0
  %v13669 = vsel %vm13625, %v13606, 0
  %v13672 = vsel %vm13625, %v13607, 0
  %vm13674 = vcmask 1040384
  %v13676 = vsel %vm13674, %v13619, 0
  %13678 = vmatprep.subr.mxu0 0.0
  %13679 = vmatpush1.msra.mxu0 %v13609
  %13680 = vmatprep.subr.mxu0 0.0
  %13681 = vmatpush1.msra.mxu0 %v13610
  %13682 = vmatprep.subr.mxu0 0.0
  %13683 = vmatpush1.msra.mxu0 %v13611
  %13684 = vmatprep.subr.mxu0 0.0
  %13685 = vmatpush1.msra.mxu0 %v13612
  %13686 = vmatprep.subr.mxu0 0.0
  %13687 = vmatpush1.msra.mxu0 %v13613
  %13688 = vmatprep.subr.mxu0 0.0
  %13689 = vmatpush1.msra.mxu0 %v13614
  %13690 = vmatprep.subr.mxu0 0.0
  %13691 = vmatpush1.msra.mxu0 %v13615
  %13692 = vmatprep.subr.mxu0 0.0
  %13693 = vmatpush1.msra.mxu0 %v13616
  %13694 = vmatprep.subr.mxu0 0.0
  %13695 = vmatpush1.msra.mxu0 %v13617
  %13696 = vmatprep.subr.mxu0 0.0
  %13697 = vmatpush1.msra.mxu0 %v13618
  %13698 = vmatprep.subr.mxu0 0.0
  %13699 = vmatpush1.msra.mxu0 %v13676
  %13700 = vmatprep.subr.mxu0 0.0
  %13701 = vmatpush1.msra.mxu0 0.0
  %13702 = vmatprep.subr.mxu0 0.0
  %13703 = vmatpush1.msra.mxu0 0.0
  %13704 = vmatprep.subr.mxu0 0.0
  %13705 = vmatpush1.msra.mxu0 0.0
  %13706 = vmatprep.subr.mxu0 0.0
  %13707 = vmatpush1.msra.mxu0 0.0
  %13708 = vmatprep.subr.mxu0 0.0
  %13709 = vmatpush1.msra.mxu0 0.0
  %13710 = vmatprep.subr.mxu0 0.0
  %13711 = vmatpush1.msra.mxu0 0.0
  %13712 = vmatprep.subr.mxu0 0.0
  %13713 = vmatpush1.msra.mxu0 0.0
  %13714 = vmatprep.subr.mxu0 0.0
  %13715 = vmatpush1.msra.mxu0 0.0
  %13716 = vmatprep.subr.mxu0 0.0
  %13717 = vmatpush1.msra.mxu0 0.0
  %13718 = vmatprep.subr.mxu0 0.0
  %13719 = vmatpush1.msra.mxu0 0.0
  %13720 = vmatprep.subr.mxu0 0.0
  %13721 = vmatpush1.msra.mxu0 0.0
  %13722 = vmatprep.subr.mxu0 0.0
  %13723 = vmatpush1.msra.mxu0 0.0
  %13724 = vmatprep.subr.mxu0 0.0
  %13725 = vmatpush1.msra.mxu0 0.0
  %13726 = vmatprep.subr.mxu0 0.0
  %13727 = vmatpush1.msra.mxu0 0.0
  %13728 = vmatprep.subr.mxu0 0.0
  %13729 = vmatpush1.msra.mxu0 0.0
  %13730 = vmatprep.subr.mxu0 0.0
  %13731 = vmatpush1.msra.mxu0 0.0
  %13732 = vmatprep.subr.mxu0 0.0
  %13733 = vmatpush1.msra.mxu0 0.0
  %13734 = vmatprep.subr.mxu0 0.0
  %13735 = vmatpush1.msra.mxu0 0.0
  %13736 = vmatprep.subr.mxu0 0.0
  %13737 = vmatpush1.msra.mxu0 0.0
  %13738 = vmatprep.subr.mxu0 0.0
  %13739 = vmatpush1.msra.mxu0 0.0
  %13740 = vmatprep.subr.mxu0 0.0
  %13741 = vmatpush1.msra.mxu0 0.0
  %13742 = vmatprep.mubr.f32.mxu0 0.0
  %13743 = vmatmul.mubr.f32.gmra.mrb[0].mxu0 %v13627
  %v13744 = vpop.f32.mrb[0].mxu0
  %v13745 = vadd.f32 %v13624, %v13744
  %v13746 = vpop.f32.mrb[0].mxu0
  %13747 = vmatprep.mubr.f32.mxu0 0.0
  %13748 = vmatmul.mubr.f32.gmra.mrb[0].mxu0 %v13630
  %v13749 = vpop.f32.mrb[0].mxu0
  %v13750 = vadd.f32 %v13624, %v13749
  %v13751 = vpop.f32.mrb[0].mxu0
  %13752 = vmatprep.mubr.f32.mxu0 0.0
  %13753 = vmatmul.mubr.f32.gmra.mrb[0].mxu0 %v13633
  %v13754 = vpop.f32.mrb[0].mxu0
  %v13755 = vadd.f32 %v13624, %v13754
  %v13756 = vpop.f32.mrb[0].mxu0
  %13757 = vmatprep.mubr.f32.mxu0 0.0
  %13758 = vmatmul.mubr.f32.gmra.mrb[0].mxu0 %v13636
  %v13759 = vpop.f32.mrb[0].mxu0
  %v13760 = vadd.f32 %v13624, %v13759
  %v13761 = vpop.f32.mrb[0].mxu0
  %13762 = vmatprep.mubr.f32.mxu0 0.0
  %13763 = vmatmul.mubr.f32.gmra.mrb[0].mxu0 %v13639
  %v13764 = vpop.f32.mrb[0].mxu0
  %v13765 = vadd.f32 %v13624, %v13764
  %v13766 = vpop.f32.mrb[0].mxu0
  %13767 = vmatprep.mubr.f32.mxu0 0.0
  %13768 = vmatmul.mubr.f32.gmra.mrb[0].mxu0 %v13642
  %v13769 = vpop.f32.mrb[0].mxu0
  %v13770 = vadd.f32 %v13624, %v13769
  %v13771 = vpop.f32.mrb[0].mxu0
  %13772 = vmatprep.mubr.f32.mxu0 0.0
  %13773 = vmatmul.mubr.f32.gmra.mrb[0].mxu0 %v13645
  %v13774 = vpop.f32.mrb[0].mxu0
  %v13775 = vadd.f32 %v13624, %v13774
  %v13776 = vpop.f32.mrb[0].mxu0
  %13777 = vmatprep.mubr.f32.mxu0 0.0
  %13778 = vmatmul.mubr.f32.gmra.mrb[0].mxu0 %v13648
  %v13779 = vpop.f32.mrb[0].mxu0
  %v13780 = vadd.f32 %v13624, %v13779
  %v13781 = vpop.f32.mrb[0].mxu0
  %13782 = vmatprep.mubr.f32.mxu0 0.0
  %13783 = vmatmul.mubr.f32.gmra.mrb[0].mxu0 %v13651
  %v13784 = vpop.f32.mrb[0].mxu0
  %v13785 = vadd.f32 %v13624, %v13784
  %v13786 = vpop.f32.mrb[0].mxu0
  %13787 = vmatprep.mubr.f32.mxu0 0.0
  %13788 = vmatmul.mubr.f32.gmra.mrb[0].mxu0 %v13654
  %v13789 = vpop.f32.mrb[0].mxu0
  %v13790 = vadd.f32 %v13624, %v13789
  %v13791 = vpop.f32.mrb[0].mxu0
  %13792 = vmatprep.mubr.f32.mxu0 0.0
  %13793 = vmatmul.mubr.f32.gmra.mrb[0].mxu0 %v13657
  %v13794 = vpop.f32.mrb[0].mxu0
  %v13795 = vadd.f32 %v13624, %v13794
  %v13796 = vpop.f32.mrb[0].mxu0
  %13797 = vmatprep.mubr.f32.mxu0 0.0
  %13798 = vmatmul.mubr.f32.gmra.mrb[0].mxu0 %v13660
  %v13799 = vpop.f32.mrb[0].mxu0
  %v13800 = vadd.f32 %v13624, %v13799
  %v13801 = vpop.f32.mrb[0].mxu0
  %13802 = vmatprep.mubr.f32.mxu0 0.0
  %13803 = vmatmul.mubr.f32.gmra.mrb[0].mxu0 %v13663
  %v13804 = vpop.f32.mrb[0].mxu0
  %v13805 = vadd.f32 %v13624, %v13804
  %v13806 = vpop.f32.mrb[0].mxu0
  %13807 = vmatprep.mubr.f32.mxu0 0.0
  %13808 = vmatmul.mubr.f32.gmra.mrb[0].mxu0 %v13666
  %v13809 = vpop.f32.mrb[0].mxu0
  %v13810 = vadd.f32 %v13624, %v13809
  %v13811 = vpop.f32.mrb[0].mxu0
  %13812 = vmatprep.mubr.f32.mxu0 0.0
  %13813 = vmatmul.mubr.f32.gmra.mrb[0].mxu0 %v13669
  %v13814 = vpop.f32.mrb[0].mxu0
  %v13815 = vadd.f32 %v13624, %v13814
  %v13816 = vpop.f32.mrb[0].mxu0
  %13817 = vmatprep.mubr.f32.mxu0 0.0
  %13818 = vmatmul.mubr.f32.gmra.mrb[0].mxu0 %v13672
  %v13819 = vpop.f32.mrb[0].mxu0
  %v13820 = vadd.f32 %v13624, %v13819
  %v13821 = vpop.f32.mrb[0].mxu0
  %13822 = vdwg.mxu0
  %13823 = vxpose.xlu0.b32.start [1/16] %v13745, 128
  %13824 = vxpose.xlu0.b32.cont [2/16] %v13750, 128
  %13825 = vxpose.xlu0.b32.cont [3/16] %v13755, 128
  %13826 = vxpose.xlu0.b32.cont [4/16] %v13760, 128
  %13827 = vxpose.xlu0.b32.cont [5/16] %v13765, 128
  %13828 = vxpose.xlu0.b32.cont [6/16] %v13770, 128
  %13829 = vxpose.xlu0.b32.cont [7/16] %v13775, 128
  %13830 = vxpose.xlu0.b32.cont [8/16] %v13780, 128
  %13831 = vxpose.xlu0.b32.cont [9/16] %v13785, 128
  %13832 = vxpose.xlu0.b32.cont [10/16] %v13790, 128
  %13833 = vxpose.xlu0.b32.cont [11/16] %v13795, 128
  %13834 = vxpose.xlu0.b32.cont [12/16] %v13800, 128
  %13835 = vxpose.xlu0.b32.cont [13/16] %v13805, 128
  %13836 = vxpose.xlu0.b32.cont [14/16] %v13810, 128
  %13837 = vxpose.xlu0.b32.cont [15/16] %v13815, 128
  %13838 = vxpose.xlu0.b32.end [16/16] %v13820, 128
  %v13839 = vpop.trf.xlu0
  %v13840 = vpop.trf.xlu0
  %v13841 = vpop.trf.xlu0
  %v13842 = vpop.trf.xlu0
  %v13843 = vpop.trf.xlu0
  %v13844 = vpop.trf.xlu0
  %v13845 = vpop.trf.xlu0
  %v13846 = vpop.trf.xlu0
  %v13847 = vpop.trf.xlu0
  %v13848 = vpop.trf.xlu0
  %v13849 = vpop.trf.xlu0
  %v13850 = vpop.trf.xlu0
  %v13851 = vpop.trf.xlu0
  %v13852 = vpop.trf.xlu0
  %v13853 = vpop.trf.xlu0
  %v13854 = vpop.trf.xlu0
  %13855 = vst [vmem:[%s3] sm:$0xff] %v13839
  %13856 = vst [vmem:[%s3 + $0x8] sm:$0x3] %v13840
  // Predicated region
  $region14: #{fused_model_forward.1} parent=0 // pred_check
    _
  $region15: #{fused_model_forward.1} parent=0 // pred_check_branch
    %13858 = sbr.rel (0) target = $region17
  $region16: #{fused_model_forward.1} parent=0 // pred_region
    _
  $region17: #{fused_model_forward.1} parent=0 // pred_fallthru
    _
  // Predicated region
  $region18: #{fused_model_forward.1} parent=0 // pred_check
    _
  $region19: #{fused_model_forward.1} parent=0 // pred_check_branch
    %13860 = sbr.rel (0) target = $region21
  $region20: #{fused_model_forward.1} parent=0 // pred_region
    _
  $region21: #{fused_model_forward.1} parent=0 // pred_fallthru
    _

</llo_original>
